<compile_context>
chip_gen: v6e
topology: v6e:2x2x1
jax: 0.10.0
libtpu: 0.0.40
codegen_flags: <defaults>
</compile_context>

<pallas_src>
import numpy as np
import jax
import jax.numpy as jnp
from jax import lax
from jax.experimental import pallas as pl
from jax.experimental.pallas import tpu as pltpu

H_IN = 30                 # time-window length
W_IN = 14                 # number of sensor features
HW = H_IN * W_IN          # 420 (fc1 input features)


# ----------------------------- Pallas kernel -------------------------------- #

def cnn_kernel(x_ref,
               w1_ref, b1_ref, w2_ref, b2_ref, w3_ref, b3_ref,
               w4_ref, b4_ref, w5_ref, b5_ref,
               fc1w_ref, fc1b_ref, fc2w_ref, fc2b_ref,
               out_ref):
    """One grid step == one block of `block_b` samples.

    x_ref:    (1, W_IN*block_b, 30) bf16, row = w*block_b + b_local, lane = h
    w*_ref:   bf16 block-banded conv matrices (30*C_in, 30*C_out) (ZeroPad2d /
              conv padding folded into the band); b*_ref: (1, 30*C_out) f32
    fc1w_ref: (W_IN, 30, 100) f32  (torch fc1 weight regrouped per sensor column)
    fc2w_ref: (1, 100) f32; fc2b_ref: (1, 1) f32
    out_ref:  (1, 1, block_b) f32  (lane-dense: batch on lanes)
    """
    block_b = out_ref.shape[2]
    w_in = fc1w_ref.shape[0]

    def conv_layer(act, w_ref, b_ref, out_dtype):
        # bf16 x bf16 MXU matmul with f32 accumulation; tanh + bias in f32
        # (safe on v5e which has no bf16 VPU/EUP), then cast for the next layer.
        y = jnp.dot(act, w_ref[...], preferred_element_type=jnp.float32)
        return jnp.tanh(y + b_ref[...]).astype(out_dtype)

    a = x_ref[0]                                     # (S_ROWS, 30) bf16
    a = conv_layer(a, w1_ref, b1_ref, jnp.bfloat16)  # (S_ROWS, 300)
    a = conv_layer(a, w2_ref, b2_ref, jnp.bfloat16)  # (S_ROWS, 300)
    a = conv_layer(a, w3_ref, b3_ref, jnp.bfloat16)  # (S_ROWS, 300)
    a = conv_layer(a, w4_ref, b4_ref, jnp.bfloat16)  # (S_ROWS, 300)
    a = conv_layer(a, w5_ref, b5_ref, jnp.float32)   # (S_ROWS, 30), fc input in f32

    # torch's .view(N, -1) + fc1 without any lane-misaligned repack/scratch:
    # fc1 weight is regrouped on the host to (w, h, out), so fc1 is the sum over
    # the 14 contiguous row blocks of conv5's output of small (B,30)@(30,100)
    # matmuls (fc1 is ~1% of total FLOPs, kept in f32).
    acc = jnp.zeros((block_b, fc1w_ref.shape[2]), jnp.float32)
    for w in range(w_in):
        acc = acc + jnp.dot(a[w * block_b:(w + 1) * block_b, :], fc1w_ref[w],
                            preferred_element_type=jnp.float32)
    hid = jnp.tanh(acc + fc1b_ref[...])              # (block_b, 100)
    # TODO(synk): torch.nn.Dropout(p=0.5) training-mode stochastic mask omitted;
    #             implemented as identity (eval/inference semantics).

    # fc2 with a lane-dense (1, block_b) result (batch on lanes -> unmasked store).
    out_row = lax.dot_general(
        fc2w_ref[...], hid,                          # (1, 100) . (block_b, 100)
        dimension_numbers=(((1,), (1,)), ((), ())),
        preferred_element_type=jnp.float32)          # (1, block_b)
    out_ref[0] = out_row + fc2b_ref[...]


# --------------------------- parameters / glue ------------------------------- #

def _torch_like_uniform(key, shape, fan_in):
    bound = 1.0 / np.sqrt(fan_in)
    return jax.random.uniform(key, shape, jnp.float32, -bound, bound)


def init_torch_params(key):
    """Deterministic params with the exact PyTorch module shapes."""
    ks = jax.random.split(key, 14)
    p = {}
    p["conv1_w"] = _torch_like_uniform(ks[0], (10, 1, 10, 1), 1 * 10)
    p["conv1_b"] = _torch_like_uniform(ks[1], (10,), 1 * 10)
    p["conv2_w"] = _torch_like_uniform(ks[2], (10, 10, 10, 1), 10 * 10)
    p["conv2_b"] = _torch_like_uniform(ks[3], (10,), 10 * 10)
    p["conv3_w"] = _torch_like_uniform(ks[4], (10, 10, 10, 1), 10 * 10)
    p["conv3_b"] = _torch_like_uniform(ks[5], (10,), 10 * 10)
    p["conv4_w"] = _torch_like_uniform(ks[6], (10, 10, 10, 1), 10 * 10)
    p["conv4_b"] = _torch_like_uniform(ks[7], (10,), 10 * 10)
    p["conv5_w"] = _torch_like_uniform(ks[8], (1, 10, 3, 1), 10 * 3)
    p["conv5_b"] = _torch_like_uniform(ks[9], (1,), 10 * 3)
    p["fc1_w"] = _torch_like_uniform(ks[10], (100, 420), 420)
    p["fc1_b"] = _torch_like_uniform(ks[11], (100,), 420)
    p["fc2_w"] = _torch_like_uniform(ks[12], (1, 100), 100)
    p["fc2_b"] = _torch_like_uniform(ks[13], (1,), 100)
    return p


def _conv_band_weight(w, pad_top):
    """torch conv weight (C_out, C_in, K, 1) -> dense block-banded matrix
    (30*C_in, 30*C_out) implementing the whole temporal conv (zero padding
    along H is folded into the band structure)."""
    c_out, c_in, k, _ = w.shape
    wk = jnp.transpose(w[:, :, :, 0], (2, 1, 0))                 # (k, c_in, c_out)
    h_in = jnp.arange(H_IN)[:, None]
    h_out = jnp.arange(H_IN)[None, :]
    dh = h_in - h_out + pad_top                                  # (30, 30)
    valid = (dh >= 0) & (dh < k)
    taps = wk[jnp.clip(dh, 0, k - 1)]                            # (30, 30, c_in, c_out)
    taps = jnp.where(valid[:, :, None, None], taps, 0.0)
    # -> [h_in, c_in, h_out, c_out] -> (30*c_in, 30*c_out)
    return jnp.transpose(taps, (0, 2, 1, 3)).reshape(H_IN * c_in, H_IN * c_out)


def _const_spec(shape):
    zeros = (0,) * len(shape)
    return pl.BlockSpec(shape, lambda i, _z=zeros: _z)


def _choose_block_b(n):
    """Samples per grid step.  Cap at 128; for small batches split into two
    balanced, multiple-of-8 blocks so a v7x megacore gets equal work per core
    with minimal padded (discarded) rows."""
    if n >= 256:
        return 128
    half = -(-n // 2)
    return min(128, max(8, -(-half // 8) * 8))


@jax.jit
def cnn_forward_pallas(x_nchw, p):
    n = x_nchw.shape[0]
    block_b = _choose_block_b(n)
    s_rows = W_IN * block_b
    nb = pl.cdiv(n, block_b)
    npad = nb * block_b

    x = x_nchw.astype(jnp.float32)
    x = jnp.pad(x, ((0, npad - n), (0, 0), (0, 0), (0, 0)))
    # (n,1,30,14) -> (nb, W_IN*block_b, 30); row within a block = w*block_b + b_local.
    xw = jnp.transpose(x[:, 0], (2, 0, 1))                        # (14, npad, 30)
    xw = xw.reshape(W_IN, nb, block_b, H_IN)
    xw = jnp.transpose(xw, (1, 0, 2, 3)).reshape(nb, s_rows, H_IN)
    xw = xw.astype(jnp.bfloat16)                                  # bf16 MXU operand

    def band(w, pad_top):
        return _conv_band_weight(w, pad_top).astype(jnp.bfloat16)

    def bias(b):
        return jnp.tile(b, H_IN).reshape(1, -1).astype(jnp.float32)

    # fc1 weight regrouped per sensor column: fc1w[w, h, j] = fc1_w[j, h*14 + w].
    fc1w = jnp.transpose(p["fc1_w"].reshape(100, H_IN, W_IN), (2, 1, 0))  # (14,30,100)

    args = (
        xw,
        band(p["conv1_w"], 0), bias(p["conv1_b"]),
        band(p["conv2_w"], 0), bias(p["conv2_b"]),
        band(p["conv3_w"], 0), bias(p["conv3_b"]),
        band(p["conv4_w"], 0), bias(p["conv4_b"]),
        band(p["conv5_w"], 1), bias(p["conv5_b"]),
        fc1w, p["fc1_b"].reshape(1, -1),
        p["fc2_w"],                                               # (1, 100)
        p["fc2_b"].reshape(1, 1),
    )

    in_specs = [pl.BlockSpec((1, s_rows, H_IN), lambda i: (i, 0, 0))]
    in_specs += [_const_spec(a.shape) for a in args[1:]]

    out = pl.pallas_call(
        cnn_kernel,
        out_shape=jax.ShapeDtypeStruct((nb, 1, block_b), jnp.float32),
        grid=(nb,),
        in_specs=in_specs,
        out_specs=pl.BlockSpec((1, 1, block_b), lambda i: (i, 0, 0)),
        compiler_params=pltpu.CompilerParams(
            dimension_semantics=("parallel",),
            vmem_limit_bytes=32 * 1024 * 1024),
    )(*args)
    return out.reshape(npad, 1)[:n]


# -------------------------- pure-JAX reference ------------------------------- #

_HI = jax.lax.Precision.HIGHEST


def cnn_forward_reference(x_nchw, p):
    x = jnp.transpose(x_nchw, (0, 2, 3, 1)).astype(jnp.float32)   # NHWC

    def conv(act, w, b, pad_top, pad_bot):
        k = w.shape[2]
        xp = jnp.pad(act, ((0, 0), (pad_top, pad_bot), (0, 0), (0, 0)))
        acc = jnp.zeros(act.shape[:3] + (w.shape[0],), jnp.float32) + b
        for dh in range(k):
            acc = acc + jnp.einsum("nhwc,cd->nhwd",
                                   xp[:, dh:dh + act.shape[1]],
                                   w[:, :, dh, 0].T, precision=_HI)
        return jnp.tanh(acc)

    h = conv(x, p["conv1_w"], p["conv1_b"], 0, 9)
    h = conv(h, p["conv2_w"], p["conv2_b"], 0, 9)
    h = conv(h, p["conv3_w"], p["conv3_b"], 0, 9)
    h = conv(h, p["conv4_w"], p["conv4_b"], 0, 9)
    h = conv(h, p["conv5_w"], p["conv5_b"], 1, 1)
    flat = h.reshape(h.shape[0], -1)                              # (N, 420)
    hid = jnp.tanh(jnp.dot(flat, p["fc1_w"].T, precision=_HI) + p["fc1_b"])
    return jnp.dot(hid, p["fc2_w"].T, precision=_HI) + p["fc2_b"]  # dropout = identity (eval)


# ------------------------------------ main ----------------------------------- #

if __name__ == "__main__":
    root = jax.random.PRNGKey(0)
    pkey, xkey = jax.random.split(root)
    params = init_torch_params(pkey)

    n_batch = 24   # 2 balanced grid blocks of 16 (last 8 rows are padding, sliced off)
    x = jax.random.normal(xkey, (n_batch, 1, H_IN, W_IN), jnp.float32)

    out = jax.block_until_ready(cnn_forward_pallas(x, params))
    ref = jax.block_until_ready(cnn_forward_reference(x, params))

    assert out.shape == (n_batch, 1), out.shape
    # bf16 conv chain vs. f32 reference -> relaxed tolerance.
    np.testing.assert_allclose(np.asarray(out), np.asarray(ref), atol=4e-2, rtol=4e-2)
    print("KERNEL_OK")
</pallas_src>

<mosaic_0001>
module attributes {stable_mosaic.version = 11 : i64} {
  func.func @cnn_kernel(%arg0: i32, %arg1: memref<1x224x30xbf16, #tpu.memory_space<vmem>>, %arg2: memref<30x300xbf16, #tpu.memory_space<vmem>>, %arg3: memref<1x300xf32, #tpu.memory_space<vmem>>, %arg4: memref<300x300xbf16, #tpu.memory_space<vmem>>, %arg5: memref<1x300xf32, #tpu.memory_space<vmem>>, %arg6: memref<300x300xbf16, #tpu.memory_space<vmem>>, %arg7: memref<1x300xf32, #tpu.memory_space<vmem>>, %arg8: memref<300x300xbf16, #tpu.memory_space<vmem>>, %arg9: memref<1x300xf32, #tpu.memory_space<vmem>>, %arg10: memref<300x30xbf16, #tpu.memory_space<vmem>>, %arg11: memref<1x30xf32, #tpu.memory_space<vmem>>, %arg12: memref<14x30x100xf32, #tpu.memory_space<vmem>>, %arg13: memref<1x100xf32, #tpu.memory_space<vmem>>, %arg14: memref<1x100xf32, #tpu.memory_space<vmem>>, %arg15: memref<1x1xf32, #tpu.memory_space<vmem>>, %arg16: memref<1x1x16xf32, #tpu.memory_space<vmem>>) attributes {dimension_semantics = [#tpu.dimension_semantics<parallel>], iteration_bounds = array<i64: 2>, scalar_prefetch = 0 : i64, scratch_operands = 0 : i64, tpu.core_type = #tpu.core_type<tc>, window_params = [{transform_indices = @transform_0, window_bounds = array<i64: 1, 224, 30>}, {pipeline_mode = #tpu.pipeline_mode<synchronous>, transform_indices = @transform_1, window_bounds = array<i64: 30, 300>}, {pipeline_mode = #tpu.pipeline_mode<synchronous>, transform_indices = @transform_2, window_bounds = array<i64: 1, 300>}, {pipeline_mode = #tpu.pipeline_mode<synchronous>, transform_indices = @transform_3, window_bounds = array<i64: 300, 300>}, {pipeline_mode = #tpu.pipeline_mode<synchronous>, transform_indices = @transform_4, window_bounds = array<i64: 1, 300>}, {pipeline_mode = #tpu.pipeline_mode<synchronous>, transform_indices = @transform_5, window_bounds = array<i64: 300, 300>}, {pipeline_mode = #tpu.pipeline_mode<synchronous>, transform_indices = @transform_6, window_bounds = array<i64: 1, 300>}, {pipeline_mode = #tpu.pipeline_mode<synchronous>, transform_indices = @transform_7, window_bounds = array<i64: 300, 300>}, {pipeline_mode = #tpu.pipeline_mode<synchronous>, transform_indices = @transform_8, window_bounds = array<i64: 1, 300>}, {pipeline_mode = #tpu.pipeline_mode<synchronous>, transform_indices = @transform_9, window_bounds = array<i64: 300, 30>}, {pipeline_mode = #tpu.pipeline_mode<synchronous>, transform_indices = @transform_10, window_bounds = array<i64: 1, 30>}, {pipeline_mode = #tpu.pipeline_mode<synchronous>, transform_indices = @transform_11, window_bounds = array<i64: 14, 30, 100>}, {pipeline_mode = #tpu.pipeline_mode<synchronous>, transform_indices = @transform_12, window_bounds = array<i64: 1, 100>}, {pipeline_mode = #tpu.pipeline_mode<synchronous>, transform_indices = @transform_13, window_bounds = array<i64: 1, 100>}, {pipeline_mode = #tpu.pipeline_mode<synchronous>, transform_indices = @transform_14, window_bounds = array<i64: 1, 1>}, {transform_indices = @transform_15, window_bounds = array<i64: 1, 1, 16>}]} {
    %c0 = arith.constant 0 : index
    %c0_0 = arith.constant 0 : index
    %c0_1 = arith.constant 0 : index
    %0 = vector.load %arg1[%c0, %c0_0, %c0_1] : memref<1x224x30xbf16, #tpu.memory_space<vmem>>, vector<1x224x30xbf16>
    %1 = vector.shape_cast %0 : vector<1x224x30xbf16> to vector<224x30xbf16>
    %c0_2 = arith.constant 0 : index
    %c0_3 = arith.constant 0 : index
    %2 = vector.load %arg2[%c0_2, %c0_3] : memref<30x300xbf16, #tpu.memory_space<vmem>>, vector<30x300xbf16>
    %cst = arith.constant dense<0.000000e+00> : vector<224x300xf32>
    %3 = tpu.matmul %1, %2, %cst {dimension_numbers = #tpu.dot_dimension_numbers<[1], [0], [0], [1], [0, 0, 1, 1], [], []>} : vector<224x30xbf16>, vector<30x300xbf16>, vector<224x300xf32> -> vector<224x300xf32>
    %c0_4 = arith.constant 0 : index
    %c0_5 = arith.constant 0 : index
    %4 = vector.load %arg3[%c0_4, %c0_5] : memref<1x300xf32, #tpu.memory_space<vmem>>, vector<1x300xf32>
    %5 = vector.broadcast %4 : vector<1x300xf32> to vector<224x300xf32>
    %6 = arith.addf %3, %5 : vector<224x300xf32>
    %7 = math.tanh %6 : vector<224x300xf32>
    %8 = arith.truncf %7 : vector<224x300xf32> to vector<224x300xbf16>
    %c0_6 = arith.constant 0 : index
    %c0_7 = arith.constant 0 : index
    %9 = vector.load %arg4[%c0_6, %c0_7] : memref<300x300xbf16, #tpu.memory_space<vmem>>, vector<300x300xbf16>
    %cst_8 = arith.constant dense<0.000000e+00> : vector<224x300xf32>
    %10 = tpu.matmul %8, %9, %cst_8 {dimension_numbers = #tpu.dot_dimension_numbers<[1], [0], [0], [1], [0, 0, 1, 1], [], []>} : vector<224x300xbf16>, vector<300x300xbf16>, vector<224x300xf32> -> vector<224x300xf32>
    %c0_9 = arith.constant 0 : index
    %c0_10 = arith.constant 0 : index
    %11 = vector.load %arg5[%c0_9, %c0_10] : memref<1x300xf32, #tpu.memory_space<vmem>>, vector<1x300xf32>
    %12 = vector.broadcast %11 : vector<1x300xf32> to vector<224x300xf32>
    %13 = arith.addf %10, %12 : vector<224x300xf32>
    %14 = math.tanh %13 : vector<224x300xf32>
    %15 = arith.truncf %14 : vector<224x300xf32> to vector<224x300xbf16>
    %c0_11 = arith.constant 0 : index
    %c0_12 = arith.constant 0 : index
    %16 = vector.load %arg6[%c0_11, %c0_12] : memref<300x300xbf16, #tpu.memory_space<vmem>>, vector<300x300xbf16>
    %cst_13 = arith.constant dense<0.000000e+00> : vector<224x300xf32>
    %17 = tpu.matmul %15, %16, %cst_13 {dimension_numbers = #tpu.dot_dimension_numbers<[1], [0], [0], [1], [0, 0, 1, 1], [], []>} : vector<224x300xbf16>, vector<300x300xbf16>, vector<224x300xf32> -> vector<224x300xf32>
    %c0_14 = arith.constant 0 : index
    %c0_15 = arith.constant 0 : index
    %18 = vector.load %arg7[%c0_14, %c0_15] : memref<1x300xf32, #tpu.memory_space<vmem>>, vector<1x300xf32>
    %19 = vector.broadcast %18 : vector<1x300xf32> to vector<224x300xf32>
    %20 = arith.addf %17, %19 : vector<224x300xf32>
    %21 = math.tanh %20 : vector<224x300xf32>
    %22 = arith.truncf %21 : vector<224x300xf32> to vector<224x300xbf16>
    %c0_16 = arith.constant 0 : index
    %c0_17 = arith.constant 0 : index
    %23 = vector.load %arg8[%c0_16, %c0_17] : memref<300x300xbf16, #tpu.memory_space<vmem>>, vector<300x300xbf16>
    %cst_18 = arith.constant dense<0.000000e+00> : vector<224x300xf32>
    %24 = tpu.matmul %22, %23, %cst_18 {dimension_numbers = #tpu.dot_dimension_numbers<[1], [0], [0], [1], [0, 0, 1, 1], [], []>} : vector<224x300xbf16>, vector<300x300xbf16>, vector<224x300xf32> -> vector<224x300xf32>
    %c0_19 = arith.constant 0 : index
    %c0_20 = arith.constant 0 : index
    %25 = vector.load %arg9[%c0_19, %c0_20] : memref<1x300xf32, #tpu.memory_space<vmem>>, vector<1x300xf32>
    %26 = vector.broadcast %25 : vector<1x300xf32> to vector<224x300xf32>
    %27 = arith.addf %24, %26 : vector<224x300xf32>
    %28 = math.tanh %27 : vector<224x300xf32>
    %29 = arith.truncf %28 : vector<224x300xf32> to vector<224x300xbf16>
    %c0_21 = arith.constant 0 : index
    %c0_22 = arith.constant 0 : index
    %30 = vector.load %arg10[%c0_21, %c0_22] : memref<300x30xbf16, #tpu.memory_space<vmem>>, vector<300x30xbf16>
    %cst_23 = arith.constant dense<0.000000e+00> : vector<224x30xf32>
    %31 = tpu.matmul %29, %30, %cst_23 {dimension_numbers = #tpu.dot_dimension_numbers<[1], [0], [0], [1], [0, 0, 1, 1], [], []>} : vector<224x300xbf16>, vector<300x30xbf16>, vector<224x30xf32> -> vector<224x30xf32>
    %c0_24 = arith.constant 0 : index
    %c0_25 = arith.constant 0 : index
    %32 = vector.load %arg11[%c0_24, %c0_25] : memref<1x30xf32, #tpu.memory_space<vmem>>, vector<1x30xf32>
    %33 = vector.broadcast %32 : vector<1x30xf32> to vector<224x30xf32>
    %34 = arith.addf %31, %33 : vector<224x30xf32>
    %35 = math.tanh %34 : vector<224x30xf32>
    %cst_26 = arith.constant 0.000000e+00 : f32
    %36 = vector.broadcast %cst_26 : f32 to vector<16x100xf32>
    %37 = vector.extract_strided_slice %35 {offsets = [0, 0], sizes = [16, 30], strides = [1, 1]} : vector<224x30xf32> to vector<16x30xf32>
    %c0_27 = arith.constant 0 : index
    %c0_28 = arith.constant 0 : index
    %c0_29 = arith.constant 0 : index
    %38 = vector.load %arg12[%c0_27, %c0_28, %c0_29] : memref<14x30x100xf32, #tpu.memory_space<vmem>>, vector<1x30x100xf32>
    %39 = vector.shape_cast %38 : vector<1x30x100xf32> to vector<30x100xf32>
    %cst_30 = arith.constant dense<0.000000e+00> : vector<16x100xf32>
    %40 = tpu.matmul %37, %39, %cst_30 {dimension_numbers = #tpu.dot_dimension_numbers<[1], [0], [0], [1], [0, 0, 1, 1], [], []>} : vector<16x30xf32>, vector<30x100xf32>, vector<16x100xf32> -> vector<16x100xf32>
    %41 = arith.addf %36, %40 : vector<16x100xf32>
    %42 = vector.extract_strided_slice %35 {offsets = [16, 0], sizes = [16, 30], strides = [1, 1]} : vector<224x30xf32> to vector<16x30xf32>
    %c1 = arith.constant 1 : index
    %c0_31 = arith.constant 0 : index
    %c0_32 = arith.constant 0 : index
    %43 = vector.load %arg12[%c1, %c0_31, %c0_32] : memref<14x30x100xf32, #tpu.memory_space<vmem>>, vector<1x30x100xf32>
    %44 = vector.shape_cast %43 : vector<1x30x100xf32> to vector<30x100xf32>
    %cst_33 = arith.constant dense<0.000000e+00> : vector<16x100xf32>
    %45 = tpu.matmul %42, %44, %cst_33 {dimension_numbers = #tpu.dot_dimension_numbers<[1], [0], [0], [1], [0, 0, 1, 1], [], []>} : vector<16x30xf32>, vector<30x100xf32>, vector<16x100xf32> -> vector<16x100xf32>
    %46 = arith.addf %41, %45 : vector<16x100xf32>
    %47 = vector.extract_strided_slice %35 {offsets = [32, 0], sizes = [16, 30], strides = [1, 1]} : vector<224x30xf32> to vector<16x30xf32>
    %c2 = arith.constant 2 : index
    %c0_34 = arith.constant 0 : index
    %c0_35 = arith.constant 0 : index
    %48 = vector.load %arg12[%c2, %c0_34, %c0_35] : memref<14x30x100xf32, #tpu.memory_space<vmem>>, vector<1x30x100xf32>
    %49 = vector.shape_cast %48 : vector<1x30x100xf32> to vector<30x100xf32>
    %cst_36 = arith.constant dense<0.000000e+00> : vector<16x100xf32>
    %50 = tpu.matmul %47, %49, %cst_36 {dimension_numbers = #tpu.dot_dimension_numbers<[1], [0], [0], [1], [0, 0, 1, 1], [], []>} : vector<16x30xf32>, vector<30x100xf32>, vector<16x100xf32> -> vector<16x100xf32>
    %51 = arith.addf %46, %50 : vector<16x100xf32>
    %52 = vector.extract_strided_slice %35 {offsets = [48, 0], sizes = [16, 30], strides = [1, 1]} : vector<224x30xf32> to vector<16x30xf32>
    %c3 = arith.constant 3 : index
    %c0_37 = arith.constant 0 : index
    %c0_38 = arith.constant 0 : index
    %53 = vector.load %arg12[%c3, %c0_37, %c0_38] : memref<14x30x100xf32, #tpu.memory_space<vmem>>, vector<1x30x100xf32>
    %54 = vector.shape_cast %53 : vector<1x30x100xf32> to vector<30x100xf32>
    %cst_39 = arith.constant dense<0.000000e+00> : vector<16x100xf32>
    %55 = tpu.matmul %52, %54, %cst_39 {dimension_numbers = #tpu.dot_dimension_numbers<[1], [0], [0], [1], [0, 0, 1, 1], [], []>} : vector<16x30xf32>, vector<30x100xf32>, vector<16x100xf32> -> vector<16x100xf32>
    %56 = arith.addf %51, %55 : vector<16x100xf32>
    %57 = vector.extract_strided_slice %35 {offsets = [64, 0], sizes = [16, 30], strides = [1, 1]} : vector<224x30xf32> to vector<16x30xf32>
    %c4 = arith.constant 4 : index
    %c0_40 = arith.constant 0 : index
    %c0_41 = arith.constant 0 : index
    %58 = vector.load %arg12[%c4, %c0_40, %c0_41] : memref<14x30x100xf32, #tpu.memory_space<vmem>>, vector<1x30x100xf32>
    %59 = vector.shape_cast %58 : vector<1x30x100xf32> to vector<30x100xf32>
    %cst_42 = arith.constant dense<0.000000e+00> : vector<16x100xf32>
    %60 = tpu.matmul %57, %59, %cst_42 {dimension_numbers = #tpu.dot_dimension_numbers<[1], [0], [0], [1], [0, 0, 1, 1], [], []>} : vector<16x30xf32>, vector<30x100xf32>, vector<16x100xf32> -> vector<16x100xf32>
    %61 = arith.addf %56, %60 : vector<16x100xf32>
    %62 = vector.extract_strided_slice %35 {offsets = [80, 0], sizes = [16, 30], strides = [1, 1]} : vector<224x30xf32> to vector<16x30xf32>
    %c5 = arith.constant 5 : index
    %c0_43 = arith.constant 0 : index
    %c0_44 = arith.constant 0 : index
    %63 = vector.load %arg12[%c5, %c0_43, %c0_44] : memref<14x30x100xf32, #tpu.memory_space<vmem>>, vector<1x30x100xf32>
    %64 = vector.shape_cast %63 : vector<1x30x100xf32> to vector<30x100xf32>
    %cst_45 = arith.constant dense<0.000000e+00> : vector<16x100xf32>
    %65 = tpu.matmul %62, %64, %cst_45 {dimension_numbers = #tpu.dot_dimension_numbers<[1], [0], [0], [1], [0, 0, 1, 1], [], []>} : vector<16x30xf32>, vector<30x100xf32>, vector<16x100xf32> -> vector<16x100xf32>
    %66 = arith.addf %61, %65 : vector<16x100xf32>
    %67 = vector.extract_strided_slice %35 {offsets = [96, 0], sizes = [16, 30], strides = [1, 1]} : vector<224x30xf32> to vector<16x30xf32>
    %c6 = arith.constant 6 : index
    %c0_46 = arith.constant 0 : index
    %c0_47 = arith.constant 0 : index
    %68 = vector.load %arg12[%c6, %c0_46, %c0_47] : memref<14x30x100xf32, #tpu.memory_space<vmem>>, vector<1x30x100xf32>
    %69 = vector.shape_cast %68 : vector<1x30x100xf32> to vector<30x100xf32>
    %cst_48 = arith.constant dense<0.000000e+00> : vector<16x100xf32>
    %70 = tpu.matmul %67, %69, %cst_48 {dimension_numbers = #tpu.dot_dimension_numbers<[1], [0], [0], [1], [0, 0, 1, 1], [], []>} : vector<16x30xf32>, vector<30x100xf32>, vector<16x100xf32> -> vector<16x100xf32>
    %71 = arith.addf %66, %70 : vector<16x100xf32>
    %72 = vector.extract_strided_slice %35 {offsets = [112, 0], sizes = [16, 30], strides = [1, 1]} : vector<224x30xf32> to vector<16x30xf32>
    %c7 = arith.constant 7 : index
    %c0_49 = arith.constant 0 : index
    %c0_50 = arith.constant 0 : index
    %73 = vector.load %arg12[%c7, %c0_49, %c0_50] : memref<14x30x100xf32, #tpu.memory_space<vmem>>, vector<1x30x100xf32>
    %74 = vector.shape_cast %73 : vector<1x30x100xf32> to vector<30x100xf32>
    %cst_51 = arith.constant dense<0.000000e+00> : vector<16x100xf32>
    %75 = tpu.matmul %72, %74, %cst_51 {dimension_numbers = #tpu.dot_dimension_numbers<[1], [0], [0], [1], [0, 0, 1, 1], [], []>} : vector<16x30xf32>, vector<30x100xf32>, vector<16x100xf32> -> vector<16x100xf32>
    %76 = arith.addf %71, %75 : vector<16x100xf32>
    %77 = vector.extract_strided_slice %35 {offsets = [128, 0], sizes = [16, 30], strides = [1, 1]} : vector<224x30xf32> to vector<16x30xf32>
    %c8 = arith.constant 8 : index
    %c0_52 = arith.constant 0 : index
    %c0_53 = arith.constant 0 : index
    %78 = vector.load %arg12[%c8, %c0_52, %c0_53] : memref<14x30x100xf32, #tpu.memory_space<vmem>>, vector<1x30x100xf32>
    %79 = vector.shape_cast %78 : vector<1x30x100xf32> to vector<30x100xf32>
    %cst_54 = arith.constant dense<0.000000e+00> : vector<16x100xf32>
    %80 = tpu.matmul %77, %79, %cst_54 {dimension_numbers = #tpu.dot_dimension_numbers<[1], [0], [0], [1], [0, 0, 1, 1], [], []>} : vector<16x30xf32>, vector<30x100xf32>, vector<16x100xf32> -> vector<16x100xf32>
    %81 = arith.addf %76, %80 : vector<16x100xf32>
    %82 = vector.extract_strided_slice %35 {offsets = [144, 0], sizes = [16, 30], strides = [1, 1]} : vector<224x30xf32> to vector<16x30xf32>
    %c9 = arith.constant 9 : index
    %c0_55 = arith.constant 0 : index
    %c0_56 = arith.constant 0 : index
    %83 = vector.load %arg12[%c9, %c0_55, %c0_56] : memref<14x30x100xf32, #tpu.memory_space<vmem>>, vector<1x30x100xf32>
    %84 = vector.shape_cast %83 : vector<1x30x100xf32> to vector<30x100xf32>
    %cst_57 = arith.constant dense<0.000000e+00> : vector<16x100xf32>
    %85 = tpu.matmul %82, %84, %cst_57 {dimension_numbers = #tpu.dot_dimension_numbers<[1], [0], [0], [1], [0, 0, 1, 1], [], []>} : vector<16x30xf32>, vector<30x100xf32>, vector<16x100xf32> -> vector<16x100xf32>
    %86 = arith.addf %81, %85 : vector<16x100xf32>
    %87 = vector.extract_strided_slice %35 {offsets = [160, 0], sizes = [16, 30], strides = [1, 1]} : vector<224x30xf32> to vector<16x30xf32>
    %c10 = arith.constant 10 : index
    %c0_58 = arith.constant 0 : index
    %c0_59 = arith.constant 0 : index
    %88 = vector.load %arg12[%c10, %c0_58, %c0_59] : memref<14x30x100xf32, #tpu.memory_space<vmem>>, vector<1x30x100xf32>
    %89 = vector.shape_cast %88 : vector<1x30x100xf32> to vector<30x100xf32>
    %cst_60 = arith.constant dense<0.000000e+00> : vector<16x100xf32>
    %90 = tpu.matmul %87, %89, %cst_60 {dimension_numbers = #tpu.dot_dimension_numbers<[1], [0], [0], [1], [0, 0, 1, 1], [], []>} : vector<16x30xf32>, vector<30x100xf32>, vector<16x100xf32> -> vector<16x100xf32>
    %91 = arith.addf %86, %90 : vector<16x100xf32>
    %92 = vector.extract_strided_slice %35 {offsets = [176, 0], sizes = [16, 30], strides = [1, 1]} : vector<224x30xf32> to vector<16x30xf32>
    %c11 = arith.constant 11 : index
    %c0_61 = arith.constant 0 : index
    %c0_62 = arith.constant 0 : index
    %93 = vector.load %arg12[%c11, %c0_61, %c0_62] : memref<14x30x100xf32, #tpu.memory_space<vmem>>, vector<1x30x100xf32>
    %94 = vector.shape_cast %93 : vector<1x30x100xf32> to vector<30x100xf32>
    %cst_63 = arith.constant dense<0.000000e+00> : vector<16x100xf32>
    %95 = tpu.matmul %92, %94, %cst_63 {dimension_numbers = #tpu.dot_dimension_numbers<[1], [0], [0], [1], [0, 0, 1, 1], [], []>} : vector<16x30xf32>, vector<30x100xf32>, vector<16x100xf32> -> vector<16x100xf32>
    %96 = arith.addf %91, %95 : vector<16x100xf32>
    %97 = vector.extract_strided_slice %35 {offsets = [192, 0], sizes = [16, 30], strides = [1, 1]} : vector<224x30xf32> to vector<16x30xf32>
    %c12 = arith.constant 12 : index
    %c0_64 = arith.constant 0 : index
    %c0_65 = arith.constant 0 : index
    %98 = vector.load %arg12[%c12, %c0_64, %c0_65] : memref<14x30x100xf32, #tpu.memory_space<vmem>>, vector<1x30x100xf32>
    %99 = vector.shape_cast %98 : vector<1x30x100xf32> to vector<30x100xf32>
    %cst_66 = arith.constant dense<0.000000e+00> : vector<16x100xf32>
    %100 = tpu.matmul %97, %99, %cst_66 {dimension_numbers = #tpu.dot_dimension_numbers<[1], [0], [0], [1], [0, 0, 1, 1], [], []>} : vector<16x30xf32>, vector<30x100xf32>, vector<16x100xf32> -> vector<16x100xf32>
    %101 = arith.addf %96, %100 : vector<16x100xf32>
    %102 = vector.extract_strided_slice %35 {offsets = [208, 0], sizes = [16, 30], strides = [1, 1]} : vector<224x30xf32> to vector<16x30xf32>
    %c13 = arith.constant 13 : index
    %c0_67 = arith.constant 0 : index
    %c0_68 = arith.constant 0 : index
    %103 = vector.load %arg12[%c13, %c0_67, %c0_68] : memref<14x30x100xf32, #tpu.memory_space<vmem>>, vector<1x30x100xf32>
    %104 = vector.shape_cast %103 : vector<1x30x100xf32> to vector<30x100xf32>
    %cst_69 = arith.constant dense<0.000000e+00> : vector<16x100xf32>
    %105 = tpu.matmul %102, %104, %cst_69 {dimension_numbers = #tpu.dot_dimension_numbers<[1], [0], [0], [1], [0, 0, 1, 1], [], []>} : vector<16x30xf32>, vector<30x100xf32>, vector<16x100xf32> -> vector<16x100xf32>
    %106 = arith.addf %101, %105 : vector<16x100xf32>
    %c0_70 = arith.constant 0 : index
    %c0_71 = arith.constant 0 : index
    %107 = vector.load %arg13[%c0_70, %c0_71] : memref<1x100xf32, #tpu.memory_space<vmem>>, vector<1x100xf32>
    %108 = vector.broadcast %107 : vector<1x100xf32> to vector<16x100xf32>
    %109 = arith.addf %106, %108 : vector<16x100xf32>
    %110 = math.tanh %109 : vector<16x100xf32>
    %c0_72 = arith.constant 0 : index
    %c0_73 = arith.constant 0 : index
    %111 = vector.load %arg14[%c0_72, %c0_73] : memref<1x100xf32, #tpu.memory_space<vmem>>, vector<1x100xf32>
    %cst_74 = arith.constant dense<0.000000e+00> : vector<1x16xf32>
    %112 = tpu.matmul %111, %110, %cst_74 {dimension_numbers = #tpu.dot_dimension_numbers<[1], [1], [0], [0], [0, 0, 1, 0], [], []>} : vector<1x100xf32>, vector<16x100xf32>, vector<1x16xf32> -> vector<1x16xf32>
    %c0_75 = arith.constant 0 : index
    %c0_76 = arith.constant 0 : index
    %113 = vector.load %arg15[%c0_75, %c0_76] : memref<1x1xf32, #tpu.memory_space<vmem>>, vector<1x1xf32>
    %114 = vector.broadcast %113 : vector<1x1xf32> to vector<1x16xf32>
    %115 = arith.addf %112, %114 : vector<1x16xf32>
    %c0_77 = arith.constant 0 : index
    %c0_78 = arith.constant 0 : index
    %c0_79 = arith.constant 0 : index
    %116 = vector.load %arg16[%c0_77, %c0_78, %c0_79] : memref<1x1x16xf32, #tpu.memory_space<vmem>>, vector<1x1x16xf32>
    %117 = vector.shape_cast %116 : vector<1x1x16xf32> to vector<1x16xf32>
    %118 = vector.shape_cast %115 : vector<1x16xf32> to vector<1x1x16xf32>
    tpu.vector_store %arg16[%c0_77, %c0_78, %c0_79], %118 {strides = array<i32>} : memref<1x1x16xf32, #tpu.memory_space<vmem>>, vector<1x1x16xf32>,
    return
  }
  func.func @transform_0(%arg0: i32) -> (i32, i32, i32) {
    %c0_i32 = arith.constant 0 : i32
    %c0_i32_0 = arith.constant 0 : i32
    %c0_i32_1 = arith.constant 0 : i32
    return %arg0, %c0_i32, %c0_i32_0 : i32, i32, i32
  }
  func.func @transform_1(%arg0: i32) -> (i32, i32) {
    %c0_i32 = arith.constant 0 : i32
    %c0_i32_0 = arith.constant 0 : i32
    %c0_i32_1 = arith.constant 0 : i32
    return %c0_i32, %c0_i32_0 : i32, i32
  }
  func.func @transform_2(%arg0: i32) -> (i32, i32) {
    %c0_i32 = arith.constant 0 : i32
    %c0_i32_0 = arith.constant 0 : i32
    %c0_i32_1 = arith.constant 0 : i32
    return %c0_i32, %c0_i32_0 : i32, i32
  }
  func.func @transform_3(%arg0: i32) -> (i32, i32) {
    %c0_i32 = arith.constant 0 : i32
    %c0_i32_0 = arith.constant 0 : i32
    %c0_i32_1 = arith.constant 0 : i32
    return %c0_i32, %c0_i32_0 : i32, i32
  }
  func.func @transform_4(%arg0: i32) -> (i32, i32) {
    %c0_i32 = arith.constant 0 : i32
    %c0_i32_0 = arith.constant 0 : i32
    %c0_i32_1 = arith.constant 0 : i32
    return %c0_i32, %c0_i32_0 : i32, i32
  }
  func.func @transform_5(%arg0: i32) -> (i32, i32) {
    %c0_i32 = arith.constant 0 : i32
    %c0_i32_0 = arith.constant 0 : i32
    %c0_i32_1 = arith.constant 0 : i32
    return %c0_i32, %c0_i32_0 : i32, i32
  }
  func.func @transform_6(%arg0: i32) -> (i32, i32) {
    %c0_i32 = arith.constant 0 : i32
    %c0_i32_0 = arith.constant 0 : i32
    %c0_i32_1 = arith.constant 0 : i32
    return %c0_i32, %c0_i32_0 : i32, i32
  }
  func.func @transform_7(%arg0: i32) -> (i32, i32) {
    %c0_i32 = arith.constant 0 : i32
    %c0_i32_0 = arith.constant 0 : i32
    %c0_i32_1 = arith.constant 0 : i32
    return %c0_i32, %c0_i32_0 : i32, i32
  }
  func.func @transform_8(%arg0: i32) -> (i32, i32) {
    %c0_i32 = arith.constant 0 : i32
    %c0_i32_0 = arith.constant 0 : i32
    %c0_i32_1 = arith.constant 0 : i32
    return %c0_i32, %c0_i32_0 : i32, i32
  }
  func.func @transform_9(%arg0: i32) -> (i32, i32) {
    %c0_i32 = arith.constant 0 : i32
    %c0_i32_0 = arith.constant 0 : i32
    %c0_i32_1 = arith.constant 0 : i32
    return %c0_i32, %c0_i32_0 : i32, i32
  }
  func.func @transform_10(%arg0: i32) -> (i32, i32) {
    %c0_i32 = arith.constant 0 : i32
    %c0_i32_0 = arith.constant 0 : i32
    %c0_i32_1 = arith.constant 0 : i32
    return %c0_i32, %c0_i32_0 : i32, i32
  }
  func.func @transform_11(%arg0: i32) -> (i32, i32, i32) {
    %c0_i32 = arith.constant 0 : i32
    %c0_i32_0 = arith.constant 0 : i32
    %c0_i32_1 = arith.constant 0 : i32
    %c0_i32_2 = arith.constant 0 : i32
    return %c0_i32, %c0_i32_0, %c0_i32_1 : i32, i32, i32
  }
  func.func @transform_12(%arg0: i32) -> (i32, i32) {
    %c0_i32 = arith.constant 0 : i32
    %c0_i32_0 = arith.constant 0 : i32
    %c0_i32_1 = arith.constant 0 : i32
    return %c0_i32, %c0_i32_0 : i32, i32
  }
  func.func @transform_13(%arg0: i32) -> (i32, i32) {
    %c0_i32 = arith.constant 0 : i32
    %c0_i32_0 = arith.constant 0 : i32
    %c0_i32_1 = arith.constant 0 : i32
    return %c0_i32, %c0_i32_0 : i32, i32
  }
  func.func @transform_14(%arg0: i32) -> (i32, i32) {
    %c0_i32 = arith.constant 0 : i32
    %c0_i32_0 = arith.constant 0 : i32
    %c0_i32_1 = arith.constant 0 : i32
    return %c0_i32, %c0_i32_0 : i32, i32
  }
  func.func @transform_15(%arg0: i32) -> (i32, i32, i32) {
    %c0_i32 = arith.constant 0 : i32
    %c0_i32_0 = arith.constant 0 : i32
    %c0_i32_1 = arith.constant 0 : i32
    return %arg0, %c0_i32, %c0_i32_0 : i32, i32, i32
  }
}

</mosaic_0001>

<llo_original>
// kernel: tile.28
$region0: #{tile.28}
  #allocation0 [shape = 's32[1]{0}', space=sflag, size = 0x4, scoped, tag = 'scoped memory for tile.28']
  %s0 = inlined_call_operand.vmem [shape: f32[10], index: 0, kind: input, shape index: {}]
  %s1 = inlined_call_operand.vmem [shape: f32[30,10], index: 1, kind: output, shape index: {}]
  // Predicated region
  $region2: #{tile.28} parent=0 // pred_check
    _
  $region3: #{tile.28} parent=0 // pred_check_branch
    %3 = sbr.rel (0) target = $region5
  $region4: #{tile.28} parent=0 // pred_region
    _
  $region5: #{tile.28} parent=0 // pred_fallthru
    _
  %v4 = vld [vmem:[%s0] ss:$0 sm:$0xff]
  %5 = vst [vmem:[%s1] sm:$0xff] %v4
  %s6 = scalar_lea.vmem %s1, 8
  %7 = vst [vmem:[%s6] sm:$0xff] %v4
  %s8 = scalar_lea.vmem %s1, 16
  %9 = vst [vmem:[%s8] sm:$0xff] %v4
  %s10 = scalar_lea.vmem %s1, 24
  %11 = vst [vmem:[%s10] sm:$0xff] %v4

// kernel: tile.29
$region0: #{tile.29}
  %s0 = inlined_call_operand.vmem [shape: f32[30,10], index: 0, kind: input, shape index: {}]
  %s1 = inlined_call_operand.vmem [shape: f32[1,300], index: 1, kind: output, shape index: {}]
  $region1: #{tile.29} parent=0
    #allocation0 [shape = 'u8[12288]{0}', space=vmem, size = 0x3000, scoped, tag = 'scoped mem for output reshape']
    %v2 = vld [vmem:[%s0] sm:$0x1]
    %vm3 = vcmask 80896
    %4 = vst.msk [vmem:[#allocation0] sm:$0x1] %vm3, %v2
    %s5 = scalar_lea.vmem %s0, 25
    %v6 = vld [vmem:[%s5] sm:$0x1]
    %s7 = scalar_lea.vmem %s0, 25
    %v8 = vld [vmem:[%s7] sm:$0x1]
    %vm9 = vcmask 48128
    %v10 = vsel %vm9, %v8, %v6
    %11 = vrot.lane.b32.xlu0 %v10, 122
    %v12 = vpop.permute.xlu0 %11
    %vm13 = vcmask 31744
    %s14 = scalar_lea.vmem [#allocation0], 16
    %15 = vst.msk [vmem:[%s14] sm:$0x1] %vm13, %v12
    %vm16 = vcmask 1048528
    %s17 = scalar_lea.vmem [#allocation0], 8
    %18 = vst.msk [vmem:[%s17] sm:$0x1] %vm16, %v12
    %s19 = scalar_lea.vmem %s0, 12
    %v20 = vld [vmem:[%s19] sm:$0x1]
    %s21 = scalar_lea.vmem %s0, 12
    %v22 = vld [vmem:[%s21] sm:$0x1]
    %vm23 = vcmask 64512
    %v24 = vsel %vm23, %v22, %v20
    %25 = vrot.lane.b32.xlu0 %v24, 120
    %v26 = vpop.permute.xlu0 %25
    %vm27 = vcmask 15360
    %s28 = scalar_lea.vmem [#allocation0], 8
    %29 = vst.msk [vmem:[%s28] sm:$0x1] %vm27, %v26
    %vm30 = vcmask 1048512
    %31 = vst.msk [vmem:[#allocation0] sm:$0x1] %vm30, %v26
    %s32 = scalar_lea.vmem %s0, 24
    %v33 = vld [vmem:[%s32] sm:$0x1]
    %34 = vrot.lane.b32.xlu0 %v33, 112
    %v35 = vpop.permute.xlu0 %34
    %vm36 = vcmask 999296
    %s37 = scalar_lea.vmem [#allocation0], 8
    %38 = vst.msk [vmem:[%s37] sm:$0x1] %vm36, %v35
    %s39 = scalar_lea.vmem %s0, 11
    %v40 = vld [vmem:[%s39] sm:$0x1]
    %41 = vrot.lane.b32.xlu0 %v40, 110
    %v42 = vpop.permute.xlu0 %41
    %vm43 = vcmask 982896
    %44 = vst.msk [vmem:[#allocation0] sm:$0x1] %vm43, %v42
    %s45 = scalar_lea.vmem %s0, 23
    %v46 = vld [vmem:[%s45] sm:$0x1]
    %47 = vrot.lane.b32.xlu0 %v46, 102
    %v48 = vpop.permute.xlu0 %47
    %vm49 = vcmask 917296
    %s50 = scalar_lea.vmem [#allocation0], 8
    %51 = vst.msk [vmem:[%s50] sm:$0x1] %vm49, %v48
    %s52 = scalar_lea.vmem %s0, 10
    %v53 = vld [vmem:[%s52] sm:$0x1]
    %54 = vrot.lane.b32.xlu0 %v53, 100
    %v55 = vpop.permute.xlu0 %54
    %vm56 = vcmask 900896
    %57 = vst.msk [vmem:[#allocation0] sm:$0x1] %vm56, %v55
    %s58 = scalar_lea.vmem %s0, 22
    %v59 = vld [vmem:[%s58] sm:$0x1]
    %60 = vrot.lane.b32.xlu0 %v59, 92
    %v61 = vpop.permute.xlu0 %60
    %vm62 = vcmask 835296
    %s63 = scalar_lea.vmem [#allocation0], 8
    %64 = vst.msk [vmem:[%s63] sm:$0x1] %vm62, %v61
    %s65 = scalar_lea.vmem %s0, 9
    %v66 = vld [vmem:[%s65] sm:$0x1]
    %67 = vrot.lane.b32.xlu0 %v66, 90
    %v68 = vpop.permute.xlu0 %67
    %vm69 = vcmask 818896
    %70 = vst.msk [vmem:[#allocation0] sm:$0x1] %vm69, %v68
    %s71 = scalar_lea.vmem %s0, 21
    %v72 = vld [vmem:[%s71] sm:$0x1]
    %73 = vrot.lane.b32.xlu0 %v72, 82
    %v74 = vpop.permute.xlu0 %73
    %vm75 = vcmask 753296
    %s76 = scalar_lea.vmem [#allocation0], 8
    %77 = vst.msk [vmem:[%s76] sm:$0x1] %vm75, %v74
    %s78 = scalar_lea.vmem %s0, 8
    %v79 = vld [vmem:[%s78] sm:$0x1]
    %80 = vrot.lane.b32.xlu0 %v79, 80
    %v81 = vpop.permute.xlu0 %80
    %vm82 = vcmask 736896
    %83 = vst.msk [vmem:[#allocation0] sm:$0x1] %vm82, %v81
    %s84 = scalar_lea.vmem %s0, 20
    %v85 = vld [vmem:[%s84] sm:$0x1]
    %86 = vrot.lane.b32.xlu0 %v85, 72
    %v87 = vpop.permute.xlu0 %86
    %vm88 = vcmask 671296
    %s89 = scalar_lea.vmem [#allocation0], 8
    %90 = vst.msk [vmem:[%s89] sm:$0x1] %vm88, %v87
    %s91 = scalar_lea.vmem %s0, 7
    %v92 = vld [vmem:[%s91] sm:$0x1]
    %93 = vrot.lane.b32.xlu0 %v92, 70
    %v94 = vpop.permute.xlu0 %93
    %vm95 = vcmask 654896
    %96 = vst.msk [vmem:[#allocation0] sm:$0x1] %vm95, %v94
    %s97 = scalar_lea.vmem %s0, 19
    %v98 = vld [vmem:[%s97] sm:$0x1]
    %99 = vrot.lane.b32.xlu0 %v98, 62
    %v100 = vpop.permute.xlu0 %99
    %vm101 = vcmask 589296
    %s102 = scalar_lea.vmem [#allocation0], 8
    %103 = vst.msk [vmem:[%s102] sm:$0x1] %vm101, %v100
    %s104 = scalar_lea.vmem %s0, 6
    %v105 = vld [vmem:[%s104] sm:$0x1]
    %106 = vrot.lane.b32.xlu0 %v105, 60
    %v107 = vpop.permute.xlu0 %106
    %vm108 = vcmask 572896
    %109 = vst.msk [vmem:[#allocation0] sm:$0x1] %vm108, %v107
    %s110 = scalar_lea.vmem %s0, 18
    %v111 = vld [vmem:[%s110] sm:$0x1]
    %112 = vrot.lane.b32.xlu0 %v111, 52
    %v113 = vpop.permute.xlu0 %112
    %vm114 = vcmask 507296
    %s115 = scalar_lea.vmem [#allocation0], 8
    %116 = vst.msk [vmem:[%s115] sm:$0x1] %vm114, %v113
    %s117 = scalar_lea.vmem %s0, 5
    %v118 = vld [vmem:[%s117] sm:$0x1]
    %119 = vrot.lane.b32.xlu0 %v118, 50
    %v120 = vpop.permute.xlu0 %119
    %vm121 = vcmask 490896
    %122 = vst.msk [vmem:[#allocation0] sm:$0x1] %vm121, %v120
    %s123 = scalar_lea.vmem %s0, 17
    %v124 = vld [vmem:[%s123] sm:$0x1]
    %125 = vrot.lane.b32.xlu0 %v124, 42
    %v126 = vpop.permute.xlu0 %125
    %vm127 = vcmask 425296
    %s128 = scalar_lea.vmem [#allocation0], 8
    %129 = vst.msk [vmem:[%s128] sm:$0x1] %vm127, %v126
    %s130 = scalar_lea.vmem %s0, 4
    %v131 = vld [vmem:[%s130] sm:$0x1]
    %132 = vrot.lane.b32.xlu0 %v131, 40
    %v133 = vpop.permute.xlu0 %132
    %vm134 = vcmask 408896
    %135 = vst.msk [vmem:[#allocation0] sm:$0x1] %vm134, %v133
    %s136 = scalar_lea.vmem %s0, 29
    %v137 = vld [vmem:[%s136] sm:$0x1]
    %138 = vrot.lane.b32.xlu0 %v137, 34
    %v139 = vpop.permute.xlu0 %138
    %vm140 = vcmask 359696
    %s141 = scalar_lea.vmem [#allocation0], 16
    %142 = vst.msk [vmem:[%s141] sm:$0x1] %vm140, %v139
    %s143 = scalar_lea.vmem %s0, 16
    %v144 = vld [vmem:[%s143] sm:$0x1]
    %145 = vrot.lane.b32.xlu0 %v144, 32
    %v146 = vpop.permute.xlu0 %145
    %vm147 = vcmask 343296
    %s148 = scalar_lea.vmem [#allocation0], 8
    %149 = vst.msk [vmem:[%s148] sm:$0x1] %vm147, %v146
    %s150 = scalar_lea.vmem %s0, 3
    %v151 = vld [vmem:[%s150] sm:$0x1]
    %152 = vrot.lane.b32.xlu0 %v151, 30
    %v153 = vpop.permute.xlu0 %152
    %vm154 = vcmask 326896
    %155 = vst.msk [vmem:[#allocation0] sm:$0x1] %vm154, %v153
    %s156 = scalar_lea.vmem %s0, 28
    %v157 = vld [vmem:[%s156] sm:$0x1]
    %158 = vrot.lane.b32.xlu0 %v157, 24
    %v159 = vpop.permute.xlu0 %158
    %vm160 = vcmask 277696
    %s161 = scalar_lea.vmem [#allocation0], 16
    %162 = vst.msk [vmem:[%s161] sm:$0x1] %vm160, %v159
    %s163 = scalar_lea.vmem %s0, 15
    %v164 = vld [vmem:[%s163] sm:$0x1]
    %165 = vrot.lane.b32.xlu0 %v164, 22
    %v166 = vpop.permute.xlu0 %165
    %vm167 = vcmask 261296
    %s168 = scalar_lea.vmem [#allocation0], 8
    %169 = vst.msk [vmem:[%s168] sm:$0x1] %vm167, %v166
    %s170 = scalar_lea.vmem %s0, 2
    %v171 = vld [vmem:[%s170] sm:$0x1]
    %172 = vrot.lane.b32.xlu0 %v171, 20
    %v173 = vpop.permute.xlu0 %172
    %vm174 = vcmask 244896
    %175 = vst.msk [vmem:[#allocation0] sm:$0x1] %vm174, %v173
    %s176 = scalar_lea.vmem %s0, 27
    %v177 = vld [vmem:[%s176] sm:$0x1]
    %178 = vrot.lane.b32.xlu0 %v177, 14
    %v179 = vpop.permute.xlu0 %178
    %vm180 = vcmask 195696
    %s181 = scalar_lea.vmem [#allocation0], 16
    %182 = vst.msk [vmem:[%s181] sm:$0x1] %vm180, %v179
    %s183 = scalar_lea.vmem %s0, 14
    %v184 = vld [vmem:[%s183] sm:$0x1]
    %185 = vrot.lane.b32.xlu0 %v184, 12
    %v186 = vpop.permute.xlu0 %185
    %vm187 = vcmask 179296
    %s188 = scalar_lea.vmem [#allocation0], 8
    %189 = vst.msk [vmem:[%s188] sm:$0x1] %vm187, %v186
    %s190 = scalar_lea.vmem %s0, 1
    %v191 = vld [vmem:[%s190] sm:$0x1]
    %192 = vrot.lane.b32.xlu0 %v191, 10
    %v193 = vpop.permute.xlu0 %192
    %vm194 = vcmask 162896
    %195 = vst.msk [vmem:[#allocation0] sm:$0x1] %vm194, %v193
    %s196 = scalar_lea.vmem %s0, 26
    %v197 = vld [vmem:[%s196] sm:$0x1]
    %198 = vrot.lane.b32.xlu0 %v197, 4
    %v199 = vpop.permute.xlu0 %198
    %vm200 = vcmask 113696
    %s201 = scalar_lea.vmem [#allocation0], 16
    %202 = vst.msk [vmem:[%s201] sm:$0x1] %vm200, %v199
    %s203 = scalar_lea.vmem %s0, 13
    %v204 = vld [vmem:[%s203] sm:$0x1]
    %205 = vrot.lane.b32.xlu0 %v204, 2
    %v206 = vpop.permute.xlu0 %205
    %vm207 = vcmask 97296
    %s208 = scalar_lea.vmem [#allocation0], 8
    %209 = vst.msk [vmem:[%s208] sm:$0x1] %vm207, %v206
    %s211 = sshll.u32 1, 1
    %s212 = ssub.s32 %s211, 1
    %v214 = vld [vmem:[#allocation0] sm:%s212]
    %s215 = sshll.u32 1, 1
    %s216 = ssub.s32 %s215, 1
    %217 = vst [vmem:[%s1] sm:%s216] %v214
    %s218 = scalar_lea.vmem [#allocation0], 8
    %v219 = vld [vmem:[%s218] sm:%s212]
    %s220 = sshll.u32 1, 1
    %s221 = ssub.s32 %s220, 1
    %s222 = scalar_lea.vmem %s1, 1
    %223 = vst [vmem:[%s222] sm:%s221] %v219
    %s224 = scalar_lea.vmem [#allocation0], 16
    %v225 = vld [vmem:[%s224] sm:%s212]
    %s226 = sshll.u32 1, 1
    %s227 = ssub.s32 %s226, 1
    %s228 = smul.addr 1, 2
    %s229 = scalar_lea.vmem %s1, %s228
    %230 = vst [vmem:[%s229] sm:%s227] %v225

// kernel: cnn_forward_pallas.1
$region0: #{cnn_forward_pallas.1}
  #allocation0 [shape = 'u32[]', space=smem, size = 0x4, offset = 0x4, fixed_abs, tag = 'smem constant byte address 0x4 - core index']
  #allocation1 [shape = 'u32[144,128]{1,0:T(1,128)}', space=vmem, size = 0x12000, scoped, tag = 'internal scratch']
  #allocation2 [shape = 'f32[1,1]{1,0:T(1,128)S(1)}', space=vmem, size = 0x200, scoped, tag = 'scoped memory for cnn_forward_pallas.1']
  %s0 = inlined_call_operand.vmem [shape: bf16[2,224,30], index: 0, kind: input, shape index: {}]
  %s1 = inlined_call_operand.vmem [shape: bf16[30,300], index: 1, kind: input, shape index: {}]
  %s2 = inlined_call_operand.vmem [shape: f32[1,300], index: 2, kind: input, shape index: {}]
  %s3 = inlined_call_operand.vmem [shape: bf16[300,300], index: 3, kind: input, shape index: {}]
  %s4 = inlined_call_operand.vmem [shape: f32[1,300], index: 4, kind: input, shape index: {}]
  %s5 = inlined_call_operand.vmem [shape: bf16[300,300], index: 5, kind: input, shape index: {}]
  %s6 = inlined_call_operand.vmem [shape: f32[1,300], index: 6, kind: input, shape index: {}]
  %s7 = inlined_call_operand.vmem [shape: bf16[300,300], index: 7, kind: input, shape index: {}]
  %s8 = inlined_call_operand.vmem [shape: f32[1,300], index: 8, kind: input, shape index: {}]
  %s9 = inlined_call_operand.vmem [shape: bf16[300,30], index: 9, kind: input, shape index: {}]
  %s10 = inlined_call_operand.vmem [shape: f32[1,30], index: 10, kind: input, shape index: {}]
  %s11 = inlined_call_operand.vmem [shape: f32[14,30,100], index: 11, kind: input, shape index: {}]
  %s12 = inlined_call_operand.vmem [shape: f32[1,100], index: 12, kind: input, shape index: {}]
  %s13 = inlined_call_operand.vmem [shape: f32[1,100], index: 13, kind: input, shape index: {}]
  %s14 = inlined_call_operand.<no memory space> [shape: f32[1,1], index: 14, kind: input, shape index: {}]
  %s15 = inlined_call_operand.vmem [shape: f32[2,1,16], index: 15, kind: output, shape index: {}]
  %s16 = sld [smem:[#allocation0]]
  $region93: #{cnn_forward_pallas.1} parent=0
    _
  %s18 = ssub.s32 1, %s16
  %s19 = scalar_select 0, %s18, %s16
  %v20 = vstv %s14
  %21 = vst [vmem:[#allocation2] sm:$0x1] %v20
  loop: start=0, step=1, limit=4
  $region2: #{cnn_forward_pallas.1} parent=0 // loop_pre_header
    _
  $region3: #{cnn_forward_pallas.1} parent=0 // loop_header
    %s23 = sphi 0, %s27
    %p24 = scmp.ge.s32.totalorder %s23, 4
    %s33 = sphi 0, %s35
    %s36 = sphi 0, %s33
    %s37 = sphi 0, %s36
    %s53 = sphi 0, %s37
    %s57 = sphi 0, %s57
    %s59 = sphi 0, %s57
    %s60 = sphi 0, %s59
    %s74 = sphi 0, %s60
    %s78 = sphi 0, %s78
    %s80 = sphi 0, %s78
    %s81 = sphi 0, %s80
    %s95 = sphi 0, %s81
    %s99 = sphi 0, %s99
    %s101 = sphi 0, %s99
    %s102 = sphi 0, %s101
    %s116 = sphi 0, %s102
    %s120 = sphi 0, %s120
    %s122 = sphi 0, %s120
    %s123 = sphi 0, %s122
    %s137 = sphi 0, %s123
    %s141 = sphi 0, %s141
    %s143 = sphi 0, %s141
    %s144 = sphi 0, %s143
    %s158 = sphi 0, %s144
    %s162 = sphi 0, %s162
    %s164 = sphi 0, %s162
    %s165 = sphi 0, %s164
    %s179 = sphi 0, %s165
    %s183 = sphi 0, %s183
    %s185 = sphi 0, %s183
    %s186 = sphi 0, %s185
    %s200 = sphi 0, %s186
    %s204 = sphi 0, %s204
    %s206 = sphi 0, %s204
    %s207 = sphi 0, %s206
    %s221 = sphi 0, %s207
    %s225 = sphi 0, %s225
    %s227 = sphi 0, %s225
    %s228 = sphi 0, %s227
    %s242 = sphi 0, %s228
    %s246 = sphi 0, %s246
    %s248 = sphi 0, %s246
    %s249 = sphi 0, %s248
    %s263 = sphi 0, %s249
    %s267 = sphi 0, %s267
    %s269 = sphi 0, %s267
    %s270 = sphi 0, %s269
    %s284 = sphi 0, %s270
    %s288 = sphi 0, %s288
    %s290 = sphi 0, %s288
    %s291 = sphi 0, %s290
    %s305 = sphi 0, %s291
    %s309 = sphi 0, %s309
    %s311 = sphi 0, %s309
    %s312 = sphi 0, %s311
    %s326 = sphi 0, %s312
    %s330 = sphi 0, %s330
    %s332 = sphi 0, %s330
    %s333 = sphi 0, %s332
    %s347 = sphi 0, %s333
    %s353 = sphi 0, %s355
    %s356 = sphi 0, %s353
    %s357 = sphi 0, %s356
    %s373 = sphi 0, %s357
  $region4: #{cnn_forward_pallas.1} parent=0 // loop_header_branch
    %26 = sbr.rel (%p24) target = $region8
  $region5: #{cnn_forward_pallas.1} parent=0 // loop_body
    %s28 = ssub.s32 %s23, 1
    %s29 = ssub.s32 %s23, 2
    %s30 = sadd.s32 %s23, 1
    %s31 = ssub.s32 %s23, %s30
    %p32 = scmp.eq.s32.totalorder %s31, 0
    %s34 = sadd.s32 %s33, 1
    %s35 = scalar_select %p32, %s33, %s34
    %p38 = pneg %p32
    %p39 = scmp.eq.s32.totalorder %s23, 1
    %p40 = por %p38, %p39
    %p41 = scmp.ne.s32.totalorder %s33, %s36
    %p42 = scmp.eq.s32.totalorder %s23, 0
    %p43 = por %p41, %p42
    %p44 = scmp.ne.s32.totalorder %s33, %s36
    %p45 = scmp.eq.s32.totalorder %s28, 1
    %p46 = por %p44, %p45
    %p47 = scmp.ne.s32.totalorder %s36, %s37
    %p48 = scmp.eq.s32.totalorder %s28, 0
    %p49 = por %p47, %p48
    %p50 = scmp.ne.s32.totalorder %s36, %s37
    %p51 = scmp.eq.s32.totalorder %s29, 1
    %p52 = por %p50, %p51
    %p54 = scmp.ne.s32.totalorder %s37, %s53
    %p55 = scmp.eq.s32.totalorder %s29, 0
    %p56 = por %p54, %p55
    %s58 = sadd.s32 %s57, 1
    %p61 = scmp.eq.s32.totalorder %s23, 1
    %p62 = scmp.ne.s32.totalorder %s57, %s59
    %p63 = scmp.eq.s32.totalorder %s23, 0
    %p64 = por %p62, %p63
    %p65 = scmp.ne.s32.totalorder %s57, %s59
    %p66 = scmp.eq.s32.totalorder %s28, 1
    %p67 = por %p65, %p66
    %p68 = scmp.ne.s32.totalorder %s59, %s60
    %p69 = scmp.eq.s32.totalorder %s28, 0
    %p70 = por %p68, %p69
    %p71 = scmp.ne.s32.totalorder %s59, %s60
    %p72 = scmp.eq.s32.totalorder %s29, 1
    %p73 = por %p71, %p72
    %p75 = scmp.ne.s32.totalorder %s60, %s74
    %p76 = scmp.eq.s32.totalorder %s29, 0
    %p77 = por %p75, %p76
    %s79 = sadd.s32 %s78, 1
    %p82 = scmp.eq.s32.totalorder %s23, 1
    %p83 = scmp.ne.s32.totalorder %s78, %s80
    %p84 = scmp.eq.s32.totalorder %s23, 0
    %p85 = por %p83, %p84
    %p86 = scmp.ne.s32.totalorder %s78, %s80
    %p87 = scmp.eq.s32.totalorder %s28, 1
    %p88 = por %p86, %p87
    %p89 = scmp.ne.s32.totalorder %s80, %s81
    %p90 = scmp.eq.s32.totalorder %s28, 0
    %p91 = por %p89, %p90
    %p92 = scmp.ne.s32.totalorder %s80, %s81
    %p93 = scmp.eq.s32.totalorder %s29, 1
    %p94 = por %p92, %p93
    %p96 = scmp.ne.s32.totalorder %s81, %s95
    %p97 = scmp.eq.s32.totalorder %s29, 0
    %p98 = por %p96, %p97
    %s100 = sadd.s32 %s99, 1
    %p103 = scmp.eq.s32.totalorder %s23, 1
    %p104 = scmp.ne.s32.totalorder %s99, %s101
    %p105 = scmp.eq.s32.totalorder %s23, 0
    %p106 = por %p104, %p105
    %p107 = scmp.ne.s32.totalorder %s99, %s101
    %p108 = scmp.eq.s32.totalorder %s28, 1
    %p109 = por %p107, %p108
    %p110 = scmp.ne.s32.totalorder %s101, %s102
    %p111 = scmp.eq.s32.totalorder %s28, 0
    %p112 = por %p110, %p111
    %p113 = scmp.ne.s32.totalorder %s101, %s102
    %p114 = scmp.eq.s32.totalorder %s29, 1
    %p115 = por %p113, %p114
    %p117 = scmp.ne.s32.totalorder %s102, %s116
    %p118 = scmp.eq.s32.totalorder %s29, 0
    %p119 = por %p117, %p118
    %s121 = sadd.s32 %s120, 1
    %p124 = scmp.eq.s32.totalorder %s23, 1
    %p125 = scmp.ne.s32.totalorder %s120, %s122
    %p126 = scmp.eq.s32.totalorder %s23, 0
    %p127 = por %p125, %p126
    %p128 = scmp.ne.s32.totalorder %s120, %s122
    %p129 = scmp.eq.s32.totalorder %s28, 1
    %p130 = por %p128, %p129
    %p131 = scmp.ne.s32.totalorder %s122, %s123
    %p132 = scmp.eq.s32.totalorder %s28, 0
    %p133 = por %p131, %p132
    %p134 = scmp.ne.s32.totalorder %s122, %s123
    %p135 = scmp.eq.s32.totalorder %s29, 1
    %p136 = por %p134, %p135
    %p138 = scmp.ne.s32.totalorder %s123, %s137
    %p139 = scmp.eq.s32.totalorder %s29, 0
    %p140 = por %p138, %p139
    %s142 = sadd.s32 %s141, 1
    %p145 = scmp.eq.s32.totalorder %s23, 1
    %p146 = scmp.ne.s32.totalorder %s141, %s143
    %p147 = scmp.eq.s32.totalorder %s23, 0
    %p148 = por %p146, %p147
    %p149 = scmp.ne.s32.totalorder %s141, %s143
    %p150 = scmp.eq.s32.totalorder %s28, 1
    %p151 = por %p149, %p150
    %p152 = scmp.ne.s32.totalorder %s143, %s144
    %p153 = scmp.eq.s32.totalorder %s28, 0
    %p154 = por %p152, %p153
    %p155 = scmp.ne.s32.totalorder %s143, %s144
    %p156 = scmp.eq.s32.totalorder %s29, 1
    %p157 = por %p155, %p156
    %p159 = scmp.ne.s32.totalorder %s144, %s158
    %p160 = scmp.eq.s32.totalorder %s29, 0
    %p161 = por %p159, %p160
    %s163 = sadd.s32 %s162, 1
    %p166 = scmp.eq.s32.totalorder %s23, 1
    %p167 = scmp.ne.s32.totalorder %s162, %s164
    %p168 = scmp.eq.s32.totalorder %s23, 0
    %p169 = por %p167, %p168
    %p170 = scmp.ne.s32.totalorder %s162, %s164
    %p171 = scmp.eq.s32.totalorder %s28, 1
    %p172 = por %p170, %p171
    %p173 = scmp.ne.s32.totalorder %s164, %s165
    %p174 = scmp.eq.s32.totalorder %s28, 0
    %p175 = por %p173, %p174
    %p176 = scmp.ne.s32.totalorder %s164, %s165
    %p177 = scmp.eq.s32.totalorder %s29, 1
    %p178 = por %p176, %p177
    %p180 = scmp.ne.s32.totalorder %s165, %s179
    %p181 = scmp.eq.s32.totalorder %s29, 0
    %p182 = por %p180, %p181
    %s184 = sadd.s32 %s183, 1
    %p187 = scmp.eq.s32.totalorder %s23, 1
    %p188 = scmp.ne.s32.totalorder %s183, %s185
    %p189 = scmp.eq.s32.totalorder %s23, 0
    %p190 = por %p188, %p189
    %p191 = scmp.ne.s32.totalorder %s183, %s185
    %p192 = scmp.eq.s32.totalorder %s28, 1
    %p193 = por %p191, %p192
    %p194 = scmp.ne.s32.totalorder %s185, %s186
    %p195 = scmp.eq.s32.totalorder %s28, 0
    %p196 = por %p194, %p195
    %p197 = scmp.ne.s32.totalorder %s185, %s186
    %p198 = scmp.eq.s32.totalorder %s29, 1
    %p199 = por %p197, %p198
    %p201 = scmp.ne.s32.totalorder %s186, %s200
    %p202 = scmp.eq.s32.totalorder %s29, 0
    %p203 = por %p201, %p202
    %s205 = sadd.s32 %s204, 1
    %p208 = scmp.eq.s32.totalorder %s23, 1
    %p209 = scmp.ne.s32.totalorder %s204, %s206
    %p210 = scmp.eq.s32.totalorder %s23, 0
    %p211 = por %p209, %p210
    %p212 = scmp.ne.s32.totalorder %s204, %s206
    %p213 = scmp.eq.s32.totalorder %s28, 1
    %p214 = por %p212, %p213
    %p215 = scmp.ne.s32.totalorder %s206, %s207
    %p216 = scmp.eq.s32.totalorder %s28, 0
    %p217 = por %p215, %p216
    %p218 = scmp.ne.s32.totalorder %s206, %s207
    %p219 = scmp.eq.s32.totalorder %s29, 1
    %p220 = por %p218, %p219
    %p222 = scmp.ne.s32.totalorder %s207, %s221
    %p223 = scmp.eq.s32.totalorder %s29, 0
    %p224 = por %p222, %p223
    %s226 = sadd.s32 %s225, 1
    %p229 = scmp.eq.s32.totalorder %s23, 1
    %p230 = scmp.ne.s32.totalorder %s225, %s227
    %p231 = scmp.eq.s32.totalorder %s23, 0
    %p232 = por %p230, %p231
    %p233 = scmp.ne.s32.totalorder %s225, %s227
    %p234 = scmp.eq.s32.totalorder %s28, 1
    %p235 = por %p233, %p234
    %p236 = scmp.ne.s32.totalorder %s227, %s228
    %p237 = scmp.eq.s32.totalorder %s28, 0
    %p238 = por %p236, %p237
    %p239 = scmp.ne.s32.totalorder %s227, %s228
    %p240 = scmp.eq.s32.totalorder %s29, 1
    %p241 = por %p239, %p240
    %p243 = scmp.ne.s32.totalorder %s228, %s242
    %p244 = scmp.eq.s32.totalorder %s29, 0
    %p245 = por %p243, %p244
    %s247 = sadd.s32 %s246, 1
    %p250 = scmp.eq.s32.totalorder %s23, 1
    %p251 = scmp.ne.s32.totalorder %s246, %s248
    %p252 = scmp.eq.s32.totalorder %s23, 0
    %p253 = por %p251, %p252
    %p254 = scmp.ne.s32.totalorder %s246, %s248
    %p255 = scmp.eq.s32.totalorder %s28, 1
    %p256 = por %p254, %p255
    %p257 = scmp.ne.s32.totalorder %s248, %s249
    %p258 = scmp.eq.s32.totalorder %s28, 0
    %p259 = por %p257, %p258
    %p260 = scmp.ne.s32.totalorder %s248, %s249
    %p261 = scmp.eq.s32.totalorder %s29, 1
    %p262 = por %p260, %p261
    %p264 = scmp.ne.s32.totalorder %s249, %s263
    %p265 = scmp.eq.s32.totalorder %s29, 0
    %p266 = por %p264, %p265
    %s268 = sadd.s32 %s267, 1
    %p271 = scmp.eq.s32.totalorder %s23, 1
    %p272 = scmp.ne.s32.totalorder %s267, %s269
    %p273 = scmp.eq.s32.totalorder %s23, 0
    %p274 = por %p272, %p273
    %p275 = scmp.ne.s32.totalorder %s267, %s269
    %p276 = scmp.eq.s32.totalorder %s28, 1
    %p277 = por %p275, %p276
    %p278 = scmp.ne.s32.totalorder %s269, %s270
    %p279 = scmp.eq.s32.totalorder %s28, 0
    %p280 = por %p278, %p279
    %p281 = scmp.ne.s32.totalorder %s269, %s270
    %p282 = scmp.eq.s32.totalorder %s29, 1
    %p283 = por %p281, %p282
    %p285 = scmp.ne.s32.totalorder %s270, %s284
    %p286 = scmp.eq.s32.totalorder %s29, 0
    %p287 = por %p285, %p286
    %s289 = sadd.s32 %s288, 1
    %p292 = scmp.eq.s32.totalorder %s23, 1
    %p293 = scmp.ne.s32.totalorder %s288, %s290
    %p294 = scmp.eq.s32.totalorder %s23, 0
    %p295 = por %p293, %p294
    %p296 = scmp.ne.s32.totalorder %s288, %s290
    %p297 = scmp.eq.s32.totalorder %s28, 1
    %p298 = por %p296, %p297
    %p299 = scmp.ne.s32.totalorder %s290, %s291
    %p300 = scmp.eq.s32.totalorder %s28, 0
    %p301 = por %p299, %p300
    %p302 = scmp.ne.s32.totalorder %s290, %s291
    %p303 = scmp.eq.s32.totalorder %s29, 1
    %p304 = por %p302, %p303
    %p306 = scmp.ne.s32.totalorder %s291, %s305
    %p307 = scmp.eq.s32.totalorder %s29, 0
    %p308 = por %p306, %p307
    %s310 = sadd.s32 %s309, 1
    %p313 = scmp.eq.s32.totalorder %s23, 1
    %p314 = scmp.ne.s32.totalorder %s309, %s311
    %p315 = scmp.eq.s32.totalorder %s23, 0
    %p316 = por %p314, %p315
    %p317 = scmp.ne.s32.totalorder %s309, %s311
    %p318 = scmp.eq.s32.totalorder %s28, 1
    %p319 = por %p317, %p318
    %p320 = scmp.ne.s32.totalorder %s311, %s312
    %p321 = scmp.eq.s32.totalorder %s28, 0
    %p322 = por %p320, %p321
    %p323 = scmp.ne.s32.totalorder %s311, %s312
    %p324 = scmp.eq.s32.totalorder %s29, 1
    %p325 = por %p323, %p324
    %p327 = scmp.ne.s32.totalorder %s312, %s326
    %p328 = scmp.eq.s32.totalorder %s29, 0
    %p329 = por %p327, %p328
    %s331 = sadd.s32 %s330, 1
    %p334 = scmp.eq.s32.totalorder %s23, 1
    %p335 = scmp.ne.s32.totalorder %s330, %s332
    %p336 = scmp.eq.s32.totalorder %s23, 0
    %p337 = por %p335, %p336
    %p338 = scmp.ne.s32.totalorder %s330, %s332
    %p339 = scmp.eq.s32.totalorder %s28, 1
    %p340 = por %p338, %p339
    %p341 = scmp.ne.s32.totalorder %s332, %s333
    %p342 = scmp.eq.s32.totalorder %s28, 0
    %p343 = por %p341, %p342
    %p344 = scmp.ne.s32.totalorder %s332, %s333
    %p345 = scmp.eq.s32.totalorder %s29, 1
    %p346 = por %p344, %p345
    %p348 = scmp.ne.s32.totalorder %s333, %s347
    %p349 = scmp.eq.s32.totalorder %s29, 0
    %p350 = por %p348, %p349
    %s351 = ssub.s32 %s23, %s30
    %p352 = scmp.eq.s32.totalorder %s351, 0
    %s354 = sadd.s32 %s353, 1
    %s355 = scalar_select %p352, %s353, %s354
    %p358 = pneg %p352
    %p359 = scmp.eq.s32.totalorder %s23, 1
    %p360 = por %p358, %p359
    %p361 = scmp.ne.s32.totalorder %s353, %s356
    %p362 = scmp.eq.s32.totalorder %s23, 0
    %p363 = por %p361, %p362
    %p364 = scmp.ne.s32.totalorder %s353, %s356
    %p365 = scmp.eq.s32.totalorder %s28, 1
    %p366 = por %p364, %p365
    %p367 = scmp.ne.s32.totalorder %s356, %s357
    %p368 = scmp.eq.s32.totalorder %s28, 0
    %p369 = por %p367, %p368
    %p370 = scmp.ne.s32.totalorder %s356, %s357
    %p371 = scmp.eq.s32.totalorder %s29, 1
    %p372 = por %p370, %p371
    %p374 = scmp.ne.s32.totalorder %s357, %s373
    %p375 = scmp.eq.s32.totalorder %s29, 0
    %p376 = por %p374, %p375
    %p377 = scmp.le.s32.totalorder 1, %s23
    %p378 = scmp.lt.s32.totalorder %s23, 3
    %p379 = pnand %p377, %p378
    %p380 = pneg %p379
    // Predicated region
    $region9: #{cnn_forward_pallas.1} parent=5 // pred_check
      _
    $region10: #{cnn_forward_pallas.1} parent=5 // pred_check_branch
      %382 = sbr.rel (%p379) target = $region12
    $region11: #{cnn_forward_pallas.1} parent=5 // pred_region
      %s383 = ssub.s32 %s23, 1
      // Predicated region
      $region13: #{cnn_forward_pallas.1} parent=11 // pred_check
        %p384 = pneg %p70
      $region14: #{cnn_forward_pallas.1} parent=11 // pred_check_branch
        %386 = sbr.rel (%p384) target = $region16
      $region15: #{cnn_forward_pallas.1} parent=11 // pred_region
        _
      $region16: #{cnn_forward_pallas.1} parent=11 // pred_fallthru
        _
      // Predicated region
      $region17: #{cnn_forward_pallas.1} parent=11 // pred_check
        %p387 = pneg %p91
      $region18: #{cnn_forward_pallas.1} parent=11 // pred_check_branch
        %389 = sbr.rel (%p387) target = $region20
      $region19: #{cnn_forward_pallas.1} parent=11 // pred_region
        _
      $region20: #{cnn_forward_pallas.1} parent=11 // pred_fallthru
        _
      // Predicated region
      $region21: #{cnn_forward_pallas.1} parent=11 // pred_check
        %p390 = pneg %p112
      $region22: #{cnn_forward_pallas.1} parent=11 // pred_check_branch
        %392 = sbr.rel (%p390) target = $region24
      $region23: #{cnn_forward_pallas.1} parent=11 // pred_region
        _
      $region24: #{cnn_forward_pallas.1} parent=11 // pred_fallthru
        _
      // Predicated region
      $region25: #{cnn_forward_pallas.1} parent=11 // pred_check
        %p393 = pneg %p133
      $region26: #{cnn_forward_pallas.1} parent=11 // pred_check_branch
        %395 = sbr.rel (%p393) target = $region28
      $region27: #{cnn_forward_pallas.1} parent=11 // pred_region
        _
      $region28: #{cnn_forward_pallas.1} parent=11 // pred_fallthru
        _
      // Predicated region
      $region29: #{cnn_forward_pallas.1} parent=11 // pred_check
        %p396 = pneg %p154
      $region30: #{cnn_forward_pallas.1} parent=11 // pred_check_branch
        %398 = sbr.rel (%p396) target = $region32
      $region31: #{cnn_forward_pallas.1} parent=11 // pred_region
        _
      $region32: #{cnn_forward_pallas.1} parent=11 // pred_fallthru
        _
      // Predicated region
      $region33: #{cnn_forward_pallas.1} parent=11 // pred_check
        %p399 = pneg %p175
      $region34: #{cnn_forward_pallas.1} parent=11 // pred_check_branch
        %401 = sbr.rel (%p399) target = $region36
      $region35: #{cnn_forward_pallas.1} parent=11 // pred_region
        _
      $region36: #{cnn_forward_pallas.1} parent=11 // pred_fallthru
        _
      // Predicated region
      $region37: #{cnn_forward_pallas.1} parent=11 // pred_check
        %p402 = pneg %p196
      $region38: #{cnn_forward_pallas.1} parent=11 // pred_check_branch
        %404 = sbr.rel (%p402) target = $region40
      $region39: #{cnn_forward_pallas.1} parent=11 // pred_region
        _
      $region40: #{cnn_forward_pallas.1} parent=11 // pred_fallthru
        _
      // Predicated region
      $region41: #{cnn_forward_pallas.1} parent=11 // pred_check
        %p405 = pneg %p217
      $region42: #{cnn_forward_pallas.1} parent=11 // pred_check_branch
        %407 = sbr.rel (%p405) target = $region44
      $region43: #{cnn_forward_pallas.1} parent=11 // pred_region
        _
      $region44: #{cnn_forward_pallas.1} parent=11 // pred_fallthru
        _
      // Predicated region
      $region45: #{cnn_forward_pallas.1} parent=11 // pred_check
        %p408 = pneg %p238
      $region46: #{cnn_forward_pallas.1} parent=11 // pred_check_branch
        %410 = sbr.rel (%p408) target = $region48
      $region47: #{cnn_forward_pallas.1} parent=11 // pred_region
        _
      $region48: #{cnn_forward_pallas.1} parent=11 // pred_fallthru
        _
      // Predicated region
      $region49: #{cnn_forward_pallas.1} parent=11 // pred_check
        %p411 = pneg %p259
      $region50: #{cnn_forward_pallas.1} parent=11 // pred_check_branch
        %413 = sbr.rel (%p411) target = $region52
      $region51: #{cnn_forward_pallas.1} parent=11 // pred_region
        _
      $region52: #{cnn_forward_pallas.1} parent=11 // pred_fallthru
        _
      // Predicated region
      $region53: #{cnn_forward_pallas.1} parent=11 // pred_check
        %p414 = pneg %p280
      $region54: #{cnn_forward_pallas.1} parent=11 // pred_check_branch
        %416 = sbr.rel (%p414) target = $region56
      $region55: #{cnn_forward_pallas.1} parent=11 // pred_region
        _
      $region56: #{cnn_forward_pallas.1} parent=11 // pred_fallthru
        _
      // Predicated region
      $region57: #{cnn_forward_pallas.1} parent=11 // pred_check
        %p417 = pneg %p301
      $region58: #{cnn_forward_pallas.1} parent=11 // pred_check_branch
        %419 = sbr.rel (%p417) target = $region60
      $region59: #{cnn_forward_pallas.1} parent=11 // pred_region
        _
      $region60: #{cnn_forward_pallas.1} parent=11 // pred_fallthru
        _
      // Predicated region
      $region61: #{cnn_forward_pallas.1} parent=11 // pred_check
        %p420 = pneg %p322
      $region62: #{cnn_forward_pallas.1} parent=11 // pred_check_branch
        %422 = sbr.rel (%p420) target = $region64
      $region63: #{cnn_forward_pallas.1} parent=11 // pred_region
        _
      $region64: #{cnn_forward_pallas.1} parent=11 // pred_fallthru
        _
      // Predicated region
      $region65: #{cnn_forward_pallas.1} parent=11 // pred_check
        %p423 = pneg %p343
      $region66: #{cnn_forward_pallas.1} parent=11 // pred_check_branch
        %425 = sbr.rel (%p423) target = $region68
      $region67: #{cnn_forward_pallas.1} parent=11 // pred_region
        _
      $region68: #{cnn_forward_pallas.1} parent=11 // pred_fallthru
        _
    $region12: #{cnn_forward_pallas.1} parent=5 // pred_fallthru
      _
    %p426 = scmp.lt.s32.totalorder %s23, 2
    // Predicated region
    $region69: #{cnn_forward_pallas.1} parent=5 // pred_check
      %p427 = pneg %p426
    $region70: #{cnn_forward_pallas.1} parent=5 // pred_check_branch
      %429 = sbr.rel (%p427) target = $region72
    $region71: #{cnn_forward_pallas.1} parent=5 // pred_region
      // Predicated region
      $region73: #{cnn_forward_pallas.1} parent=71 // pred_check
        %p430 = pneg %p43
      $region74: #{cnn_forward_pallas.1} parent=71 // pred_check_branch
        %432 = sbr.rel (%p430) target = $region76
      $region75: #{cnn_forward_pallas.1} parent=71 // pred_region
        %p433 = scmp.lt.s32.totalorder %s23, 1
        %s434 = scalar_select %p433, %s23, 1
        %s435 = smul.addr %s434, 28
        %s436 = smul.addr %s435, 4
        %s437 = scalar_lea.vmem %s0, %s436
      $region76: #{cnn_forward_pallas.1} parent=71 // pred_fallthru
        _
    $region72: #{cnn_forward_pallas.1} parent=5 // pred_fallthru
      _
    %p438 = scmp.le.s32.totalorder 1, %s23
    %p439 = scmp.lt.s32.totalorder %s23, 3
    %p440 = pnand %p438, %p439
    %p441 = pneg %p440
    // Predicated region
    $region77: #{cnn_forward_pallas.1} parent=5 // pred_check
      _
    $region78: #{cnn_forward_pallas.1} parent=5 // pred_check_branch
      %443 = sbr.rel (%p440) target = $region80
    $region79: #{cnn_forward_pallas.1} parent=5 // pred_region
      %s444 = ssub.s32 %s23, 1
      %p445 = scmp.lt.s32.totalorder %s28, 1
      %s446 = scalar_select %p445, %s28, 1
      %s447 = smul.addr %s446, 28
      %s448 = smul.addr %s447, 4
      %s449 = scalar_lea.vmem %s0, %s448
      %p450 = pneg %p49
      %p451 = pneg %p46
      %p452 = pneg %p70
      %p453 = pneg %p67
      %p454 = pneg %p91
      %p455 = pneg %p88
      %p456 = pneg %p112
      %p457 = pneg %p109
      %p458 = pneg %p133
      %p459 = pneg %p130
      %p460 = pneg %p154
      %p461 = pneg %p151
      %p462 = pneg %p175
      %p463 = pneg %p172
      %p464 = pneg %p196
      %p465 = pneg %p193
      %p466 = pneg %p217
      %p467 = pneg %p214
      %p468 = pneg %p238
      %p469 = pneg %p235
      %p470 = pneg %p259
      %p471 = pneg %p256
      %p472 = pneg %p280
      %p473 = pneg %p277
      %p474 = pneg %p301
      %p475 = pneg %p298
      %p476 = pneg %p322
      %p477 = pneg %p319
      %p478 = pneg %p343
      %p479 = pneg %p340
      %p480 = pneg %p369
      %p481 = pneg %p366
      %p482 = scmp.lt.s32.totalorder %s28, 1
      %s483 = scalar_select %p482, %s28, 1
      %s484 = scalar_lea.vmem %s15, %s483
      %p485 = scmp.lt.s32.totalorder %s28, 1
      %s486 = scalar_select %p485, %s28, 1
      %s487 = smul.addr %s486, 28
      %s488 = smul.addr %s487, 4
      %s489 = scalar_lea.vmem %s0, %s488
      %p490 = scmp.lt.s32.totalorder %s28, 1
      %s491 = scalar_select %p490, %s28, 1
      %s492 = scalar_lea.vmem %s15, %s491
      %v494 = vld [vmem:[%s489] sm:$0xf]
      %v495 = vld [vmem:[%s489 + $0x4] sm:$0xf]
      %v496 = vld [vmem:[%s489 + $0x8] sm:$0xf]
      %v497 = vld [vmem:[%s489 + $0xc] sm:$0xf]
      %v498 = vld [vmem:[%s489 + $0x10] sm:$0xf]
      %v499 = vld [vmem:[%s489 + $0x14] sm:$0xf]
      %v500 = vld [vmem:[%s489 + $0x18] sm:$0xf]
      %v501 = vld [vmem:[%s489 + $0x1c] sm:$0xf]
      %v502 = vld [vmem:[%s489 + $0x20] sm:$0xf]
      %v503 = vld [vmem:[%s489 + $0x24] sm:$0xf]
      %v504 = vld [vmem:[%s489 + $0x28] sm:$0xf]
      %v505 = vld [vmem:[%s489 + $0x2c] sm:$0xf]
      %v506 = vld [vmem:[%s489 + $0x30] sm:$0xf]
      %v507 = vld [vmem:[%s489 + $0x34] sm:$0xf]
      %v508 = vld [vmem:[%s489 + $0x38] sm:$0xf]
      %v509 = vld [vmem:[%s489 + $0x3c] sm:$0xf]
      %v510 = vld [vmem:[%s489 + $0x40] sm:$0xf]
      %v511 = vld [vmem:[%s489 + $0x44] sm:$0xf]
      %v512 = vld [vmem:[%s489 + $0x48] sm:$0xf]
      %v513 = vld [vmem:[%s489 + $0x4c] sm:$0xf]
      %v514 = vld [vmem:[%s489 + $0x50] sm:$0xf]
      %v515 = vld [vmem:[%s489 + $0x54] sm:$0xf]
      %v516 = vld [vmem:[%s489 + $0x58] sm:$0xf]
      %v517 = vld [vmem:[%s489 + $0x5c] sm:$0xf]
      %v518 = vld [vmem:[%s489 + $0x60] sm:$0xf]
      %v519 = vld [vmem:[%s489 + $0x64] sm:$0xf]
      %v520 = vld [vmem:[%s489 + $0x68] sm:$0xf]
      %v521 = vld [vmem:[%s489 + $0x6c] sm:$0xf]
      %v522 = vld [vmem:[%s1] sm:$0xff]
      %v523 = vld [vmem:[%s1 + $0x8] sm:$0xf]
      %v524 = vld [vmem:[%s1 + $0xc] sm:$0xff]
      %v525 = vld [vmem:[%s1 + $0x14] sm:$0xf]
      %v526 = vld [vmem:[%s1 + $0x18] sm:$0xff]
      %v527 = vld [vmem:[%s1 + $0x20] sm:$0xf]
      %v528 = vld [vmem:[%s1 + $0x24] sm:$0x77]
      %v529 = vld [vmem:[%s1 + $0x2c] sm:$0x7]
      %v530 = vld [vmem:[%s2] sm:$0x7]
      %v532 = vlaneseq
      %v533 = vshrl.u32 %v532, 7
      %v534 = vsub.s32 0, %v533
      %v535 = vrot.slane %v530, %v534
      %v536 = vlaneseq
      %v537 = vshrl.u32 %v536, 7
      %v538 = vsub.s32 1, %v537
      %v539 = vrot.slane %v530, %v538
      %v540 = vlaneseq
      %v541 = vshrl.u32 %v540, 7
      %v542 = vsub.s32 2, %v541
      %v543 = vrot.slane %v530, %v542
      %v575 = vunpack.c.l.b16 %v494
      %v576 = vunpack.c.l.b16 %v495
      %v577 = vunpack.c.l.b16 %v496
      %v578 = vunpack.c.l.b16 %v497
      %v579 = vunpack.c.l.b16 %v498
      %v580 = vunpack.c.l.b16 %v499
      %v581 = vunpack.c.l.b16 %v500
      %v582 = vunpack.c.l.b16 %v501
      %v583 = vunpack.c.l.b16 %v502
      %v584 = vunpack.c.l.b16 %v503
      %v585 = vunpack.c.l.b16 %v504
      %v586 = vunpack.c.l.b16 %v505
      %v587 = vunpack.c.l.b16 %v506
      %v588 = vunpack.c.l.b16 %v507
      %v589 = vunpack.c.l.b16 %v508
      %v590 = vunpack.c.l.b16 %v509
      %v591 = vunpack.c.l.b16 %v510
      %v592 = vunpack.c.l.b16 %v511
      %v593 = vunpack.c.l.b16 %v512
      %v594 = vunpack.c.l.b16 %v513
      %v595 = vunpack.c.l.b16 %v514
      %v596 = vunpack.c.l.b16 %v515
      %v597 = vunpack.c.l.b16 %v516
      %v598 = vunpack.c.l.b16 %v517
      %v599 = vunpack.c.l.b16 %v518
      %v600 = vunpack.c.l.b16 %v519
      %v601 = vunpack.c.l.b16 %v520
      %v602 = vunpack.c.l.b16 %v521
      %v603 = vpack.c.b16 %v576, %v575
      %v604 = vpack.c.b16 %v578, %v577
      %v605 = vpack.c.b16 %v580, %v579
      %v606 = vpack.c.b16 %v582, %v581
      %v607 = vpack.c.b16 %v584, %v583
      %v608 = vpack.c.b16 %v586, %v585
      %v609 = vpack.c.b16 %v588, %v587
      %v610 = vpack.c.b16 %v590, %v589
      %v611 = vpack.c.b16 %v592, %v591
      %v612 = vpack.c.b16 %v594, %v593
      %v613 = vpack.c.b16 %v596, %v595
      %v614 = vpack.c.b16 %v598, %v597
      %v615 = vpack.c.b16 %v600, %v599
      %v616 = vpack.c.b16 %v602, %v601
      %v625 = vunpack.c.l.b16 %v522
      %v626 = vunpack.c.h.b16 %v522
      %v627 = vunpack.c.l.b16 %v523
      %v628 = vunpack.c.l.b16 %v524
      %v629 = vunpack.c.h.b16 %v524
      %v630 = vunpack.c.l.b16 %v525
      %v631 = vunpack.c.l.b16 %v526
      %v632 = vunpack.c.h.b16 %v526
      %v633 = vunpack.c.l.b16 %v527
      %v634 = vunpack.c.l.b16 %v528
      %v635 = vunpack.c.h.b16 %v528
      %v636 = vunpack.c.l.b16 %v529
      %v637 = vpack.c.b16 %v628, %v625
      %v638 = vpack.c.b16 %v629, %v626
      %v639 = vpack.c.b16 %v630, %v627
      %v640 = vpack.c.b16 %v634, %v631
      %v641 = vpack.c.b16 %v635, %v632
      %v642 = vpack.c.b16 %v636, %v633
      %vm646 = vcmask 244736
      %v648 = vsel %vm646, %v603, 0
      %v651 = vsel %vm646, %v604, 0
      %v654 = vsel %vm646, %v605, 0
      %v657 = vsel %vm646, %v606, 0
      %v660 = vsel %vm646, %v607, 0
      %v663 = vsel %vm646, %v608, 0
      %v666 = vsel %vm646, %v609, 0
      %v669 = vsel %vm646, %v610, 0
      %v672 = vsel %vm646, %v611, 0
      %v675 = vsel %vm646, %v612, 0
      %v678 = vsel %vm646, %v613, 0
      %v681 = vsel %vm646, %v614, 0
      %v684 = vsel %vm646, %v615, 0
      %v687 = vsel %vm646, %v616, 0
      %vm689 = vcmask 1046528
      %v691 = vsel %vm689, %v640, 0
      %v694 = vsel %vm689, %v641, 0
      %v697 = vsel %vm689, %v642, 0
      %699 = vmatprep.subr.bf16.mxu0 0
      %700 = vmatpush1.bf16.msra.mxu0 0
      %701 = vmatprep.subr.bf16.mxu0 0
      %702 = vmatpush1.bf16.msra.mxu0 0
      %703 = vmatprep.subr.bf16.mxu0 0
      %704 = vmatpush1.bf16.msra.mxu0 0
      %705 = vmatprep.subr.bf16.mxu0 0
      %706 = vmatpush1.bf16.msra.mxu0 0
      %707 = vmatprep.subr.bf16.mxu0 0
      %708 = vmatpush1.bf16.msra.mxu0 0
      %709 = vmatprep.subr.bf16.mxu0 0
      %710 = vmatpush1.bf16.msra.mxu0 0
      %711 = vmatprep.subr.bf16.mxu0 %v694
      %712 = vmatpush1.bf16.msra.mxu0 %v691
      %713 = vmatprep.subr.bf16.mxu0 %v638
      %714 = vmatpush1.bf16.msra.mxu0 %v637
      %715 = vmatprep.subr.bf16.mxu0 0
      %716 = vmatpush2.bf16.msra.mxu0 0
      %717 = vmatprep.subr.bf16.mxu0 0
      %718 = vmatpush2.bf16.msra.mxu0 0
      %719 = vmatprep.subr.bf16.mxu0 0
      %720 = vmatpush2.bf16.msra.mxu0 0
      %721 = vmatprep.subr.bf16.mxu0 0
      %722 = vmatpush2.bf16.msra.mxu0 0
      %723 = vmatprep.subr.bf16.mxu0 0
      %724 = vmatpush2.bf16.msra.mxu0 0
      %725 = vmatprep.subr.bf16.mxu0 0
      %726 = vmatpush2.bf16.msra.mxu0 0
      %727 = vmatprep.subr.bf16.mxu0 0
      %728 = vmatpush2.bf16.msra.mxu0 0
      %729 = vmatprep.subr.bf16.mxu0 0
      %730 = vmatpush2.bf16.msra.mxu0 0
      %731 = vmatprep.mubr.bf16.mxu0 0
      %732 = vmatmul.mubr.bf16.gmra.mxu0 %v648
      %v733 = vpop.f32.mrf.mxu0
      %v734 = vadd.f32 %v535, %v733
      %v735 = vpop.f32.mrf.mxu0
      %v736 = vadd.f32 %v539, %v735
      %v737 = vpop.f32.mrf.mxu0
      %v738 = vadd.f32 %v535, %v737
      %v739 = vpop.f32.mrf.mxu0
      %v740 = vadd.f32 %v539, %v739
      %741 = vmatprep.mubr.bf16.mxu0 0
      %742 = vmatmul.mubr.bf16.gmra.mxu0 %v651
      %v743 = vpop.f32.mrf.mxu0
      %v744 = vadd.f32 %v535, %v743
      %v745 = vpop.f32.mrf.mxu0
      %v746 = vadd.f32 %v539, %v745
      %v747 = vpop.f32.mrf.mxu0
      %v748 = vadd.f32 %v535, %v747
      %v749 = vpop.f32.mrf.mxu0
      %v750 = vadd.f32 %v539, %v749
      %751 = vmatprep.mubr.bf16.mxu0 0
      %752 = vmatmul.mubr.bf16.gmra.mxu0 %v654
      %v753 = vpop.f32.mrf.mxu0
      %v754 = vadd.f32 %v535, %v753
      %v755 = vpop.f32.mrf.mxu0
      %v756 = vadd.f32 %v539, %v755
      %v757 = vpop.f32.mrf.mxu0
      %v758 = vadd.f32 %v535, %v757
      %v759 = vpop.f32.mrf.mxu0
      %v760 = vadd.f32 %v539, %v759
      %761 = vmatprep.mubr.bf16.mxu0 0
      %762 = vmatmul.mubr.bf16.gmra.mxu0 %v657
      %v763 = vpop.f32.mrf.mxu0
      %v764 = vadd.f32 %v535, %v763
      %v765 = vpop.f32.mrf.mxu0
      %v766 = vadd.f32 %v539, %v765
      %v767 = vpop.f32.mrf.mxu0
      %v768 = vadd.f32 %v535, %v767
      %v769 = vpop.f32.mrf.mxu0
      %v770 = vadd.f32 %v539, %v769
      %771 = vmatprep.mubr.bf16.mxu0 0
      %772 = vmatmul.mubr.bf16.gmra.mxu0 %v660
      %v773 = vpop.f32.mrf.mxu0
      %v774 = vadd.f32 %v535, %v773
      %v775 = vpop.f32.mrf.mxu0
      %v776 = vadd.f32 %v539, %v775
      %v777 = vpop.f32.mrf.mxu0
      %v778 = vadd.f32 %v535, %v777
      %v779 = vpop.f32.mrf.mxu0
      %v780 = vadd.f32 %v539, %v779
      %781 = vmatprep.mubr.bf16.mxu0 0
      %782 = vmatmul.mubr.bf16.gmra.mxu0 %v663
      %v783 = vpop.f32.mrf.mxu0
      %v784 = vadd.f32 %v535, %v783
      %v785 = vpop.f32.mrf.mxu0
      %v786 = vadd.f32 %v539, %v785
      %v787 = vpop.f32.mrf.mxu0
      %v788 = vadd.f32 %v535, %v787
      %v789 = vpop.f32.mrf.mxu0
      %v790 = vadd.f32 %v539, %v789
      %791 = vmatprep.mubr.bf16.mxu0 0
      %792 = vmatmul.mubr.bf16.gmra.mxu0 %v666
      %v793 = vpop.f32.mrf.mxu0
      %v794 = vadd.f32 %v535, %v793
      %v795 = vpop.f32.mrf.mxu0
      %v796 = vadd.f32 %v539, %v795
      %v797 = vpop.f32.mrf.mxu0
      %v798 = vadd.f32 %v535, %v797
      %v799 = vpop.f32.mrf.mxu0
      %v800 = vadd.f32 %v539, %v799
      %801 = vmatprep.mubr.bf16.mxu0 0
      %802 = vmatmul.mubr.bf16.gmra.mxu0 %v669
      %v803 = vpop.f32.mrf.mxu0
      %v804 = vadd.f32 %v535, %v803
      %v805 = vpop.f32.mrf.mxu0
      %v806 = vadd.f32 %v539, %v805
      %v807 = vpop.f32.mrf.mxu0
      %v808 = vadd.f32 %v535, %v807
      %v809 = vpop.f32.mrf.mxu0
      %v810 = vadd.f32 %v539, %v809
      %811 = vmatprep.mubr.bf16.mxu0 0
      %812 = vmatmul.mubr.bf16.gmra.mxu0 %v672
      %v813 = vpop.f32.mrf.mxu0
      %v814 = vadd.f32 %v535, %v813
      %v815 = vpop.f32.mrf.mxu0
      %v816 = vadd.f32 %v539, %v815
      %v817 = vpop.f32.mrf.mxu0
      %v818 = vadd.f32 %v535, %v817
      %v819 = vpop.f32.mrf.mxu0
      %v820 = vadd.f32 %v539, %v819
      %821 = vmatprep.mubr.bf16.mxu0 0
      %822 = vmatmul.mubr.bf16.gmra.mxu0 %v675
      %v823 = vpop.f32.mrf.mxu0
      %v824 = vadd.f32 %v535, %v823
      %v825 = vpop.f32.mrf.mxu0
      %v826 = vadd.f32 %v539, %v825
      %v827 = vpop.f32.mrf.mxu0
      %v828 = vadd.f32 %v535, %v827
      %v829 = vpop.f32.mrf.mxu0
      %v830 = vadd.f32 %v539, %v829
      %831 = vmatprep.mubr.bf16.mxu0 0
      %832 = vmatmul.mubr.bf16.gmra.mxu0 %v678
      %v833 = vpop.f32.mrf.mxu0
      %v834 = vadd.f32 %v535, %v833
      %v835 = vpop.f32.mrf.mxu0
      %v836 = vadd.f32 %v539, %v835
      %v837 = vpop.f32.mrf.mxu0
      %v838 = vadd.f32 %v535, %v837
      %v839 = vpop.f32.mrf.mxu0
      %v840 = vadd.f32 %v539, %v839
      %841 = vmatprep.mubr.bf16.mxu0 0
      %842 = vmatmul.mubr.bf16.gmra.mxu0 %v681
      %v843 = vpop.f32.mrf.mxu0
      %v844 = vadd.f32 %v535, %v843
      %v845 = vpop.f32.mrf.mxu0
      %v846 = vadd.f32 %v539, %v845
      %v847 = vpop.f32.mrf.mxu0
      %v848 = vadd.f32 %v535, %v847
      %v849 = vpop.f32.mrf.mxu0
      %v850 = vadd.f32 %v539, %v849
      %851 = vmatprep.mubr.bf16.mxu0 0
      %852 = vmatmul.mubr.bf16.gmra.mxu0 %v684
      %v853 = vpop.f32.mrf.mxu0
      %v854 = vadd.f32 %v535, %v853
      %v855 = vpop.f32.mrf.mxu0
      %v856 = vadd.f32 %v539, %v855
      %v857 = vpop.f32.mrf.mxu0
      %v858 = vadd.f32 %v535, %v857
      %v859 = vpop.f32.mrf.mxu0
      %v860 = vadd.f32 %v539, %v859
      %861 = vmatprep.mubr.bf16.mxu0 0
      %862 = vmatmul.mubr.bf16.gmra.mxu0 %v687
      %v863 = vpop.f32.mrf.mxu0
      %v864 = vadd.f32 %v535, %v863
      %v865 = vpop.f32.mrf.mxu0
      %v866 = vadd.f32 %v539, %v865
      %v867 = vpop.f32.mrf.mxu0
      %v868 = vadd.f32 %v535, %v867
      %v869 = vpop.f32.mrf.mxu0
      %v870 = vadd.f32 %v539, %v869
      %871 = vdwg.mxu0
      %872 = vmatprep.subr.bf16.mxu0 0
      %873 = vmatpush1.bf16.msra.mxu0 0
      %874 = vmatprep.subr.bf16.mxu0 0
      %875 = vmatpush1.bf16.msra.mxu0 0
      %876 = vmatprep.subr.bf16.mxu0 0
      %877 = vmatpush1.bf16.msra.mxu0 0
      %878 = vmatprep.subr.bf16.mxu0 0
      %879 = vmatpush1.bf16.msra.mxu0 0
      %880 = vmatprep.subr.bf16.mxu0 0
      %881 = vmatpush1.bf16.msra.mxu0 0
      %882 = vmatprep.subr.bf16.mxu0 0
      %883 = vmatpush1.bf16.msra.mxu0 0
      %884 = vmatprep.subr.bf16.mxu0 0
      %885 = vmatpush1.bf16.msra.mxu0 %v697
      %886 = vmatprep.subr.bf16.mxu0 0
      %887 = vmatpush1.bf16.msra.mxu0 %v639
      %888 = vmatprep.subr.bf16.mxu0 0
      %889 = vmatpush2.bf16.msra.mxu0 0
      %890 = vmatprep.subr.bf16.mxu0 0
      %891 = vmatpush2.bf16.msra.mxu0 0
      %892 = vmatprep.subr.bf16.mxu0 0
      %893 = vmatpush2.bf16.msra.mxu0 0
      %894 = vmatprep.subr.bf16.mxu0 0
      %895 = vmatpush2.bf16.msra.mxu0 0
      %896 = vmatprep.subr.bf16.mxu0 0
      %897 = vmatpush2.bf16.msra.mxu0 0
      %898 = vmatprep.subr.bf16.mxu0 0
      %899 = vmatpush2.bf16.msra.mxu0 0
      %900 = vmatprep.subr.bf16.mxu0 0
      %901 = vmatpush2.bf16.msra.mxu0 0
      %902 = vmatprep.subr.bf16.mxu0 0
      %903 = vmatpush2.bf16.msra.mxu0 0
      %904 = vmatprep.mubr.bf16.mxu0 0
      %905 = vmatmul.mubr.bf16.gmra.mxu0 %v648
      %v906 = vpop.f32.mrf.mxu0
      %v907 = vadd.f32 %v543, %v906
      %v908 = vpop.f32.mrf.mxu0
      %v909 = vpop.f32.mrf.mxu0
      %v910 = vadd.f32 %v543, %v909
      %v911 = vpop.f32.mrf.mxu0
      %912 = vmatprep.mubr.bf16.mxu0 0
      %913 = vmatmul.mubr.bf16.gmra.mxu0 %v651
      %v914 = vpop.f32.mrf.mxu0
      %v915 = vadd.f32 %v543, %v914
      %v916 = vpop.f32.mrf.mxu0
      %v917 = vpop.f32.mrf.mxu0
      %v918 = vadd.f32 %v543, %v917
      %v919 = vpop.f32.mrf.mxu0
      %920 = vmatprep.mubr.bf16.mxu0 0
      %921 = vmatmul.mubr.bf16.gmra.mxu0 %v654
      %v922 = vpop.f32.mrf.mxu0
      %v923 = vadd.f32 %v543, %v922
      %v924 = vpop.f32.mrf.mxu0
      %v925 = vpop.f32.mrf.mxu0
      %v926 = vadd.f32 %v543, %v925
      %v927 = vpop.f32.mrf.mxu0
      %928 = vmatprep.mubr.bf16.mxu0 0
      %929 = vmatmul.mubr.bf16.gmra.mxu0 %v657
      %v930 = vpop.f32.mrf.mxu0
      %v931 = vadd.f32 %v543, %v930
      %v932 = vpop.f32.mrf.mxu0
      %v933 = vpop.f32.mrf.mxu0
      %v934 = vadd.f32 %v543, %v933
      %v935 = vpop.f32.mrf.mxu0
      %936 = vmatprep.mubr.bf16.mxu0 0
      %937 = vmatmul.mubr.bf16.gmra.mxu0 %v660
      %v938 = vpop.f32.mrf.mxu0
      %v939 = vadd.f32 %v543, %v938
      %v940 = vpop.f32.mrf.mxu0
      %v941 = vpop.f32.mrf.mxu0
      %v942 = vadd.f32 %v543, %v941
      %v943 = vpop.f32.mrf.mxu0
      %944 = vmatprep.mubr.bf16.mxu0 0
      %945 = vmatmul.mubr.bf16.gmra.mxu0 %v663
      %v946 = vpop.f32.mrf.mxu0
      %v947 = vadd.f32 %v543, %v946
      %v948 = vpop.f32.mrf.mxu0
      %v949 = vpop.f32.mrf.mxu0
      %v950 = vadd.f32 %v543, %v949
      %v951 = vpop.f32.mrf.mxu0
      %952 = vmatprep.mubr.bf16.mxu0 0
      %953 = vmatmul.mubr.bf16.gmra.mxu0 %v666
      %v954 = vpop.f32.mrf.mxu0
      %v955 = vadd.f32 %v543, %v954
      %v956 = vpop.f32.mrf.mxu0
      %v957 = vpop.f32.mrf.mxu0
      %v958 = vadd.f32 %v543, %v957
      %v959 = vpop.f32.mrf.mxu0
      %960 = vmatprep.mubr.bf16.mxu0 0
      %961 = vmatmul.mubr.bf16.gmra.mxu0 %v669
      %v962 = vpop.f32.mrf.mxu0
      %v963 = vadd.f32 %v543, %v962
      %v964 = vpop.f32.mrf.mxu0
      %v965 = vpop.f32.mrf.mxu0
      %v966 = vadd.f32 %v543, %v965
      %v967 = vpop.f32.mrf.mxu0
      %968 = vmatprep.mubr.bf16.mxu0 0
      %969 = vmatmul.mubr.bf16.gmra.mxu0 %v672
      %v970 = vpop.f32.mrf.mxu0
      %v971 = vadd.f32 %v543, %v970
      %v972 = vpop.f32.mrf.mxu0
      %v973 = vpop.f32.mrf.mxu0
      %v974 = vadd.f32 %v543, %v973
      %v975 = vpop.f32.mrf.mxu0
      %976 = vmatprep.mubr.bf16.mxu0 0
      %977 = vmatmul.mubr.bf16.gmra.mxu0 %v675
      %v978 = vpop.f32.mrf.mxu0
      %v979 = vadd.f32 %v543, %v978
      %v980 = vpop.f32.mrf.mxu0
      %v981 = vpop.f32.mrf.mxu0
      %v982 = vadd.f32 %v543, %v981
      %v983 = vpop.f32.mrf.mxu0
      %984 = vmatprep.mubr.bf16.mxu0 0
      %985 = vmatmul.mubr.bf16.gmra.mxu0 %v678
      %v986 = vpop.f32.mrf.mxu0
      %v987 = vadd.f32 %v543, %v986
      %v988 = vpop.f32.mrf.mxu0
      %v989 = vpop.f32.mrf.mxu0
      %v990 = vadd.f32 %v543, %v989
      %v991 = vpop.f32.mrf.mxu0
      %992 = vmatprep.mubr.bf16.mxu0 0
      %993 = vmatmul.mubr.bf16.gmra.mxu0 %v681
      %v994 = vpop.f32.mrf.mxu0
      %v995 = vadd.f32 %v543, %v994
      %v996 = vpop.f32.mrf.mxu0
      %v997 = vpop.f32.mrf.mxu0
      %v998 = vadd.f32 %v543, %v997
      %v999 = vpop.f32.mrf.mxu0
      %1000 = vmatprep.mubr.bf16.mxu0 0
      %1001 = vmatmul.mubr.bf16.gmra.mxu0 %v684
      %v1002 = vpop.f32.mrf.mxu0
      %v1003 = vadd.f32 %v543, %v1002
      %v1004 = vpop.f32.mrf.mxu0
      %v1005 = vpop.f32.mrf.mxu0
      %v1006 = vadd.f32 %v543, %v1005
      %v1007 = vpop.f32.mrf.mxu0
      %1008 = vmatprep.mubr.bf16.mxu0 0
      %1009 = vmatmul.mubr.bf16.gmra.mxu0 %v687
      %v1010 = vpop.f32.mrf.mxu0
      %v1011 = vadd.f32 %v543, %v1010
      %v1012 = vpop.f32.mrf.mxu0
      %v1013 = vpop.f32.mrf.mxu0
      %v1014 = vadd.f32 %v543, %v1013
      %v1015 = vpop.f32.mrf.mxu0
      %1016 = vdwg.mxu0
      %v1017 = vtanh.pop %v734
      %v1018 = vtanh.pop %v736
      %v1019 = vtanh.pop %v907
      %v1020 = vtanh.pop %v738
      %v1021 = vtanh.pop %v740
      %v1022 = vtanh.pop %v910
      %v1023 = vtanh.pop %v744
      %v1024 = vtanh.pop %v746
      %v1025 = vtanh.pop %v915
      %v1026 = vtanh.pop %v748
      %v1027 = vtanh.pop %v750
      %v1028 = vtanh.pop %v918
      %v1029 = vtanh.pop %v754
      %v1030 = vtanh.pop %v756
      %v1031 = vtanh.pop %v923
      %v1032 = vtanh.pop %v758
      %v1033 = vtanh.pop %v760
      %v1034 = vtanh.pop %v926
      %v1035 = vtanh.pop %v764
      %v1036 = vtanh.pop %v766
      %v1037 = vtanh.pop %v931
      %v1038 = vtanh.pop %v768
      %v1039 = vtanh.pop %v770
      %v1040 = vtanh.pop %v934
      %v1041 = vtanh.pop %v774
      %v1042 = vtanh.pop %v776
      %v1043 = vtanh.pop %v939
      %v1044 = vtanh.pop %v778
      %v1045 = vtanh.pop %v780
      %v1046 = vtanh.pop %v942
      %v1047 = vtanh.pop %v784
      %v1048 = vtanh.pop %v786
      %v1049 = vtanh.pop %v947
      %v1050 = vtanh.pop %v788
      %v1051 = vtanh.pop %v790
      %v1052 = vtanh.pop %v950
      %v1053 = vtanh.pop %v794
      %v1054 = vtanh.pop %v796
      %v1055 = vtanh.pop %v955
      %v1056 = vtanh.pop %v798
      %v1057 = vtanh.pop %v800
      %v1058 = vtanh.pop %v958
      %v1059 = vtanh.pop %v804
      %v1060 = vtanh.pop %v806
      %v1061 = vtanh.pop %v963
      %v1062 = vtanh.pop %v808
      %v1063 = vtanh.pop %v810
      %v1064 = vtanh.pop %v966
      %v1065 = vtanh.pop %v814
      %v1066 = vtanh.pop %v816
      %v1067 = vtanh.pop %v971
      %v1068 = vtanh.pop %v818
      %v1069 = vtanh.pop %v820
      %v1070 = vtanh.pop %v974
      %v1071 = vtanh.pop %v824
      %v1072 = vtanh.pop %v826
      %v1073 = vtanh.pop %v979
      %v1074 = vtanh.pop %v828
      %v1075 = vtanh.pop %v830
      %v1076 = vtanh.pop %v982
      %v1077 = vtanh.pop %v834
      %v1078 = vtanh.pop %v836
      %v1079 = vtanh.pop %v987
      %v1080 = vtanh.pop %v838
      %v1081 = vtanh.pop %v840
      %v1082 = vtanh.pop %v990
      %v1083 = vtanh.pop %v844
      %v1084 = vtanh.pop %v846
      %v1085 = vtanh.pop %v995
      %v1086 = vtanh.pop %v848
      %v1087 = vtanh.pop %v850
      %v1088 = vtanh.pop %v998
      %v1089 = vtanh.pop %v854
      %v1090 = vtanh.pop %v856
      %v1091 = vtanh.pop %v1003
      %v1092 = vtanh.pop %v858
      %v1093 = vtanh.pop %v860
      %v1094 = vtanh.pop %v1006
      %v1095 = vtanh.pop %v864
      %v1096 = vtanh.pop %v866
      %v1097 = vtanh.pop %v1011
      %v1098 = vtanh.pop %v868
      %v1099 = vtanh.pop %v870
      %v1100 = vtanh.pop %v1014
      %v1101 = vpack.c.bf16 %v1020, %v1017
      %v1102 = vpack.c.bf16 %v1021, %v1018
      %v1103 = vpack.c.bf16 %v1022, %v1019
      %v1104 = vpack.c.bf16 %v1026, %v1023
      %v1105 = vpack.c.bf16 %v1027, %v1024
      %v1106 = vpack.c.bf16 %v1028, %v1025
      %v1107 = vpack.c.bf16 %v1032, %v1029
      %v1108 = vpack.c.bf16 %v1033, %v1030
      %v1109 = vpack.c.bf16 %v1034, %v1031
      %v1110 = vpack.c.bf16 %v1038, %v1035
      %v1111 = vpack.c.bf16 %v1039, %v1036
      %v1112 = vpack.c.bf16 %v1040, %v1037
      %v1113 = vpack.c.bf16 %v1044, %v1041
      %v1114 = vpack.c.bf16 %v1045, %v1042
      %v1115 = vpack.c.bf16 %v1046, %v1043
      %v1116 = vpack.c.bf16 %v1050, %v1047
      %v1117 = vpack.c.bf16 %v1051, %v1048
      %v1118 = vpack.c.bf16 %v1052, %v1049
      %v1119 = vpack.c.bf16 %v1056, %v1053
      %v1120 = vpack.c.bf16 %v1057, %v1054
      %v1121 = vpack.c.bf16 %v1058, %v1055
      %v1122 = vpack.c.bf16 %v1062, %v1059
      %v1123 = vpack.c.bf16 %v1063, %v1060
      %v1124 = vpack.c.bf16 %v1064, %v1061
      %v1125 = vpack.c.bf16 %v1068, %v1065
      %v1126 = vpack.c.bf16 %v1069, %v1066
      %v1127 = vpack.c.bf16 %v1070, %v1067
      %v1128 = vpack.c.bf16 %v1074, %v1071
      %v1129 = vpack.c.bf16 %v1075, %v1072
      %v1130 = vpack.c.bf16 %v1076, %v1073
      %v1131 = vpack.c.bf16 %v1080, %v1077
      %v1132 = vpack.c.bf16 %v1081, %v1078
      %v1133 = vpack.c.bf16 %v1082, %v1079
      %v1134 = vpack.c.bf16 %v1086, %v1083
      %v1135 = vpack.c.bf16 %v1087, %v1084
      %v1136 = vpack.c.bf16 %v1088, %v1085
      %v1137 = vpack.c.bf16 %v1092, %v1089
      %v1138 = vpack.c.bf16 %v1093, %v1090
      %v1139 = vpack.c.bf16 %v1094, %v1091
      %v1140 = vpack.c.bf16 %v1098, %v1095
      %v1141 = vpack.c.bf16 %v1099, %v1096
      %v1142 = vpack.c.bf16 %v1100, %v1097
      %v1143 = vld [vmem:[%s3] sm:$0xff]
      %v1144 = vld [vmem:[%s3 + $0x8] sm:$0xf]
      %v1145 = vld [vmem:[%s3 + $0xc] sm:$0xff]
      %v1146 = vld [vmem:[%s3 + $0x14] sm:$0xf]
      %v1147 = vld [vmem:[%s3 + $0x18] sm:$0xff]
      %v1148 = vld [vmem:[%s3 + $0x20] sm:$0xf]
      %v1149 = vld [vmem:[%s3 + $0x24] sm:$0xff]
      %v1150 = vld [vmem:[%s3 + $0x2c] sm:$0xf]
      %v1151 = vld [vmem:[%s3 + $0x30] sm:$0xff]
      %v1152 = vld [vmem:[%s3 + $0x38] sm:$0xf]
      %v1153 = vld [vmem:[%s3 + $0x3c] sm:$0xff]
      %v1154 = vld [vmem:[%s3 + $0x44] sm:$0xf]
      %v1155 = vld [vmem:[%s3 + $0x48] sm:$0xff]
      %v1156 = vld [vmem:[%s3 + $0x50] sm:$0xf]
      %v1157 = vld [vmem:[%s3 + $0x54] sm:$0xff]
      %v1158 = vld [vmem:[%s3 + $0x5c] sm:$0xf]
      %v1159 = vld [vmem:[%s3 + $0x60] sm:$0xff]
      %v1160 = vld [vmem:[%s3 + $0x68] sm:$0xf]
      %v1161 = vld [vmem:[%s3 + $0x6c] sm:$0xff]
      %v1162 = vld [vmem:[%s3 + $0x74] sm:$0xf]
      %v1163 = vld [vmem:[%s3 + $0x78] sm:$0xff]
      %v1164 = vld [vmem:[%s3 + $0x80] sm:$0xf]
      %v1165 = vld [vmem:[%s3 + $0x84] sm:$0xff]
      %v1166 = vld [vmem:[%s3 + $0x8c] sm:$0xf]
      %v1167 = vld [vmem:[%s3 + $0x90] sm:$0xff]
      %v1168 = vld [vmem:[%s3 + $0x98] sm:$0xf]
      %v1169 = vld [vmem:[%s3 + $0x9c] sm:$0xff]
      %v1170 = vld [vmem:[%s3 + $0xa4] sm:$0xf]
      %v1171 = vld [vmem:[%s3 + $0xa8] sm:$0xff]
      %v1172 = vld [vmem:[%s3 + $0xb0] sm:$0xf]
      %v1173 = vld [vmem:[%s3 + $0xb4] sm:$0xff]
      %v1174 = vld [vmem:[%s3 + $0xbc] sm:$0xf]
      %v1175 = vld [vmem:[%s3 + $0xc0] sm:$0xff]
      %v1176 = vld [vmem:[%s3 + $0xc8] sm:$0xf]
      %v1177 = vld [vmem:[%s3 + $0xcc] sm:$0xff]
      %v1178 = vld [vmem:[%s3 + $0xd4] sm:$0xf]
      %v1179 = vld [vmem:[%s3 + $0xd8] sm:$0xff]
      %v1180 = vld [vmem:[%s3 + $0xe0] sm:$0xf]
      %v1181 = vld [vmem:[%s3 + $0xe4] sm:$0xff]
      %v1182 = vld [vmem:[%s3 + $0xec] sm:$0xf]
      %v1183 = vld [vmem:[%s3 + $0xf0] sm:$0xff]
      %v1184 = vld [vmem:[%s3 + $0xf8] sm:$0xf]
      %v1185 = vld [vmem:[%s3 + $0xfc] sm:$0xff]
      %v1186 = vld [vmem:[%s3 + $0x104] sm:$0xf]
      %v1187 = vld [vmem:[%s3 + $0x108] sm:$0xff]
      %v1188 = vld [vmem:[%s3 + $0x110] sm:$0xf]
      %v1189 = vld [vmem:[%s3 + $0x114] sm:$0xff]
      %v1190 = vld [vmem:[%s3 + $0x11c] sm:$0xf]
      %v1191 = vld [vmem:[%s3 + $0x120] sm:$0xff]
      %v1192 = vld [vmem:[%s3 + $0x128] sm:$0xf]
      %v1193 = vld [vmem:[%s3 + $0x12c] sm:$0xff]
      %v1194 = vld [vmem:[%s3 + $0x134] sm:$0xf]
      %v1195 = vld [vmem:[%s3 + $0x138] sm:$0xff]
      %v1196 = vld [vmem:[%s3 + $0x140] sm:$0xf]
      %v1197 = vld [vmem:[%s3 + $0x144] sm:$0xff]
      %v1198 = vld [vmem:[%s3 + $0x14c] sm:$0xf]
      %v1199 = vld [vmem:[%s3 + $0x150] sm:$0xff]
      %v1200 = vld [vmem:[%s3 + $0x158] sm:$0xf]
      %v1201 = vld [vmem:[%s3 + $0x15c] sm:$0xff]
      %v1202 = vld [vmem:[%s3 + $0x164] sm:$0xf]
      %v1203 = vld [vmem:[%s3 + $0x168] sm:$0xff]
      %v1204 = vld [vmem:[%s3 + $0x170] sm:$0xf]
      %v1205 = vld [vmem:[%s3 + $0x174] sm:$0xff]
      %v1206 = vld [vmem:[%s3 + $0x17c] sm:$0xf]
      %v1207 = vld [vmem:[%s3 + $0x180] sm:$0xff]
      %v1208 = vld [vmem:[%s3 + $0x188] sm:$0xf]
      %v1209 = vld [vmem:[%s3 + $0x18c] sm:$0xff]
      %v1210 = vld [vmem:[%s3 + $0x194] sm:$0xf]
      %v1211 = vld [vmem:[%s3 + $0x198] sm:$0xff]
      %v1212 = vld [vmem:[%s3 + $0x1a0] sm:$0xf]
      %v1213 = vld [vmem:[%s3 + $0x1a4] sm:$0xff]
      %v1214 = vld [vmem:[%s3 + $0x1ac] sm:$0xf]
      %v1215 = vld [vmem:[%s3 + $0x1b0] sm:$0xff]
      %v1216 = vld [vmem:[%s3 + $0x1b8] sm:$0xf]
      %v1217 = vld [vmem:[%s3 + $0x1bc] sm:$0x33]
      %v1218 = vld [vmem:[%s3 + $0x1c4] sm:$0x3]
      %v1219 = vld [vmem:[%s4] sm:$0x7]
      %v1221 = vlaneseq
      %v1222 = vshrl.u32 %v1221, 7
      %v1223 = vsub.s32 0, %v1222
      %v1224 = vrot.slane %v1219, %v1223
      %v1225 = vlaneseq
      %v1226 = vshrl.u32 %v1225, 7
      %v1227 = vsub.s32 1, %v1226
      %v1228 = vrot.slane %v1219, %v1227
      %v1229 = vlaneseq
      %v1230 = vshrl.u32 %v1229, 7
      %v1231 = vsub.s32 2, %v1230
      %v1232 = vrot.slane %v1219, %v1231
      %v1312 = vunpack.c.l.b16 %v1143
      %v1313 = vunpack.c.h.b16 %v1143
      %v1314 = vunpack.c.l.b16 %v1144
      %v1315 = vunpack.c.l.b16 %v1145
      %v1316 = vunpack.c.h.b16 %v1145
      %v1317 = vunpack.c.l.b16 %v1146
      %v1318 = vunpack.c.l.b16 %v1147
      %v1319 = vunpack.c.h.b16 %v1147
      %v1320 = vunpack.c.l.b16 %v1148
      %v1321 = vunpack.c.l.b16 %v1149
      %v1322 = vunpack.c.h.b16 %v1149
      %v1323 = vunpack.c.l.b16 %v1150
      %v1324 = vunpack.c.l.b16 %v1151
      %v1325 = vunpack.c.h.b16 %v1151
      %v1326 = vunpack.c.l.b16 %v1152
      %v1327 = vunpack.c.l.b16 %v1153
      %v1328 = vunpack.c.h.b16 %v1153
      %v1329 = vunpack.c.l.b16 %v1154
      %v1330 = vunpack.c.l.b16 %v1155
      %v1331 = vunpack.c.h.b16 %v1155
      %v1332 = vunpack.c.l.b16 %v1156
      %v1333 = vunpack.c.l.b16 %v1157
      %v1334 = vunpack.c.h.b16 %v1157
      %v1335 = vunpack.c.l.b16 %v1158
      %v1336 = vunpack.c.l.b16 %v1159
      %v1337 = vunpack.c.h.b16 %v1159
      %v1338 = vunpack.c.l.b16 %v1160
      %v1339 = vunpack.c.l.b16 %v1161
      %v1340 = vunpack.c.h.b16 %v1161
      %v1341 = vunpack.c.l.b16 %v1162
      %v1342 = vunpack.c.l.b16 %v1163
      %v1343 = vunpack.c.h.b16 %v1163
      %v1344 = vunpack.c.l.b16 %v1164
      %v1345 = vunpack.c.l.b16 %v1165
      %v1346 = vunpack.c.h.b16 %v1165
      %v1347 = vunpack.c.l.b16 %v1166
      %v1348 = vunpack.c.l.b16 %v1167
      %v1349 = vunpack.c.h.b16 %v1167
      %v1350 = vunpack.c.l.b16 %v1168
      %v1351 = vunpack.c.l.b16 %v1169
      %v1352 = vunpack.c.h.b16 %v1169
      %v1353 = vunpack.c.l.b16 %v1170
      %v1354 = vunpack.c.l.b16 %v1171
      %v1355 = vunpack.c.h.b16 %v1171
      %v1356 = vunpack.c.l.b16 %v1172
      %v1357 = vunpack.c.l.b16 %v1173
      %v1358 = vunpack.c.h.b16 %v1173
      %v1359 = vunpack.c.l.b16 %v1174
      %v1360 = vunpack.c.l.b16 %v1175
      %v1361 = vunpack.c.h.b16 %v1175
      %v1362 = vunpack.c.l.b16 %v1176
      %v1363 = vunpack.c.l.b16 %v1177
      %v1364 = vunpack.c.h.b16 %v1177
      %v1365 = vunpack.c.l.b16 %v1178
      %v1366 = vunpack.c.l.b16 %v1179
      %v1367 = vunpack.c.h.b16 %v1179
      %v1368 = vunpack.c.l.b16 %v1180
      %v1369 = vunpack.c.l.b16 %v1181
      %v1370 = vunpack.c.h.b16 %v1181
      %v1371 = vunpack.c.l.b16 %v1182
      %v1372 = vunpack.c.l.b16 %v1183
      %v1373 = vunpack.c.h.b16 %v1183
      %v1374 = vunpack.c.l.b16 %v1184
      %v1375 = vunpack.c.l.b16 %v1185
      %v1376 = vunpack.c.h.b16 %v1185
      %v1377 = vunpack.c.l.b16 %v1186
      %v1378 = vunpack.c.l.b16 %v1187
      %v1379 = vunpack.c.h.b16 %v1187
      %v1380 = vunpack.c.l.b16 %v1188
      %v1381 = vunpack.c.l.b16 %v1189
      %v1382 = vunpack.c.h.b16 %v1189
      %v1383 = vunpack.c.l.b16 %v1190
      %v1384 = vunpack.c.l.b16 %v1191
      %v1385 = vunpack.c.h.b16 %v1191
      %v1386 = vunpack.c.l.b16 %v1192
      %v1387 = vunpack.c.l.b16 %v1193
      %v1388 = vunpack.c.h.b16 %v1193
      %v1389 = vunpack.c.l.b16 %v1194
      %v1390 = vunpack.c.l.b16 %v1195
      %v1391 = vunpack.c.h.b16 %v1195
      %v1392 = vunpack.c.l.b16 %v1196
      %v1393 = vunpack.c.l.b16 %v1197
      %v1394 = vunpack.c.h.b16 %v1197
      %v1395 = vunpack.c.l.b16 %v1198
      %v1396 = vunpack.c.l.b16 %v1199
      %v1397 = vunpack.c.h.b16 %v1199
      %v1398 = vunpack.c.l.b16 %v1200
      %v1399 = vunpack.c.l.b16 %v1201
      %v1400 = vunpack.c.h.b16 %v1201
      %v1401 = vunpack.c.l.b16 %v1202
      %v1402 = vunpack.c.l.b16 %v1203
      %v1403 = vunpack.c.h.b16 %v1203
      %v1404 = vunpack.c.l.b16 %v1204
      %v1405 = vunpack.c.l.b16 %v1205
      %v1406 = vunpack.c.h.b16 %v1205
      %v1407 = vunpack.c.l.b16 %v1206
      %v1408 = vunpack.c.l.b16 %v1207
      %v1409 = vunpack.c.h.b16 %v1207
      %v1410 = vunpack.c.l.b16 %v1208
      %v1411 = vunpack.c.l.b16 %v1209
      %v1412 = vunpack.c.h.b16 %v1209
      %v1413 = vunpack.c.l.b16 %v1210
      %v1414 = vunpack.c.l.b16 %v1211
      %v1415 = vunpack.c.h.b16 %v1211
      %v1416 = vunpack.c.l.b16 %v1212
      %v1417 = vunpack.c.l.b16 %v1213
      %v1418 = vunpack.c.h.b16 %v1213
      %v1419 = vunpack.c.l.b16 %v1214
      %v1420 = vunpack.c.l.b16 %v1215
      %v1421 = vunpack.c.h.b16 %v1215
      %v1422 = vunpack.c.l.b16 %v1216
      %v1423 = vunpack.c.l.b16 %v1217
      %v1424 = vunpack.c.h.b16 %v1217
      %v1425 = vunpack.c.l.b16 %v1218
      %v1426 = vpack.c.b16 %v1315, %v1312
      %v1427 = vpack.c.b16 %v1316, %v1313
      %v1428 = vpack.c.b16 %v1317, %v1314
      %v1429 = vpack.c.b16 %v1321, %v1318
      %v1430 = vpack.c.b16 %v1322, %v1319
      %v1431 = vpack.c.b16 %v1323, %v1320
      %v1432 = vpack.c.b16 %v1327, %v1324
      %v1433 = vpack.c.b16 %v1328, %v1325
      %v1434 = vpack.c.b16 %v1329, %v1326
      %v1435 = vpack.c.b16 %v1333, %v1330
      %v1436 = vpack.c.b16 %v1334, %v1331
      %v1437 = vpack.c.b16 %v1335, %v1332
      %v1438 = vpack.c.b16 %v1339, %v1336
      %v1439 = vpack.c.b16 %v1340, %v1337
      %v1440 = vpack.c.b16 %v1341, %v1338
      %v1441 = vpack.c.b16 %v1345, %v1342
      %v1442 = vpack.c.b16 %v1346, %v1343
      %v1443 = vpack.c.b16 %v1347, %v1344
      %v1444 = vpack.c.b16 %v1351, %v1348
      %v1445 = vpack.c.b16 %v1352, %v1349
      %v1446 = vpack.c.b16 %v1353, %v1350
      %v1447 = vpack.c.b16 %v1357, %v1354
      %v1448 = vpack.c.b16 %v1358, %v1355
      %v1449 = vpack.c.b16 %v1359, %v1356
      %v1450 = vpack.c.b16 %v1363, %v1360
      %v1451 = vpack.c.b16 %v1364, %v1361
      %v1452 = vpack.c.b16 %v1365, %v1362
      %v1453 = vpack.c.b16 %v1369, %v1366
      %v1454 = vpack.c.b16 %v1370, %v1367
      %v1455 = vpack.c.b16 %v1371, %v1368
      %v1456 = vpack.c.b16 %v1375, %v1372
      %v1457 = vpack.c.b16 %v1376, %v1373
      %v1458 = vpack.c.b16 %v1377, %v1374
      %v1459 = vpack.c.b16 %v1381, %v1378
      %v1460 = vpack.c.b16 %v1382, %v1379
      %v1461 = vpack.c.b16 %v1383, %v1380
      %v1462 = vpack.c.b16 %v1387, %v1384
      %v1463 = vpack.c.b16 %v1388, %v1385
      %v1464 = vpack.c.b16 %v1389, %v1386
      %v1465 = vpack.c.b16 %v1393, %v1390
      %v1466 = vpack.c.b16 %v1394, %v1391
      %v1467 = vpack.c.b16 %v1395, %v1392
      %v1468 = vpack.c.b16 %v1399, %v1396
      %v1469 = vpack.c.b16 %v1400, %v1397
      %v1470 = vpack.c.b16 %v1401, %v1398
      %v1471 = vpack.c.b16 %v1405, %v1402
      %v1472 = vpack.c.b16 %v1406, %v1403
      %v1473 = vpack.c.b16 %v1407, %v1404
      %v1474 = vpack.c.b16 %v1411, %v1408
      %v1475 = vpack.c.b16 %v1412, %v1409
      %v1476 = vpack.c.b16 %v1413, %v1410
      %v1477 = vpack.c.b16 %v1417, %v1414
      %v1478 = vpack.c.b16 %v1418, %v1415
      %v1479 = vpack.c.b16 %v1419, %v1416
      %v1480 = vpack.c.b16 %v1423, %v1420
      %v1481 = vpack.c.b16 %v1424, %v1421
      %v1482 = vpack.c.b16 %v1425, %v1422
      %vm1537 = vcmask 359424
      %v1539 = vsel %vm1537, %v1103, 0
      %v1542 = vsel %vm1537, %v1106, 0
      %v1545 = vsel %vm1537, %v1109, 0
      %v1548 = vsel %vm1537, %v1112, 0
      %v1551 = vsel %vm1537, %v1115, 0
      %v1554 = vsel %vm1537, %v1118, 0
      %v1557 = vsel %vm1537, %v1121, 0
      %v1560 = vsel %vm1537, %v1124, 0
      %v1563 = vsel %vm1537, %v1127, 0
      %v1566 = vsel %vm1537, %v1130, 0
      %v1569 = vsel %vm1537, %v1133, 0
      %v1572 = vsel %vm1537, %v1136, 0
      %v1575 = vsel %vm1537, %v1139, 0
      %v1578 = vsel %vm1537, %v1142, 0
      %vm1580 = vcmask 1045504
      %v1582 = vsel %vm1580, %v1480, 0
      %v1585 = vsel %vm1580, %v1481, 0
      %v1588 = vsel %vm1580, %v1482, 0
      %1590 = vmatprep.subr.bf16.mxu0 %v1448
      %1591 = vmatpush1.bf16.msra.mxu0 %v1447
      %1592 = vmatprep.subr.bf16.mxu0 %v1445
      %1593 = vmatpush1.bf16.msra.mxu0 %v1444
      %1594 = vmatprep.subr.bf16.mxu0 %v1442
      %1595 = vmatpush1.bf16.msra.mxu0 %v1441
      %1596 = vmatprep.subr.bf16.mxu0 %v1439
      %1597 = vmatpush1.bf16.msra.mxu0 %v1438
      %1598 = vmatprep.subr.bf16.mxu0 %v1436
      %1599 = vmatpush1.bf16.msra.mxu0 %v1435
      %1600 = vmatprep.subr.bf16.mxu0 %v1433
      %1601 = vmatpush1.bf16.msra.mxu0 %v1432
      %1602 = vmatprep.subr.bf16.mxu0 %v1430
      %1603 = vmatpush1.bf16.msra.mxu0 %v1429
      %1604 = vmatprep.subr.bf16.mxu0 %v1427
      %1605 = vmatpush1.bf16.msra.mxu0 %v1426
      %1606 = vmatprep.subr.bf16.mxu0 %v1472
      %1607 = vmatpush2.bf16.msra.mxu0 %v1471
      %1608 = vmatprep.subr.bf16.mxu0 %v1469
      %1609 = vmatpush2.bf16.msra.mxu0 %v1468
      %1610 = vmatprep.subr.bf16.mxu0 %v1466
      %1611 = vmatpush2.bf16.msra.mxu0 %v1465
      %1612 = vmatprep.subr.bf16.mxu0 %v1463
      %1613 = vmatpush2.bf16.msra.mxu0 %v1462
      %1614 = vmatprep.subr.bf16.mxu0 %v1460
      %1615 = vmatpush2.bf16.msra.mxu0 %v1459
      %1616 = vmatprep.subr.bf16.mxu0 %v1457
      %1617 = vmatpush2.bf16.msra.mxu0 %v1456
      %1618 = vmatprep.subr.bf16.mxu0 %v1454
      %1619 = vmatpush2.bf16.msra.mxu0 %v1453
      %1620 = vmatprep.subr.bf16.mxu0 %v1451
      %1621 = vmatpush2.bf16.msra.mxu0 %v1450
      %1622 = vmatprep.mubr.bf16.mxu0 %v1102
      %1623 = vmatmul.mubr.bf16.gmra.mxu0 %v1101
      %v1624 = vpop.f32.mrf.mxu0
      %v1625 = vadd.f32 %v1224, %v1624
      %v1626 = vpop.f32.mrf.mxu0
      %v1627 = vadd.f32 %v1228, %v1626
      %v1628 = vpop.f32.mrf.mxu0
      %v1629 = vadd.f32 %v1224, %v1628
      %v1630 = vpop.f32.mrf.mxu0
      %v1631 = vadd.f32 %v1228, %v1630
      %1632 = vmatprep.mubr.bf16.mxu0 %v1105
      %1633 = vmatmul.mubr.bf16.gmra.mxu0 %v1104
      %v1634 = vpop.f32.mrf.mxu0
      %v1635 = vadd.f32 %v1224, %v1634
      %v1636 = vpop.f32.mrf.mxu0
      %v1637 = vadd.f32 %v1228, %v1636
      %v1638 = vpop.f32.mrf.mxu0
      %v1639 = vadd.f32 %v1224, %v1638
      %v1640 = vpop.f32.mrf.mxu0
      %v1641 = vadd.f32 %v1228, %v1640
      %1642 = vmatprep.mubr.bf16.mxu0 %v1108
      %1643 = vmatmul.mubr.bf16.gmra.mxu0 %v1107
      %v1644 = vpop.f32.mrf.mxu0
      %v1645 = vadd.f32 %v1224, %v1644
      %v1646 = vpop.f32.mrf.mxu0
      %v1647 = vadd.f32 %v1228, %v1646
      %v1648 = vpop.f32.mrf.mxu0
      %v1649 = vadd.f32 %v1224, %v1648
      %v1650 = vpop.f32.mrf.mxu0
      %v1651 = vadd.f32 %v1228, %v1650
      %1652 = vmatprep.mubr.bf16.mxu0 %v1111
      %1653 = vmatmul.mubr.bf16.gmra.mxu0 %v1110
      %v1654 = vpop.f32.mrf.mxu0
      %v1655 = vadd.f32 %v1224, %v1654
      %v1656 = vpop.f32.mrf.mxu0
      %v1657 = vadd.f32 %v1228, %v1656
      %v1658 = vpop.f32.mrf.mxu0
      %v1659 = vadd.f32 %v1224, %v1658
      %v1660 = vpop.f32.mrf.mxu0
      %v1661 = vadd.f32 %v1228, %v1660
      %1662 = vmatprep.mubr.bf16.mxu0 %v1114
      %1663 = vmatmul.mubr.bf16.gmra.mxu0 %v1113
      %v1664 = vpop.f32.mrf.mxu0
      %v1665 = vadd.f32 %v1224, %v1664
      %v1666 = vpop.f32.mrf.mxu0
      %v1667 = vadd.f32 %v1228, %v1666
      %v1668 = vpop.f32.mrf.mxu0
      %v1669 = vadd.f32 %v1224, %v1668
      %v1670 = vpop.f32.mrf.mxu0
      %v1671 = vadd.f32 %v1228, %v1670
      %1672 = vmatprep.mubr.bf16.mxu0 %v1117
      %1673 = vmatmul.mubr.bf16.gmra.mxu0 %v1116
      %v1674 = vpop.f32.mrf.mxu0
      %v1675 = vadd.f32 %v1224, %v1674
      %v1676 = vpop.f32.mrf.mxu0
      %v1677 = vadd.f32 %v1228, %v1676
      %v1678 = vpop.f32.mrf.mxu0
      %v1679 = vadd.f32 %v1224, %v1678
      %v1680 = vpop.f32.mrf.mxu0
      %v1681 = vadd.f32 %v1228, %v1680
      %1682 = vmatprep.mubr.bf16.mxu0 %v1120
      %1683 = vmatmul.mubr.bf16.gmra.mxu0 %v1119
      %v1684 = vpop.f32.mrf.mxu0
      %v1685 = vadd.f32 %v1224, %v1684
      %v1686 = vpop.f32.mrf.mxu0
      %v1687 = vadd.f32 %v1228, %v1686
      %v1688 = vpop.f32.mrf.mxu0
      %v1689 = vadd.f32 %v1224, %v1688
      %v1690 = vpop.f32.mrf.mxu0
      %v1691 = vadd.f32 %v1228, %v1690
      %1692 = vmatprep.mubr.bf16.mxu0 %v1123
      %1693 = vmatmul.mubr.bf16.gmra.mxu0 %v1122
      %v1694 = vpop.f32.mrf.mxu0
      %v1695 = vadd.f32 %v1224, %v1694
      %v1696 = vpop.f32.mrf.mxu0
      %v1697 = vadd.f32 %v1228, %v1696
      %v1698 = vpop.f32.mrf.mxu0
      %v1699 = vadd.f32 %v1224, %v1698
      %v1700 = vpop.f32.mrf.mxu0
      %v1701 = vadd.f32 %v1228, %v1700
      %1702 = vmatprep.mubr.bf16.mxu0 %v1126
      %1703 = vmatmul.mubr.bf16.gmra.mxu0 %v1125
      %v1704 = vpop.f32.mrf.mxu0
      %v1705 = vadd.f32 %v1224, %v1704
      %v1706 = vpop.f32.mrf.mxu0
      %v1707 = vadd.f32 %v1228, %v1706
      %v1708 = vpop.f32.mrf.mxu0
      %v1709 = vadd.f32 %v1224, %v1708
      %v1710 = vpop.f32.mrf.mxu0
      %v1711 = vadd.f32 %v1228, %v1710
      %1712 = vmatprep.mubr.bf16.mxu0 %v1129
      %1713 = vmatmul.mubr.bf16.gmra.mxu0 %v1128
      %v1714 = vpop.f32.mrf.mxu0
      %v1715 = vadd.f32 %v1224, %v1714
      %v1716 = vpop.f32.mrf.mxu0
      %v1717 = vadd.f32 %v1228, %v1716
      %v1718 = vpop.f32.mrf.mxu0
      %v1719 = vadd.f32 %v1224, %v1718
      %v1720 = vpop.f32.mrf.mxu0
      %v1721 = vadd.f32 %v1228, %v1720
      %1722 = vmatprep.mubr.bf16.mxu0 %v1132
      %1723 = vmatmul.mubr.bf16.gmra.mxu0 %v1131
      %v1724 = vpop.f32.mrf.mxu0
      %v1725 = vadd.f32 %v1224, %v1724
      %v1726 = vpop.f32.mrf.mxu0
      %v1727 = vadd.f32 %v1228, %v1726
      %v1728 = vpop.f32.mrf.mxu0
      %v1729 = vadd.f32 %v1224, %v1728
      %v1730 = vpop.f32.mrf.mxu0
      %v1731 = vadd.f32 %v1228, %v1730
      %1732 = vmatprep.mubr.bf16.mxu0 %v1135
      %1733 = vmatmul.mubr.bf16.gmra.mxu0 %v1134
      %v1734 = vpop.f32.mrf.mxu0
      %v1735 = vadd.f32 %v1224, %v1734
      %v1736 = vpop.f32.mrf.mxu0
      %v1737 = vadd.f32 %v1228, %v1736
      %v1738 = vpop.f32.mrf.mxu0
      %v1739 = vadd.f32 %v1224, %v1738
      %v1740 = vpop.f32.mrf.mxu0
      %v1741 = vadd.f32 %v1228, %v1740
      %1742 = vmatprep.mubr.bf16.mxu0 %v1138
      %1743 = vmatmul.mubr.bf16.gmra.mxu0 %v1137
      %v1744 = vpop.f32.mrf.mxu0
      %v1745 = vadd.f32 %v1224, %v1744
      %v1746 = vpop.f32.mrf.mxu0
      %v1747 = vadd.f32 %v1228, %v1746
      %v1748 = vpop.f32.mrf.mxu0
      %v1749 = vadd.f32 %v1224, %v1748
      %v1750 = vpop.f32.mrf.mxu0
      %v1751 = vadd.f32 %v1228, %v1750
      %1752 = vmatprep.mubr.bf16.mxu0 %v1141
      %1753 = vmatmul.mubr.bf16.gmra.mxu0 %v1140
      %v1754 = vpop.f32.mrf.mxu0
      %v1755 = vadd.f32 %v1224, %v1754
      %v1756 = vpop.f32.mrf.mxu0
      %v1757 = vadd.f32 %v1228, %v1756
      %v1758 = vpop.f32.mrf.mxu0
      %v1759 = vadd.f32 %v1224, %v1758
      %v1760 = vpop.f32.mrf.mxu0
      %v1761 = vadd.f32 %v1228, %v1760
      %1762 = vdwg.mxu0
      %1763 = vmatprep.subr.bf16.mxu0 0
      %1764 = vmatpush1.bf16.msra.mxu0 0
      %1765 = vmatprep.subr.bf16.mxu0 0
      %1766 = vmatpush1.bf16.msra.mxu0 0
      %1767 = vmatprep.subr.bf16.mxu0 0
      %1768 = vmatpush1.bf16.msra.mxu0 0
      %1769 = vmatprep.subr.bf16.mxu0 0
      %1770 = vmatpush1.bf16.msra.mxu0 0
      %1771 = vmatprep.subr.bf16.mxu0 0
      %1772 = vmatpush1.bf16.msra.mxu0 0
      %1773 = vmatprep.subr.bf16.mxu0 %v1585
      %1774 = vmatpush1.bf16.msra.mxu0 %v1582
      %1775 = vmatprep.subr.bf16.mxu0 %v1478
      %1776 = vmatpush1.bf16.msra.mxu0 %v1477
      %1777 = vmatprep.subr.bf16.mxu0 %v1475
      %1778 = vmatpush1.bf16.msra.mxu0 %v1474
      %1779 = vmatprep.subr.bf16.mxu0 0
      %1780 = vmatpush2.bf16.msra.mxu0 0
      %1781 = vmatprep.subr.bf16.mxu0 0
      %1782 = vmatpush2.bf16.msra.mxu0 0
      %1783 = vmatprep.subr.bf16.mxu0 0
      %1784 = vmatpush2.bf16.msra.mxu0 0
      %1785 = vmatprep.subr.bf16.mxu0 0
      %1786 = vmatpush2.bf16.msra.mxu0 0
      %1787 = vmatprep.subr.bf16.mxu0 0
      %1788 = vmatpush2.bf16.msra.mxu0 0
      %1789 = vmatprep.subr.bf16.mxu0 0
      %1790 = vmatpush2.bf16.msra.mxu0 0
      %1791 = vmatprep.subr.bf16.mxu0 0
      %1792 = vmatpush2.bf16.msra.mxu0 0
      %1793 = vmatprep.subr.bf16.mxu0 0
      %1794 = vmatpush2.bf16.msra.mxu0 0
      %1795 = vmatprep.mubr.bf16.mxu0 0
      %1796 = vmatmul.mubr.bf16.gmra.mxu0 %v1539
      %v1797 = vpop.f32.mrf.mxu0
      %v1798 = vadd.f32 %v1625, %v1797
      %v1799 = vpop.f32.mrf.mxu0
      %v1800 = vadd.f32 %v1627, %v1799
      %v1801 = vpop.f32.mrf.mxu0
      %v1802 = vadd.f32 %v1629, %v1801
      %v1803 = vpop.f32.mrf.mxu0
      %v1804 = vadd.f32 %v1631, %v1803
      %1805 = vmatprep.mubr.bf16.mxu0 0
      %1806 = vmatmul.mubr.bf16.gmra.mxu0 %v1542
      %v1807 = vpop.f32.mrf.mxu0
      %v1808 = vadd.f32 %v1635, %v1807
      %v1809 = vpop.f32.mrf.mxu0
      %v1810 = vadd.f32 %v1637, %v1809
      %v1811 = vpop.f32.mrf.mxu0
      %v1812 = vadd.f32 %v1639, %v1811
      %v1813 = vpop.f32.mrf.mxu0
      %v1814 = vadd.f32 %v1641, %v1813
      %1815 = vmatprep.mubr.bf16.mxu0 0
      %1816 = vmatmul.mubr.bf16.gmra.mxu0 %v1545
      %v1817 = vpop.f32.mrf.mxu0
      %v1818 = vadd.f32 %v1645, %v1817
      %v1819 = vpop.f32.mrf.mxu0
      %v1820 = vadd.f32 %v1647, %v1819
      %v1821 = vpop.f32.mrf.mxu0
      %v1822 = vadd.f32 %v1649, %v1821
      %v1823 = vpop.f32.mrf.mxu0
      %v1824 = vadd.f32 %v1651, %v1823
      %1825 = vmatprep.mubr.bf16.mxu0 0
      %1826 = vmatmul.mubr.bf16.gmra.mxu0 %v1548
      %v1827 = vpop.f32.mrf.mxu0
      %v1828 = vadd.f32 %v1655, %v1827
      %v1829 = vpop.f32.mrf.mxu0
      %v1830 = vadd.f32 %v1657, %v1829
      %v1831 = vpop.f32.mrf.mxu0
      %v1832 = vadd.f32 %v1659, %v1831
      %v1833 = vpop.f32.mrf.mxu0
      %v1834 = vadd.f32 %v1661, %v1833
      %1835 = vmatprep.mubr.bf16.mxu0 0
      %1836 = vmatmul.mubr.bf16.gmra.mxu0 %v1551
      %v1837 = vpop.f32.mrf.mxu0
      %v1838 = vadd.f32 %v1665, %v1837
      %v1839 = vpop.f32.mrf.mxu0
      %v1840 = vadd.f32 %v1667, %v1839
      %v1841 = vpop.f32.mrf.mxu0
      %v1842 = vadd.f32 %v1669, %v1841
      %v1843 = vpop.f32.mrf.mxu0
      %v1844 = vadd.f32 %v1671, %v1843
      %1845 = vmatprep.mubr.bf16.mxu0 0
      %1846 = vmatmul.mubr.bf16.gmra.mxu0 %v1554
      %v1847 = vpop.f32.mrf.mxu0
      %v1848 = vadd.f32 %v1675, %v1847
      %v1849 = vpop.f32.mrf.mxu0
      %v1850 = vadd.f32 %v1677, %v1849
      %v1851 = vpop.f32.mrf.mxu0
      %v1852 = vadd.f32 %v1679, %v1851
      %v1853 = vpop.f32.mrf.mxu0
      %v1854 = vadd.f32 %v1681, %v1853
      %1855 = vmatprep.mubr.bf16.mxu0 0
      %1856 = vmatmul.mubr.bf16.gmra.mxu0 %v1557
      %v1857 = vpop.f32.mrf.mxu0
      %v1858 = vadd.f32 %v1685, %v1857
      %v1859 = vpop.f32.mrf.mxu0
      %v1860 = vadd.f32 %v1687, %v1859
      %v1861 = vpop.f32.mrf.mxu0
      %v1862 = vadd.f32 %v1689, %v1861
      %v1863 = vpop.f32.mrf.mxu0
      %v1864 = vadd.f32 %v1691, %v1863
      %1865 = vmatprep.mubr.bf16.mxu0 0
      %1866 = vmatmul.mubr.bf16.gmra.mxu0 %v1560
      %v1867 = vpop.f32.mrf.mxu0
      %v1868 = vadd.f32 %v1695, %v1867
      %v1869 = vpop.f32.mrf.mxu0
      %v1870 = vadd.f32 %v1697, %v1869
      %v1871 = vpop.f32.mrf.mxu0
      %v1872 = vadd.f32 %v1699, %v1871
      %v1873 = vpop.f32.mrf.mxu0
      %v1874 = vadd.f32 %v1701, %v1873
      %1875 = vmatprep.mubr.bf16.mxu0 0
      %1876 = vmatmul.mubr.bf16.gmra.mxu0 %v1563
      %v1877 = vpop.f32.mrf.mxu0
      %v1878 = vadd.f32 %v1705, %v1877
      %v1879 = vpop.f32.mrf.mxu0
      %v1880 = vadd.f32 %v1707, %v1879
      %v1881 = vpop.f32.mrf.mxu0
      %v1882 = vadd.f32 %v1709, %v1881
      %v1883 = vpop.f32.mrf.mxu0
      %v1884 = vadd.f32 %v1711, %v1883
      %1885 = vmatprep.mubr.bf16.mxu0 0
      %1886 = vmatmul.mubr.bf16.gmra.mxu0 %v1566
      %v1887 = vpop.f32.mrf.mxu0
      %v1888 = vadd.f32 %v1715, %v1887
      %v1889 = vpop.f32.mrf.mxu0
      %v1890 = vadd.f32 %v1717, %v1889
      %v1891 = vpop.f32.mrf.mxu0
      %v1892 = vadd.f32 %v1719, %v1891
      %v1893 = vpop.f32.mrf.mxu0
      %v1894 = vadd.f32 %v1721, %v1893
      %1895 = vmatprep.mubr.bf16.mxu0 0
      %1896 = vmatmul.mubr.bf16.gmra.mxu0 %v1569
      %v1897 = vpop.f32.mrf.mxu0
      %v1898 = vadd.f32 %v1725, %v1897
      %v1899 = vpop.f32.mrf.mxu0
      %v1900 = vadd.f32 %v1727, %v1899
      %v1901 = vpop.f32.mrf.mxu0
      %v1902 = vadd.f32 %v1729, %v1901
      %v1903 = vpop.f32.mrf.mxu0
      %v1904 = vadd.f32 %v1731, %v1903
      %1905 = vmatprep.mubr.bf16.mxu0 0
      %1906 = vmatmul.mubr.bf16.gmra.mxu0 %v1572
      %v1907 = vpop.f32.mrf.mxu0
      %v1908 = vadd.f32 %v1735, %v1907
      %v1909 = vpop.f32.mrf.mxu0
      %v1910 = vadd.f32 %v1737, %v1909
      %v1911 = vpop.f32.mrf.mxu0
      %v1912 = vadd.f32 %v1739, %v1911
      %v1913 = vpop.f32.mrf.mxu0
      %v1914 = vadd.f32 %v1741, %v1913
      %1915 = vmatprep.mubr.bf16.mxu0 0
      %1916 = vmatmul.mubr.bf16.gmra.mxu0 %v1575
      %v1917 = vpop.f32.mrf.mxu0
      %v1918 = vadd.f32 %v1745, %v1917
      %v1919 = vpop.f32.mrf.mxu0
      %v1920 = vadd.f32 %v1747, %v1919
      %v1921 = vpop.f32.mrf.mxu0
      %v1922 = vadd.f32 %v1749, %v1921
      %v1923 = vpop.f32.mrf.mxu0
      %v1924 = vadd.f32 %v1751, %v1923
      %1925 = vmatprep.mubr.bf16.mxu0 0
      %1926 = vmatmul.mubr.bf16.gmra.mxu0 %v1578
      %v1927 = vpop.f32.mrf.mxu0
      %v1928 = vadd.f32 %v1755, %v1927
      %v1929 = vpop.f32.mrf.mxu0
      %v1930 = vadd.f32 %v1757, %v1929
      %v1931 = vpop.f32.mrf.mxu0
      %v1932 = vadd.f32 %v1759, %v1931
      %v1933 = vpop.f32.mrf.mxu0
      %v1934 = vadd.f32 %v1761, %v1933
      %1935 = vdwg.mxu0
      %1936 = vmatprep.subr.bf16.mxu0 0
      %1937 = vmatpush1.bf16.msra.mxu0 %v1449
      %1938 = vmatprep.subr.bf16.mxu0 0
      %1939 = vmatpush1.bf16.msra.mxu0 %v1446
      %1940 = vmatprep.subr.bf16.mxu0 0
      %1941 = vmatpush1.bf16.msra.mxu0 %v1443
      %1942 = vmatprep.subr.bf16.mxu0 0
      %1943 = vmatpush1.bf16.msra.mxu0 %v1440
      %1944 = vmatprep.subr.bf16.mxu0 0
      %1945 = vmatpush1.bf16.msra.mxu0 %v1437
      %1946 = vmatprep.subr.bf16.mxu0 0
      %1947 = vmatpush1.bf16.msra.mxu0 %v1434
      %1948 = vmatprep.subr.bf16.mxu0 0
      %1949 = vmatpush1.bf16.msra.mxu0 %v1431
      %1950 = vmatprep.subr.bf16.mxu0 0
      %1951 = vmatpush1.bf16.msra.mxu0 %v1428
      %1952 = vmatprep.subr.bf16.mxu0 0
      %1953 = vmatpush2.bf16.msra.mxu0 %v1473
      %1954 = vmatprep.subr.bf16.mxu0 0
      %1955 = vmatpush2.bf16.msra.mxu0 %v1470
      %1956 = vmatprep.subr.bf16.mxu0 0
      %1957 = vmatpush2.bf16.msra.mxu0 %v1467
      %1958 = vmatprep.subr.bf16.mxu0 0
      %1959 = vmatpush2.bf16.msra.mxu0 %v1464
      %1960 = vmatprep.subr.bf16.mxu0 0
      %1961 = vmatpush2.bf16.msra.mxu0 %v1461
      %1962 = vmatprep.subr.bf16.mxu0 0
      %1963 = vmatpush2.bf16.msra.mxu0 %v1458
      %1964 = vmatprep.subr.bf16.mxu0 0
      %1965 = vmatpush2.bf16.msra.mxu0 %v1455
      %1966 = vmatprep.subr.bf16.mxu0 0
      %1967 = vmatpush2.bf16.msra.mxu0 %v1452
      %1968 = vmatprep.mubr.bf16.mxu0 %v1102
      %1969 = vmatmul.mubr.bf16.gmra.mxu0 %v1101
      %v1970 = vpop.f32.mrf.mxu0
      %v1971 = vadd.f32 %v1232, %v1970
      %v1972 = vpop.f32.mrf.mxu0
      %v1973 = vpop.f32.mrf.mxu0
      %v1974 = vadd.f32 %v1232, %v1973
      %v1975 = vpop.f32.mrf.mxu0
      %1976 = vmatprep.mubr.bf16.mxu0 %v1105
      %1977 = vmatmul.mubr.bf16.gmra.mxu0 %v1104
      %v1978 = vpop.f32.mrf.mxu0
      %v1979 = vadd.f32 %v1232, %v1978
      %v1980 = vpop.f32.mrf.mxu0
      %v1981 = vpop.f32.mrf.mxu0
      %v1982 = vadd.f32 %v1232, %v1981
      %v1983 = vpop.f32.mrf.mxu0
      %1984 = vmatprep.mubr.bf16.mxu0 %v1108
      %1985 = vmatmul.mubr.bf16.gmra.mxu0 %v1107
      %v1986 = vpop.f32.mrf.mxu0
      %v1987 = vadd.f32 %v1232, %v1986
      %v1988 = vpop.f32.mrf.mxu0
      %v1989 = vpop.f32.mrf.mxu0
      %v1990 = vadd.f32 %v1232, %v1989
      %v1991 = vpop.f32.mrf.mxu0
      %1992 = vmatprep.mubr.bf16.mxu0 %v1111
      %1993 = vmatmul.mubr.bf16.gmra.mxu0 %v1110
      %v1994 = vpop.f32.mrf.mxu0
      %v1995 = vadd.f32 %v1232, %v1994
      %v1996 = vpop.f32.mrf.mxu0
      %v1997 = vpop.f32.mrf.mxu0
      %v1998 = vadd.f32 %v1232, %v1997
      %v1999 = vpop.f32.mrf.mxu0
      %2000 = vmatprep.mubr.bf16.mxu0 %v1114
      %2001 = vmatmul.mubr.bf16.gmra.mxu0 %v1113
      %v2002 = vpop.f32.mrf.mxu0
      %v2003 = vadd.f32 %v1232, %v2002
      %v2004 = vpop.f32.mrf.mxu0
      %v2005 = vpop.f32.mrf.mxu0
      %v2006 = vadd.f32 %v1232, %v2005
      %v2007 = vpop.f32.mrf.mxu0
      %2008 = vmatprep.mubr.bf16.mxu0 %v1117
      %2009 = vmatmul.mubr.bf16.gmra.mxu0 %v1116
      %v2010 = vpop.f32.mrf.mxu0
      %v2011 = vadd.f32 %v1232, %v2010
      %v2012 = vpop.f32.mrf.mxu0
      %v2013 = vpop.f32.mrf.mxu0
      %v2014 = vadd.f32 %v1232, %v2013
      %v2015 = vpop.f32.mrf.mxu0
      %2016 = vmatprep.mubr.bf16.mxu0 %v1120
      %2017 = vmatmul.mubr.bf16.gmra.mxu0 %v1119
      %v2018 = vpop.f32.mrf.mxu0
      %v2019 = vadd.f32 %v1232, %v2018
      %v2020 = vpop.f32.mrf.mxu0
      %v2021 = vpop.f32.mrf.mxu0
      %v2022 = vadd.f32 %v1232, %v2021
      %v2023 = vpop.f32.mrf.mxu0
      %2024 = vmatprep.mubr.bf16.mxu0 %v1123
      %2025 = vmatmul.mubr.bf16.gmra.mxu0 %v1122
      %v2026 = vpop.f32.mrf.mxu0
      %v2027 = vadd.f32 %v1232, %v2026
      %v2028 = vpop.f32.mrf.mxu0
      %v2029 = vpop.f32.mrf.mxu0
      %v2030 = vadd.f32 %v1232, %v2029
      %v2031 = vpop.f32.mrf.mxu0
      %2032 = vmatprep.mubr.bf16.mxu0 %v1126
      %2033 = vmatmul.mubr.bf16.gmra.mxu0 %v1125
      %v2034 = vpop.f32.mrf.mxu0
      %v2035 = vadd.f32 %v1232, %v2034
      %v2036 = vpop.f32.mrf.mxu0
      %v2037 = vpop.f32.mrf.mxu0
      %v2038 = vadd.f32 %v1232, %v2037
      %v2039 = vpop.f32.mrf.mxu0
      %2040 = vmatprep.mubr.bf16.mxu0 %v1129
      %2041 = vmatmul.mubr.bf16.gmra.mxu0 %v1128
      %v2042 = vpop.f32.mrf.mxu0
      %v2043 = vadd.f32 %v1232, %v2042
      %v2044 = vpop.f32.mrf.mxu0
      %v2045 = vpop.f32.mrf.mxu0
      %v2046 = vadd.f32 %v1232, %v2045
      %v2047 = vpop.f32.mrf.mxu0
      %2048 = vmatprep.mubr.bf16.mxu0 %v1132
      %2049 = vmatmul.mubr.bf16.gmra.mxu0 %v1131
      %v2050 = vpop.f32.mrf.mxu0
      %v2051 = vadd.f32 %v1232, %v2050
      %v2052 = vpop.f32.mrf.mxu0
      %v2053 = vpop.f32.mrf.mxu0
      %v2054 = vadd.f32 %v1232, %v2053
      %v2055 = vpop.f32.mrf.mxu0
      %2056 = vmatprep.mubr.bf16.mxu0 %v1135
      %2057 = vmatmul.mubr.bf16.gmra.mxu0 %v1134
      %v2058 = vpop.f32.mrf.mxu0
      %v2059 = vadd.f32 %v1232, %v2058
      %v2060 = vpop.f32.mrf.mxu0
      %v2061 = vpop.f32.mrf.mxu0
      %v2062 = vadd.f32 %v1232, %v2061
      %v2063 = vpop.f32.mrf.mxu0
      %2064 = vmatprep.mubr.bf16.mxu0 %v1138
      %2065 = vmatmul.mubr.bf16.gmra.mxu0 %v1137
      %v2066 = vpop.f32.mrf.mxu0
      %v2067 = vadd.f32 %v1232, %v2066
      %v2068 = vpop.f32.mrf.mxu0
      %v2069 = vpop.f32.mrf.mxu0
      %v2070 = vadd.f32 %v1232, %v2069
      %v2071 = vpop.f32.mrf.mxu0
      %2072 = vmatprep.mubr.bf16.mxu0 %v1141
      %2073 = vmatmul.mubr.bf16.gmra.mxu0 %v1140
      %v2074 = vpop.f32.mrf.mxu0
      %v2075 = vadd.f32 %v1232, %v2074
      %v2076 = vpop.f32.mrf.mxu0
      %v2077 = vpop.f32.mrf.mxu0
      %v2078 = vadd.f32 %v1232, %v2077
      %v2079 = vpop.f32.mrf.mxu0
      %2080 = vdwg.mxu0
      %2081 = vmatprep.subr.bf16.mxu0 0
      %2082 = vmatpush1.bf16.msra.mxu0 0
      %2083 = vmatprep.subr.bf16.mxu0 0
      %2084 = vmatpush1.bf16.msra.mxu0 0
      %2085 = vmatprep.subr.bf16.mxu0 0
      %2086 = vmatpush1.bf16.msra.mxu0 0
      %2087 = vmatprep.subr.bf16.mxu0 0
      %2088 = vmatpush1.bf16.msra.mxu0 0
      %2089 = vmatprep.subr.bf16.mxu0 0
      %2090 = vmatpush1.bf16.msra.mxu0 0
      %2091 = vmatprep.subr.bf16.mxu0 0
      %2092 = vmatpush1.bf16.msra.mxu0 %v1588
      %2093 = vmatprep.subr.bf16.mxu0 0
      %2094 = vmatpush1.bf16.msra.mxu0 %v1479
      %2095 = vmatprep.subr.bf16.mxu0 0
      %2096 = vmatpush1.bf16.msra.mxu0 %v1476
      %2097 = vmatprep.subr.bf16.mxu0 0
      %2098 = vmatpush2.bf16.msra.mxu0 0
      %2099 = vmatprep.subr.bf16.mxu0 0
      %2100 = vmatpush2.bf16.msra.mxu0 0
      %2101 = vmatprep.subr.bf16.mxu0 0
      %2102 = vmatpush2.bf16.msra.mxu0 0
      %2103 = vmatprep.subr.bf16.mxu0 0
      %2104 = vmatpush2.bf16.msra.mxu0 0
      %2105 = vmatprep.subr.bf16.mxu0 0
      %2106 = vmatpush2.bf16.msra.mxu0 0
      %2107 = vmatprep.subr.bf16.mxu0 0
      %2108 = vmatpush2.bf16.msra.mxu0 0
      %2109 = vmatprep.subr.bf16.mxu0 0
      %2110 = vmatpush2.bf16.msra.mxu0 0
      %2111 = vmatprep.subr.bf16.mxu0 0
      %2112 = vmatpush2.bf16.msra.mxu0 0
      %2113 = vmatprep.mubr.bf16.mxu0 0
      %2114 = vmatmul.mubr.bf16.gmra.mxu0 %v1539
      %v2115 = vpop.f32.mrf.mxu0
      %v2116 = vadd.f32 %v1971, %v2115
      %v2117 = vpop.f32.mrf.mxu0
      %v2118 = vpop.f32.mrf.mxu0
      %v2119 = vadd.f32 %v1974, %v2118
      %v2120 = vpop.f32.mrf.mxu0
      %2121 = vmatprep.mubr.bf16.mxu0 0
      %2122 = vmatmul.mubr.bf16.gmra.mxu0 %v1542
      %v2123 = vpop.f32.mrf.mxu0
      %v2124 = vadd.f32 %v1979, %v2123
      %v2125 = vpop.f32.mrf.mxu0
      %v2126 = vpop.f32.mrf.mxu0
      %v2127 = vadd.f32 %v1982, %v2126
      %v2128 = vpop.f32.mrf.mxu0
      %2129 = vmatprep.mubr.bf16.mxu0 0
      %2130 = vmatmul.mubr.bf16.gmra.mxu0 %v1545
      %v2131 = vpop.f32.mrf.mxu0
      %v2132 = vadd.f32 %v1987, %v2131
      %v2133 = vpop.f32.mrf.mxu0
      %v2134 = vpop.f32.mrf.mxu0
      %v2135 = vadd.f32 %v1990, %v2134
      %v2136 = vpop.f32.mrf.mxu0
      %2137 = vmatprep.mubr.bf16.mxu0 0
      %2138 = vmatmul.mubr.bf16.gmra.mxu0 %v1548
      %v2139 = vpop.f32.mrf.mxu0
      %v2140 = vadd.f32 %v1995, %v2139
      %v2141 = vpop.f32.mrf.mxu0
      %v2142 = vpop.f32.mrf.mxu0
      %v2143 = vadd.f32 %v1998, %v2142
      %v2144 = vpop.f32.mrf.mxu0
      %2145 = vmatprep.mubr.bf16.mxu0 0
      %2146 = vmatmul.mubr.bf16.gmra.mxu0 %v1551
      %v2147 = vpop.f32.mrf.mxu0
      %v2148 = vadd.f32 %v2003, %v2147
      %v2149 = vpop.f32.mrf.mxu0
      %v2150 = vpop.f32.mrf.mxu0
      %v2151 = vadd.f32 %v2006, %v2150
      %v2152 = vpop.f32.mrf.mxu0
      %2153 = vmatprep.mubr.bf16.mxu0 0
      %2154 = vmatmul.mubr.bf16.gmra.mxu0 %v1554
      %v2155 = vpop.f32.mrf.mxu0
      %v2156 = vadd.f32 %v2011, %v2155
      %v2157 = vpop.f32.mrf.mxu0
      %v2158 = vpop.f32.mrf.mxu0
      %v2159 = vadd.f32 %v2014, %v2158
      %v2160 = vpop.f32.mrf.mxu0
      %2161 = vmatprep.mubr.bf16.mxu0 0
      %2162 = vmatmul.mubr.bf16.gmra.mxu0 %v1557
      %v2163 = vpop.f32.mrf.mxu0
      %v2164 = vadd.f32 %v2019, %v2163
      %v2165 = vpop.f32.mrf.mxu0
      %v2166 = vpop.f32.mrf.mxu0
      %v2167 = vadd.f32 %v2022, %v2166
      %v2168 = vpop.f32.mrf.mxu0
      %2169 = vmatprep.mubr.bf16.mxu0 0
      %2170 = vmatmul.mubr.bf16.gmra.mxu0 %v1560
      %v2171 = vpop.f32.mrf.mxu0
      %v2172 = vadd.f32 %v2027, %v2171
      %v2173 = vpop.f32.mrf.mxu0
      %v2174 = vpop.f32.mrf.mxu0
      %v2175 = vadd.f32 %v2030, %v2174
      %v2176 = vpop.f32.mrf.mxu0
      %2177 = vmatprep.mubr.bf16.mxu0 0
      %2178 = vmatmul.mubr.bf16.gmra.mxu0 %v1563
      %v2179 = vpop.f32.mrf.mxu0
      %v2180 = vadd.f32 %v2035, %v2179
      %v2181 = vpop.f32.mrf.mxu0
      %v2182 = vpop.f32.mrf.mxu0
      %v2183 = vadd.f32 %v2038, %v2182
      %v2184 = vpop.f32.mrf.mxu0
      %2185 = vmatprep.mubr.bf16.mxu0 0
      %2186 = vmatmul.mubr.bf16.gmra.mxu0 %v1566
      %v2187 = vpop.f32.mrf.mxu0
      %v2188 = vadd.f32 %v2043, %v2187
      %v2189 = vpop.f32.mrf.mxu0
      %v2190 = vpop.f32.mrf.mxu0
      %v2191 = vadd.f32 %v2046, %v2190
      %v2192 = vpop.f32.mrf.mxu0
      %2193 = vmatprep.mubr.bf16.mxu0 0
      %2194 = vmatmul.mubr.bf16.gmra.mxu0 %v1569
      %v2195 = vpop.f32.mrf.mxu0
      %v2196 = vadd.f32 %v2051, %v2195
      %v2197 = vpop.f32.mrf.mxu0
      %v2198 = vpop.f32.mrf.mxu0
      %v2199 = vadd.f32 %v2054, %v2198
      %v2200 = vpop.f32.mrf.mxu0
      %2201 = vmatprep.mubr.bf16.mxu0 0
      %2202 = vmatmul.mubr.bf16.gmra.mxu0 %v1572
      %v2203 = vpop.f32.mrf.mxu0
      %v2204 = vadd.f32 %v2059, %v2203
      %v2205 = vpop.f32.mrf.mxu0
      %v2206 = vpop.f32.mrf.mxu0
      %v2207 = vadd.f32 %v2062, %v2206
      %v2208 = vpop.f32.mrf.mxu0
      %2209 = vmatprep.mubr.bf16.mxu0 0
      %2210 = vmatmul.mubr.bf16.gmra.mxu0 %v1575
      %v2211 = vpop.f32.mrf.mxu0
      %v2212 = vadd.f32 %v2067, %v2211
      %v2213 = vpop.f32.mrf.mxu0
      %v2214 = vpop.f32.mrf.mxu0
      %v2215 = vadd.f32 %v2070, %v2214
      %v2216 = vpop.f32.mrf.mxu0
      %2217 = vmatprep.mubr.bf16.mxu0 0
      %2218 = vmatmul.mubr.bf16.gmra.mxu0 %v1578
      %v2219 = vpop.f32.mrf.mxu0
      %v2220 = vadd.f32 %v2075, %v2219
      %v2221 = vpop.f32.mrf.mxu0
      %v2222 = vpop.f32.mrf.mxu0
      %v2223 = vadd.f32 %v2078, %v2222
      %v2224 = vpop.f32.mrf.mxu0
      %2225 = vdwg.mxu0
      %v2226 = vtanh.pop %v1798
      %v2227 = vtanh.pop %v1800
      %v2228 = vtanh.pop %v2116
      %v2229 = vtanh.pop %v1802
      %v2230 = vtanh.pop %v1804
      %v2231 = vtanh.pop %v2119
      %v2232 = vtanh.pop %v1808
      %v2233 = vtanh.pop %v1810
      %v2234 = vtanh.pop %v2124
      %v2235 = vtanh.pop %v1812
      %v2236 = vtanh.pop %v1814
      %v2237 = vtanh.pop %v2127
      %v2238 = vtanh.pop %v1818
      %v2239 = vtanh.pop %v1820
      %v2240 = vtanh.pop %v2132
      %v2241 = vtanh.pop %v1822
      %v2242 = vtanh.pop %v1824
      %v2243 = vtanh.pop %v2135
      %v2244 = vtanh.pop %v1828
      %v2245 = vtanh.pop %v1830
      %v2246 = vtanh.pop %v2140
      %v2247 = vtanh.pop %v1832
      %v2248 = vtanh.pop %v1834
      %v2249 = vtanh.pop %v2143
      %v2250 = vtanh.pop %v1838
      %v2251 = vtanh.pop %v1840
      %v2252 = vtanh.pop %v2148
      %v2253 = vtanh.pop %v1842
      %v2254 = vtanh.pop %v1844
      %v2255 = vtanh.pop %v2151
      %v2256 = vtanh.pop %v1848
      %v2257 = vtanh.pop %v1850
      %v2258 = vtanh.pop %v2156
      %v2259 = vtanh.pop %v1852
      %v2260 = vtanh.pop %v1854
      %v2261 = vtanh.pop %v2159
      %v2262 = vtanh.pop %v1858
      %v2263 = vtanh.pop %v1860
      %v2264 = vtanh.pop %v2164
      %v2265 = vtanh.pop %v1862
      %v2266 = vtanh.pop %v1864
      %v2267 = vtanh.pop %v2167
      %v2268 = vtanh.pop %v1868
      %v2269 = vtanh.pop %v1870
      %v2270 = vtanh.pop %v2172
      %v2271 = vtanh.pop %v1872
      %v2272 = vtanh.pop %v1874
      %v2273 = vtanh.pop %v2175
      %v2274 = vtanh.pop %v1878
      %v2275 = vtanh.pop %v1880
      %v2276 = vtanh.pop %v2180
      %v2277 = vtanh.pop %v1882
      %v2278 = vtanh.pop %v1884
      %v2279 = vtanh.pop %v2183
      %v2280 = vtanh.pop %v1888
      %v2281 = vtanh.pop %v1890
      %v2282 = vtanh.pop %v2188
      %v2283 = vtanh.pop %v1892
      %v2284 = vtanh.pop %v1894
      %v2285 = vtanh.pop %v2191
      %v2286 = vtanh.pop %v1898
      %v2287 = vtanh.pop %v1900
      %v2288 = vtanh.pop %v2196
      %v2289 = vtanh.pop %v1902
      %v2290 = vtanh.pop %v1904
      %v2291 = vtanh.pop %v2199
      %v2292 = vtanh.pop %v1908
      %v2293 = vtanh.pop %v1910
      %v2294 = vtanh.pop %v2204
      %v2295 = vtanh.pop %v1912
      %v2296 = vtanh.pop %v1914
      %v2297 = vtanh.pop %v2207
      %v2298 = vtanh.pop %v1918
      %v2299 = vtanh.pop %v1920
      %v2300 = vtanh.pop %v2212
      %v2301 = vtanh.pop %v1922
      %v2302 = vtanh.pop %v1924
      %v2303 = vtanh.pop %v2215
      %v2304 = vtanh.pop %v1928
      %v2305 = vtanh.pop %v1930
      %v2306 = vtanh.pop %v2220
      %v2307 = vtanh.pop %v1932
      %v2308 = vtanh.pop %v1934
      %v2309 = vtanh.pop %v2223
      %v2310 = vpack.c.bf16 %v2229, %v2226
      %v2311 = vpack.c.bf16 %v2230, %v2227
      %v2312 = vpack.c.bf16 %v2231, %v2228
      %v2313 = vpack.c.bf16 %v2235, %v2232
      %v2314 = vpack.c.bf16 %v2236, %v2233
      %v2315 = vpack.c.bf16 %v2237, %v2234
      %v2316 = vpack.c.bf16 %v2241, %v2238
      %v2317 = vpack.c.bf16 %v2242, %v2239
      %v2318 = vpack.c.bf16 %v2243, %v2240
      %v2319 = vpack.c.bf16 %v2247, %v2244
      %v2320 = vpack.c.bf16 %v2248, %v2245
      %v2321 = vpack.c.bf16 %v2249, %v2246
      %v2322 = vpack.c.bf16 %v2253, %v2250
      %v2323 = vpack.c.bf16 %v2254, %v2251
      %v2324 = vpack.c.bf16 %v2255, %v2252
      %v2325 = vpack.c.bf16 %v2259, %v2256
      %v2326 = vpack.c.bf16 %v2260, %v2257
      %v2327 = vpack.c.bf16 %v2261, %v2258
      %v2328 = vpack.c.bf16 %v2265, %v2262
      %v2329 = vpack.c.bf16 %v2266, %v2263
      %v2330 = vpack.c.bf16 %v2267, %v2264
      %v2331 = vpack.c.bf16 %v2271, %v2268
      %v2332 = vpack.c.bf16 %v2272, %v2269
      %v2333 = vpack.c.bf16 %v2273, %v2270
      %v2334 = vpack.c.bf16 %v2277, %v2274
      %v2335 = vpack.c.bf16 %v2278, %v2275
      %v2336 = vpack.c.bf16 %v2279, %v2276
      %v2337 = vpack.c.bf16 %v2283, %v2280
      %v2338 = vpack.c.bf16 %v2284, %v2281
      %v2339 = vpack.c.bf16 %v2285, %v2282
      %v2340 = vpack.c.bf16 %v2289, %v2286
      %v2341 = vpack.c.bf16 %v2290, %v2287
      %v2342 = vpack.c.bf16 %v2291, %v2288
      %v2343 = vpack.c.bf16 %v2295, %v2292
      %v2344 = vpack.c.bf16 %v2296, %v2293
      %v2345 = vpack.c.bf16 %v2297, %v2294
      %v2346 = vpack.c.bf16 %v2301, %v2298
      %v2347 = vpack.c.bf16 %v2302, %v2299
      %v2348 = vpack.c.bf16 %v2303, %v2300
      %v2349 = vpack.c.bf16 %v2307, %v2304
      %v2350 = vpack.c.bf16 %v2308, %v2305
      %v2351 = vpack.c.bf16 %v2309, %v2306
      %v2352 = vld [vmem:[%s5] sm:$0xff]
      %v2353 = vld [vmem:[%s5 + $0x8] sm:$0xf]
      %v2354 = vld [vmem:[%s5 + $0xc] sm:$0xff]
      %v2355 = vld [vmem:[%s5 + $0x14] sm:$0xf]
      %v2356 = vld [vmem:[%s5 + $0x18] sm:$0xff]
      %v2357 = vld [vmem:[%s5 + $0x20] sm:$0xf]
      %v2358 = vld [vmem:[%s5 + $0x24] sm:$0xff]
      %v2359 = vld [vmem:[%s5 + $0x2c] sm:$0xf]
      %v2360 = vld [vmem:[%s5 + $0x30] sm:$0xff]
      %v2361 = vld [vmem:[%s5 + $0x38] sm:$0xf]
      %v2362 = vld [vmem:[%s5 + $0x3c] sm:$0xff]
      %v2363 = vld [vmem:[%s5 + $0x44] sm:$0xf]
      %v2364 = vld [vmem:[%s5 + $0x48] sm:$0xff]
      %v2365 = vld [vmem:[%s5 + $0x50] sm:$0xf]
      %v2366 = vld [vmem:[%s5 + $0x54] sm:$0xff]
      %v2367 = vld [vmem:[%s5 + $0x5c] sm:$0xf]
      %v2368 = vld [vmem:[%s5 + $0x60] sm:$0xff]
      %v2369 = vld [vmem:[%s5 + $0x68] sm:$0xf]
      %v2370 = vld [vmem:[%s5 + $0x6c] sm:$0xff]
      %v2371 = vld [vmem:[%s5 + $0x74] sm:$0xf]
      %v2372 = vld [vmem:[%s5 + $0x78] sm:$0xff]
      %v2373 = vld [vmem:[%s5 + $0x80] sm:$0xf]
      %v2374 = vld [vmem:[%s5 + $0x84] sm:$0xff]
      %v2375 = vld [vmem:[%s5 + $0x8c] sm:$0xf]
      %v2376 = vld [vmem:[%s5 + $0x90] sm:$0xff]
      %v2377 = vld [vmem:[%s5 + $0x98] sm:$0xf]
      %v2378 = vld [vmem:[%s5 + $0x9c] sm:$0xff]
      %v2379 = vld [vmem:[%s5 + $0xa4] sm:$0xf]
      %v2380 = vld [vmem:[%s5 + $0xa8] sm:$0xff]
      %v2381 = vld [vmem:[%s5 + $0xb0] sm:$0xf]
      %v2382 = vld [vmem:[%s5 + $0xb4] sm:$0xff]
      %v2383 = vld [vmem:[%s5 + $0xbc] sm:$0xf]
      %v2384 = vld [vmem:[%s5 + $0xc0] sm:$0xff]
      %v2385 = vld [vmem:[%s5 + $0xc8] sm:$0xf]
      %v2386 = vld [vmem:[%s5 + $0xcc] sm:$0xff]
      %v2387 = vld [vmem:[%s5 + $0xd4] sm:$0xf]
      %v2388 = vld [vmem:[%s5 + $0xd8] sm:$0xff]
      %v2389 = vld [vmem:[%s5 + $0xe0] sm:$0xf]
      %v2390 = vld [vmem:[%s5 + $0xe4] sm:$0xff]
      %v2391 = vld [vmem:[%s5 + $0xec] sm:$0xf]
      %v2392 = vld [vmem:[%s5 + $0xf0] sm:$0xff]
      %v2393 = vld [vmem:[%s5 + $0xf8] sm:$0xf]
      %v2394 = vld [vmem:[%s5 + $0xfc] sm:$0xff]
      %v2395 = vld [vmem:[%s5 + $0x104] sm:$0xf]
      %v2396 = vld [vmem:[%s5 + $0x108] sm:$0xff]
      %v2397 = vld [vmem:[%s5 + $0x110] sm:$0xf]
      %v2398 = vld [vmem:[%s5 + $0x114] sm:$0xff]
      %v2399 = vld [vmem:[%s5 + $0x11c] sm:$0xf]
      %v2400 = vld [vmem:[%s5 + $0x120] sm:$0xff]
      %v2401 = vld [vmem:[%s5 + $0x128] sm:$0xf]
      %v2402 = vld [vmem:[%s5 + $0x12c] sm:$0xff]
      %v2403 = vld [vmem:[%s5 + $0x134] sm:$0xf]
      %v2404 = vld [vmem:[%s5 + $0x138] sm:$0xff]
      %v2405 = vld [vmem:[%s5 + $0x140] sm:$0xf]
      %v2406 = vld [vmem:[%s5 + $0x144] sm:$0xff]
      %v2407 = vld [vmem:[%s5 + $0x14c] sm:$0xf]
      %v2408 = vld [vmem:[%s5 + $0x150] sm:$0xff]
      %v2409 = vld [vmem:[%s5 + $0x158] sm:$0xf]
      %v2410 = vld [vmem:[%s5 + $0x15c] sm:$0xff]
      %v2411 = vld [vmem:[%s5 + $0x164] sm:$0xf]
      %v2412 = vld [vmem:[%s5 + $0x168] sm:$0xff]
      %v2413 = vld [vmem:[%s5 + $0x170] sm:$0xf]
      %v2414 = vld [vmem:[%s5 + $0x174] sm:$0xff]
      %v2415 = vld [vmem:[%s5 + $0x17c] sm:$0xf]
      %v2416 = vld [vmem:[%s5 + $0x180] sm:$0xff]
      %v2417 = vld [vmem:[%s5 + $0x188] sm:$0xf]
      %v2418 = vld [vmem:[%s5 + $0x18c] sm:$0xff]
      %v2419 = vld [vmem:[%s5 + $0x194] sm:$0xf]
      %v2420 = vld [vmem:[%s5 + $0x198] sm:$0xff]
      %v2421 = vld [vmem:[%s5 + $0x1a0] sm:$0xf]
      %v2422 = vld [vmem:[%s5 + $0x1a4] sm:$0xff]
      %v2423 = vld [vmem:[%s5 + $0x1ac] sm:$0xf]
      %v2424 = vld [vmem:[%s5 + $0x1b0] sm:$0xff]
      %v2425 = vld [vmem:[%s5 + $0x1b8] sm:$0xf]
      %v2426 = vld [vmem:[%s5 + $0x1bc] sm:$0x33]
      %v2427 = vld [vmem:[%s5 + $0x1c4] sm:$0x3]
      %v2428 = vld [vmem:[%s6] sm:$0x7]
      %v2430 = vlaneseq
      %v2431 = vshrl.u32 %v2430, 7
      %v2432 = vsub.s32 0, %v2431
      %v2433 = vrot.slane %v2428, %v2432
      %v2434 = vlaneseq
      %v2435 = vshrl.u32 %v2434, 7
      %v2436 = vsub.s32 1, %v2435
      %v2437 = vrot.slane %v2428, %v2436
      %v2438 = vlaneseq
      %v2439 = vshrl.u32 %v2438, 7
      %v2440 = vsub.s32 2, %v2439
      %v2441 = vrot.slane %v2428, %v2440
      %v2521 = vunpack.c.l.b16 %v2352
      %v2522 = vunpack.c.h.b16 %v2352
      %v2523 = vunpack.c.l.b16 %v2353
      %v2524 = vunpack.c.l.b16 %v2354
      %v2525 = vunpack.c.h.b16 %v2354
      %v2526 = vunpack.c.l.b16 %v2355
      %v2527 = vunpack.c.l.b16 %v2356
      %v2528 = vunpack.c.h.b16 %v2356
      %v2529 = vunpack.c.l.b16 %v2357
      %v2530 = vunpack.c.l.b16 %v2358
      %v2531 = vunpack.c.h.b16 %v2358
      %v2532 = vunpack.c.l.b16 %v2359
      %v2533 = vunpack.c.l.b16 %v2360
      %v2534 = vunpack.c.h.b16 %v2360
      %v2535 = vunpack.c.l.b16 %v2361
      %v2536 = vunpack.c.l.b16 %v2362
      %v2537 = vunpack.c.h.b16 %v2362
      %v2538 = vunpack.c.l.b16 %v2363
      %v2539 = vunpack.c.l.b16 %v2364
      %v2540 = vunpack.c.h.b16 %v2364
      %v2541 = vunpack.c.l.b16 %v2365
      %v2542 = vunpack.c.l.b16 %v2366
      %v2543 = vunpack.c.h.b16 %v2366
      %v2544 = vunpack.c.l.b16 %v2367
      %v2545 = vunpack.c.l.b16 %v2368
      %v2546 = vunpack.c.h.b16 %v2368
      %v2547 = vunpack.c.l.b16 %v2369
      %v2548 = vunpack.c.l.b16 %v2370
      %v2549 = vunpack.c.h.b16 %v2370
      %v2550 = vunpack.c.l.b16 %v2371
      %v2551 = vunpack.c.l.b16 %v2372
      %v2552 = vunpack.c.h.b16 %v2372
      %v2553 = vunpack.c.l.b16 %v2373
      %v2554 = vunpack.c.l.b16 %v2374
      %v2555 = vunpack.c.h.b16 %v2374
      %v2556 = vunpack.c.l.b16 %v2375
      %v2557 = vunpack.c.l.b16 %v2376
      %v2558 = vunpack.c.h.b16 %v2376
      %v2559 = vunpack.c.l.b16 %v2377
      %v2560 = vunpack.c.l.b16 %v2378
      %v2561 = vunpack.c.h.b16 %v2378
      %v2562 = vunpack.c.l.b16 %v2379
      %v2563 = vunpack.c.l.b16 %v2380
      %v2564 = vunpack.c.h.b16 %v2380
      %v2565 = vunpack.c.l.b16 %v2381
      %v2566 = vunpack.c.l.b16 %v2382
      %v2567 = vunpack.c.h.b16 %v2382
      %v2568 = vunpack.c.l.b16 %v2383
      %v2569 = vunpack.c.l.b16 %v2384
      %v2570 = vunpack.c.h.b16 %v2384
      %v2571 = vunpack.c.l.b16 %v2385
      %v2572 = vunpack.c.l.b16 %v2386
      %v2573 = vunpack.c.h.b16 %v2386
      %v2574 = vunpack.c.l.b16 %v2387
      %v2575 = vunpack.c.l.b16 %v2388
      %v2576 = vunpack.c.h.b16 %v2388
      %v2577 = vunpack.c.l.b16 %v2389
      %v2578 = vunpack.c.l.b16 %v2390
      %v2579 = vunpack.c.h.b16 %v2390
      %v2580 = vunpack.c.l.b16 %v2391
      %v2581 = vunpack.c.l.b16 %v2392
      %v2582 = vunpack.c.h.b16 %v2392
      %v2583 = vunpack.c.l.b16 %v2393
      %v2584 = vunpack.c.l.b16 %v2394
      %v2585 = vunpack.c.h.b16 %v2394
      %v2586 = vunpack.c.l.b16 %v2395
      %v2587 = vunpack.c.l.b16 %v2396
      %v2588 = vunpack.c.h.b16 %v2396
      %v2589 = vunpack.c.l.b16 %v2397
      %v2590 = vunpack.c.l.b16 %v2398
      %v2591 = vunpack.c.h.b16 %v2398
      %v2592 = vunpack.c.l.b16 %v2399
      %v2593 = vunpack.c.l.b16 %v2400
      %v2594 = vunpack.c.h.b16 %v2400
      %v2595 = vunpack.c.l.b16 %v2401
      %v2596 = vunpack.c.l.b16 %v2402
      %v2597 = vunpack.c.h.b16 %v2402
      %v2598 = vunpack.c.l.b16 %v2403
      %v2599 = vunpack.c.l.b16 %v2404
      %v2600 = vunpack.c.h.b16 %v2404
      %v2601 = vunpack.c.l.b16 %v2405
      %v2602 = vunpack.c.l.b16 %v2406
      %v2603 = vunpack.c.h.b16 %v2406
      %v2604 = vunpack.c.l.b16 %v2407
      %v2605 = vunpack.c.l.b16 %v2408
      %v2606 = vunpack.c.h.b16 %v2408
      %v2607 = vunpack.c.l.b16 %v2409
      %v2608 = vunpack.c.l.b16 %v2410
      %v2609 = vunpack.c.h.b16 %v2410
      %v2610 = vunpack.c.l.b16 %v2411
      %v2611 = vunpack.c.l.b16 %v2412
      %v2612 = vunpack.c.h.b16 %v2412
      %v2613 = vunpack.c.l.b16 %v2413
      %v2614 = vunpack.c.l.b16 %v2414
      %v2615 = vunpack.c.h.b16 %v2414
      %v2616 = vunpack.c.l.b16 %v2415
      %v2617 = vunpack.c.l.b16 %v2416
      %v2618 = vunpack.c.h.b16 %v2416
      %v2619 = vunpack.c.l.b16 %v2417
      %v2620 = vunpack.c.l.b16 %v2418
      %v2621 = vunpack.c.h.b16 %v2418
      %v2622 = vunpack.c.l.b16 %v2419
      %v2623 = vunpack.c.l.b16 %v2420
      %v2624 = vunpack.c.h.b16 %v2420
      %v2625 = vunpack.c.l.b16 %v2421
      %v2626 = vunpack.c.l.b16 %v2422
      %v2627 = vunpack.c.h.b16 %v2422
      %v2628 = vunpack.c.l.b16 %v2423
      %v2629 = vunpack.c.l.b16 %v2424
      %v2630 = vunpack.c.h.b16 %v2424
      %v2631 = vunpack.c.l.b16 %v2425
      %v2632 = vunpack.c.l.b16 %v2426
      %v2633 = vunpack.c.h.b16 %v2426
      %v2634 = vunpack.c.l.b16 %v2427
      %v2635 = vpack.c.b16 %v2524, %v2521
      %v2636 = vpack.c.b16 %v2525, %v2522
      %v2637 = vpack.c.b16 %v2526, %v2523
      %v2638 = vpack.c.b16 %v2530, %v2527
      %v2639 = vpack.c.b16 %v2531, %v2528
      %v2640 = vpack.c.b16 %v2532, %v2529
      %v2641 = vpack.c.b16 %v2536, %v2533
      %v2642 = vpack.c.b16 %v2537, %v2534
      %v2643 = vpack.c.b16 %v2538, %v2535
      %v2644 = vpack.c.b16 %v2542, %v2539
      %v2645 = vpack.c.b16 %v2543, %v2540
      %v2646 = vpack.c.b16 %v2544, %v2541
      %v2647 = vpack.c.b16 %v2548, %v2545
      %v2648 = vpack.c.b16 %v2549, %v2546
      %v2649 = vpack.c.b16 %v2550, %v2547
      %v2650 = vpack.c.b16 %v2554, %v2551
      %v2651 = vpack.c.b16 %v2555, %v2552
      %v2652 = vpack.c.b16 %v2556, %v2553
      %v2653 = vpack.c.b16 %v2560, %v2557
      %v2654 = vpack.c.b16 %v2561, %v2558
      %v2655 = vpack.c.b16 %v2562, %v2559
      %v2656 = vpack.c.b16 %v2566, %v2563
      %v2657 = vpack.c.b16 %v2567, %v2564
      %v2658 = vpack.c.b16 %v2568, %v2565
      %v2659 = vpack.c.b16 %v2572, %v2569
      %v2660 = vpack.c.b16 %v2573, %v2570
      %v2661 = vpack.c.b16 %v2574, %v2571
      %v2662 = vpack.c.b16 %v2578, %v2575
      %v2663 = vpack.c.b16 %v2579, %v2576
      %v2664 = vpack.c.b16 %v2580, %v2577
      %v2665 = vpack.c.b16 %v2584, %v2581
      %v2666 = vpack.c.b16 %v2585, %v2582
      %v2667 = vpack.c.b16 %v2586, %v2583
      %v2668 = vpack.c.b16 %v2590, %v2587
      %v2669 = vpack.c.b16 %v2591, %v2588
      %v2670 = vpack.c.b16 %v2592, %v2589
      %v2671 = vpack.c.b16 %v2596, %v2593
      %v2672 = vpack.c.b16 %v2597, %v2594
      %v2673 = vpack.c.b16 %v2598, %v2595
      %v2674 = vpack.c.b16 %v2602, %v2599
      %v2675 = vpack.c.b16 %v2603, %v2600
      %v2676 = vpack.c.b16 %v2604, %v2601
      %v2677 = vpack.c.b16 %v2608, %v2605
      %v2678 = vpack.c.b16 %v2609, %v2606
      %v2679 = vpack.c.b16 %v2610, %v2607
      %v2680 = vpack.c.b16 %v2614, %v2611
      %v2681 = vpack.c.b16 %v2615, %v2612
      %v2682 = vpack.c.b16 %v2616, %v2613
      %v2683 = vpack.c.b16 %v2620, %v2617
      %v2684 = vpack.c.b16 %v2621, %v2618
      %v2685 = vpack.c.b16 %v2622, %v2619
      %v2686 = vpack.c.b16 %v2626, %v2623
      %v2687 = vpack.c.b16 %v2627, %v2624
      %v2688 = vpack.c.b16 %v2628, %v2625
      %v2689 = vpack.c.b16 %v2632, %v2629
      %v2690 = vpack.c.b16 %v2633, %v2630
      %v2691 = vpack.c.b16 %v2634, %v2631
      %v2747 = vsel %vm1537, %v2312, 0
      %v2750 = vsel %vm1537, %v2315, 0
      %v2753 = vsel %vm1537, %v2318, 0
      %v2756 = vsel %vm1537, %v2321, 0
      %v2759 = vsel %vm1537, %v2324, 0
      %v2762 = vsel %vm1537, %v2327, 0
      %v2765 = vsel %vm1537, %v2330, 0
      %v2768 = vsel %vm1537, %v2333, 0
      %v2771 = vsel %vm1537, %v2336, 0
      %v2774 = vsel %vm1537, %v2339, 0
      %v2777 = vsel %vm1537, %v2342, 0
      %v2780 = vsel %vm1537, %v2345, 0
      %v2783 = vsel %vm1537, %v2348, 0
      %v2786 = vsel %vm1537, %v2351, 0
      %v2789 = vsel %vm1580, %v2689, 0
      %v2792 = vsel %vm1580, %v2690, 0
      %v2795 = vsel %vm1580, %v2691, 0
      %2797 = vmatprep.subr.bf16.mxu0 %v2657
      %2798 = vmatpush1.bf16.msra.mxu0 %v2656
      %2799 = vmatprep.subr.bf16.mxu0 %v2654
      %2800 = vmatpush1.bf16.msra.mxu0 %v2653
      %2801 = vmatprep.subr.bf16.mxu0 %v2651
      %2802 = vmatpush1.bf16.msra.mxu0 %v2650
      %2803 = vmatprep.subr.bf16.mxu0 %v2648
      %2804 = vmatpush1.bf16.msra.mxu0 %v2647
      %2805 = vmatprep.subr.bf16.mxu0 %v2645
      %2806 = vmatpush1.bf16.msra.mxu0 %v2644
      %2807 = vmatprep.subr.bf16.mxu0 %v2642
      %2808 = vmatpush1.bf16.msra.mxu0 %v2641
      %2809 = vmatprep.subr.bf16.mxu0 %v2639
      %2810 = vmatpush1.bf16.msra.mxu0 %v2638
      %2811 = vmatprep.subr.bf16.mxu0 %v2636
      %2812 = vmatpush1.bf16.msra.mxu0 %v2635
      %2813 = vmatprep.subr.bf16.mxu0 %v2681
      %2814 = vmatpush2.bf16.msra.mxu0 %v2680
      %2815 = vmatprep.subr.bf16.mxu0 %v2678
      %2816 = vmatpush2.bf16.msra.mxu0 %v2677
      %2817 = vmatprep.subr.bf16.mxu0 %v2675
      %2818 = vmatpush2.bf16.msra.mxu0 %v2674
      %2819 = vmatprep.subr.bf16.mxu0 %v2672
      %2820 = vmatpush2.bf16.msra.mxu0 %v2671
      %2821 = vmatprep.subr.bf16.mxu0 %v2669
      %2822 = vmatpush2.bf16.msra.mxu0 %v2668
      %2823 = vmatprep.subr.bf16.mxu0 %v2666
      %2824 = vmatpush2.bf16.msra.mxu0 %v2665
      %2825 = vmatprep.subr.bf16.mxu0 %v2663
      %2826 = vmatpush2.bf16.msra.mxu0 %v2662
      %2827 = vmatprep.subr.bf16.mxu0 %v2660
      %2828 = vmatpush2.bf16.msra.mxu0 %v2659
      %2829 = vmatprep.mubr.bf16.mxu0 %v2311
      %2830 = vmatmul.mubr.bf16.gmra.mxu0 %v2310
      %v2831 = vpop.f32.mrf.mxu0
      %v2832 = vadd.f32 %v2433, %v2831
      %v2833 = vpop.f32.mrf.mxu0
      %v2834 = vadd.f32 %v2437, %v2833
      %v2835 = vpop.f32.mrf.mxu0
      %v2836 = vadd.f32 %v2433, %v2835
      %v2837 = vpop.f32.mrf.mxu0
      %v2838 = vadd.f32 %v2437, %v2837
      %2839 = vmatprep.mubr.bf16.mxu0 %v2314
      %2840 = vmatmul.mubr.bf16.gmra.mxu0 %v2313
      %v2841 = vpop.f32.mrf.mxu0
      %v2842 = vadd.f32 %v2433, %v2841
      %v2843 = vpop.f32.mrf.mxu0
      %v2844 = vadd.f32 %v2437, %v2843
      %v2845 = vpop.f32.mrf.mxu0
      %v2846 = vadd.f32 %v2433, %v2845
      %v2847 = vpop.f32.mrf.mxu0
      %v2848 = vadd.f32 %v2437, %v2847
      %2849 = vmatprep.mubr.bf16.mxu0 %v2317
      %2850 = vmatmul.mubr.bf16.gmra.mxu0 %v2316
      %v2851 = vpop.f32.mrf.mxu0
      %v2852 = vadd.f32 %v2433, %v2851
      %v2853 = vpop.f32.mrf.mxu0
      %v2854 = vadd.f32 %v2437, %v2853
      %v2855 = vpop.f32.mrf.mxu0
      %v2856 = vadd.f32 %v2433, %v2855
      %v2857 = vpop.f32.mrf.mxu0
      %v2858 = vadd.f32 %v2437, %v2857
      %2859 = vmatprep.mubr.bf16.mxu0 %v2320
      %2860 = vmatmul.mubr.bf16.gmra.mxu0 %v2319
      %v2861 = vpop.f32.mrf.mxu0
      %v2862 = vadd.f32 %v2433, %v2861
      %v2863 = vpop.f32.mrf.mxu0
      %v2864 = vadd.f32 %v2437, %v2863
      %v2865 = vpop.f32.mrf.mxu0
      %v2866 = vadd.f32 %v2433, %v2865
      %v2867 = vpop.f32.mrf.mxu0
      %v2868 = vadd.f32 %v2437, %v2867
      %2869 = vmatprep.mubr.bf16.mxu0 %v2323
      %2870 = vmatmul.mubr.bf16.gmra.mxu0 %v2322
      %v2871 = vpop.f32.mrf.mxu0
      %v2872 = vadd.f32 %v2433, %v2871
      %v2873 = vpop.f32.mrf.mxu0
      %v2874 = vadd.f32 %v2437, %v2873
      %v2875 = vpop.f32.mrf.mxu0
      %v2876 = vadd.f32 %v2433, %v2875
      %v2877 = vpop.f32.mrf.mxu0
      %v2878 = vadd.f32 %v2437, %v2877
      %2879 = vmatprep.mubr.bf16.mxu0 %v2326
      %2880 = vmatmul.mubr.bf16.gmra.mxu0 %v2325
      %v2881 = vpop.f32.mrf.mxu0
      %v2882 = vadd.f32 %v2433, %v2881
      %v2883 = vpop.f32.mrf.mxu0
      %v2884 = vadd.f32 %v2437, %v2883
      %v2885 = vpop.f32.mrf.mxu0
      %v2886 = vadd.f32 %v2433, %v2885
      %v2887 = vpop.f32.mrf.mxu0
      %v2888 = vadd.f32 %v2437, %v2887
      %2889 = vmatprep.mubr.bf16.mxu0 %v2329
      %2890 = vmatmul.mubr.bf16.gmra.mxu0 %v2328
      %v2891 = vpop.f32.mrf.mxu0
      %v2892 = vadd.f32 %v2433, %v2891
      %v2893 = vpop.f32.mrf.mxu0
      %v2894 = vadd.f32 %v2437, %v2893
      %v2895 = vpop.f32.mrf.mxu0
      %v2896 = vadd.f32 %v2433, %v2895
      %v2897 = vpop.f32.mrf.mxu0
      %v2898 = vadd.f32 %v2437, %v2897
      %2899 = vmatprep.mubr.bf16.mxu0 %v2332
      %2900 = vmatmul.mubr.bf16.gmra.mxu0 %v2331
      %v2901 = vpop.f32.mrf.mxu0
      %v2902 = vadd.f32 %v2433, %v2901
      %v2903 = vpop.f32.mrf.mxu0
      %v2904 = vadd.f32 %v2437, %v2903
      %v2905 = vpop.f32.mrf.mxu0
      %v2906 = vadd.f32 %v2433, %v2905
      %v2907 = vpop.f32.mrf.mxu0
      %v2908 = vadd.f32 %v2437, %v2907
      %2909 = vmatprep.mubr.bf16.mxu0 %v2335
      %2910 = vmatmul.mubr.bf16.gmra.mxu0 %v2334
      %v2911 = vpop.f32.mrf.mxu0
      %v2912 = vadd.f32 %v2433, %v2911
      %v2913 = vpop.f32.mrf.mxu0
      %v2914 = vadd.f32 %v2437, %v2913
      %v2915 = vpop.f32.mrf.mxu0
      %v2916 = vadd.f32 %v2433, %v2915
      %v2917 = vpop.f32.mrf.mxu0
      %v2918 = vadd.f32 %v2437, %v2917
      %2919 = vmatprep.mubr.bf16.mxu0 %v2338
      %2920 = vmatmul.mubr.bf16.gmra.mxu0 %v2337
      %v2921 = vpop.f32.mrf.mxu0
      %v2922 = vadd.f32 %v2433, %v2921
      %v2923 = vpop.f32.mrf.mxu0
      %v2924 = vadd.f32 %v2437, %v2923
      %v2925 = vpop.f32.mrf.mxu0
      %v2926 = vadd.f32 %v2433, %v2925
      %v2927 = vpop.f32.mrf.mxu0
      %v2928 = vadd.f32 %v2437, %v2927
      %2929 = vmatprep.mubr.bf16.mxu0 %v2341
      %2930 = vmatmul.mubr.bf16.gmra.mxu0 %v2340
      %v2931 = vpop.f32.mrf.mxu0
      %v2932 = vadd.f32 %v2433, %v2931
      %v2933 = vpop.f32.mrf.mxu0
      %v2934 = vadd.f32 %v2437, %v2933
      %v2935 = vpop.f32.mrf.mxu0
      %v2936 = vadd.f32 %v2433, %v2935
      %v2937 = vpop.f32.mrf.mxu0
      %v2938 = vadd.f32 %v2437, %v2937
      %2939 = vmatprep.mubr.bf16.mxu0 %v2344
      %2940 = vmatmul.mubr.bf16.gmra.mxu0 %v2343
      %v2941 = vpop.f32.mrf.mxu0
      %v2942 = vadd.f32 %v2433, %v2941
      %v2943 = vpop.f32.mrf.mxu0
      %v2944 = vadd.f32 %v2437, %v2943
      %v2945 = vpop.f32.mrf.mxu0
      %v2946 = vadd.f32 %v2433, %v2945
      %v2947 = vpop.f32.mrf.mxu0
      %v2948 = vadd.f32 %v2437, %v2947
      %2949 = vmatprep.mubr.bf16.mxu0 %v2347
      %2950 = vmatmul.mubr.bf16.gmra.mxu0 %v2346
      %v2951 = vpop.f32.mrf.mxu0
      %v2952 = vadd.f32 %v2433, %v2951
      %v2953 = vpop.f32.mrf.mxu0
      %v2954 = vadd.f32 %v2437, %v2953
      %v2955 = vpop.f32.mrf.mxu0
      %v2956 = vadd.f32 %v2433, %v2955
      %v2957 = vpop.f32.mrf.mxu0
      %v2958 = vadd.f32 %v2437, %v2957
      %2959 = vmatprep.mubr.bf16.mxu0 %v2350
      %2960 = vmatmul.mubr.bf16.gmra.mxu0 %v2349
      %v2961 = vpop.f32.mrf.mxu0
      %v2962 = vadd.f32 %v2433, %v2961
      %v2963 = vpop.f32.mrf.mxu0
      %v2964 = vadd.f32 %v2437, %v2963
      %v2965 = vpop.f32.mrf.mxu0
      %v2966 = vadd.f32 %v2433, %v2965
      %v2967 = vpop.f32.mrf.mxu0
      %v2968 = vadd.f32 %v2437, %v2967
      %2969 = vdwg.mxu0
      %2970 = vmatprep.subr.bf16.mxu0 0
      %2971 = vmatpush1.bf16.msra.mxu0 0
      %2972 = vmatprep.subr.bf16.mxu0 0
      %2973 = vmatpush1.bf16.msra.mxu0 0
      %2974 = vmatprep.subr.bf16.mxu0 0
      %2975 = vmatpush1.bf16.msra.mxu0 0
      %2976 = vmatprep.subr.bf16.mxu0 0
      %2977 = vmatpush1.bf16.msra.mxu0 0
      %2978 = vmatprep.subr.bf16.mxu0 0
      %2979 = vmatpush1.bf16.msra.mxu0 0
      %2980 = vmatprep.subr.bf16.mxu0 %v2792
      %2981 = vmatpush1.bf16.msra.mxu0 %v2789
      %2982 = vmatprep.subr.bf16.mxu0 %v2687
      %2983 = vmatpush1.bf16.msra.mxu0 %v2686
      %2984 = vmatprep.subr.bf16.mxu0 %v2684
      %2985 = vmatpush1.bf16.msra.mxu0 %v2683
      %2986 = vmatprep.subr.bf16.mxu0 0
      %2987 = vmatpush2.bf16.msra.mxu0 0
      %2988 = vmatprep.subr.bf16.mxu0 0
      %2989 = vmatpush2.bf16.msra.mxu0 0
      %2990 = vmatprep.subr.bf16.mxu0 0
      %2991 = vmatpush2.bf16.msra.mxu0 0
      %2992 = vmatprep.subr.bf16.mxu0 0
      %2993 = vmatpush2.bf16.msra.mxu0 0
      %2994 = vmatprep.subr.bf16.mxu0 0
      %2995 = vmatpush2.bf16.msra.mxu0 0
      %2996 = vmatprep.subr.bf16.mxu0 0
      %2997 = vmatpush2.bf16.msra.mxu0 0
      %2998 = vmatprep.subr.bf16.mxu0 0
      %2999 = vmatpush2.bf16.msra.mxu0 0
      %3000 = vmatprep.subr.bf16.mxu0 0
      %3001 = vmatpush2.bf16.msra.mxu0 0
      %3002 = vmatprep.mubr.bf16.mxu0 0
      %3003 = vmatmul.mubr.bf16.gmra.mxu0 %v2747
      %v3004 = vpop.f32.mrf.mxu0
      %v3005 = vadd.f32 %v2832, %v3004
      %v3006 = vpop.f32.mrf.mxu0
      %v3007 = vadd.f32 %v2834, %v3006
      %v3008 = vpop.f32.mrf.mxu0
      %v3009 = vadd.f32 %v2836, %v3008
      %v3010 = vpop.f32.mrf.mxu0
      %v3011 = vadd.f32 %v2838, %v3010
      %3012 = vmatprep.mubr.bf16.mxu0 0
      %3013 = vmatmul.mubr.bf16.gmra.mxu0 %v2750
      %v3014 = vpop.f32.mrf.mxu0
      %v3015 = vadd.f32 %v2842, %v3014
      %v3016 = vpop.f32.mrf.mxu0
      %v3017 = vadd.f32 %v2844, %v3016
      %v3018 = vpop.f32.mrf.mxu0
      %v3019 = vadd.f32 %v2846, %v3018
      %v3020 = vpop.f32.mrf.mxu0
      %v3021 = vadd.f32 %v2848, %v3020
      %3022 = vmatprep.mubr.bf16.mxu0 0
      %3023 = vmatmul.mubr.bf16.gmra.mxu0 %v2753
      %v3024 = vpop.f32.mrf.mxu0
      %v3025 = vadd.f32 %v2852, %v3024
      %v3026 = vpop.f32.mrf.mxu0
      %v3027 = vadd.f32 %v2854, %v3026
      %v3028 = vpop.f32.mrf.mxu0
      %v3029 = vadd.f32 %v2856, %v3028
      %v3030 = vpop.f32.mrf.mxu0
      %v3031 = vadd.f32 %v2858, %v3030
      %3032 = vmatprep.mubr.bf16.mxu0 0
      %3033 = vmatmul.mubr.bf16.gmra.mxu0 %v2756
      %v3034 = vpop.f32.mrf.mxu0
      %v3035 = vadd.f32 %v2862, %v3034
      %v3036 = vpop.f32.mrf.mxu0
      %v3037 = vadd.f32 %v2864, %v3036
      %v3038 = vpop.f32.mrf.mxu0
      %v3039 = vadd.f32 %v2866, %v3038
      %v3040 = vpop.f32.mrf.mxu0
      %v3041 = vadd.f32 %v2868, %v3040
      %3042 = vmatprep.mubr.bf16.mxu0 0
      %3043 = vmatmul.mubr.bf16.gmra.mxu0 %v2759
      %v3044 = vpop.f32.mrf.mxu0
      %v3045 = vadd.f32 %v2872, %v3044
      %v3046 = vpop.f32.mrf.mxu0
      %v3047 = vadd.f32 %v2874, %v3046
      %v3048 = vpop.f32.mrf.mxu0
      %v3049 = vadd.f32 %v2876, %v3048
      %v3050 = vpop.f32.mrf.mxu0
      %v3051 = vadd.f32 %v2878, %v3050
      %3052 = vmatprep.mubr.bf16.mxu0 0
      %3053 = vmatmul.mubr.bf16.gmra.mxu0 %v2762
      %v3054 = vpop.f32.mrf.mxu0
      %v3055 = vadd.f32 %v2882, %v3054
      %v3056 = vpop.f32.mrf.mxu0
      %v3057 = vadd.f32 %v2884, %v3056
      %v3058 = vpop.f32.mrf.mxu0
      %v3059 = vadd.f32 %v2886, %v3058
      %v3060 = vpop.f32.mrf.mxu0
      %v3061 = vadd.f32 %v2888, %v3060
      %3062 = vmatprep.mubr.bf16.mxu0 0
      %3063 = vmatmul.mubr.bf16.gmra.mxu0 %v2765
      %v3064 = vpop.f32.mrf.mxu0
      %v3065 = vadd.f32 %v2892, %v3064
      %v3066 = vpop.f32.mrf.mxu0
      %v3067 = vadd.f32 %v2894, %v3066
      %v3068 = vpop.f32.mrf.mxu0
      %v3069 = vadd.f32 %v2896, %v3068
      %v3070 = vpop.f32.mrf.mxu0
      %v3071 = vadd.f32 %v2898, %v3070
      %3072 = vmatprep.mubr.bf16.mxu0 0
      %3073 = vmatmul.mubr.bf16.gmra.mxu0 %v2768
      %v3074 = vpop.f32.mrf.mxu0
      %v3075 = vadd.f32 %v2902, %v3074
      %v3076 = vpop.f32.mrf.mxu0
      %v3077 = vadd.f32 %v2904, %v3076
      %v3078 = vpop.f32.mrf.mxu0
      %v3079 = vadd.f32 %v2906, %v3078
      %v3080 = vpop.f32.mrf.mxu0
      %v3081 = vadd.f32 %v2908, %v3080
      %3082 = vmatprep.mubr.bf16.mxu0 0
      %3083 = vmatmul.mubr.bf16.gmra.mxu0 %v2771
      %v3084 = vpop.f32.mrf.mxu0
      %v3085 = vadd.f32 %v2912, %v3084
      %v3086 = vpop.f32.mrf.mxu0
      %v3087 = vadd.f32 %v2914, %v3086
      %v3088 = vpop.f32.mrf.mxu0
      %v3089 = vadd.f32 %v2916, %v3088
      %v3090 = vpop.f32.mrf.mxu0
      %v3091 = vadd.f32 %v2918, %v3090
      %3092 = vmatprep.mubr.bf16.mxu0 0
      %3093 = vmatmul.mubr.bf16.gmra.mxu0 %v2774
      %v3094 = vpop.f32.mrf.mxu0
      %v3095 = vadd.f32 %v2922, %v3094
      %v3096 = vpop.f32.mrf.mxu0
      %v3097 = vadd.f32 %v2924, %v3096
      %v3098 = vpop.f32.mrf.mxu0
      %v3099 = vadd.f32 %v2926, %v3098
      %v3100 = vpop.f32.mrf.mxu0
      %v3101 = vadd.f32 %v2928, %v3100
      %3102 = vmatprep.mubr.bf16.mxu0 0
      %3103 = vmatmul.mubr.bf16.gmra.mxu0 %v2777
      %v3104 = vpop.f32.mrf.mxu0
      %v3105 = vadd.f32 %v2932, %v3104
      %v3106 = vpop.f32.mrf.mxu0
      %v3107 = vadd.f32 %v2934, %v3106
      %v3108 = vpop.f32.mrf.mxu0
      %v3109 = vadd.f32 %v2936, %v3108
      %v3110 = vpop.f32.mrf.mxu0
      %v3111 = vadd.f32 %v2938, %v3110
      %3112 = vmatprep.mubr.bf16.mxu0 0
      %3113 = vmatmul.mubr.bf16.gmra.mxu0 %v2780
      %v3114 = vpop.f32.mrf.mxu0
      %v3115 = vadd.f32 %v2942, %v3114
      %v3116 = vpop.f32.mrf.mxu0
      %v3117 = vadd.f32 %v2944, %v3116
      %v3118 = vpop.f32.mrf.mxu0
      %v3119 = vadd.f32 %v2946, %v3118
      %v3120 = vpop.f32.mrf.mxu0
      %v3121 = vadd.f32 %v2948, %v3120
      %3122 = vmatprep.mubr.bf16.mxu0 0
      %3123 = vmatmul.mubr.bf16.gmra.mxu0 %v2783
      %v3124 = vpop.f32.mrf.mxu0
      %v3125 = vadd.f32 %v2952, %v3124
      %v3126 = vpop.f32.mrf.mxu0
      %v3127 = vadd.f32 %v2954, %v3126
      %v3128 = vpop.f32.mrf.mxu0
      %v3129 = vadd.f32 %v2956, %v3128
      %v3130 = vpop.f32.mrf.mxu0
      %v3131 = vadd.f32 %v2958, %v3130
      %3132 = vmatprep.mubr.bf16.mxu0 0
      %3133 = vmatmul.mubr.bf16.gmra.mxu0 %v2786
      %v3134 = vpop.f32.mrf.mxu0
      %v3135 = vadd.f32 %v2962, %v3134
      %v3136 = vpop.f32.mrf.mxu0
      %v3137 = vadd.f32 %v2964, %v3136
      %v3138 = vpop.f32.mrf.mxu0
      %v3139 = vadd.f32 %v2966, %v3138
      %v3140 = vpop.f32.mrf.mxu0
      %v3141 = vadd.f32 %v2968, %v3140
      %3142 = vdwg.mxu0
      %3143 = vmatprep.subr.bf16.mxu0 0
      %3144 = vmatpush1.bf16.msra.mxu0 %v2658
      %3145 = vmatprep.subr.bf16.mxu0 0
      %3146 = vmatpush1.bf16.msra.mxu0 %v2655
      %3147 = vmatprep.subr.bf16.mxu0 0
      %3148 = vmatpush1.bf16.msra.mxu0 %v2652
      %3149 = vmatprep.subr.bf16.mxu0 0
      %3150 = vmatpush1.bf16.msra.mxu0 %v2649
      %3151 = vmatprep.subr.bf16.mxu0 0
      %3152 = vmatpush1.bf16.msra.mxu0 %v2646
      %3153 = vmatprep.subr.bf16.mxu0 0
      %3154 = vmatpush1.bf16.msra.mxu0 %v2643
      %3155 = vmatprep.subr.bf16.mxu0 0
      %3156 = vmatpush1.bf16.msra.mxu0 %v2640
      %3157 = vmatprep.subr.bf16.mxu0 0
      %3158 = vmatpush1.bf16.msra.mxu0 %v2637
      %3159 = vmatprep.subr.bf16.mxu0 0
      %3160 = vmatpush2.bf16.msra.mxu0 %v2682
      %3161 = vmatprep.subr.bf16.mxu0 0
      %3162 = vmatpush2.bf16.msra.mxu0 %v2679
      %3163 = vmatprep.subr.bf16.mxu0 0
      %3164 = vmatpush2.bf16.msra.mxu0 %v2676
      %3165 = vmatprep.subr.bf16.mxu0 0
      %3166 = vmatpush2.bf16.msra.mxu0 %v2673
      %3167 = vmatprep.subr.bf16.mxu0 0
      %3168 = vmatpush2.bf16.msra.mxu0 %v2670
      %3169 = vmatprep.subr.bf16.mxu0 0
      %3170 = vmatpush2.bf16.msra.mxu0 %v2667
      %3171 = vmatprep.subr.bf16.mxu0 0
      %3172 = vmatpush2.bf16.msra.mxu0 %v2664
      %3173 = vmatprep.subr.bf16.mxu0 0
      %3174 = vmatpush2.bf16.msra.mxu0 %v2661
      %3175 = vmatprep.mubr.bf16.mxu0 %v2311
      %3176 = vmatmul.mubr.bf16.gmra.mxu0 %v2310
      %v3177 = vpop.f32.mrf.mxu0
      %v3178 = vadd.f32 %v2441, %v3177
      %v3179 = vpop.f32.mrf.mxu0
      %v3180 = vpop.f32.mrf.mxu0
      %v3181 = vadd.f32 %v2441, %v3180
      %v3182 = vpop.f32.mrf.mxu0
      %3183 = vmatprep.mubr.bf16.mxu0 %v2314
      %3184 = vmatmul.mubr.bf16.gmra.mxu0 %v2313
      %v3185 = vpop.f32.mrf.mxu0
      %v3186 = vadd.f32 %v2441, %v3185
      %v3187 = vpop.f32.mrf.mxu0
      %v3188 = vpop.f32.mrf.mxu0
      %v3189 = vadd.f32 %v2441, %v3188
      %v3190 = vpop.f32.mrf.mxu0
      %3191 = vmatprep.mubr.bf16.mxu0 %v2317
      %3192 = vmatmul.mubr.bf16.gmra.mxu0 %v2316
      %v3193 = vpop.f32.mrf.mxu0
      %v3194 = vadd.f32 %v2441, %v3193
      %v3195 = vpop.f32.mrf.mxu0
      %v3196 = vpop.f32.mrf.mxu0
      %v3197 = vadd.f32 %v2441, %v3196
      %v3198 = vpop.f32.mrf.mxu0
      %3199 = vmatprep.mubr.bf16.mxu0 %v2320
      %3200 = vmatmul.mubr.bf16.gmra.mxu0 %v2319
      %v3201 = vpop.f32.mrf.mxu0
      %v3202 = vadd.f32 %v2441, %v3201
      %v3203 = vpop.f32.mrf.mxu0
      %v3204 = vpop.f32.mrf.mxu0
      %v3205 = vadd.f32 %v2441, %v3204
      %v3206 = vpop.f32.mrf.mxu0
      %3207 = vmatprep.mubr.bf16.mxu0 %v2323
      %3208 = vmatmul.mubr.bf16.gmra.mxu0 %v2322
      %v3209 = vpop.f32.mrf.mxu0
      %v3210 = vadd.f32 %v2441, %v3209
      %v3211 = vpop.f32.mrf.mxu0
      %v3212 = vpop.f32.mrf.mxu0
      %v3213 = vadd.f32 %v2441, %v3212
      %v3214 = vpop.f32.mrf.mxu0
      %3215 = vmatprep.mubr.bf16.mxu0 %v2326
      %3216 = vmatmul.mubr.bf16.gmra.mxu0 %v2325
      %v3217 = vpop.f32.mrf.mxu0
      %v3218 = vadd.f32 %v2441, %v3217
      %v3219 = vpop.f32.mrf.mxu0
      %v3220 = vpop.f32.mrf.mxu0
      %v3221 = vadd.f32 %v2441, %v3220
      %v3222 = vpop.f32.mrf.mxu0
      %3223 = vmatprep.mubr.bf16.mxu0 %v2329
      %3224 = vmatmul.mubr.bf16.gmra.mxu0 %v2328
      %v3225 = vpop.f32.mrf.mxu0
      %v3226 = vadd.f32 %v2441, %v3225
      %v3227 = vpop.f32.mrf.mxu0
      %v3228 = vpop.f32.mrf.mxu0
      %v3229 = vadd.f32 %v2441, %v3228
      %v3230 = vpop.f32.mrf.mxu0
      %3231 = vmatprep.mubr.bf16.mxu0 %v2332
      %3232 = vmatmul.mubr.bf16.gmra.mxu0 %v2331
      %v3233 = vpop.f32.mrf.mxu0
      %v3234 = vadd.f32 %v2441, %v3233
      %v3235 = vpop.f32.mrf.mxu0
      %v3236 = vpop.f32.mrf.mxu0
      %v3237 = vadd.f32 %v2441, %v3236
      %v3238 = vpop.f32.mrf.mxu0
      %3239 = vmatprep.mubr.bf16.mxu0 %v2335
      %3240 = vmatmul.mubr.bf16.gmra.mxu0 %v2334
      %v3241 = vpop.f32.mrf.mxu0
      %v3242 = vadd.f32 %v2441, %v3241
      %v3243 = vpop.f32.mrf.mxu0
      %v3244 = vpop.f32.mrf.mxu0
      %v3245 = vadd.f32 %v2441, %v3244
      %v3246 = vpop.f32.mrf.mxu0
      %3247 = vmatprep.mubr.bf16.mxu0 %v2338
      %3248 = vmatmul.mubr.bf16.gmra.mxu0 %v2337
      %v3249 = vpop.f32.mrf.mxu0
      %v3250 = vadd.f32 %v2441, %v3249
      %v3251 = vpop.f32.mrf.mxu0
      %v3252 = vpop.f32.mrf.mxu0
      %v3253 = vadd.f32 %v2441, %v3252
      %v3254 = vpop.f32.mrf.mxu0
      %3255 = vmatprep.mubr.bf16.mxu0 %v2341
      %3256 = vmatmul.mubr.bf16.gmra.mxu0 %v2340
      %v3257 = vpop.f32.mrf.mxu0
      %v3258 = vadd.f32 %v2441, %v3257
      %v3259 = vpop.f32.mrf.mxu0
      %v3260 = vpop.f32.mrf.mxu0
      %v3261 = vadd.f32 %v2441, %v3260
      %v3262 = vpop.f32.mrf.mxu0
      %3263 = vmatprep.mubr.bf16.mxu0 %v2344
      %3264 = vmatmul.mubr.bf16.gmra.mxu0 %v2343
      %v3265 = vpop.f32.mrf.mxu0
      %v3266 = vadd.f32 %v2441, %v3265
      %v3267 = vpop.f32.mrf.mxu0
      %v3268 = vpop.f32.mrf.mxu0
      %v3269 = vadd.f32 %v2441, %v3268
      %v3270 = vpop.f32.mrf.mxu0
      %3271 = vmatprep.mubr.bf16.mxu0 %v2347
      %3272 = vmatmul.mubr.bf16.gmra.mxu0 %v2346
      %v3273 = vpop.f32.mrf.mxu0
      %v3274 = vadd.f32 %v2441, %v3273
      %v3275 = vpop.f32.mrf.mxu0
      %v3276 = vpop.f32.mrf.mxu0
      %v3277 = vadd.f32 %v2441, %v3276
      %v3278 = vpop.f32.mrf.mxu0
      %3279 = vmatprep.mubr.bf16.mxu0 %v2350
      %3280 = vmatmul.mubr.bf16.gmra.mxu0 %v2349
      %v3281 = vpop.f32.mrf.mxu0
      %v3282 = vadd.f32 %v2441, %v3281
      %v3283 = vpop.f32.mrf.mxu0
      %v3284 = vpop.f32.mrf.mxu0
      %v3285 = vadd.f32 %v2441, %v3284
      %v3286 = vpop.f32.mrf.mxu0
      %3287 = vdwg.mxu0
      %3288 = vmatprep.subr.bf16.mxu0 0
      %3289 = vmatpush1.bf16.msra.mxu0 0
      %3290 = vmatprep.subr.bf16.mxu0 0
      %3291 = vmatpush1.bf16.msra.mxu0 0
      %3292 = vmatprep.subr.bf16.mxu0 0
      %3293 = vmatpush1.bf16.msra.mxu0 0
      %3294 = vmatprep.subr.bf16.mxu0 0
      %3295 = vmatpush1.bf16.msra.mxu0 0
      %3296 = vmatprep.subr.bf16.mxu0 0
      %3297 = vmatpush1.bf16.msra.mxu0 0
      %3298 = vmatprep.subr.bf16.mxu0 0
      %3299 = vmatpush1.bf16.msra.mxu0 %v2795
      %3300 = vmatprep.subr.bf16.mxu0 0
      %3301 = vmatpush1.bf16.msra.mxu0 %v2688
      %3302 = vmatprep.subr.bf16.mxu0 0
      %3303 = vmatpush1.bf16.msra.mxu0 %v2685
      %3304 = vmatprep.subr.bf16.mxu0 0
      %3305 = vmatpush2.bf16.msra.mxu0 0
      %3306 = vmatprep.subr.bf16.mxu0 0
      %3307 = vmatpush2.bf16.msra.mxu0 0
      %3308 = vmatprep.subr.bf16.mxu0 0
      %3309 = vmatpush2.bf16.msra.mxu0 0
      %3310 = vmatprep.subr.bf16.mxu0 0
      %3311 = vmatpush2.bf16.msra.mxu0 0
      %3312 = vmatprep.subr.bf16.mxu0 0
      %3313 = vmatpush2.bf16.msra.mxu0 0
      %3314 = vmatprep.subr.bf16.mxu0 0
      %3315 = vmatpush2.bf16.msra.mxu0 0
      %3316 = vmatprep.subr.bf16.mxu0 0
      %3317 = vmatpush2.bf16.msra.mxu0 0
      %3318 = vmatprep.subr.bf16.mxu0 0
      %3319 = vmatpush2.bf16.msra.mxu0 0
      %3320 = vmatprep.mubr.bf16.mxu0 0
      %3321 = vmatmul.mubr.bf16.gmra.mxu0 %v2747
      %v3322 = vpop.f32.mrf.mxu0
      %v3323 = vadd.f32 %v3178, %v3322
      %v3324 = vpop.f32.mrf.mxu0
      %v3325 = vpop.f32.mrf.mxu0
      %v3326 = vadd.f32 %v3181, %v3325
      %v3327 = vpop.f32.mrf.mxu0
      %3328 = vmatprep.mubr.bf16.mxu0 0
      %3329 = vmatmul.mubr.bf16.gmra.mxu0 %v2750
      %v3330 = vpop.f32.mrf.mxu0
      %v3331 = vadd.f32 %v3186, %v3330
      %v3332 = vpop.f32.mrf.mxu0
      %v3333 = vpop.f32.mrf.mxu0
      %v3334 = vadd.f32 %v3189, %v3333
      %v3335 = vpop.f32.mrf.mxu0
      %3336 = vmatprep.mubr.bf16.mxu0 0
      %3337 = vmatmul.mubr.bf16.gmra.mxu0 %v2753
      %v3338 = vpop.f32.mrf.mxu0
      %v3339 = vadd.f32 %v3194, %v3338
      %v3340 = vpop.f32.mrf.mxu0
      %v3341 = vpop.f32.mrf.mxu0
      %v3342 = vadd.f32 %v3197, %v3341
      %v3343 = vpop.f32.mrf.mxu0
      %3344 = vmatprep.mubr.bf16.mxu0 0
      %3345 = vmatmul.mubr.bf16.gmra.mxu0 %v2756
      %v3346 = vpop.f32.mrf.mxu0
      %v3347 = vadd.f32 %v3202, %v3346
      %v3348 = vpop.f32.mrf.mxu0
      %v3349 = vpop.f32.mrf.mxu0
      %v3350 = vadd.f32 %v3205, %v3349
      %v3351 = vpop.f32.mrf.mxu0
      %3352 = vmatprep.mubr.bf16.mxu0 0
      %3353 = vmatmul.mubr.bf16.gmra.mxu0 %v2759
      %v3354 = vpop.f32.mrf.mxu0
      %v3355 = vadd.f32 %v3210, %v3354
      %v3356 = vpop.f32.mrf.mxu0
      %v3357 = vpop.f32.mrf.mxu0
      %v3358 = vadd.f32 %v3213, %v3357
      %v3359 = vpop.f32.mrf.mxu0
      %3360 = vmatprep.mubr.bf16.mxu0 0
      %3361 = vmatmul.mubr.bf16.gmra.mxu0 %v2762
      %v3362 = vpop.f32.mrf.mxu0
      %v3363 = vadd.f32 %v3218, %v3362
      %v3364 = vpop.f32.mrf.mxu0
      %v3365 = vpop.f32.mrf.mxu0
      %v3366 = vadd.f32 %v3221, %v3365
      %v3367 = vpop.f32.mrf.mxu0
      %3368 = vmatprep.mubr.bf16.mxu0 0
      %3369 = vmatmul.mubr.bf16.gmra.mxu0 %v2765
      %v3370 = vpop.f32.mrf.mxu0
      %v3371 = vadd.f32 %v3226, %v3370
      %v3372 = vpop.f32.mrf.mxu0
      %v3373 = vpop.f32.mrf.mxu0
      %v3374 = vadd.f32 %v3229, %v3373
      %v3375 = vpop.f32.mrf.mxu0
      %3376 = vmatprep.mubr.bf16.mxu0 0
      %3377 = vmatmul.mubr.bf16.gmra.mxu0 %v2768
      %v3378 = vpop.f32.mrf.mxu0
      %v3379 = vadd.f32 %v3234, %v3378
      %v3380 = vpop.f32.mrf.mxu0
      %v3381 = vpop.f32.mrf.mxu0
      %v3382 = vadd.f32 %v3237, %v3381
      %v3383 = vpop.f32.mrf.mxu0
      %3384 = vmatprep.mubr.bf16.mxu0 0
      %3385 = vmatmul.mubr.bf16.gmra.mxu0 %v2771
      %v3386 = vpop.f32.mrf.mxu0
      %v3387 = vadd.f32 %v3242, %v3386
      %v3388 = vpop.f32.mrf.mxu0
      %v3389 = vpop.f32.mrf.mxu0
      %v3390 = vadd.f32 %v3245, %v3389
      %v3391 = vpop.f32.mrf.mxu0
      %3392 = vmatprep.mubr.bf16.mxu0 0
      %3393 = vmatmul.mubr.bf16.gmra.mxu0 %v2774
      %v3394 = vpop.f32.mrf.mxu0
      %v3395 = vadd.f32 %v3250, %v3394
      %v3396 = vpop.f32.mrf.mxu0
      %v3397 = vpop.f32.mrf.mxu0
      %v3398 = vadd.f32 %v3253, %v3397
      %v3399 = vpop.f32.mrf.mxu0
      %3400 = vmatprep.mubr.bf16.mxu0 0
      %3401 = vmatmul.mubr.bf16.gmra.mxu0 %v2777
      %v3402 = vpop.f32.mrf.mxu0
      %v3403 = vadd.f32 %v3258, %v3402
      %v3404 = vpop.f32.mrf.mxu0
      %v3405 = vpop.f32.mrf.mxu0
      %v3406 = vadd.f32 %v3261, %v3405
      %v3407 = vpop.f32.mrf.mxu0
      %3408 = vmatprep.mubr.bf16.mxu0 0
      %3409 = vmatmul.mubr.bf16.gmra.mxu0 %v2780
      %v3410 = vpop.f32.mrf.mxu0
      %v3411 = vadd.f32 %v3266, %v3410
      %v3412 = vpop.f32.mrf.mxu0
      %v3413 = vpop.f32.mrf.mxu0
      %v3414 = vadd.f32 %v3269, %v3413
      %v3415 = vpop.f32.mrf.mxu0
      %3416 = vmatprep.mubr.bf16.mxu0 0
      %3417 = vmatmul.mubr.bf16.gmra.mxu0 %v2783
      %v3418 = vpop.f32.mrf.mxu0
      %v3419 = vadd.f32 %v3274, %v3418
      %v3420 = vpop.f32.mrf.mxu0
      %v3421 = vpop.f32.mrf.mxu0
      %v3422 = vadd.f32 %v3277, %v3421
      %v3423 = vpop.f32.mrf.mxu0
      %3424 = vmatprep.mubr.bf16.mxu0 0
      %3425 = vmatmul.mubr.bf16.gmra.mxu0 %v2786
      %v3426 = vpop.f32.mrf.mxu0
      %v3427 = vadd.f32 %v3282, %v3426
      %v3428 = vpop.f32.mrf.mxu0
      %v3429 = vpop.f32.mrf.mxu0
      %v3430 = vadd.f32 %v3285, %v3429
      %v3431 = vpop.f32.mrf.mxu0
      %3432 = vdwg.mxu0
      %v3433 = vtanh.pop %v3005
      %v3434 = vtanh.pop %v3007
      %v3435 = vtanh.pop %v3323
      %v3436 = vtanh.pop %v3009
      %v3437 = vtanh.pop %v3011
      %v3438 = vtanh.pop %v3326
      %v3439 = vtanh.pop %v3015
      %v3440 = vtanh.pop %v3017
      %v3441 = vtanh.pop %v3331
      %v3442 = vtanh.pop %v3019
      %v3443 = vtanh.pop %v3021
      %v3444 = vtanh.pop %v3334
      %v3445 = vtanh.pop %v3025
      %v3446 = vtanh.pop %v3027
      %v3447 = vtanh.pop %v3339
      %v3448 = vtanh.pop %v3029
      %v3449 = vtanh.pop %v3031
      %v3450 = vtanh.pop %v3342
      %v3451 = vtanh.pop %v3035
      %v3452 = vtanh.pop %v3037
      %v3453 = vtanh.pop %v3347
      %v3454 = vtanh.pop %v3039
      %v3455 = vtanh.pop %v3041
      %v3456 = vtanh.pop %v3350
      %v3457 = vtanh.pop %v3045
      %v3458 = vtanh.pop %v3047
      %v3459 = vtanh.pop %v3355
      %v3460 = vtanh.pop %v3049
      %v3461 = vtanh.pop %v3051
      %v3462 = vtanh.pop %v3358
      %v3463 = vtanh.pop %v3055
      %v3464 = vtanh.pop %v3057
      %v3465 = vtanh.pop %v3363
      %v3466 = vtanh.pop %v3059
      %v3467 = vtanh.pop %v3061
      %v3468 = vtanh.pop %v3366
      %v3469 = vtanh.pop %v3065
      %v3470 = vtanh.pop %v3067
      %v3471 = vtanh.pop %v3371
      %v3472 = vtanh.pop %v3069
      %v3473 = vtanh.pop %v3071
      %v3474 = vtanh.pop %v3374
      %v3475 = vtanh.pop %v3075
      %v3476 = vtanh.pop %v3077
      %v3477 = vtanh.pop %v3379
      %v3478 = vtanh.pop %v3079
      %v3479 = vtanh.pop %v3081
      %v3480 = vtanh.pop %v3382
      %v3481 = vtanh.pop %v3085
      %v3482 = vtanh.pop %v3087
      %v3483 = vtanh.pop %v3387
      %v3484 = vtanh.pop %v3089
      %v3485 = vtanh.pop %v3091
      %v3486 = vtanh.pop %v3390
      %v3487 = vtanh.pop %v3095
      %v3488 = vtanh.pop %v3097
      %v3489 = vtanh.pop %v3395
      %v3490 = vtanh.pop %v3099
      %v3491 = vtanh.pop %v3101
      %v3492 = vtanh.pop %v3398
      %v3493 = vtanh.pop %v3105
      %v3494 = vtanh.pop %v3107
      %v3495 = vtanh.pop %v3403
      %v3496 = vtanh.pop %v3109
      %v3497 = vtanh.pop %v3111
      %v3498 = vtanh.pop %v3406
      %v3499 = vtanh.pop %v3115
      %v3500 = vtanh.pop %v3117
      %v3501 = vtanh.pop %v3411
      %v3502 = vtanh.pop %v3119
      %v3503 = vtanh.pop %v3121
      %v3504 = vtanh.pop %v3414
      %v3505 = vtanh.pop %v3125
      %v3506 = vtanh.pop %v3127
      %v3507 = vtanh.pop %v3419
      %v3508 = vtanh.pop %v3129
      %v3509 = vtanh.pop %v3131
      %v3510 = vtanh.pop %v3422
      %v3511 = vtanh.pop %v3135
      %v3512 = vtanh.pop %v3137
      %v3513 = vtanh.pop %v3427
      %v3514 = vtanh.pop %v3139
      %v3515 = vtanh.pop %v3141
      %v3516 = vtanh.pop %v3430
      %v3517 = vpack.c.bf16 %v3436, %v3433
      %v3518 = vpack.c.bf16 %v3437, %v3434
      %v3519 = vpack.c.bf16 %v3438, %v3435
      %v3520 = vpack.c.bf16 %v3442, %v3439
      %v3521 = vpack.c.bf16 %v3443, %v3440
      %v3522 = vpack.c.bf16 %v3444, %v3441
      %v3523 = vpack.c.bf16 %v3448, %v3445
      %v3524 = vpack.c.bf16 %v3449, %v3446
      %v3525 = vpack.c.bf16 %v3450, %v3447
      %v3526 = vpack.c.bf16 %v3454, %v3451
      %v3527 = vpack.c.bf16 %v3455, %v3452
      %v3528 = vpack.c.bf16 %v3456, %v3453
      %v3529 = vpack.c.bf16 %v3460, %v3457
      %v3530 = vpack.c.bf16 %v3461, %v3458
      %v3531 = vpack.c.bf16 %v3462, %v3459
      %v3532 = vpack.c.bf16 %v3466, %v3463
      %v3533 = vpack.c.bf16 %v3467, %v3464
      %v3534 = vpack.c.bf16 %v3468, %v3465
      %v3535 = vpack.c.bf16 %v3472, %v3469
      %v3536 = vpack.c.bf16 %v3473, %v3470
      %v3537 = vpack.c.bf16 %v3474, %v3471
      %v3538 = vpack.c.bf16 %v3478, %v3475
      %v3539 = vpack.c.bf16 %v3479, %v3476
      %v3540 = vpack.c.bf16 %v3480, %v3477
      %v3541 = vpack.c.bf16 %v3484, %v3481
      %v3542 = vpack.c.bf16 %v3485, %v3482
      %v3543 = vpack.c.bf16 %v3486, %v3483
      %v3544 = vpack.c.bf16 %v3490, %v3487
      %v3545 = vpack.c.bf16 %v3491, %v3488
      %v3546 = vpack.c.bf16 %v3492, %v3489
      %v3547 = vpack.c.bf16 %v3496, %v3493
      %v3548 = vpack.c.bf16 %v3497, %v3494
      %v3549 = vpack.c.bf16 %v3498, %v3495
      %v3550 = vpack.c.bf16 %v3502, %v3499
      %v3551 = vpack.c.bf16 %v3503, %v3500
      %v3552 = vpack.c.bf16 %v3504, %v3501
      %v3553 = vpack.c.bf16 %v3508, %v3505
      %v3554 = vpack.c.bf16 %v3509, %v3506
      %v3555 = vpack.c.bf16 %v3510, %v3507
      %v3556 = vpack.c.bf16 %v3514, %v3511
      %v3557 = vpack.c.bf16 %v3515, %v3512
      %v3558 = vpack.c.bf16 %v3516, %v3513
      %v3559 = vld [vmem:[%s7] sm:$0xff]
      %v3560 = vld [vmem:[%s7 + $0x8] sm:$0xf]
      %v3561 = vld [vmem:[%s7 + $0xc] sm:$0xff]
      %v3562 = vld [vmem:[%s7 + $0x14] sm:$0xf]
      %v3563 = vld [vmem:[%s7 + $0x18] sm:$0xff]
      %v3564 = vld [vmem:[%s7 + $0x20] sm:$0xf]
      %v3565 = vld [vmem:[%s7 + $0x24] sm:$0xff]
      %v3566 = vld [vmem:[%s7 + $0x2c] sm:$0xf]
      %v3567 = vld [vmem:[%s7 + $0x30] sm:$0xff]
      %v3568 = vld [vmem:[%s7 + $0x38] sm:$0xf]
      %v3569 = vld [vmem:[%s7 + $0x3c] sm:$0xff]
      %v3570 = vld [vmem:[%s7 + $0x44] sm:$0xf]
      %v3571 = vld [vmem:[%s7 + $0x48] sm:$0xff]
      %v3572 = vld [vmem:[%s7 + $0x50] sm:$0xf]
      %v3573 = vld [vmem:[%s7 + $0x54] sm:$0xff]
      %v3574 = vld [vmem:[%s7 + $0x5c] sm:$0xf]
      %v3575 = vld [vmem:[%s7 + $0x60] sm:$0xff]
      %v3576 = vld [vmem:[%s7 + $0x68] sm:$0xf]
      %v3577 = vld [vmem:[%s7 + $0x6c] sm:$0xff]
      %v3578 = vld [vmem:[%s7 + $0x74] sm:$0xf]
      %v3579 = vld [vmem:[%s7 + $0x78] sm:$0xff]
      %v3580 = vld [vmem:[%s7 + $0x80] sm:$0xf]
      %v3581 = vld [vmem:[%s7 + $0x84] sm:$0xff]
      %v3582 = vld [vmem:[%s7 + $0x8c] sm:$0xf]
      %v3583 = vld [vmem:[%s7 + $0x90] sm:$0xff]
      %v3584 = vld [vmem:[%s7 + $0x98] sm:$0xf]
      %v3585 = vld [vmem:[%s7 + $0x9c] sm:$0xff]
      %v3586 = vld [vmem:[%s7 + $0xa4] sm:$0xf]
      %v3587 = vld [vmem:[%s7 + $0xa8] sm:$0xff]
      %v3588 = vld [vmem:[%s7 + $0xb0] sm:$0xf]
      %v3589 = vld [vmem:[%s7 + $0xb4] sm:$0xff]
      %v3590 = vld [vmem:[%s7 + $0xbc] sm:$0xf]
      %v3591 = vld [vmem:[%s7 + $0xc0] sm:$0xff]
      %v3592 = vld [vmem:[%s7 + $0xc8] sm:$0xf]
      %v3593 = vld [vmem:[%s7 + $0xcc] sm:$0xff]
      %v3594 = vld [vmem:[%s7 + $0xd4] sm:$0xf]
      %v3595 = vld [vmem:[%s7 + $0xd8] sm:$0xff]
      %v3596 = vld [vmem:[%s7 + $0xe0] sm:$0xf]
      %v3597 = vld [vmem:[%s7 + $0xe4] sm:$0xff]
      %v3598 = vld [vmem:[%s7 + $0xec] sm:$0xf]
      %v3599 = vld [vmem:[%s7 + $0xf0] sm:$0xff]
      %v3600 = vld [vmem:[%s7 + $0xf8] sm:$0xf]
      %v3601 = vld [vmem:[%s7 + $0xfc] sm:$0xff]
      %v3602 = vld [vmem:[%s7 + $0x104] sm:$0xf]
      %v3603 = vld [vmem:[%s7 + $0x108] sm:$0xff]
      %v3604 = vld [vmem:[%s7 + $0x110] sm:$0xf]
      %v3605 = vld [vmem:[%s7 + $0x114] sm:$0xff]
      %v3606 = vld [vmem:[%s7 + $0x11c] sm:$0xf]
      %v3607 = vld [vmem:[%s7 + $0x120] sm:$0xff]
      %v3608 = vld [vmem:[%s7 + $0x128] sm:$0xf]
      %v3609 = vld [vmem:[%s7 + $0x12c] sm:$0xff]
      %v3610 = vld [vmem:[%s7 + $0x134] sm:$0xf]
      %v3611 = vld [vmem:[%s7 + $0x138] sm:$0xff]
      %v3612 = vld [vmem:[%s7 + $0x140] sm:$0xf]
      %v3613 = vld [vmem:[%s7 + $0x144] sm:$0xff]
      %v3614 = vld [vmem:[%s7 + $0x14c] sm:$0xf]
      %v3615 = vld [vmem:[%s7 + $0x150] sm:$0xff]
      %v3616 = vld [vmem:[%s7 + $0x158] sm:$0xf]
      %v3617 = vld [vmem:[%s7 + $0x15c] sm:$0xff]
      %v3618 = vld [vmem:[%s7 + $0x164] sm:$0xf]
      %v3619 = vld [vmem:[%s7 + $0x168] sm:$0xff]
      %v3620 = vld [vmem:[%s7 + $0x170] sm:$0xf]
      %v3621 = vld [vmem:[%s7 + $0x174] sm:$0xff]
      %v3622 = vld [vmem:[%s7 + $0x17c] sm:$0xf]
      %v3623 = vld [vmem:[%s7 + $0x180] sm:$0xff]
      %v3624 = vld [vmem:[%s7 + $0x188] sm:$0xf]
      %v3625 = vld [vmem:[%s7 + $0x18c] sm:$0xff]
      %v3626 = vld [vmem:[%s7 + $0x194] sm:$0xf]
      %v3627 = vld [vmem:[%s7 + $0x198] sm:$0xff]
      %v3628 = vld [vmem:[%s7 + $0x1a0] sm:$0xf]
      %v3629 = vld [vmem:[%s7 + $0x1a4] sm:$0xff]
      %v3630 = vld [vmem:[%s7 + $0x1ac] sm:$0xf]
      %v3631 = vld [vmem:[%s7 + $0x1b0] sm:$0xff]
      %v3632 = vld [vmem:[%s7 + $0x1b8] sm:$0xf]
      %v3633 = vld [vmem:[%s7 + $0x1bc] sm:$0x33]
      %v3634 = vld [vmem:[%s7 + $0x1c4] sm:$0x3]
      %v3635 = vld [vmem:[%s8] sm:$0x7]
      %v3637 = vlaneseq
      %v3638 = vshrl.u32 %v3637, 7
      %v3639 = vsub.s32 0, %v3638
      %v3640 = vrot.slane %v3635, %v3639
      %v3641 = vlaneseq
      %v3642 = vshrl.u32 %v3641, 7
      %v3643 = vsub.s32 1, %v3642
      %v3644 = vrot.slane %v3635, %v3643
      %v3645 = vlaneseq
      %v3646 = vshrl.u32 %v3645, 7
      %v3647 = vsub.s32 2, %v3646
      %v3648 = vrot.slane %v3635, %v3647
      %v3728 = vunpack.c.l.b16 %v3559
      %v3729 = vunpack.c.h.b16 %v3559
      %v3730 = vunpack.c.l.b16 %v3560
      %v3731 = vunpack.c.l.b16 %v3561
      %v3732 = vunpack.c.h.b16 %v3561
      %v3733 = vunpack.c.l.b16 %v3562
      %v3734 = vunpack.c.l.b16 %v3563
      %v3735 = vunpack.c.h.b16 %v3563
      %v3736 = vunpack.c.l.b16 %v3564
      %v3737 = vunpack.c.l.b16 %v3565
      %v3738 = vunpack.c.h.b16 %v3565
      %v3739 = vunpack.c.l.b16 %v3566
      %v3740 = vunpack.c.l.b16 %v3567
      %v3741 = vunpack.c.h.b16 %v3567
      %v3742 = vunpack.c.l.b16 %v3568
      %v3743 = vunpack.c.l.b16 %v3569
      %v3744 = vunpack.c.h.b16 %v3569
      %v3745 = vunpack.c.l.b16 %v3570
      %v3746 = vunpack.c.l.b16 %v3571
      %v3747 = vunpack.c.h.b16 %v3571
      %v3748 = vunpack.c.l.b16 %v3572
      %v3749 = vunpack.c.l.b16 %v3573
      %v3750 = vunpack.c.h.b16 %v3573
      %v3751 = vunpack.c.l.b16 %v3574
      %v3752 = vunpack.c.l.b16 %v3575
      %v3753 = vunpack.c.h.b16 %v3575
      %v3754 = vunpack.c.l.b16 %v3576
      %v3755 = vunpack.c.l.b16 %v3577
      %v3756 = vunpack.c.h.b16 %v3577
      %v3757 = vunpack.c.l.b16 %v3578
      %v3758 = vunpack.c.l.b16 %v3579
      %v3759 = vunpack.c.h.b16 %v3579
      %v3760 = vunpack.c.l.b16 %v3580
      %v3761 = vunpack.c.l.b16 %v3581
      %v3762 = vunpack.c.h.b16 %v3581
      %v3763 = vunpack.c.l.b16 %v3582
      %v3764 = vunpack.c.l.b16 %v3583
      %v3765 = vunpack.c.h.b16 %v3583
      %v3766 = vunpack.c.l.b16 %v3584
      %v3767 = vunpack.c.l.b16 %v3585
      %v3768 = vunpack.c.h.b16 %v3585
      %v3769 = vunpack.c.l.b16 %v3586
      %v3770 = vunpack.c.l.b16 %v3587
      %v3771 = vunpack.c.h.b16 %v3587
      %v3772 = vunpack.c.l.b16 %v3588
      %v3773 = vunpack.c.l.b16 %v3589
      %v3774 = vunpack.c.h.b16 %v3589
      %v3775 = vunpack.c.l.b16 %v3590
      %v3776 = vunpack.c.l.b16 %v3591
      %v3777 = vunpack.c.h.b16 %v3591
      %v3778 = vunpack.c.l.b16 %v3592
      %v3779 = vunpack.c.l.b16 %v3593
      %v3780 = vunpack.c.h.b16 %v3593
      %v3781 = vunpack.c.l.b16 %v3594
      %v3782 = vunpack.c.l.b16 %v3595
      %v3783 = vunpack.c.h.b16 %v3595
      %v3784 = vunpack.c.l.b16 %v3596
      %v3785 = vunpack.c.l.b16 %v3597
      %v3786 = vunpack.c.h.b16 %v3597
      %v3787 = vunpack.c.l.b16 %v3598
      %v3788 = vunpack.c.l.b16 %v3599
      %v3789 = vunpack.c.h.b16 %v3599
      %v3790 = vunpack.c.l.b16 %v3600
      %v3791 = vunpack.c.l.b16 %v3601
      %v3792 = vunpack.c.h.b16 %v3601
      %v3793 = vunpack.c.l.b16 %v3602
      %v3794 = vunpack.c.l.b16 %v3603
      %v3795 = vunpack.c.h.b16 %v3603
      %v3796 = vunpack.c.l.b16 %v3604
      %v3797 = vunpack.c.l.b16 %v3605
      %v3798 = vunpack.c.h.b16 %v3605
      %v3799 = vunpack.c.l.b16 %v3606
      %v3800 = vunpack.c.l.b16 %v3607
      %v3801 = vunpack.c.h.b16 %v3607
      %v3802 = vunpack.c.l.b16 %v3608
      %v3803 = vunpack.c.l.b16 %v3609
      %v3804 = vunpack.c.h.b16 %v3609
      %v3805 = vunpack.c.l.b16 %v3610
      %v3806 = vunpack.c.l.b16 %v3611
      %v3807 = vunpack.c.h.b16 %v3611
      %v3808 = vunpack.c.l.b16 %v3612
      %v3809 = vunpack.c.l.b16 %v3613
      %v3810 = vunpack.c.h.b16 %v3613
      %v3811 = vunpack.c.l.b16 %v3614
      %v3812 = vunpack.c.l.b16 %v3615
      %v3813 = vunpack.c.h.b16 %v3615
      %v3814 = vunpack.c.l.b16 %v3616
      %v3815 = vunpack.c.l.b16 %v3617
      %v3816 = vunpack.c.h.b16 %v3617
      %v3817 = vunpack.c.l.b16 %v3618
      %v3818 = vunpack.c.l.b16 %v3619
      %v3819 = vunpack.c.h.b16 %v3619
      %v3820 = vunpack.c.l.b16 %v3620
      %v3821 = vunpack.c.l.b16 %v3621
      %v3822 = vunpack.c.h.b16 %v3621
      %v3823 = vunpack.c.l.b16 %v3622
      %v3824 = vunpack.c.l.b16 %v3623
      %v3825 = vunpack.c.h.b16 %v3623
      %v3826 = vunpack.c.l.b16 %v3624
      %v3827 = vunpack.c.l.b16 %v3625
      %v3828 = vunpack.c.h.b16 %v3625
      %v3829 = vunpack.c.l.b16 %v3626
      %v3830 = vunpack.c.l.b16 %v3627
      %v3831 = vunpack.c.h.b16 %v3627
      %v3832 = vunpack.c.l.b16 %v3628
      %v3833 = vunpack.c.l.b16 %v3629
      %v3834 = vunpack.c.h.b16 %v3629
      %v3835 = vunpack.c.l.b16 %v3630
      %v3836 = vunpack.c.l.b16 %v3631
      %v3837 = vunpack.c.h.b16 %v3631
      %v3838 = vunpack.c.l.b16 %v3632
      %v3839 = vunpack.c.l.b16 %v3633
      %v3840 = vunpack.c.h.b16 %v3633
      %v3841 = vunpack.c.l.b16 %v3634
      %v3842 = vpack.c.b16 %v3731, %v3728
      %v3843 = vpack.c.b16 %v3732, %v3729
      %v3844 = vpack.c.b16 %v3733, %v3730
      %v3845 = vpack.c.b16 %v3737, %v3734
      %v3846 = vpack.c.b16 %v3738, %v3735
      %v3847 = vpack.c.b16 %v3739, %v3736
      %v3848 = vpack.c.b16 %v3743, %v3740
      %v3849 = vpack.c.b16 %v3744, %v3741
      %v3850 = vpack.c.b16 %v3745, %v3742
      %v3851 = vpack.c.b16 %v3749, %v3746
      %v3852 = vpack.c.b16 %v3750, %v3747
      %v3853 = vpack.c.b16 %v3751, %v3748
      %v3854 = vpack.c.b16 %v3755, %v3752
      %v3855 = vpack.c.b16 %v3756, %v3753
      %v3856 = vpack.c.b16 %v3757, %v3754
      %v3857 = vpack.c.b16 %v3761, %v3758
      %v3858 = vpack.c.b16 %v3762, %v3759
      %v3859 = vpack.c.b16 %v3763, %v3760
      %v3860 = vpack.c.b16 %v3767, %v3764
      %v3861 = vpack.c.b16 %v3768, %v3765
      %v3862 = vpack.c.b16 %v3769, %v3766
      %v3863 = vpack.c.b16 %v3773, %v3770
      %v3864 = vpack.c.b16 %v3774, %v3771
      %v3865 = vpack.c.b16 %v3775, %v3772
      %v3866 = vpack.c.b16 %v3779, %v3776
      %v3867 = vpack.c.b16 %v3780, %v3777
      %v3868 = vpack.c.b16 %v3781, %v3778
      %v3869 = vpack.c.b16 %v3785, %v3782
      %v3870 = vpack.c.b16 %v3786, %v3783
      %v3871 = vpack.c.b16 %v3787, %v3784
      %v3872 = vpack.c.b16 %v3791, %v3788
      %v3873 = vpack.c.b16 %v3792, %v3789
      %v3874 = vpack.c.b16 %v3793, %v3790
      %v3875 = vpack.c.b16 %v3797, %v3794
      %v3876 = vpack.c.b16 %v3798, %v3795
      %v3877 = vpack.c.b16 %v3799, %v3796
      %v3878 = vpack.c.b16 %v3803, %v3800
      %v3879 = vpack.c.b16 %v3804, %v3801
      %v3880 = vpack.c.b16 %v3805, %v3802
      %v3881 = vpack.c.b16 %v3809, %v3806
      %v3882 = vpack.c.b16 %v3810, %v3807
      %v3883 = vpack.c.b16 %v3811, %v3808
      %v3884 = vpack.c.b16 %v3815, %v3812
      %v3885 = vpack.c.b16 %v3816, %v3813
      %v3886 = vpack.c.b16 %v3817, %v3814
      %v3887 = vpack.c.b16 %v3821, %v3818
      %v3888 = vpack.c.b16 %v3822, %v3819
      %v3889 = vpack.c.b16 %v3823, %v3820
      %v3890 = vpack.c.b16 %v3827, %v3824
      %v3891 = vpack.c.b16 %v3828, %v3825
      %v3892 = vpack.c.b16 %v3829, %v3826
      %v3893 = vpack.c.b16 %v3833, %v3830
      %v3894 = vpack.c.b16 %v3834, %v3831
      %v3895 = vpack.c.b16 %v3835, %v3832
      %v3896 = vpack.c.b16 %v3839, %v3836
      %v3897 = vpack.c.b16 %v3840, %v3837
      %v3898 = vpack.c.b16 %v3841, %v3838
      %v3954 = vsel %vm1537, %v3519, 0
      %v3957 = vsel %vm1537, %v3522, 0
      %v3960 = vsel %vm1537, %v3525, 0
      %v3963 = vsel %vm1537, %v3528, 0
      %v3966 = vsel %vm1537, %v3531, 0
      %v3969 = vsel %vm1537, %v3534, 0
      %v3972 = vsel %vm1537, %v3537, 0
      %v3975 = vsel %vm1537, %v3540, 0
      %v3978 = vsel %vm1537, %v3543, 0
      %v3981 = vsel %vm1537, %v3546, 0
      %v3984 = vsel %vm1537, %v3549, 0
      %v3987 = vsel %vm1537, %v3552, 0
      %v3990 = vsel %vm1537, %v3555, 0
      %v3993 = vsel %vm1537, %v3558, 0
      %v3996 = vsel %vm1580, %v3896, 0
      %v3999 = vsel %vm1580, %v3897, 0
      %v4002 = vsel %vm1580, %v3898, 0
      %4004 = vmatprep.subr.bf16.mxu0 %v3864
      %4005 = vmatpush1.bf16.msra.mxu0 %v3863
      %4006 = vmatprep.subr.bf16.mxu0 %v3861
      %4007 = vmatpush1.bf16.msra.mxu0 %v3860
      %4008 = vmatprep.subr.bf16.mxu0 %v3858
      %4009 = vmatpush1.bf16.msra.mxu0 %v3857
      %4010 = vmatprep.subr.bf16.mxu0 %v3855
      %4011 = vmatpush1.bf16.msra.mxu0 %v3854
      %4012 = vmatprep.subr.bf16.mxu0 %v3852
      %4013 = vmatpush1.bf16.msra.mxu0 %v3851
      %4014 = vmatprep.subr.bf16.mxu0 %v3849
      %4015 = vmatpush1.bf16.msra.mxu0 %v3848
      %4016 = vmatprep.subr.bf16.mxu0 %v3846
      %4017 = vmatpush1.bf16.msra.mxu0 %v3845
      %4018 = vmatprep.subr.bf16.mxu0 %v3843
      %4019 = vmatpush1.bf16.msra.mxu0 %v3842
      %4020 = vmatprep.subr.bf16.mxu0 %v3888
      %4021 = vmatpush2.bf16.msra.mxu0 %v3887
      %4022 = vmatprep.subr.bf16.mxu0 %v3885
      %4023 = vmatpush2.bf16.msra.mxu0 %v3884
      %4024 = vmatprep.subr.bf16.mxu0 %v3882
      %4025 = vmatpush2.bf16.msra.mxu0 %v3881
      %4026 = vmatprep.subr.bf16.mxu0 %v3879
      %4027 = vmatpush2.bf16.msra.mxu0 %v3878
      %4028 = vmatprep.subr.bf16.mxu0 %v3876
      %4029 = vmatpush2.bf16.msra.mxu0 %v3875
      %4030 = vmatprep.subr.bf16.mxu0 %v3873
      %4031 = vmatpush2.bf16.msra.mxu0 %v3872
      %4032 = vmatprep.subr.bf16.mxu0 %v3870
      %4033 = vmatpush2.bf16.msra.mxu0 %v3869
      %4034 = vmatprep.subr.bf16.mxu0 %v3867
      %4035 = vmatpush2.bf16.msra.mxu0 %v3866
      %4036 = vmatprep.mubr.bf16.mxu0 %v3518
      %4037 = vmatmul.mubr.bf16.gmra.mxu0 %v3517
      %v4038 = vpop.f32.mrf.mxu0
      %v4039 = vadd.f32 %v3640, %v4038
      %v4040 = vpop.f32.mrf.mxu0
      %v4041 = vadd.f32 %v3644, %v4040
      %v4042 = vpop.f32.mrf.mxu0
      %v4043 = vadd.f32 %v3640, %v4042
      %v4044 = vpop.f32.mrf.mxu0
      %v4045 = vadd.f32 %v3644, %v4044
      %4046 = vmatprep.mubr.bf16.mxu0 %v3521
      %4047 = vmatmul.mubr.bf16.gmra.mxu0 %v3520
      %v4048 = vpop.f32.mrf.mxu0
      %v4049 = vadd.f32 %v3640, %v4048
      %v4050 = vpop.f32.mrf.mxu0
      %v4051 = vadd.f32 %v3644, %v4050
      %v4052 = vpop.f32.mrf.mxu0
      %v4053 = vadd.f32 %v3640, %v4052
      %v4054 = vpop.f32.mrf.mxu0
      %v4055 = vadd.f32 %v3644, %v4054
      %4056 = vmatprep.mubr.bf16.mxu0 %v3524
      %4057 = vmatmul.mubr.bf16.gmra.mxu0 %v3523
      %v4058 = vpop.f32.mrf.mxu0
      %v4059 = vadd.f32 %v3640, %v4058
      %v4060 = vpop.f32.mrf.mxu0
      %v4061 = vadd.f32 %v3644, %v4060
      %v4062 = vpop.f32.mrf.mxu0
      %v4063 = vadd.f32 %v3640, %v4062
      %v4064 = vpop.f32.mrf.mxu0
      %v4065 = vadd.f32 %v3644, %v4064
      %4066 = vmatprep.mubr.bf16.mxu0 %v3527
      %4067 = vmatmul.mubr.bf16.gmra.mxu0 %v3526
      %v4068 = vpop.f32.mrf.mxu0
      %v4069 = vadd.f32 %v3640, %v4068
      %v4070 = vpop.f32.mrf.mxu0
      %v4071 = vadd.f32 %v3644, %v4070
      %v4072 = vpop.f32.mrf.mxu0
      %v4073 = vadd.f32 %v3640, %v4072
      %v4074 = vpop.f32.mrf.mxu0
      %v4075 = vadd.f32 %v3644, %v4074
      %4076 = vmatprep.mubr.bf16.mxu0 %v3530
      %4077 = vmatmul.mubr.bf16.gmra.mxu0 %v3529
      %v4078 = vpop.f32.mrf.mxu0
      %v4079 = vadd.f32 %v3640, %v4078
      %v4080 = vpop.f32.mrf.mxu0
      %v4081 = vadd.f32 %v3644, %v4080
      %v4082 = vpop.f32.mrf.mxu0
      %v4083 = vadd.f32 %v3640, %v4082
      %v4084 = vpop.f32.mrf.mxu0
      %v4085 = vadd.f32 %v3644, %v4084
      %4086 = vmatprep.mubr.bf16.mxu0 %v3533
      %4087 = vmatmul.mubr.bf16.gmra.mxu0 %v3532
      %v4088 = vpop.f32.mrf.mxu0
      %v4089 = vadd.f32 %v3640, %v4088
      %v4090 = vpop.f32.mrf.mxu0
      %v4091 = vadd.f32 %v3644, %v4090
      %v4092 = vpop.f32.mrf.mxu0
      %v4093 = vadd.f32 %v3640, %v4092
      %v4094 = vpop.f32.mrf.mxu0
      %v4095 = vadd.f32 %v3644, %v4094
      %4096 = vmatprep.mubr.bf16.mxu0 %v3536
      %4097 = vmatmul.mubr.bf16.gmra.mxu0 %v3535
      %v4098 = vpop.f32.mrf.mxu0
      %v4099 = vadd.f32 %v3640, %v4098
      %v4100 = vpop.f32.mrf.mxu0
      %v4101 = vadd.f32 %v3644, %v4100
      %v4102 = vpop.f32.mrf.mxu0
      %v4103 = vadd.f32 %v3640, %v4102
      %v4104 = vpop.f32.mrf.mxu0
      %v4105 = vadd.f32 %v3644, %v4104
      %4106 = vmatprep.mubr.bf16.mxu0 %v3539
      %4107 = vmatmul.mubr.bf16.gmra.mxu0 %v3538
      %v4108 = vpop.f32.mrf.mxu0
      %v4109 = vadd.f32 %v3640, %v4108
      %v4110 = vpop.f32.mrf.mxu0
      %v4111 = vadd.f32 %v3644, %v4110
      %v4112 = vpop.f32.mrf.mxu0
      %v4113 = vadd.f32 %v3640, %v4112
      %v4114 = vpop.f32.mrf.mxu0
      %v4115 = vadd.f32 %v3644, %v4114
      %4116 = vmatprep.mubr.bf16.mxu0 %v3542
      %4117 = vmatmul.mubr.bf16.gmra.mxu0 %v3541
      %v4118 = vpop.f32.mrf.mxu0
      %v4119 = vadd.f32 %v3640, %v4118
      %v4120 = vpop.f32.mrf.mxu0
      %v4121 = vadd.f32 %v3644, %v4120
      %v4122 = vpop.f32.mrf.mxu0
      %v4123 = vadd.f32 %v3640, %v4122
      %v4124 = vpop.f32.mrf.mxu0
      %v4125 = vadd.f32 %v3644, %v4124
      %4126 = vmatprep.mubr.bf16.mxu0 %v3545
      %4127 = vmatmul.mubr.bf16.gmra.mxu0 %v3544
      %v4128 = vpop.f32.mrf.mxu0
      %v4129 = vadd.f32 %v3640, %v4128
      %v4130 = vpop.f32.mrf.mxu0
      %v4131 = vadd.f32 %v3644, %v4130
      %v4132 = vpop.f32.mrf.mxu0
      %v4133 = vadd.f32 %v3640, %v4132
      %v4134 = vpop.f32.mrf.mxu0
      %v4135 = vadd.f32 %v3644, %v4134
      %4136 = vmatprep.mubr.bf16.mxu0 %v3548
      %4137 = vmatmul.mubr.bf16.gmra.mxu0 %v3547
      %v4138 = vpop.f32.mrf.mxu0
      %v4139 = vadd.f32 %v3640, %v4138
      %v4140 = vpop.f32.mrf.mxu0
      %v4141 = vadd.f32 %v3644, %v4140
      %v4142 = vpop.f32.mrf.mxu0
      %v4143 = vadd.f32 %v3640, %v4142
      %v4144 = vpop.f32.mrf.mxu0
      %v4145 = vadd.f32 %v3644, %v4144
      %4146 = vmatprep.mubr.bf16.mxu0 %v3551
      %4147 = vmatmul.mubr.bf16.gmra.mxu0 %v3550
      %v4148 = vpop.f32.mrf.mxu0
      %v4149 = vadd.f32 %v3640, %v4148
      %v4150 = vpop.f32.mrf.mxu0
      %v4151 = vadd.f32 %v3644, %v4150
      %v4152 = vpop.f32.mrf.mxu0
      %v4153 = vadd.f32 %v3640, %v4152
      %v4154 = vpop.f32.mrf.mxu0
      %v4155 = vadd.f32 %v3644, %v4154
      %4156 = vmatprep.mubr.bf16.mxu0 %v3554
      %4157 = vmatmul.mubr.bf16.gmra.mxu0 %v3553
      %v4158 = vpop.f32.mrf.mxu0
      %v4159 = vadd.f32 %v3640, %v4158
      %v4160 = vpop.f32.mrf.mxu0
      %v4161 = vadd.f32 %v3644, %v4160
      %v4162 = vpop.f32.mrf.mxu0
      %v4163 = vadd.f32 %v3640, %v4162
      %v4164 = vpop.f32.mrf.mxu0
      %v4165 = vadd.f32 %v3644, %v4164
      %4166 = vmatprep.mubr.bf16.mxu0 %v3557
      %4167 = vmatmul.mubr.bf16.gmra.mxu0 %v3556
      %v4168 = vpop.f32.mrf.mxu0
      %v4169 = vadd.f32 %v3640, %v4168
      %v4170 = vpop.f32.mrf.mxu0
      %v4171 = vadd.f32 %v3644, %v4170
      %v4172 = vpop.f32.mrf.mxu0
      %v4173 = vadd.f32 %v3640, %v4172
      %v4174 = vpop.f32.mrf.mxu0
      %v4175 = vadd.f32 %v3644, %v4174
      %4176 = vdwg.mxu0
      %4177 = vmatprep.subr.bf16.mxu0 0
      %4178 = vmatpush1.bf16.msra.mxu0 0
      %4179 = vmatprep.subr.bf16.mxu0 0
      %4180 = vmatpush1.bf16.msra.mxu0 0
      %4181 = vmatprep.subr.bf16.mxu0 0
      %4182 = vmatpush1.bf16.msra.mxu0 0
      %4183 = vmatprep.subr.bf16.mxu0 0
      %4184 = vmatpush1.bf16.msra.mxu0 0
      %4185 = vmatprep.subr.bf16.mxu0 0
      %4186 = vmatpush1.bf16.msra.mxu0 0
      %4187 = vmatprep.subr.bf16.mxu0 %v3999
      %4188 = vmatpush1.bf16.msra.mxu0 %v3996
      %4189 = vmatprep.subr.bf16.mxu0 %v3894
      %4190 = vmatpush1.bf16.msra.mxu0 %v3893
      %4191 = vmatprep.subr.bf16.mxu0 %v3891
      %4192 = vmatpush1.bf16.msra.mxu0 %v3890
      %4193 = vmatprep.subr.bf16.mxu0 0
      %4194 = vmatpush2.bf16.msra.mxu0 0
      %4195 = vmatprep.subr.bf16.mxu0 0
      %4196 = vmatpush2.bf16.msra.mxu0 0
      %4197 = vmatprep.subr.bf16.mxu0 0
      %4198 = vmatpush2.bf16.msra.mxu0 0
      %4199 = vmatprep.subr.bf16.mxu0 0
      %4200 = vmatpush2.bf16.msra.mxu0 0
      %4201 = vmatprep.subr.bf16.mxu0 0
      %4202 = vmatpush2.bf16.msra.mxu0 0
      %4203 = vmatprep.subr.bf16.mxu0 0
      %4204 = vmatpush2.bf16.msra.mxu0 0
      %4205 = vmatprep.subr.bf16.mxu0 0
      %4206 = vmatpush2.bf16.msra.mxu0 0
      %4207 = vmatprep.subr.bf16.mxu0 0
      %4208 = vmatpush2.bf16.msra.mxu0 0
      %4209 = vmatprep.mubr.bf16.mxu0 0
      %4210 = vmatmul.mubr.bf16.gmra.mxu0 %v3954
      %v4211 = vpop.f32.mrf.mxu0
      %v4212 = vadd.f32 %v4039, %v4211
      %v4213 = vpop.f32.mrf.mxu0
      %v4214 = vadd.f32 %v4041, %v4213
      %v4215 = vpop.f32.mrf.mxu0
      %v4216 = vadd.f32 %v4043, %v4215
      %v4217 = vpop.f32.mrf.mxu0
      %v4218 = vadd.f32 %v4045, %v4217
      %4219 = vmatprep.mubr.bf16.mxu0 0
      %4220 = vmatmul.mubr.bf16.gmra.mxu0 %v3957
      %v4221 = vpop.f32.mrf.mxu0
      %v4222 = vadd.f32 %v4049, %v4221
      %v4223 = vpop.f32.mrf.mxu0
      %v4224 = vadd.f32 %v4051, %v4223
      %v4225 = vpop.f32.mrf.mxu0
      %v4226 = vadd.f32 %v4053, %v4225
      %v4227 = vpop.f32.mrf.mxu0
      %v4228 = vadd.f32 %v4055, %v4227
      %4229 = vmatprep.mubr.bf16.mxu0 0
      %4230 = vmatmul.mubr.bf16.gmra.mxu0 %v3960
      %v4231 = vpop.f32.mrf.mxu0
      %v4232 = vadd.f32 %v4059, %v4231
      %v4233 = vpop.f32.mrf.mxu0
      %v4234 = vadd.f32 %v4061, %v4233
      %v4235 = vpop.f32.mrf.mxu0
      %v4236 = vadd.f32 %v4063, %v4235
      %v4237 = vpop.f32.mrf.mxu0
      %v4238 = vadd.f32 %v4065, %v4237
      %4239 = vmatprep.mubr.bf16.mxu0 0
      %4240 = vmatmul.mubr.bf16.gmra.mxu0 %v3963
      %v4241 = vpop.f32.mrf.mxu0
      %v4242 = vadd.f32 %v4069, %v4241
      %v4243 = vpop.f32.mrf.mxu0
      %v4244 = vadd.f32 %v4071, %v4243
      %v4245 = vpop.f32.mrf.mxu0
      %v4246 = vadd.f32 %v4073, %v4245
      %v4247 = vpop.f32.mrf.mxu0
      %v4248 = vadd.f32 %v4075, %v4247
      %4249 = vmatprep.mubr.bf16.mxu0 0
      %4250 = vmatmul.mubr.bf16.gmra.mxu0 %v3966
      %v4251 = vpop.f32.mrf.mxu0
      %v4252 = vadd.f32 %v4079, %v4251
      %v4253 = vpop.f32.mrf.mxu0
      %v4254 = vadd.f32 %v4081, %v4253
      %v4255 = vpop.f32.mrf.mxu0
      %v4256 = vadd.f32 %v4083, %v4255
      %v4257 = vpop.f32.mrf.mxu0
      %v4258 = vadd.f32 %v4085, %v4257
      %4259 = vmatprep.mubr.bf16.mxu0 0
      %4260 = vmatmul.mubr.bf16.gmra.mxu0 %v3969
      %v4261 = vpop.f32.mrf.mxu0
      %v4262 = vadd.f32 %v4089, %v4261
      %v4263 = vpop.f32.mrf.mxu0
      %v4264 = vadd.f32 %v4091, %v4263
      %v4265 = vpop.f32.mrf.mxu0
      %v4266 = vadd.f32 %v4093, %v4265
      %v4267 = vpop.f32.mrf.mxu0
      %v4268 = vadd.f32 %v4095, %v4267
      %4269 = vmatprep.mubr.bf16.mxu0 0
      %4270 = vmatmul.mubr.bf16.gmra.mxu0 %v3972
      %v4271 = vpop.f32.mrf.mxu0
      %v4272 = vadd.f32 %v4099, %v4271
      %v4273 = vpop.f32.mrf.mxu0
      %v4274 = vadd.f32 %v4101, %v4273
      %v4275 = vpop.f32.mrf.mxu0
      %v4276 = vadd.f32 %v4103, %v4275
      %v4277 = vpop.f32.mrf.mxu0
      %v4278 = vadd.f32 %v4105, %v4277
      %4279 = vmatprep.mubr.bf16.mxu0 0
      %4280 = vmatmul.mubr.bf16.gmra.mxu0 %v3975
      %v4281 = vpop.f32.mrf.mxu0
      %v4282 = vadd.f32 %v4109, %v4281
      %v4283 = vpop.f32.mrf.mxu0
      %v4284 = vadd.f32 %v4111, %v4283
      %v4285 = vpop.f32.mrf.mxu0
      %v4286 = vadd.f32 %v4113, %v4285
      %v4287 = vpop.f32.mrf.mxu0
      %v4288 = vadd.f32 %v4115, %v4287
      %4289 = vmatprep.mubr.bf16.mxu0 0
      %4290 = vmatmul.mubr.bf16.gmra.mxu0 %v3978
      %v4291 = vpop.f32.mrf.mxu0
      %v4292 = vadd.f32 %v4119, %v4291
      %v4293 = vpop.f32.mrf.mxu0
      %v4294 = vadd.f32 %v4121, %v4293
      %v4295 = vpop.f32.mrf.mxu0
      %v4296 = vadd.f32 %v4123, %v4295
      %v4297 = vpop.f32.mrf.mxu0
      %v4298 = vadd.f32 %v4125, %v4297
      %4299 = vmatprep.mubr.bf16.mxu0 0
      %4300 = vmatmul.mubr.bf16.gmra.mxu0 %v3981
      %v4301 = vpop.f32.mrf.mxu0
      %v4302 = vadd.f32 %v4129, %v4301
      %v4303 = vpop.f32.mrf.mxu0
      %v4304 = vadd.f32 %v4131, %v4303
      %v4305 = vpop.f32.mrf.mxu0
      %v4306 = vadd.f32 %v4133, %v4305
      %v4307 = vpop.f32.mrf.mxu0
      %v4308 = vadd.f32 %v4135, %v4307
      %4309 = vmatprep.mubr.bf16.mxu0 0
      %4310 = vmatmul.mubr.bf16.gmra.mxu0 %v3984
      %v4311 = vpop.f32.mrf.mxu0
      %v4312 = vadd.f32 %v4139, %v4311
      %v4313 = vpop.f32.mrf.mxu0
      %v4314 = vadd.f32 %v4141, %v4313
      %v4315 = vpop.f32.mrf.mxu0
      %v4316 = vadd.f32 %v4143, %v4315
      %v4317 = vpop.f32.mrf.mxu0
      %v4318 = vadd.f32 %v4145, %v4317
      %4319 = vmatprep.mubr.bf16.mxu0 0
      %4320 = vmatmul.mubr.bf16.gmra.mxu0 %v3987
      %v4321 = vpop.f32.mrf.mxu0
      %v4322 = vadd.f32 %v4149, %v4321
      %v4323 = vpop.f32.mrf.mxu0
      %v4324 = vadd.f32 %v4151, %v4323
      %v4325 = vpop.f32.mrf.mxu0
      %v4326 = vadd.f32 %v4153, %v4325
      %v4327 = vpop.f32.mrf.mxu0
      %v4328 = vadd.f32 %v4155, %v4327
      %4329 = vmatprep.mubr.bf16.mxu0 0
      %4330 = vmatmul.mubr.bf16.gmra.mxu0 %v3990
      %v4331 = vpop.f32.mrf.mxu0
      %v4332 = vadd.f32 %v4159, %v4331
      %v4333 = vpop.f32.mrf.mxu0
      %v4334 = vadd.f32 %v4161, %v4333
      %v4335 = vpop.f32.mrf.mxu0
      %v4336 = vadd.f32 %v4163, %v4335
      %v4337 = vpop.f32.mrf.mxu0
      %v4338 = vadd.f32 %v4165, %v4337
      %4339 = vmatprep.mubr.bf16.mxu0 0
      %4340 = vmatmul.mubr.bf16.gmra.mxu0 %v3993
      %v4341 = vpop.f32.mrf.mxu0
      %v4342 = vadd.f32 %v4169, %v4341
      %v4343 = vpop.f32.mrf.mxu0
      %v4344 = vadd.f32 %v4171, %v4343
      %v4345 = vpop.f32.mrf.mxu0
      %v4346 = vadd.f32 %v4173, %v4345
      %v4347 = vpop.f32.mrf.mxu0
      %v4348 = vadd.f32 %v4175, %v4347
      %4349 = vdwg.mxu0
      %4350 = vmatprep.subr.bf16.mxu0 0
      %4351 = vmatpush1.bf16.msra.mxu0 %v3865
      %4352 = vmatprep.subr.bf16.mxu0 0
      %4353 = vmatpush1.bf16.msra.mxu0 %v3862
      %4354 = vmatprep.subr.bf16.mxu0 0
      %4355 = vmatpush1.bf16.msra.mxu0 %v3859
      %4356 = vmatprep.subr.bf16.mxu0 0
      %4357 = vmatpush1.bf16.msra.mxu0 %v3856
      %4358 = vmatprep.subr.bf16.mxu0 0
      %4359 = vmatpush1.bf16.msra.mxu0 %v3853
      %4360 = vmatprep.subr.bf16.mxu0 0
      %4361 = vmatpush1.bf16.msra.mxu0 %v3850
      %4362 = vmatprep.subr.bf16.mxu0 0
      %4363 = vmatpush1.bf16.msra.mxu0 %v3847
      %4364 = vmatprep.subr.bf16.mxu0 0
      %4365 = vmatpush1.bf16.msra.mxu0 %v3844
      %4366 = vmatprep.subr.bf16.mxu0 0
      %4367 = vmatpush2.bf16.msra.mxu0 %v3889
      %4368 = vmatprep.subr.bf16.mxu0 0
      %4369 = vmatpush2.bf16.msra.mxu0 %v3886
      %4370 = vmatprep.subr.bf16.mxu0 0
      %4371 = vmatpush2.bf16.msra.mxu0 %v3883
      %4372 = vmatprep.subr.bf16.mxu0 0
      %4373 = vmatpush2.bf16.msra.mxu0 %v3880
      %4374 = vmatprep.subr.bf16.mxu0 0
      %4375 = vmatpush2.bf16.msra.mxu0 %v3877
      %4376 = vmatprep.subr.bf16.mxu0 0
      %4377 = vmatpush2.bf16.msra.mxu0 %v3874
      %4378 = vmatprep.subr.bf16.mxu0 0
      %4379 = vmatpush2.bf16.msra.mxu0 %v3871
      %4380 = vmatprep.subr.bf16.mxu0 0
      %4381 = vmatpush2.bf16.msra.mxu0 %v3868
      %4382 = vmatprep.mubr.bf16.mxu0 %v3518
      %4383 = vmatmul.mubr.bf16.gmra.mxu0 %v3517
      %v4384 = vpop.f32.mrf.mxu0
      %v4385 = vadd.f32 %v3648, %v4384
      %v4386 = vpop.f32.mrf.mxu0
      %v4387 = vpop.f32.mrf.mxu0
      %v4388 = vadd.f32 %v3648, %v4387
      %v4389 = vpop.f32.mrf.mxu0
      %4390 = vmatprep.mubr.bf16.mxu0 %v3521
      %4391 = vmatmul.mubr.bf16.gmra.mxu0 %v3520
      %v4392 = vpop.f32.mrf.mxu0
      %v4393 = vadd.f32 %v3648, %v4392
      %v4394 = vpop.f32.mrf.mxu0
      %v4395 = vpop.f32.mrf.mxu0
      %v4396 = vadd.f32 %v3648, %v4395
      %v4397 = vpop.f32.mrf.mxu0
      %4398 = vmatprep.mubr.bf16.mxu0 %v3524
      %4399 = vmatmul.mubr.bf16.gmra.mxu0 %v3523
      %v4400 = vpop.f32.mrf.mxu0
      %v4401 = vadd.f32 %v3648, %v4400
      %v4402 = vpop.f32.mrf.mxu0
      %v4403 = vpop.f32.mrf.mxu0
      %v4404 = vadd.f32 %v3648, %v4403
      %v4405 = vpop.f32.mrf.mxu0
      %4406 = vmatprep.mubr.bf16.mxu0 %v3527
      %4407 = vmatmul.mubr.bf16.gmra.mxu0 %v3526
      %v4408 = vpop.f32.mrf.mxu0
      %v4409 = vadd.f32 %v3648, %v4408
      %v4410 = vpop.f32.mrf.mxu0
      %v4411 = vpop.f32.mrf.mxu0
      %v4412 = vadd.f32 %v3648, %v4411
      %v4413 = vpop.f32.mrf.mxu0
      %4414 = vmatprep.mubr.bf16.mxu0 %v3530
      %4415 = vmatmul.mubr.bf16.gmra.mxu0 %v3529
      %v4416 = vpop.f32.mrf.mxu0
      %v4417 = vadd.f32 %v3648, %v4416
      %v4418 = vpop.f32.mrf.mxu0
      %v4419 = vpop.f32.mrf.mxu0
      %v4420 = vadd.f32 %v3648, %v4419
      %v4421 = vpop.f32.mrf.mxu0
      %4422 = vmatprep.mubr.bf16.mxu0 %v3533
      %4423 = vmatmul.mubr.bf16.gmra.mxu0 %v3532
      %v4424 = vpop.f32.mrf.mxu0
      %v4425 = vadd.f32 %v3648, %v4424
      %v4426 = vpop.f32.mrf.mxu0
      %v4427 = vpop.f32.mrf.mxu0
      %v4428 = vadd.f32 %v3648, %v4427
      %v4429 = vpop.f32.mrf.mxu0
      %4430 = vmatprep.mubr.bf16.mxu0 %v3536
      %4431 = vmatmul.mubr.bf16.gmra.mxu0 %v3535
      %v4432 = vpop.f32.mrf.mxu0
      %v4433 = vadd.f32 %v3648, %v4432
      %v4434 = vpop.f32.mrf.mxu0
      %v4435 = vpop.f32.mrf.mxu0
      %v4436 = vadd.f32 %v3648, %v4435
      %v4437 = vpop.f32.mrf.mxu0
      %4438 = vmatprep.mubr.bf16.mxu0 %v3539
      %4439 = vmatmul.mubr.bf16.gmra.mxu0 %v3538
      %v4440 = vpop.f32.mrf.mxu0
      %v4441 = vadd.f32 %v3648, %v4440
      %v4442 = vpop.f32.mrf.mxu0
      %v4443 = vpop.f32.mrf.mxu0
      %v4444 = vadd.f32 %v3648, %v4443
      %v4445 = vpop.f32.mrf.mxu0
      %4446 = vmatprep.mubr.bf16.mxu0 %v3542
      %4447 = vmatmul.mubr.bf16.gmra.mxu0 %v3541
      %v4448 = vpop.f32.mrf.mxu0
      %v4449 = vadd.f32 %v3648, %v4448
      %v4450 = vpop.f32.mrf.mxu0
      %v4451 = vpop.f32.mrf.mxu0
      %v4452 = vadd.f32 %v3648, %v4451
      %v4453 = vpop.f32.mrf.mxu0
      %4454 = vmatprep.mubr.bf16.mxu0 %v3545
      %4455 = vmatmul.mubr.bf16.gmra.mxu0 %v3544
      %v4456 = vpop.f32.mrf.mxu0
      %v4457 = vadd.f32 %v3648, %v4456
      %v4458 = vpop.f32.mrf.mxu0
      %v4459 = vpop.f32.mrf.mxu0
      %v4460 = vadd.f32 %v3648, %v4459
      %v4461 = vpop.f32.mrf.mxu0
      %4462 = vmatprep.mubr.bf16.mxu0 %v3548
      %4463 = vmatmul.mubr.bf16.gmra.mxu0 %v3547
      %v4464 = vpop.f32.mrf.mxu0
      %v4465 = vadd.f32 %v3648, %v4464
      %v4466 = vpop.f32.mrf.mxu0
      %v4467 = vpop.f32.mrf.mxu0
      %v4468 = vadd.f32 %v3648, %v4467
      %v4469 = vpop.f32.mrf.mxu0
      %4470 = vmatprep.mubr.bf16.mxu0 %v3551
      %4471 = vmatmul.mubr.bf16.gmra.mxu0 %v3550
      %v4472 = vpop.f32.mrf.mxu0
      %v4473 = vadd.f32 %v3648, %v4472
      %v4474 = vpop.f32.mrf.mxu0
      %v4475 = vpop.f32.mrf.mxu0
      %v4476 = vadd.f32 %v3648, %v4475
      %v4477 = vpop.f32.mrf.mxu0
      %4478 = vmatprep.mubr.bf16.mxu0 %v3554
      %4479 = vmatmul.mubr.bf16.gmra.mxu0 %v3553
      %v4480 = vpop.f32.mrf.mxu0
      %v4481 = vadd.f32 %v3648, %v4480
      %v4482 = vpop.f32.mrf.mxu0
      %v4483 = vpop.f32.mrf.mxu0
      %v4484 = vadd.f32 %v3648, %v4483
      %v4485 = vpop.f32.mrf.mxu0
      %4486 = vmatprep.mubr.bf16.mxu0 %v3557
      %4487 = vmatmul.mubr.bf16.gmra.mxu0 %v3556
      %v4488 = vpop.f32.mrf.mxu0
      %v4489 = vadd.f32 %v3648, %v4488
      %v4490 = vpop.f32.mrf.mxu0
      %v4491 = vpop.f32.mrf.mxu0
      %v4492 = vadd.f32 %v3648, %v4491
      %v4493 = vpop.f32.mrf.mxu0
      %4494 = vdwg.mxu0
      %4495 = vmatprep.subr.bf16.mxu0 0
      %4496 = vmatpush1.bf16.msra.mxu0 0
      %4497 = vmatprep.subr.bf16.mxu0 0
      %4498 = vmatpush1.bf16.msra.mxu0 0
      %4499 = vmatprep.subr.bf16.mxu0 0
      %4500 = vmatpush1.bf16.msra.mxu0 0
      %4501 = vmatprep.subr.bf16.mxu0 0
      %4502 = vmatpush1.bf16.msra.mxu0 0
      %4503 = vmatprep.subr.bf16.mxu0 0
      %4504 = vmatpush1.bf16.msra.mxu0 0
      %4505 = vmatprep.subr.bf16.mxu0 0
      %4506 = vmatpush1.bf16.msra.mxu0 %v4002
      %4507 = vmatprep.subr.bf16.mxu0 0
      %4508 = vmatpush1.bf16.msra.mxu0 %v3895
      %4509 = vmatprep.subr.bf16.mxu0 0
      %4510 = vmatpush1.bf16.msra.mxu0 %v3892
      %4511 = vmatprep.subr.bf16.mxu0 0
      %4512 = vmatpush2.bf16.msra.mxu0 0
      %4513 = vmatprep.subr.bf16.mxu0 0
      %4514 = vmatpush2.bf16.msra.mxu0 0
      %4515 = vmatprep.subr.bf16.mxu0 0
      %4516 = vmatpush2.bf16.msra.mxu0 0
      %4517 = vmatprep.subr.bf16.mxu0 0
      %4518 = vmatpush2.bf16.msra.mxu0 0
      %4519 = vmatprep.subr.bf16.mxu0 0
      %4520 = vmatpush2.bf16.msra.mxu0 0
      %4521 = vmatprep.subr.bf16.mxu0 0
      %4522 = vmatpush2.bf16.msra.mxu0 0
      %4523 = vmatprep.subr.bf16.mxu0 0
      %4524 = vmatpush2.bf16.msra.mxu0 0
      %4525 = vmatprep.subr.bf16.mxu0 0
      %4526 = vmatpush2.bf16.msra.mxu0 0
      %4527 = vmatprep.mubr.bf16.mxu0 0
      %4528 = vmatmul.mubr.bf16.gmra.mxu0 %v3954
      %v4529 = vpop.f32.mrf.mxu0
      %v4530 = vadd.f32 %v4385, %v4529
      %v4531 = vpop.f32.mrf.mxu0
      %v4532 = vpop.f32.mrf.mxu0
      %v4533 = vadd.f32 %v4388, %v4532
      %v4534 = vpop.f32.mrf.mxu0
      %4535 = vmatprep.mubr.bf16.mxu0 0
      %4536 = vmatmul.mubr.bf16.gmra.mxu0 %v3957
      %v4537 = vpop.f32.mrf.mxu0
      %v4538 = vadd.f32 %v4393, %v4537
      %v4539 = vpop.f32.mrf.mxu0
      %v4540 = vpop.f32.mrf.mxu0
      %v4541 = vadd.f32 %v4396, %v4540
      %v4542 = vpop.f32.mrf.mxu0
      %4543 = vmatprep.mubr.bf16.mxu0 0
      %4544 = vmatmul.mubr.bf16.gmra.mxu0 %v3960
      %v4545 = vpop.f32.mrf.mxu0
      %v4546 = vadd.f32 %v4401, %v4545
      %v4547 = vpop.f32.mrf.mxu0
      %v4548 = vpop.f32.mrf.mxu0
      %v4549 = vadd.f32 %v4404, %v4548
      %v4550 = vpop.f32.mrf.mxu0
      %4551 = vmatprep.mubr.bf16.mxu0 0
      %4552 = vmatmul.mubr.bf16.gmra.mxu0 %v3963
      %v4553 = vpop.f32.mrf.mxu0
      %v4554 = vadd.f32 %v4409, %v4553
      %v4555 = vpop.f32.mrf.mxu0
      %v4556 = vpop.f32.mrf.mxu0
      %v4557 = vadd.f32 %v4412, %v4556
      %v4558 = vpop.f32.mrf.mxu0
      %4559 = vmatprep.mubr.bf16.mxu0 0
      %4560 = vmatmul.mubr.bf16.gmra.mxu0 %v3966
      %v4561 = vpop.f32.mrf.mxu0
      %v4562 = vadd.f32 %v4417, %v4561
      %v4563 = vpop.f32.mrf.mxu0
      %v4564 = vpop.f32.mrf.mxu0
      %v4565 = vadd.f32 %v4420, %v4564
      %v4566 = vpop.f32.mrf.mxu0
      %4567 = vmatprep.mubr.bf16.mxu0 0
      %4568 = vmatmul.mubr.bf16.gmra.mxu0 %v3969
      %v4569 = vpop.f32.mrf.mxu0
      %v4570 = vadd.f32 %v4425, %v4569
      %v4571 = vpop.f32.mrf.mxu0
      %v4572 = vpop.f32.mrf.mxu0
      %v4573 = vadd.f32 %v4428, %v4572
      %v4574 = vpop.f32.mrf.mxu0
      %4575 = vmatprep.mubr.bf16.mxu0 0
      %4576 = vmatmul.mubr.bf16.gmra.mxu0 %v3972
      %v4577 = vpop.f32.mrf.mxu0
      %v4578 = vadd.f32 %v4433, %v4577
      %v4579 = vpop.f32.mrf.mxu0
      %v4580 = vpop.f32.mrf.mxu0
      %v4581 = vadd.f32 %v4436, %v4580
      %v4582 = vpop.f32.mrf.mxu0
      %4583 = vmatprep.mubr.bf16.mxu0 0
      %4584 = vmatmul.mubr.bf16.gmra.mxu0 %v3975
      %v4585 = vpop.f32.mrf.mxu0
      %v4586 = vadd.f32 %v4441, %v4585
      %v4587 = vpop.f32.mrf.mxu0
      %v4588 = vpop.f32.mrf.mxu0
      %v4589 = vadd.f32 %v4444, %v4588
      %v4590 = vpop.f32.mrf.mxu0
      %4591 = vmatprep.mubr.bf16.mxu0 0
      %4592 = vmatmul.mubr.bf16.gmra.mxu0 %v3978
      %v4593 = vpop.f32.mrf.mxu0
      %v4594 = vadd.f32 %v4449, %v4593
      %v4595 = vpop.f32.mrf.mxu0
      %v4596 = vpop.f32.mrf.mxu0
      %v4597 = vadd.f32 %v4452, %v4596
      %v4598 = vpop.f32.mrf.mxu0
      %4599 = vmatprep.mubr.bf16.mxu0 0
      %4600 = vmatmul.mubr.bf16.gmra.mxu0 %v3981
      %v4601 = vpop.f32.mrf.mxu0
      %v4602 = vadd.f32 %v4457, %v4601
      %v4603 = vpop.f32.mrf.mxu0
      %v4604 = vpop.f32.mrf.mxu0
      %v4605 = vadd.f32 %v4460, %v4604
      %v4606 = vpop.f32.mrf.mxu0
      %4607 = vmatprep.mubr.bf16.mxu0 0
      %4608 = vmatmul.mubr.bf16.gmra.mxu0 %v3984
      %v4609 = vpop.f32.mrf.mxu0
      %v4610 = vadd.f32 %v4465, %v4609
      %v4611 = vpop.f32.mrf.mxu0
      %v4612 = vpop.f32.mrf.mxu0
      %v4613 = vadd.f32 %v4468, %v4612
      %v4614 = vpop.f32.mrf.mxu0
      %4615 = vmatprep.mubr.bf16.mxu0 0
      %4616 = vmatmul.mubr.bf16.gmra.mxu0 %v3987
      %v4617 = vpop.f32.mrf.mxu0
      %v4618 = vadd.f32 %v4473, %v4617
      %v4619 = vpop.f32.mrf.mxu0
      %v4620 = vpop.f32.mrf.mxu0
      %v4621 = vadd.f32 %v4476, %v4620
      %v4622 = vpop.f32.mrf.mxu0
      %4623 = vmatprep.mubr.bf16.mxu0 0
      %4624 = vmatmul.mubr.bf16.gmra.mxu0 %v3990
      %v4625 = vpop.f32.mrf.mxu0
      %v4626 = vadd.f32 %v4481, %v4625
      %v4627 = vpop.f32.mrf.mxu0
      %v4628 = vpop.f32.mrf.mxu0
      %v4629 = vadd.f32 %v4484, %v4628
      %v4630 = vpop.f32.mrf.mxu0
      %4631 = vmatprep.mubr.bf16.mxu0 0
      %4632 = vmatmul.mubr.bf16.gmra.mxu0 %v3993
      %v4633 = vpop.f32.mrf.mxu0
      %v4634 = vadd.f32 %v4489, %v4633
      %v4635 = vpop.f32.mrf.mxu0
      %v4636 = vpop.f32.mrf.mxu0
      %v4637 = vadd.f32 %v4492, %v4636
      %v4638 = vpop.f32.mrf.mxu0
      %4639 = vdwg.mxu0
      %v4640 = vtanh.pop %v4212
      %v4641 = vtanh.pop %v4214
      %v4642 = vtanh.pop %v4530
      %v4643 = vtanh.pop %v4216
      %v4644 = vtanh.pop %v4218
      %v4645 = vtanh.pop %v4533
      %v4646 = vtanh.pop %v4222
      %v4647 = vtanh.pop %v4224
      %v4648 = vtanh.pop %v4538
      %v4649 = vtanh.pop %v4226
      %v4650 = vtanh.pop %v4228
      %v4651 = vtanh.pop %v4541
      %v4652 = vtanh.pop %v4232
      %v4653 = vtanh.pop %v4234
      %v4654 = vtanh.pop %v4546
      %v4655 = vtanh.pop %v4236
      %v4656 = vtanh.pop %v4238
      %v4657 = vtanh.pop %v4549
      %v4658 = vtanh.pop %v4242
      %v4659 = vtanh.pop %v4244
      %v4660 = vtanh.pop %v4554
      %v4661 = vtanh.pop %v4246
      %v4662 = vtanh.pop %v4248
      %v4663 = vtanh.pop %v4557
      %v4664 = vtanh.pop %v4252
      %v4665 = vtanh.pop %v4254
      %v4666 = vtanh.pop %v4562
      %v4667 = vtanh.pop %v4256
      %v4668 = vtanh.pop %v4258
      %v4669 = vtanh.pop %v4565
      %v4670 = vtanh.pop %v4262
      %v4671 = vtanh.pop %v4264
      %v4672 = vtanh.pop %v4570
      %v4673 = vtanh.pop %v4266
      %v4674 = vtanh.pop %v4268
      %v4675 = vtanh.pop %v4573
      %v4676 = vtanh.pop %v4272
      %v4677 = vtanh.pop %v4274
      %v4678 = vtanh.pop %v4578
      %v4679 = vtanh.pop %v4276
      %v4680 = vtanh.pop %v4278
      %v4681 = vtanh.pop %v4581
      %v4682 = vtanh.pop %v4282
      %v4683 = vtanh.pop %v4284
      %v4684 = vtanh.pop %v4586
      %v4685 = vtanh.pop %v4286
      %v4686 = vtanh.pop %v4288
      %v4687 = vtanh.pop %v4589
      %v4688 = vtanh.pop %v4292
      %v4689 = vtanh.pop %v4294
      %v4690 = vtanh.pop %v4594
      %v4691 = vtanh.pop %v4296
      %v4692 = vtanh.pop %v4298
      %v4693 = vtanh.pop %v4597
      %v4694 = vtanh.pop %v4302
      %v4695 = vtanh.pop %v4304
      %v4696 = vtanh.pop %v4602
      %v4697 = vtanh.pop %v4306
      %v4698 = vtanh.pop %v4308
      %v4699 = vtanh.pop %v4605
      %v4700 = vtanh.pop %v4312
      %v4701 = vtanh.pop %v4314
      %v4702 = vtanh.pop %v4610
      %v4703 = vtanh.pop %v4316
      %v4704 = vtanh.pop %v4318
      %v4705 = vtanh.pop %v4613
      %v4706 = vtanh.pop %v4322
      %v4707 = vtanh.pop %v4324
      %v4708 = vtanh.pop %v4618
      %v4709 = vtanh.pop %v4326
      %v4710 = vtanh.pop %v4328
      %v4711 = vtanh.pop %v4621
      %v4712 = vtanh.pop %v4332
      %v4713 = vtanh.pop %v4334
      %v4714 = vtanh.pop %v4626
      %v4715 = vtanh.pop %v4336
      %v4716 = vtanh.pop %v4338
      %v4717 = vtanh.pop %v4629
      %v4718 = vtanh.pop %v4342
      %v4719 = vtanh.pop %v4344
      %v4720 = vtanh.pop %v4634
      %v4721 = vtanh.pop %v4346
      %v4722 = vtanh.pop %v4348
      %v4723 = vtanh.pop %v4637
      %v4724 = vpack.c.bf16 %v4643, %v4640
      %v4725 = vpack.c.bf16 %v4644, %v4641
      %v4726 = vpack.c.bf16 %v4645, %v4642
      %v4727 = vpack.c.bf16 %v4649, %v4646
      %v4728 = vpack.c.bf16 %v4650, %v4647
      %v4729 = vpack.c.bf16 %v4651, %v4648
      %v4730 = vpack.c.bf16 %v4655, %v4652
      %v4731 = vpack.c.bf16 %v4656, %v4653
      %v4732 = vpack.c.bf16 %v4657, %v4654
      %v4733 = vpack.c.bf16 %v4661, %v4658
      %v4734 = vpack.c.bf16 %v4662, %v4659
      %v4735 = vpack.c.bf16 %v4663, %v4660
      %v4736 = vpack.c.bf16 %v4667, %v4664
      %v4737 = vpack.c.bf16 %v4668, %v4665
      %v4738 = vpack.c.bf16 %v4669, %v4666
      %v4739 = vpack.c.bf16 %v4673, %v4670
      %v4740 = vpack.c.bf16 %v4674, %v4671
      %v4741 = vpack.c.bf16 %v4675, %v4672
      %v4742 = vpack.c.bf16 %v4679, %v4676
      %v4743 = vpack.c.bf16 %v4680, %v4677
      %v4744 = vpack.c.bf16 %v4681, %v4678
      %v4745 = vpack.c.bf16 %v4685, %v4682
      %v4746 = vpack.c.bf16 %v4686, %v4683
      %v4747 = vpack.c.bf16 %v4687, %v4684
      %v4748 = vpack.c.bf16 %v4691, %v4688
      %v4749 = vpack.c.bf16 %v4692, %v4689
      %v4750 = vpack.c.bf16 %v4693, %v4690
      %v4751 = vpack.c.bf16 %v4697, %v4694
      %v4752 = vpack.c.bf16 %v4698, %v4695
      %v4753 = vpack.c.bf16 %v4699, %v4696
      %v4754 = vpack.c.bf16 %v4703, %v4700
      %v4755 = vpack.c.bf16 %v4704, %v4701
      %v4756 = vpack.c.bf16 %v4705, %v4702
      %v4757 = vpack.c.bf16 %v4709, %v4706
      %v4758 = vpack.c.bf16 %v4710, %v4707
      %v4759 = vpack.c.bf16 %v4711, %v4708
      %v4760 = vpack.c.bf16 %v4715, %v4712
      %v4761 = vpack.c.bf16 %v4716, %v4713
      %v4762 = vpack.c.bf16 %v4717, %v4714
      %v4763 = vpack.c.bf16 %v4721, %v4718
      %v4764 = vpack.c.bf16 %v4722, %v4719
      %v4765 = vpack.c.bf16 %v4723, %v4720
      %v4766 = vld [vmem:[%s9] sm:$0xf]
      %v4767 = vld [vmem:[%s9 + $0x4] sm:$0xf]
      %v4768 = vld [vmem:[%s9 + $0x8] sm:$0xf]
      %v4769 = vld [vmem:[%s9 + $0xc] sm:$0xf]
      %v4770 = vld [vmem:[%s9 + $0x10] sm:$0xf]
      %v4771 = vld [vmem:[%s9 + $0x14] sm:$0xf]
      %v4772 = vld [vmem:[%s9 + $0x18] sm:$0xf]
      %v4773 = vld [vmem:[%s9 + $0x1c] sm:$0xf]
      %v4774 = vld [vmem:[%s9 + $0x20] sm:$0xf]
      %v4775 = vld [vmem:[%s9 + $0x24] sm:$0xf]
      %v4776 = vld [vmem:[%s9 + $0x28] sm:$0xf]
      %v4777 = vld [vmem:[%s9 + $0x2c] sm:$0xf]
      %v4778 = vld [vmem:[%s9 + $0x30] sm:$0xf]
      %v4779 = vld [vmem:[%s9 + $0x34] sm:$0xf]
      %v4780 = vld [vmem:[%s9 + $0x38] sm:$0xf]
      %v4781 = vld [vmem:[%s9 + $0x3c] sm:$0xf]
      %v4782 = vld [vmem:[%s9 + $0x40] sm:$0xf]
      %v4783 = vld [vmem:[%s9 + $0x44] sm:$0xf]
      %v4784 = vld [vmem:[%s9 + $0x48] sm:$0xf]
      %v4785 = vld [vmem:[%s9 + $0x4c] sm:$0xf]
      %v4786 = vld [vmem:[%s9 + $0x50] sm:$0xf]
      %v4787 = vld [vmem:[%s9 + $0x54] sm:$0xf]
      %v4788 = vld [vmem:[%s9 + $0x58] sm:$0xf]
      %v4789 = vld [vmem:[%s9 + $0x5c] sm:$0xf]
      %v4790 = vld [vmem:[%s9 + $0x60] sm:$0xf]
      %v4791 = vld [vmem:[%s9 + $0x64] sm:$0xf]
      %v4792 = vld [vmem:[%s9 + $0x68] sm:$0xf]
      %v4793 = vld [vmem:[%s9 + $0x6c] sm:$0xf]
      %v4794 = vld [vmem:[%s9 + $0x70] sm:$0xf]
      %v4795 = vld [vmem:[%s9 + $0x74] sm:$0xf]
      %v4796 = vld [vmem:[%s9 + $0x78] sm:$0xf]
      %v4797 = vld [vmem:[%s9 + $0x7c] sm:$0xf]
      %v4798 = vld [vmem:[%s9 + $0x80] sm:$0xf]
      %v4799 = vld [vmem:[%s9 + $0x84] sm:$0xf]
      %v4800 = vld [vmem:[%s9 + $0x88] sm:$0xf]
      %v4801 = vld [vmem:[%s9 + $0x8c] sm:$0xf]
      %v4802 = vld [vmem:[%s9 + $0x90] sm:$0xf]
      %v4803 = vld [vmem:[%s9 + $0x94] sm:$0x3]
      %v4804 = vld [vmem:[%s10] sm:$0x1]
      %v4806 = vlaneseq
      %v4807 = vshrl.u32 %v4806, 7
      %v4808 = vsub.s32 0, %v4807
      %v4809 = vrot.slane %v4804, %v4808
      %v4849 = vunpack.c.l.b16 %v4766
      %v4850 = vunpack.c.l.b16 %v4767
      %v4851 = vunpack.c.l.b16 %v4768
      %v4852 = vunpack.c.l.b16 %v4769
      %v4853 = vunpack.c.l.b16 %v4770
      %v4854 = vunpack.c.l.b16 %v4771
      %v4855 = vunpack.c.l.b16 %v4772
      %v4856 = vunpack.c.l.b16 %v4773
      %v4857 = vunpack.c.l.b16 %v4774
      %v4858 = vunpack.c.l.b16 %v4775
      %v4859 = vunpack.c.l.b16 %v4776
      %v4860 = vunpack.c.l.b16 %v4777
      %v4861 = vunpack.c.l.b16 %v4778
      %v4862 = vunpack.c.l.b16 %v4779
      %v4863 = vunpack.c.l.b16 %v4780
      %v4864 = vunpack.c.l.b16 %v4781
      %v4865 = vunpack.c.l.b16 %v4782
      %v4866 = vunpack.c.l.b16 %v4783
      %v4867 = vunpack.c.l.b16 %v4784
      %v4868 = vunpack.c.l.b16 %v4785
      %v4869 = vunpack.c.l.b16 %v4786
      %v4870 = vunpack.c.l.b16 %v4787
      %v4871 = vunpack.c.l.b16 %v4788
      %v4872 = vunpack.c.l.b16 %v4789
      %v4873 = vunpack.c.l.b16 %v4790
      %v4874 = vunpack.c.l.b16 %v4791
      %v4875 = vunpack.c.l.b16 %v4792
      %v4876 = vunpack.c.l.b16 %v4793
      %v4877 = vunpack.c.l.b16 %v4794
      %v4878 = vunpack.c.l.b16 %v4795
      %v4879 = vunpack.c.l.b16 %v4796
      %v4880 = vunpack.c.l.b16 %v4797
      %v4881 = vunpack.c.l.b16 %v4798
      %v4882 = vunpack.c.l.b16 %v4799
      %v4883 = vunpack.c.l.b16 %v4800
      %v4884 = vunpack.c.l.b16 %v4801
      %v4885 = vunpack.c.l.b16 %v4802
      %v4886 = vunpack.c.l.b16 %v4803
      %v4887 = vpack.c.b16 %v4850, %v4849
      %v4888 = vpack.c.b16 %v4852, %v4851
      %v4889 = vpack.c.b16 %v4854, %v4853
      %v4890 = vpack.c.b16 %v4856, %v4855
      %v4891 = vpack.c.b16 %v4858, %v4857
      %v4892 = vpack.c.b16 %v4860, %v4859
      %v4893 = vpack.c.b16 %v4862, %v4861
      %v4894 = vpack.c.b16 %v4864, %v4863
      %v4895 = vpack.c.b16 %v4866, %v4865
      %v4896 = vpack.c.b16 %v4868, %v4867
      %v4897 = vpack.c.b16 %v4870, %v4869
      %v4898 = vpack.c.b16 %v4872, %v4871
      %v4899 = vpack.c.b16 %v4874, %v4873
      %v4900 = vpack.c.b16 %v4876, %v4875
      %v4901 = vpack.c.b16 %v4878, %v4877
      %v4902 = vpack.c.b16 %v4880, %v4879
      %v4903 = vpack.c.b16 %v4882, %v4881
      %v4904 = vpack.c.b16 %v4884, %v4883
      %v4905 = vpack.c.b16 %v4886, %v4885
      %v4925 = vsel %vm1537, %v4726, 0
      %v4928 = vsel %vm1537, %v4729, 0
      %v4931 = vsel %vm1537, %v4732, 0
      %v4934 = vsel %vm1537, %v4735, 0
      %v4937 = vsel %vm1537, %v4738, 0
      %v4940 = vsel %vm1537, %v4741, 0
      %v4943 = vsel %vm1537, %v4744, 0
      %v4946 = vsel %vm1537, %v4747, 0
      %v4949 = vsel %vm1537, %v4750, 0
      %v4952 = vsel %vm1537, %v4753, 0
      %v4955 = vsel %vm1537, %v4756, 0
      %v4958 = vsel %vm1537, %v4759, 0
      %v4961 = vsel %vm1537, %v4762, 0
      %v4964 = vsel %vm1537, %v4765, 0
      %v4967 = vsel %vm1580, %v4905, 0
      %4969 = vmatprep.subr.bf16.mxu0 0
      %4970 = vmatpush1.bf16.msra.mxu0 %v4894
      %4971 = vmatprep.subr.bf16.mxu0 0
      %4972 = vmatpush1.bf16.msra.mxu0 %v4893
      %4973 = vmatprep.subr.bf16.mxu0 0
      %4974 = vmatpush1.bf16.msra.mxu0 %v4892
      %4975 = vmatprep.subr.bf16.mxu0 0
      %4976 = vmatpush1.bf16.msra.mxu0 %v4891
      %4977 = vmatprep.subr.bf16.mxu0 0
      %4978 = vmatpush1.bf16.msra.mxu0 %v4890
      %4979 = vmatprep.subr.bf16.mxu0 0
      %4980 = vmatpush1.bf16.msra.mxu0 %v4889
      %4981 = vmatprep.subr.bf16.mxu0 0
      %4982 = vmatpush1.bf16.msra.mxu0 %v4888
      %4983 = vmatprep.subr.bf16.mxu0 0
      %4984 = vmatpush1.bf16.msra.mxu0 %v4887
      %4985 = vmatprep.subr.bf16.mxu0 0
      %4986 = vmatpush2.bf16.msra.mxu0 %v4902
      %4987 = vmatprep.subr.bf16.mxu0 0
      %4988 = vmatpush2.bf16.msra.mxu0 %v4901
      %4989 = vmatprep.subr.bf16.mxu0 0
      %4990 = vmatpush2.bf16.msra.mxu0 %v4900
      %4991 = vmatprep.subr.bf16.mxu0 0
      %4992 = vmatpush2.bf16.msra.mxu0 %v4899
      %4993 = vmatprep.subr.bf16.mxu0 0
      %4994 = vmatpush2.bf16.msra.mxu0 %v4898
      %4995 = vmatprep.subr.bf16.mxu0 0
      %4996 = vmatpush2.bf16.msra.mxu0 %v4897
      %4997 = vmatprep.subr.bf16.mxu0 0
      %4998 = vmatpush2.bf16.msra.mxu0 %v4896
      %4999 = vmatprep.subr.bf16.mxu0 0
      %5000 = vmatpush2.bf16.msra.mxu0 %v4895
      %5001 = vmatprep.mubr.bf16.mxu0 %v4725
      %5002 = vmatmul.mubr.bf16.gmra.mxu0 %v4724
      %v5003 = vpop.f32.mrf.mxu0
      %v5004 = vadd.f32 %v4809, %v5003
      %v5005 = vpop.f32.mrf.mxu0
      %v5006 = vpop.f32.mrf.mxu0
      %v5007 = vadd.f32 %v4809, %v5006
      %v5008 = vpop.f32.mrf.mxu0
      %5009 = vmatprep.mubr.bf16.mxu0 %v4728
      %5010 = vmatmul.mubr.bf16.gmra.mxu0 %v4727
      %v5011 = vpop.f32.mrf.mxu0
      %v5012 = vadd.f32 %v4809, %v5011
      %v5013 = vpop.f32.mrf.mxu0
      %v5014 = vpop.f32.mrf.mxu0
      %v5015 = vadd.f32 %v4809, %v5014
      %v5016 = vpop.f32.mrf.mxu0
      %5017 = vmatprep.mubr.bf16.mxu0 %v4731
      %5018 = vmatmul.mubr.bf16.gmra.mxu0 %v4730
      %v5019 = vpop.f32.mrf.mxu0
      %v5020 = vadd.f32 %v4809, %v5019
      %v5021 = vpop.f32.mrf.mxu0
      %v5022 = vpop.f32.mrf.mxu0
      %v5023 = vadd.f32 %v4809, %v5022
      %v5024 = vpop.f32.mrf.mxu0
      %5025 = vmatprep.mubr.bf16.mxu0 %v4734
      %5026 = vmatmul.mubr.bf16.gmra.mxu0 %v4733
      %v5027 = vpop.f32.mrf.mxu0
      %v5028 = vadd.f32 %v4809, %v5027
      %v5029 = vpop.f32.mrf.mxu0
      %v5030 = vpop.f32.mrf.mxu0
      %v5031 = vadd.f32 %v4809, %v5030
      %v5032 = vpop.f32.mrf.mxu0
      %5033 = vmatprep.mubr.bf16.mxu0 %v4737
      %5034 = vmatmul.mubr.bf16.gmra.mxu0 %v4736
      %v5035 = vpop.f32.mrf.mxu0
      %v5036 = vadd.f32 %v4809, %v5035
      %v5037 = vpop.f32.mrf.mxu0
      %v5038 = vpop.f32.mrf.mxu0
      %v5039 = vadd.f32 %v4809, %v5038
      %v5040 = vpop.f32.mrf.mxu0
      %5041 = vmatprep.mubr.bf16.mxu0 %v4740
      %5042 = vmatmul.mubr.bf16.gmra.mxu0 %v4739
      %v5043 = vpop.f32.mrf.mxu0
      %v5044 = vadd.f32 %v4809, %v5043
      %v5045 = vpop.f32.mrf.mxu0
      %v5046 = vpop.f32.mrf.mxu0
      %v5047 = vadd.f32 %v4809, %v5046
      %v5048 = vpop.f32.mrf.mxu0
      %5049 = vmatprep.mubr.bf16.mxu0 %v4743
      %5050 = vmatmul.mubr.bf16.gmra.mxu0 %v4742
      %v5051 = vpop.f32.mrf.mxu0
      %v5052 = vadd.f32 %v4809, %v5051
      %v5053 = vpop.f32.mrf.mxu0
      %v5054 = vpop.f32.mrf.mxu0
      %v5055 = vadd.f32 %v4809, %v5054
      %v5056 = vpop.f32.mrf.mxu0
      %5057 = vmatprep.mubr.bf16.mxu0 %v4746
      %5058 = vmatmul.mubr.bf16.gmra.mxu0 %v4745
      %v5059 = vpop.f32.mrf.mxu0
      %v5060 = vadd.f32 %v4809, %v5059
      %v5061 = vpop.f32.mrf.mxu0
      %v5062 = vpop.f32.mrf.mxu0
      %v5063 = vadd.f32 %v4809, %v5062
      %v5064 = vpop.f32.mrf.mxu0
      %5065 = vmatprep.mubr.bf16.mxu0 %v4749
      %5066 = vmatmul.mubr.bf16.gmra.mxu0 %v4748
      %v5067 = vpop.f32.mrf.mxu0
      %v5068 = vadd.f32 %v4809, %v5067
      %v5069 = vpop.f32.mrf.mxu0
      %v5070 = vpop.f32.mrf.mxu0
      %v5071 = vadd.f32 %v4809, %v5070
      %v5072 = vpop.f32.mrf.mxu0
      %5073 = vmatprep.mubr.bf16.mxu0 %v4752
      %5074 = vmatmul.mubr.bf16.gmra.mxu0 %v4751
      %v5075 = vpop.f32.mrf.mxu0
      %v5076 = vadd.f32 %v4809, %v5075
      %v5077 = vpop.f32.mrf.mxu0
      %v5078 = vpop.f32.mrf.mxu0
      %v5079 = vadd.f32 %v4809, %v5078
      %v5080 = vpop.f32.mrf.mxu0
      %5081 = vmatprep.mubr.bf16.mxu0 %v4755
      %5082 = vmatmul.mubr.bf16.gmra.mxu0 %v4754
      %v5083 = vpop.f32.mrf.mxu0
      %v5084 = vadd.f32 %v4809, %v5083
      %v5085 = vpop.f32.mrf.mxu0
      %v5086 = vpop.f32.mrf.mxu0
      %v5087 = vadd.f32 %v4809, %v5086
      %v5088 = vpop.f32.mrf.mxu0
      %5089 = vmatprep.mubr.bf16.mxu0 %v4758
      %5090 = vmatmul.mubr.bf16.gmra.mxu0 %v4757
      %v5091 = vpop.f32.mrf.mxu0
      %v5092 = vadd.f32 %v4809, %v5091
      %v5093 = vpop.f32.mrf.mxu0
      %v5094 = vpop.f32.mrf.mxu0
      %v5095 = vadd.f32 %v4809, %v5094
      %v5096 = vpop.f32.mrf.mxu0
      %5097 = vmatprep.mubr.bf16.mxu0 %v4761
      %5098 = vmatmul.mubr.bf16.gmra.mxu0 %v4760
      %v5099 = vpop.f32.mrf.mxu0
      %v5100 = vadd.f32 %v4809, %v5099
      %v5101 = vpop.f32.mrf.mxu0
      %v5102 = vpop.f32.mrf.mxu0
      %v5103 = vadd.f32 %v4809, %v5102
      %v5104 = vpop.f32.mrf.mxu0
      %5105 = vmatprep.mubr.bf16.mxu0 %v4764
      %5106 = vmatmul.mubr.bf16.gmra.mxu0 %v4763
      %v5107 = vpop.f32.mrf.mxu0
      %v5108 = vadd.f32 %v4809, %v5107
      %v5109 = vpop.f32.mrf.mxu0
      %v5110 = vpop.f32.mrf.mxu0
      %v5111 = vadd.f32 %v4809, %v5110
      %v5112 = vpop.f32.mrf.mxu0
      %5113 = vdwg.mxu0
      %5114 = vmatprep.subr.bf16.mxu0 0
      %5115 = vmatpush1.bf16.msra.mxu0 0
      %5116 = vmatprep.subr.bf16.mxu0 0
      %5117 = vmatpush1.bf16.msra.mxu0 0
      %5118 = vmatprep.subr.bf16.mxu0 0
      %5119 = vmatpush1.bf16.msra.mxu0 0
      %5120 = vmatprep.subr.bf16.mxu0 0
      %5121 = vmatpush1.bf16.msra.mxu0 0
      %5122 = vmatprep.subr.bf16.mxu0 0
      %5123 = vmatpush1.bf16.msra.mxu0 0
      %5124 = vmatprep.subr.bf16.mxu0 0
      %5125 = vmatpush1.bf16.msra.mxu0 %v4967
      %5126 = vmatprep.subr.bf16.mxu0 0
      %5127 = vmatpush1.bf16.msra.mxu0 %v4904
      %5128 = vmatprep.subr.bf16.mxu0 0
      %5129 = vmatpush1.bf16.msra.mxu0 %v4903
      %5130 = vmatprep.subr.bf16.mxu0 0
      %5131 = vmatpush2.bf16.msra.mxu0 0
      %5132 = vmatprep.subr.bf16.mxu0 0
      %5133 = vmatpush2.bf16.msra.mxu0 0
      %5134 = vmatprep.subr.bf16.mxu0 0
      %5135 = vmatpush2.bf16.msra.mxu0 0
      %5136 = vmatprep.subr.bf16.mxu0 0
      %5137 = vmatpush2.bf16.msra.mxu0 0
      %5138 = vmatprep.subr.bf16.mxu0 0
      %5139 = vmatpush2.bf16.msra.mxu0 0
      %5140 = vmatprep.subr.bf16.mxu0 0
      %5141 = vmatpush2.bf16.msra.mxu0 0
      %5142 = vmatprep.subr.bf16.mxu0 0
      %5143 = vmatpush2.bf16.msra.mxu0 0
      %5144 = vmatprep.subr.bf16.mxu0 0
      %5145 = vmatpush2.bf16.msra.mxu0 0
      %5146 = vmatprep.mubr.bf16.mxu0 0
      %5147 = vmatmul.mubr.bf16.gmra.mxu0 %v4925
      %v5148 = vpop.f32.mrf.mxu0
      %v5149 = vadd.f32 %v5004, %v5148
      %v5150 = vpop.f32.mrf.mxu0
      %v5151 = vpop.f32.mrf.mxu0
      %v5152 = vadd.f32 %v5007, %v5151
      %v5153 = vpop.f32.mrf.mxu0
      %5154 = vmatprep.mubr.bf16.mxu0 0
      %5155 = vmatmul.mubr.bf16.gmra.mxu0 %v4928
      %v5156 = vpop.f32.mrf.mxu0
      %v5157 = vadd.f32 %v5012, %v5156
      %v5158 = vpop.f32.mrf.mxu0
      %v5159 = vpop.f32.mrf.mxu0
      %v5160 = vadd.f32 %v5015, %v5159
      %v5161 = vpop.f32.mrf.mxu0
      %5162 = vmatprep.mubr.bf16.mxu0 0
      %5163 = vmatmul.mubr.bf16.gmra.mxu0 %v4931
      %v5164 = vpop.f32.mrf.mxu0
      %v5165 = vadd.f32 %v5020, %v5164
      %v5166 = vpop.f32.mrf.mxu0
      %v5167 = vpop.f32.mrf.mxu0
      %v5168 = vadd.f32 %v5023, %v5167
      %v5169 = vpop.f32.mrf.mxu0
      %5170 = vmatprep.mubr.bf16.mxu0 0
      %5171 = vmatmul.mubr.bf16.gmra.mxu0 %v4934
      %v5172 = vpop.f32.mrf.mxu0
      %v5173 = vadd.f32 %v5028, %v5172
      %v5174 = vpop.f32.mrf.mxu0
      %v5175 = vpop.f32.mrf.mxu0
      %v5176 = vadd.f32 %v5031, %v5175
      %v5177 = vpop.f32.mrf.mxu0
      %5178 = vmatprep.mubr.bf16.mxu0 0
      %5179 = vmatmul.mubr.bf16.gmra.mxu0 %v4937
      %v5180 = vpop.f32.mrf.mxu0
      %v5181 = vadd.f32 %v5036, %v5180
      %v5182 = vpop.f32.mrf.mxu0
      %v5183 = vpop.f32.mrf.mxu0
      %v5184 = vadd.f32 %v5039, %v5183
      %v5185 = vpop.f32.mrf.mxu0
      %5186 = vmatprep.mubr.bf16.mxu0 0
      %5187 = vmatmul.mubr.bf16.gmra.mxu0 %v4940
      %v5188 = vpop.f32.mrf.mxu0
      %v5189 = vadd.f32 %v5044, %v5188
      %v5190 = vpop.f32.mrf.mxu0
      %v5191 = vpop.f32.mrf.mxu0
      %v5192 = vadd.f32 %v5047, %v5191
      %v5193 = vpop.f32.mrf.mxu0
      %5194 = vmatprep.mubr.bf16.mxu0 0
      %5195 = vmatmul.mubr.bf16.gmra.mxu0 %v4943
      %v5196 = vpop.f32.mrf.mxu0
      %v5197 = vadd.f32 %v5052, %v5196
      %v5198 = vpop.f32.mrf.mxu0
      %v5199 = vpop.f32.mrf.mxu0
      %v5200 = vadd.f32 %v5055, %v5199
      %v5201 = vpop.f32.mrf.mxu0
      %5202 = vmatprep.mubr.bf16.mxu0 0
      %5203 = vmatmul.mubr.bf16.gmra.mxu0 %v4946
      %v5204 = vpop.f32.mrf.mxu0
      %v5205 = vadd.f32 %v5060, %v5204
      %v5206 = vpop.f32.mrf.mxu0
      %v5207 = vpop.f32.mrf.mxu0
      %v5208 = vadd.f32 %v5063, %v5207
      %v5209 = vpop.f32.mrf.mxu0
      %5210 = vmatprep.mubr.bf16.mxu0 0
      %5211 = vmatmul.mubr.bf16.gmra.mxu0 %v4949
      %v5212 = vpop.f32.mrf.mxu0
      %v5213 = vadd.f32 %v5068, %v5212
      %v5214 = vpop.f32.mrf.mxu0
      %v5215 = vpop.f32.mrf.mxu0
      %v5216 = vadd.f32 %v5071, %v5215
      %v5217 = vpop.f32.mrf.mxu0
      %5218 = vmatprep.mubr.bf16.mxu0 0
      %5219 = vmatmul.mubr.bf16.gmra.mxu0 %v4952
      %v5220 = vpop.f32.mrf.mxu0
      %v5221 = vadd.f32 %v5076, %v5220
      %v5222 = vpop.f32.mrf.mxu0
      %v5223 = vpop.f32.mrf.mxu0
      %v5224 = vadd.f32 %v5079, %v5223
      %v5225 = vpop.f32.mrf.mxu0
      %5226 = vmatprep.mubr.bf16.mxu0 0
      %5227 = vmatmul.mubr.bf16.gmra.mxu0 %v4955
      %v5228 = vpop.f32.mrf.mxu0
      %v5229 = vadd.f32 %v5084, %v5228
      %v5230 = vpop.f32.mrf.mxu0
      %v5231 = vpop.f32.mrf.mxu0
      %v5232 = vadd.f32 %v5087, %v5231
      %v5233 = vpop.f32.mrf.mxu0
      %5234 = vmatprep.mubr.bf16.mxu0 0
      %5235 = vmatmul.mubr.bf16.gmra.mxu0 %v4958
      %v5236 = vpop.f32.mrf.mxu0
      %v5237 = vadd.f32 %v5092, %v5236
      %v5238 = vpop.f32.mrf.mxu0
      %v5239 = vpop.f32.mrf.mxu0
      %v5240 = vadd.f32 %v5095, %v5239
      %v5241 = vpop.f32.mrf.mxu0
      %5242 = vmatprep.mubr.bf16.mxu0 0
      %5243 = vmatmul.mubr.bf16.gmra.mxu0 %v4961
      %v5244 = vpop.f32.mrf.mxu0
      %v5245 = vadd.f32 %v5100, %v5244
      %v5246 = vpop.f32.mrf.mxu0
      %v5247 = vpop.f32.mrf.mxu0
      %v5248 = vadd.f32 %v5103, %v5247
      %v5249 = vpop.f32.mrf.mxu0
      %5250 = vmatprep.mubr.bf16.mxu0 0
      %5251 = vmatmul.mubr.bf16.gmra.mxu0 %v4964
      %v5252 = vpop.f32.mrf.mxu0
      %v5253 = vadd.f32 %v5108, %v5252
      %v5254 = vpop.f32.mrf.mxu0
      %v5255 = vpop.f32.mrf.mxu0
      %v5256 = vadd.f32 %v5111, %v5255
      %v5257 = vpop.f32.mrf.mxu0
      %5258 = vdwg.mxu0
      %v5259 = vtanh.pop %v5149
      %v5260 = vtanh.pop %v5152
      %v5261 = vtanh.pop %v5157
      %v5262 = vtanh.pop %v5160
      %v5263 = vtanh.pop %v5165
      %v5264 = vtanh.pop %v5168
      %v5265 = vtanh.pop %v5173
      %v5266 = vtanh.pop %v5176
      %v5267 = vtanh.pop %v5181
      %v5268 = vtanh.pop %v5184
      %v5269 = vtanh.pop %v5189
      %v5270 = vtanh.pop %v5192
      %v5271 = vtanh.pop %v5197
      %v5272 = vtanh.pop %v5200
      %v5273 = vtanh.pop %v5205
      %v5274 = vtanh.pop %v5208
      %v5275 = vtanh.pop %v5213
      %v5276 = vtanh.pop %v5216
      %v5277 = vtanh.pop %v5221
      %v5278 = vtanh.pop %v5224
      %v5279 = vtanh.pop %v5229
      %v5280 = vtanh.pop %v5232
      %v5281 = vtanh.pop %v5237
      %v5282 = vtanh.pop %v5240
      %v5283 = vtanh.pop %v5245
      %v5284 = vtanh.pop %v5248
      %v5285 = vtanh.pop %v5253
      %v5286 = vtanh.pop %v5256
      %v5287 = vld [vmem:[%s11] sm:$0xff]
      %v5288 = vld [vmem:[%s11 + $0x8] sm:$0xff]
      %v5289 = vld [vmem:[%s11 + $0x10] sm:$0xff]
      %v5290 = vld [vmem:[%s11 + $0x18] sm:$0x3f]
      %s5291 = scalar_lea.vmem %s11, 32
      %v5292 = vld [vmem:[%s5291] sm:$0xff]
      %v5293 = vld [vmem:[%s5291 + $0x8] sm:$0xff]
      %v5294 = vld [vmem:[%s5291 + $0x10] sm:$0xff]
      %v5295 = vld [vmem:[%s5291 + $0x18] sm:$0x3f]
      %v5297 = vsel %vm646, %v5261, 0
      %v5300 = vsel %vm646, %v5262, 0
      %v5303 = vsel %vm1580, %v5295, 0
      %5305 = vmatprep.subr.mxu0 0.0
      %5306 = vmatpush1.msra.mxu0 0.0
      %5307 = vmatprep.subr.mxu0 0.0
      %5308 = vmatpush1.msra.mxu0 0.0
      %5309 = vmatprep.subr.mxu0 0.0
      %5310 = vmatpush1.msra.mxu0 0.0
      %5311 = vmatprep.subr.mxu0 0.0
      %5312 = vmatpush1.msra.mxu0 0.0
      %5313 = vmatprep.subr.mxu0 0.0
      %5314 = vmatpush1.msra.mxu0 0.0
      %5315 = vmatprep.subr.mxu0 0.0
      %5316 = vmatpush1.msra.mxu0 0.0
      %5317 = vmatprep.subr.mxu0 0.0
      %5318 = vmatpush1.msra.mxu0 0.0
      %5319 = vmatprep.subr.mxu0 0.0
      %5320 = vmatpush1.msra.mxu0 0.0
      %5321 = vmatprep.subr.mxu0 0.0
      %5322 = vmatpush1.msra.mxu0 0.0
      %5323 = vmatprep.subr.mxu0 0.0
      %5324 = vmatpush1.msra.mxu0 0.0
      %5325 = vmatprep.subr.mxu0 0.0
      %5326 = vmatpush1.msra.mxu0 0.0
      %5327 = vmatprep.subr.mxu0 0.0
      %5328 = vmatpush1.msra.mxu0 0.0
      %5329 = vmatprep.subr.mxu0 0.0
      %5330 = vmatpush1.msra.mxu0 %v5303
      %5331 = vmatprep.subr.mxu0 0.0
      %5332 = vmatpush1.msra.mxu0 %v5294
      %5333 = vmatprep.subr.mxu0 0.0
      %5334 = vmatpush1.msra.mxu0 %v5293
      %5335 = vmatprep.subr.mxu0 0.0
      %5336 = vmatpush1.msra.mxu0 %v5292
      %5337 = vmatprep.subr.mxu0 0.0
      %5338 = vmatpush2.msra.mxu0 0.0
      %5339 = vmatprep.subr.mxu0 0.0
      %5340 = vmatpush2.msra.mxu0 0.0
      %5341 = vmatprep.subr.mxu0 0.0
      %5342 = vmatpush2.msra.mxu0 0.0
      %5343 = vmatprep.subr.mxu0 0.0
      %5344 = vmatpush2.msra.mxu0 0.0
      %5345 = vmatprep.subr.mxu0 0.0
      %5346 = vmatpush2.msra.mxu0 0.0
      %5347 = vmatprep.subr.mxu0 0.0
      %5348 = vmatpush2.msra.mxu0 0.0
      %5349 = vmatprep.subr.mxu0 0.0
      %5350 = vmatpush2.msra.mxu0 0.0
      %5351 = vmatprep.subr.mxu0 0.0
      %5352 = vmatpush2.msra.mxu0 0.0
      %5353 = vmatprep.subr.mxu0 0.0
      %5354 = vmatpush2.msra.mxu0 0.0
      %5355 = vmatprep.subr.mxu0 0.0
      %5356 = vmatpush2.msra.mxu0 0.0
      %5357 = vmatprep.subr.mxu0 0.0
      %5358 = vmatpush2.msra.mxu0 0.0
      %5359 = vmatprep.subr.mxu0 0.0
      %5360 = vmatpush2.msra.mxu0 0.0
      %5361 = vmatprep.subr.mxu0 0.0
      %5362 = vmatpush2.msra.mxu0 0.0
      %5363 = vmatprep.subr.mxu0 0.0
      %5364 = vmatpush2.msra.mxu0 0.0
      %5365 = vmatprep.subr.mxu0 0.0
      %5366 = vmatpush2.msra.mxu0 0.0
      %5367 = vmatprep.subr.mxu0 0.0
      %5368 = vmatpush2.msra.mxu0 0.0
      %5369 = vmatprep.mubr.f32.mxu0 0.0
      %5370 = vmatmul.mubr.f32.gmra.mxu0 %v5297
      %v5371 = vpop.f32.mrf.mxu0
      %v5372 = vadd.f32 0.0, %v5371
      %v5373 = vpop.f32.mrf.mxu0
      %5374 = vmatprep.mubr.f32.mxu0 0.0
      %5375 = vmatmul.mubr.f32.gmra.mxu0 %v5300
      %v5376 = vpop.f32.mrf.mxu0
      %v5377 = vadd.f32 0.0, %v5376
      %v5378 = vpop.f32.mrf.mxu0
      %5379 = vdwg.mxu0
      %v5381 = vsel %vm646, %v5259, 0
      %v5384 = vsel %vm646, %v5260, 0
      %v5387 = vsel %vm1580, %v5290, 0
      %5389 = vmatprep.subr.mxu0 0.0
      %5390 = vmatpush1.msra.mxu0 0.0
      %5391 = vmatprep.subr.mxu0 0.0
      %5392 = vmatpush1.msra.mxu0 0.0
      %5393 = vmatprep.subr.mxu0 0.0
      %5394 = vmatpush1.msra.mxu0 0.0
      %5395 = vmatprep.subr.mxu0 0.0
      %5396 = vmatpush1.msra.mxu0 0.0
      %5397 = vmatprep.subr.mxu0 0.0
      %5398 = vmatpush1.msra.mxu0 0.0
      %5399 = vmatprep.subr.mxu0 0.0
      %5400 = vmatpush1.msra.mxu0 0.0
      %5401 = vmatprep.subr.mxu0 0.0
      %5402 = vmatpush1.msra.mxu0 0.0
      %5403 = vmatprep.subr.mxu0 0.0
      %5404 = vmatpush1.msra.mxu0 0.0
      %5405 = vmatprep.subr.mxu0 0.0
      %5406 = vmatpush1.msra.mxu0 0.0
      %5407 = vmatprep.subr.mxu0 0.0
      %5408 = vmatpush1.msra.mxu0 0.0
      %5409 = vmatprep.subr.mxu0 0.0
      %5410 = vmatpush1.msra.mxu0 0.0
      %5411 = vmatprep.subr.mxu0 0.0
      %5412 = vmatpush1.msra.mxu0 0.0
      %5413 = vmatprep.subr.mxu0 0.0
      %5414 = vmatpush1.msra.mxu0 %v5387
      %5415 = vmatprep.subr.mxu0 0.0
      %5416 = vmatpush1.msra.mxu0 %v5289
      %5417 = vmatprep.subr.mxu0 0.0
      %5418 = vmatpush1.msra.mxu0 %v5288
      %5419 = vmatprep.subr.mxu0 0.0
      %5420 = vmatpush1.msra.mxu0 %v5287
      %5421 = vmatprep.subr.mxu0 0.0
      %5422 = vmatpush2.msra.mxu0 0.0
      %5423 = vmatprep.subr.mxu0 0.0
      %5424 = vmatpush2.msra.mxu0 0.0
      %5425 = vmatprep.subr.mxu0 0.0
      %5426 = vmatpush2.msra.mxu0 0.0
      %5427 = vmatprep.subr.mxu0 0.0
      %5428 = vmatpush2.msra.mxu0 0.0
      %5429 = vmatprep.subr.mxu0 0.0
      %5430 = vmatpush2.msra.mxu0 0.0
      %5431 = vmatprep.subr.mxu0 0.0
      %5432 = vmatpush2.msra.mxu0 0.0
      %5433 = vmatprep.subr.mxu0 0.0
      %5434 = vmatpush2.msra.mxu0 0.0
      %5435 = vmatprep.subr.mxu0 0.0
      %5436 = vmatpush2.msra.mxu0 0.0
      %5437 = vmatprep.subr.mxu0 0.0
      %5438 = vmatpush2.msra.mxu0 0.0
      %5439 = vmatprep.subr.mxu0 0.0
      %5440 = vmatpush2.msra.mxu0 0.0
      %5441 = vmatprep.subr.mxu0 0.0
      %5442 = vmatpush2.msra.mxu0 0.0
      %5443 = vmatprep.subr.mxu0 0.0
      %5444 = vmatpush2.msra.mxu0 0.0
      %5445 = vmatprep.subr.mxu0 0.0
      %5446 = vmatpush2.msra.mxu0 0.0
      %5447 = vmatprep.subr.mxu0 0.0
      %5448 = vmatpush2.msra.mxu0 0.0
      %5449 = vmatprep.subr.mxu0 0.0
      %5450 = vmatpush2.msra.mxu0 0.0
      %5451 = vmatprep.subr.mxu0 0.0
      %5452 = vmatpush2.msra.mxu0 0.0
      %5453 = vmatprep.mubr.f32.mxu0 0.0
      %5454 = vmatmul.mubr.f32.gmra.mxu0 %v5381
      %v5455 = vpop.f32.mrf.mxu0
      %v5456 = vadd.f32 %v5372, %v5455
      %v5457 = vpop.f32.mrf.mxu0
      %5458 = vmatprep.mubr.f32.mxu0 0.0
      %5459 = vmatmul.mubr.f32.gmra.mxu0 %v5384
      %v5460 = vpop.f32.mrf.mxu0
      %v5461 = vadd.f32 %v5377, %v5460
      %v5462 = vpop.f32.mrf.mxu0
      %5463 = vdwg.mxu0
      %s5464 = scalar_lea.vmem %s11, 64
      %v5465 = vld [vmem:[%s5464] sm:$0xff]
      %v5466 = vld [vmem:[%s5464 + $0x8] sm:$0xff]
      %v5467 = vld [vmem:[%s5464 + $0x10] sm:$0xff]
      %v5468 = vld [vmem:[%s5464 + $0x18] sm:$0x3f]
      %v5470 = vsel %vm646, %v5263, 0
      %v5473 = vsel %vm646, %v5264, 0
      %v5476 = vsel %vm1580, %v5468, 0
      %5478 = vmatprep.subr.mxu0 0.0
      %5479 = vmatpush1.msra.mxu0 0.0
      %5480 = vmatprep.subr.mxu0 0.0
      %5481 = vmatpush1.msra.mxu0 0.0
      %5482 = vmatprep.subr.mxu0 0.0
      %5483 = vmatpush1.msra.mxu0 0.0
      %5484 = vmatprep.subr.mxu0 0.0
      %5485 = vmatpush1.msra.mxu0 0.0
      %5486 = vmatprep.subr.mxu0 0.0
      %5487 = vmatpush1.msra.mxu0 0.0
      %5488 = vmatprep.subr.mxu0 0.0
      %5489 = vmatpush1.msra.mxu0 0.0
      %5490 = vmatprep.subr.mxu0 0.0
      %5491 = vmatpush1.msra.mxu0 0.0
      %5492 = vmatprep.subr.mxu0 0.0
      %5493 = vmatpush1.msra.mxu0 0.0
      %5494 = vmatprep.subr.mxu0 0.0
      %5495 = vmatpush1.msra.mxu0 0.0
      %5496 = vmatprep.subr.mxu0 0.0
      %5497 = vmatpush1.msra.mxu0 0.0
      %5498 = vmatprep.subr.mxu0 0.0
      %5499 = vmatpush1.msra.mxu0 0.0
      %5500 = vmatprep.subr.mxu0 0.0
      %5501 = vmatpush1.msra.mxu0 0.0
      %5502 = vmatprep.subr.mxu0 0.0
      %5503 = vmatpush1.msra.mxu0 %v5476
      %5504 = vmatprep.subr.mxu0 0.0
      %5505 = vmatpush1.msra.mxu0 %v5467
      %5506 = vmatprep.subr.mxu0 0.0
      %5507 = vmatpush1.msra.mxu0 %v5466
      %5508 = vmatprep.subr.mxu0 0.0
      %5509 = vmatpush1.msra.mxu0 %v5465
      %5510 = vmatprep.subr.mxu0 0.0
      %5511 = vmatpush2.msra.mxu0 0.0
      %5512 = vmatprep.subr.mxu0 0.0
      %5513 = vmatpush2.msra.mxu0 0.0
      %5514 = vmatprep.subr.mxu0 0.0
      %5515 = vmatpush2.msra.mxu0 0.0
      %5516 = vmatprep.subr.mxu0 0.0
      %5517 = vmatpush2.msra.mxu0 0.0
      %5518 = vmatprep.subr.mxu0 0.0
      %5519 = vmatpush2.msra.mxu0 0.0
      %5520 = vmatprep.subr.mxu0 0.0
      %5521 = vmatpush2.msra.mxu0 0.0
      %5522 = vmatprep.subr.mxu0 0.0
      %5523 = vmatpush2.msra.mxu0 0.0
      %5524 = vmatprep.subr.mxu0 0.0
      %5525 = vmatpush2.msra.mxu0 0.0
      %5526 = vmatprep.subr.mxu0 0.0
      %5527 = vmatpush2.msra.mxu0 0.0
      %5528 = vmatprep.subr.mxu0 0.0
      %5529 = vmatpush2.msra.mxu0 0.0
      %5530 = vmatprep.subr.mxu0 0.0
      %5531 = vmatpush2.msra.mxu0 0.0
      %5532 = vmatprep.subr.mxu0 0.0
      %5533 = vmatpush2.msra.mxu0 0.0
      %5534 = vmatprep.subr.mxu0 0.0
      %5535 = vmatpush2.msra.mxu0 0.0
      %5536 = vmatprep.subr.mxu0 0.0
      %5537 = vmatpush2.msra.mxu0 0.0
      %5538 = vmatprep.subr.mxu0 0.0
      %5539 = vmatpush2.msra.mxu0 0.0
      %5540 = vmatprep.subr.mxu0 0.0
      %5541 = vmatpush2.msra.mxu0 0.0
      %5542 = vmatprep.mubr.f32.mxu0 0.0
      %5543 = vmatmul.mubr.f32.gmra.mxu0 %v5470
      %v5544 = vpop.f32.mrf.mxu0
      %v5545 = vadd.f32 0.0, %v5544
      %v5546 = vpop.f32.mrf.mxu0
      %5547 = vmatprep.mubr.f32.mxu0 0.0
      %5548 = vmatmul.mubr.f32.gmra.mxu0 %v5473
      %v5549 = vpop.f32.mrf.mxu0
      %v5550 = vadd.f32 0.0, %v5549
      %v5551 = vpop.f32.mrf.mxu0
      %5552 = vdwg.mxu0
      %v5553 = vadd.f32 %v5456, %v5545
      %v5554 = vadd.f32 %v5461, %v5550
      %s5555 = scalar_lea.vmem %s11, 96
      %v5556 = vld [vmem:[%s5555] sm:$0xff]
      %v5557 = vld [vmem:[%s5555 + $0x8] sm:$0xff]
      %v5558 = vld [vmem:[%s5555 + $0x10] sm:$0xff]
      %v5559 = vld [vmem:[%s5555 + $0x18] sm:$0x3f]
      %v5561 = vsel %vm646, %v5265, 0
      %v5564 = vsel %vm646, %v5266, 0
      %v5567 = vsel %vm1580, %v5559, 0
      %5569 = vmatprep.subr.mxu0 0.0
      %5570 = vmatpush1.msra.mxu0 0.0
      %5571 = vmatprep.subr.mxu0 0.0
      %5572 = vmatpush1.msra.mxu0 0.0
      %5573 = vmatprep.subr.mxu0 0.0
      %5574 = vmatpush1.msra.mxu0 0.0
      %5575 = vmatprep.subr.mxu0 0.0
      %5576 = vmatpush1.msra.mxu0 0.0
      %5577 = vmatprep.subr.mxu0 0.0
      %5578 = vmatpush1.msra.mxu0 0.0
      %5579 = vmatprep.subr.mxu0 0.0
      %5580 = vmatpush1.msra.mxu0 0.0
      %5581 = vmatprep.subr.mxu0 0.0
      %5582 = vmatpush1.msra.mxu0 0.0
      %5583 = vmatprep.subr.mxu0 0.0
      %5584 = vmatpush1.msra.mxu0 0.0
      %5585 = vmatprep.subr.mxu0 0.0
      %5586 = vmatpush1.msra.mxu0 0.0
      %5587 = vmatprep.subr.mxu0 0.0
      %5588 = vmatpush1.msra.mxu0 0.0
      %5589 = vmatprep.subr.mxu0 0.0
      %5590 = vmatpush1.msra.mxu0 0.0
      %5591 = vmatprep.subr.mxu0 0.0
      %5592 = vmatpush1.msra.mxu0 0.0
      %5593 = vmatprep.subr.mxu0 0.0
      %5594 = vmatpush1.msra.mxu0 %v5567
      %5595 = vmatprep.subr.mxu0 0.0
      %5596 = vmatpush1.msra.mxu0 %v5558
      %5597 = vmatprep.subr.mxu0 0.0
      %5598 = vmatpush1.msra.mxu0 %v5557
      %5599 = vmatprep.subr.mxu0 0.0
      %5600 = vmatpush1.msra.mxu0 %v5556
      %5601 = vmatprep.subr.mxu0 0.0
      %5602 = vmatpush2.msra.mxu0 0.0
      %5603 = vmatprep.subr.mxu0 0.0
      %5604 = vmatpush2.msra.mxu0 0.0
      %5605 = vmatprep.subr.mxu0 0.0
      %5606 = vmatpush2.msra.mxu0 0.0
      %5607 = vmatprep.subr.mxu0 0.0
      %5608 = vmatpush2.msra.mxu0 0.0
      %5609 = vmatprep.subr.mxu0 0.0
      %5610 = vmatpush2.msra.mxu0 0.0
      %5611 = vmatprep.subr.mxu0 0.0
      %5612 = vmatpush2.msra.mxu0 0.0
      %5613 = vmatprep.subr.mxu0 0.0
      %5614 = vmatpush2.msra.mxu0 0.0
      %5615 = vmatprep.subr.mxu0 0.0
      %5616 = vmatpush2.msra.mxu0 0.0
      %5617 = vmatprep.subr.mxu0 0.0
      %5618 = vmatpush2.msra.mxu0 0.0
      %5619 = vmatprep.subr.mxu0 0.0
      %5620 = vmatpush2.msra.mxu0 0.0
      %5621 = vmatprep.subr.mxu0 0.0
      %5622 = vmatpush2.msra.mxu0 0.0
      %5623 = vmatprep.subr.mxu0 0.0
      %5624 = vmatpush2.msra.mxu0 0.0
      %5625 = vmatprep.subr.mxu0 0.0
      %5626 = vmatpush2.msra.mxu0 0.0
      %5627 = vmatprep.subr.mxu0 0.0
      %5628 = vmatpush2.msra.mxu0 0.0
      %5629 = vmatprep.subr.mxu0 0.0
      %5630 = vmatpush2.msra.mxu0 0.0
      %5631 = vmatprep.subr.mxu0 0.0
      %5632 = vmatpush2.msra.mxu0 0.0
      %5633 = vmatprep.mubr.f32.mxu0 0.0
      %5634 = vmatmul.mubr.f32.gmra.mxu0 %v5561
      %v5635 = vpop.f32.mrf.mxu0
      %v5636 = vadd.f32 0.0, %v5635
      %v5637 = vpop.f32.mrf.mxu0
      %5638 = vmatprep.mubr.f32.mxu0 0.0
      %5639 = vmatmul.mubr.f32.gmra.mxu0 %v5564
      %v5640 = vpop.f32.mrf.mxu0
      %v5641 = vadd.f32 0.0, %v5640
      %v5642 = vpop.f32.mrf.mxu0
      %5643 = vdwg.mxu0
      %v5644 = vadd.f32 %v5553, %v5636
      %v5645 = vadd.f32 %v5554, %v5641
      %s5646 = scalar_lea.vmem %s11, 128
      %v5647 = vld [vmem:[%s5646] sm:$0xff]
      %v5648 = vld [vmem:[%s5646 + $0x8] sm:$0xff]
      %v5649 = vld [vmem:[%s5646 + $0x10] sm:$0xff]
      %v5650 = vld [vmem:[%s5646 + $0x18] sm:$0x3f]
      %v5652 = vsel %vm646, %v5267, 0
      %v5655 = vsel %vm646, %v5268, 0
      %v5658 = vsel %vm1580, %v5650, 0
      %5660 = vmatprep.subr.mxu0 0.0
      %5661 = vmatpush1.msra.mxu0 0.0
      %5662 = vmatprep.subr.mxu0 0.0
      %5663 = vmatpush1.msra.mxu0 0.0
      %5664 = vmatprep.subr.mxu0 0.0
      %5665 = vmatpush1.msra.mxu0 0.0
      %5666 = vmatprep.subr.mxu0 0.0
      %5667 = vmatpush1.msra.mxu0 0.0
      %5668 = vmatprep.subr.mxu0 0.0
      %5669 = vmatpush1.msra.mxu0 0.0
      %5670 = vmatprep.subr.mxu0 0.0
      %5671 = vmatpush1.msra.mxu0 0.0
      %5672 = vmatprep.subr.mxu0 0.0
      %5673 = vmatpush1.msra.mxu0 0.0
      %5674 = vmatprep.subr.mxu0 0.0
      %5675 = vmatpush1.msra.mxu0 0.0
      %5676 = vmatprep.subr.mxu0 0.0
      %5677 = vmatpush1.msra.mxu0 0.0
      %5678 = vmatprep.subr.mxu0 0.0
      %5679 = vmatpush1.msra.mxu0 0.0
      %5680 = vmatprep.subr.mxu0 0.0
      %5681 = vmatpush1.msra.mxu0 0.0
      %5682 = vmatprep.subr.mxu0 0.0
      %5683 = vmatpush1.msra.mxu0 0.0
      %5684 = vmatprep.subr.mxu0 0.0
      %5685 = vmatpush1.msra.mxu0 %v5658
      %5686 = vmatprep.subr.mxu0 0.0
      %5687 = vmatpush1.msra.mxu0 %v5649
      %5688 = vmatprep.subr.mxu0 0.0
      %5689 = vmatpush1.msra.mxu0 %v5648
      %5690 = vmatprep.subr.mxu0 0.0
      %5691 = vmatpush1.msra.mxu0 %v5647
      %5692 = vmatprep.subr.mxu0 0.0
      %5693 = vmatpush2.msra.mxu0 0.0
      %5694 = vmatprep.subr.mxu0 0.0
      %5695 = vmatpush2.msra.mxu0 0.0
      %5696 = vmatprep.subr.mxu0 0.0
      %5697 = vmatpush2.msra.mxu0 0.0
      %5698 = vmatprep.subr.mxu0 0.0
      %5699 = vmatpush2.msra.mxu0 0.0
      %5700 = vmatprep.subr.mxu0 0.0
      %5701 = vmatpush2.msra.mxu0 0.0
      %5702 = vmatprep.subr.mxu0 0.0
      %5703 = vmatpush2.msra.mxu0 0.0
      %5704 = vmatprep.subr.mxu0 0.0
      %5705 = vmatpush2.msra.mxu0 0.0
      %5706 = vmatprep.subr.mxu0 0.0
      %5707 = vmatpush2.msra.mxu0 0.0
      %5708 = vmatprep.subr.mxu0 0.0
      %5709 = vmatpush2.msra.mxu0 0.0
      %5710 = vmatprep.subr.mxu0 0.0
      %5711 = vmatpush2.msra.mxu0 0.0
      %5712 = vmatprep.subr.mxu0 0.0
      %5713 = vmatpush2.msra.mxu0 0.0
      %5714 = vmatprep.subr.mxu0 0.0
      %5715 = vmatpush2.msra.mxu0 0.0
      %5716 = vmatprep.subr.mxu0 0.0
      %5717 = vmatpush2.msra.mxu0 0.0
      %5718 = vmatprep.subr.mxu0 0.0
      %5719 = vmatpush2.msra.mxu0 0.0
      %5720 = vmatprep.subr.mxu0 0.0
      %5721 = vmatpush2.msra.mxu0 0.0
      %5722 = vmatprep.subr.mxu0 0.0
      %5723 = vmatpush2.msra.mxu0 0.0
      %5724 = vmatprep.mubr.f32.mxu0 0.0
      %5725 = vmatmul.mubr.f32.gmra.mxu0 %v5652
      %v5726 = vpop.f32.mrf.mxu0
      %v5727 = vadd.f32 0.0, %v5726
      %v5728 = vpop.f32.mrf.mxu0
      %5729 = vmatprep.mubr.f32.mxu0 0.0
      %5730 = vmatmul.mubr.f32.gmra.mxu0 %v5655
      %v5731 = vpop.f32.mrf.mxu0
      %v5732 = vadd.f32 0.0, %v5731
      %v5733 = vpop.f32.mrf.mxu0
      %5734 = vdwg.mxu0
      %v5735 = vadd.f32 %v5644, %v5727
      %v5736 = vadd.f32 %v5645, %v5732
      %s5737 = scalar_lea.vmem %s11, 160
      %v5738 = vld [vmem:[%s5737] sm:$0xff]
      %v5739 = vld [vmem:[%s5737 + $0x8] sm:$0xff]
      %v5740 = vld [vmem:[%s5737 + $0x10] sm:$0xff]
      %v5741 = vld [vmem:[%s5737 + $0x18] sm:$0x3f]
      %v5743 = vsel %vm646, %v5269, 0
      %v5746 = vsel %vm646, %v5270, 0
      %v5749 = vsel %vm1580, %v5741, 0
      %5751 = vmatprep.subr.mxu0 0.0
      %5752 = vmatpush1.msra.mxu0 0.0
      %5753 = vmatprep.subr.mxu0 0.0
      %5754 = vmatpush1.msra.mxu0 0.0
      %5755 = vmatprep.subr.mxu0 0.0
      %5756 = vmatpush1.msra.mxu0 0.0
      %5757 = vmatprep.subr.mxu0 0.0
      %5758 = vmatpush1.msra.mxu0 0.0
      %5759 = vmatprep.subr.mxu0 0.0
      %5760 = vmatpush1.msra.mxu0 0.0
      %5761 = vmatprep.subr.mxu0 0.0
      %5762 = vmatpush1.msra.mxu0 0.0
      %5763 = vmatprep.subr.mxu0 0.0
      %5764 = vmatpush1.msra.mxu0 0.0
      %5765 = vmatprep.subr.mxu0 0.0
      %5766 = vmatpush1.msra.mxu0 0.0
      %5767 = vmatprep.subr.mxu0 0.0
      %5768 = vmatpush1.msra.mxu0 0.0
      %5769 = vmatprep.subr.mxu0 0.0
      %5770 = vmatpush1.msra.mxu0 0.0
      %5771 = vmatprep.subr.mxu0 0.0
      %5772 = vmatpush1.msra.mxu0 0.0
      %5773 = vmatprep.subr.mxu0 0.0
      %5774 = vmatpush1.msra.mxu0 0.0
      %5775 = vmatprep.subr.mxu0 0.0
      %5776 = vmatpush1.msra.mxu0 %v5749
      %5777 = vmatprep.subr.mxu0 0.0
      %5778 = vmatpush1.msra.mxu0 %v5740
      %5779 = vmatprep.subr.mxu0 0.0
      %5780 = vmatpush1.msra.mxu0 %v5739
      %5781 = vmatprep.subr.mxu0 0.0
      %5782 = vmatpush1.msra.mxu0 %v5738
      %5783 = vmatprep.subr.mxu0 0.0
      %5784 = vmatpush2.msra.mxu0 0.0
      %5785 = vmatprep.subr.mxu0 0.0
      %5786 = vmatpush2.msra.mxu0 0.0
      %5787 = vmatprep.subr.mxu0 0.0
      %5788 = vmatpush2.msra.mxu0 0.0
      %5789 = vmatprep.subr.mxu0 0.0
      %5790 = vmatpush2.msra.mxu0 0.0
      %5791 = vmatprep.subr.mxu0 0.0
      %5792 = vmatpush2.msra.mxu0 0.0
      %5793 = vmatprep.subr.mxu0 0.0
      %5794 = vmatpush2.msra.mxu0 0.0
      %5795 = vmatprep.subr.mxu0 0.0
      %5796 = vmatpush2.msra.mxu0 0.0
      %5797 = vmatprep.subr.mxu0 0.0
      %5798 = vmatpush2.msra.mxu0 0.0
      %5799 = vmatprep.subr.mxu0 0.0
      %5800 = vmatpush2.msra.mxu0 0.0
      %5801 = vmatprep.subr.mxu0 0.0
      %5802 = vmatpush2.msra.mxu0 0.0
      %5803 = vmatprep.subr.mxu0 0.0
      %5804 = vmatpush2.msra.mxu0 0.0
      %5805 = vmatprep.subr.mxu0 0.0
      %5806 = vmatpush2.msra.mxu0 0.0
      %5807 = vmatprep.subr.mxu0 0.0
      %5808 = vmatpush2.msra.mxu0 0.0
      %5809 = vmatprep.subr.mxu0 0.0
      %5810 = vmatpush2.msra.mxu0 0.0
      %5811 = vmatprep.subr.mxu0 0.0
      %5812 = vmatpush2.msra.mxu0 0.0
      %5813 = vmatprep.subr.mxu0 0.0
      %5814 = vmatpush2.msra.mxu0 0.0
      %5815 = vmatprep.mubr.f32.mxu0 0.0
      %5816 = vmatmul.mubr.f32.gmra.mxu0 %v5743
      %v5817 = vpop.f32.mrf.mxu0
      %v5818 = vadd.f32 0.0, %v5817
      %v5819 = vpop.f32.mrf.mxu0
      %5820 = vmatprep.mubr.f32.mxu0 0.0
      %5821 = vmatmul.mubr.f32.gmra.mxu0 %v5746
      %v5822 = vpop.f32.mrf.mxu0
      %v5823 = vadd.f32 0.0, %v5822
      %v5824 = vpop.f32.mrf.mxu0
      %5825 = vdwg.mxu0
      %v5826 = vadd.f32 %v5735, %v5818
      %v5827 = vadd.f32 %v5736, %v5823
      %s5828 = scalar_lea.vmem %s11, 192
      %v5829 = vld [vmem:[%s5828] sm:$0xff]
      %v5830 = vld [vmem:[%s5828 + $0x8] sm:$0xff]
      %v5831 = vld [vmem:[%s5828 + $0x10] sm:$0xff]
      %v5832 = vld [vmem:[%s5828 + $0x18] sm:$0x3f]
      %v5834 = vsel %vm646, %v5271, 0
      %v5837 = vsel %vm646, %v5272, 0
      %v5840 = vsel %vm1580, %v5832, 0
      %5842 = vmatprep.subr.mxu0 0.0
      %5843 = vmatpush1.msra.mxu0 0.0
      %5844 = vmatprep.subr.mxu0 0.0
      %5845 = vmatpush1.msra.mxu0 0.0
      %5846 = vmatprep.subr.mxu0 0.0
      %5847 = vmatpush1.msra.mxu0 0.0
      %5848 = vmatprep.subr.mxu0 0.0
      %5849 = vmatpush1.msra.mxu0 0.0
      %5850 = vmatprep.subr.mxu0 0.0
      %5851 = vmatpush1.msra.mxu0 0.0
      %5852 = vmatprep.subr.mxu0 0.0
      %5853 = vmatpush1.msra.mxu0 0.0
      %5854 = vmatprep.subr.mxu0 0.0
      %5855 = vmatpush1.msra.mxu0 0.0
      %5856 = vmatprep.subr.mxu0 0.0
      %5857 = vmatpush1.msra.mxu0 0.0
      %5858 = vmatprep.subr.mxu0 0.0
      %5859 = vmatpush1.msra.mxu0 0.0
      %5860 = vmatprep.subr.mxu0 0.0
      %5861 = vmatpush1.msra.mxu0 0.0
      %5862 = vmatprep.subr.mxu0 0.0
      %5863 = vmatpush1.msra.mxu0 0.0
      %5864 = vmatprep.subr.mxu0 0.0
      %5865 = vmatpush1.msra.mxu0 0.0
      %5866 = vmatprep.subr.mxu0 0.0
      %5867 = vmatpush1.msra.mxu0 %v5840
      %5868 = vmatprep.subr.mxu0 0.0
      %5869 = vmatpush1.msra.mxu0 %v5831
      %5870 = vmatprep.subr.mxu0 0.0
      %5871 = vmatpush1.msra.mxu0 %v5830
      %5872 = vmatprep.subr.mxu0 0.0
      %5873 = vmatpush1.msra.mxu0 %v5829
      %5874 = vmatprep.subr.mxu0 0.0
      %5875 = vmatpush2.msra.mxu0 0.0
      %5876 = vmatprep.subr.mxu0 0.0
      %5877 = vmatpush2.msra.mxu0 0.0
      %5878 = vmatprep.subr.mxu0 0.0
      %5879 = vmatpush2.msra.mxu0 0.0
      %5880 = vmatprep.subr.mxu0 0.0
      %5881 = vmatpush2.msra.mxu0 0.0
      %5882 = vmatprep.subr.mxu0 0.0
      %5883 = vmatpush2.msra.mxu0 0.0
      %5884 = vmatprep.subr.mxu0 0.0
      %5885 = vmatpush2.msra.mxu0 0.0
      %5886 = vmatprep.subr.mxu0 0.0
      %5887 = vmatpush2.msra.mxu0 0.0
      %5888 = vmatprep.subr.mxu0 0.0
      %5889 = vmatpush2.msra.mxu0 0.0
      %5890 = vmatprep.subr.mxu0 0.0
      %5891 = vmatpush2.msra.mxu0 0.0
      %5892 = vmatprep.subr.mxu0 0.0
      %5893 = vmatpush2.msra.mxu0 0.0
      %5894 = vmatprep.subr.mxu0 0.0
      %5895 = vmatpush2.msra.mxu0 0.0
      %5896 = vmatprep.subr.mxu0 0.0
      %5897 = vmatpush2.msra.mxu0 0.0
      %5898 = vmatprep.subr.mxu0 0.0
      %5899 = vmatpush2.msra.mxu0 0.0
      %5900 = vmatprep.subr.mxu0 0.0
      %5901 = vmatpush2.msra.mxu0 0.0
      %5902 = vmatprep.subr.mxu0 0.0
      %5903 = vmatpush2.msra.mxu0 0.0
      %5904 = vmatprep.subr.mxu0 0.0
      %5905 = vmatpush2.msra.mxu0 0.0
      %5906 = vmatprep.mubr.f32.mxu0 0.0
      %5907 = vmatmul.mubr.f32.gmra.mxu0 %v5834
      %v5908 = vpop.f32.mrf.mxu0
      %v5909 = vadd.f32 0.0, %v5908
      %v5910 = vpop.f32.mrf.mxu0
      %5911 = vmatprep.mubr.f32.mxu0 0.0
      %5912 = vmatmul.mubr.f32.gmra.mxu0 %v5837
      %v5913 = vpop.f32.mrf.mxu0
      %v5914 = vadd.f32 0.0, %v5913
      %v5915 = vpop.f32.mrf.mxu0
      %5916 = vdwg.mxu0
      %v5917 = vadd.f32 %v5826, %v5909
      %v5918 = vadd.f32 %v5827, %v5914
      %s5919 = scalar_lea.vmem %s11, 224
      %v5920 = vld [vmem:[%s5919] sm:$0xff]
      %v5921 = vld [vmem:[%s5919 + $0x8] sm:$0xff]
      %v5922 = vld [vmem:[%s5919 + $0x10] sm:$0xff]
      %v5923 = vld [vmem:[%s5919 + $0x18] sm:$0x3f]
      %v5925 = vsel %vm646, %v5273, 0
      %v5928 = vsel %vm646, %v5274, 0
      %v5931 = vsel %vm1580, %v5923, 0
      %5933 = vmatprep.subr.mxu0 0.0
      %5934 = vmatpush1.msra.mxu0 0.0
      %5935 = vmatprep.subr.mxu0 0.0
      %5936 = vmatpush1.msra.mxu0 0.0
      %5937 = vmatprep.subr.mxu0 0.0
      %5938 = vmatpush1.msra.mxu0 0.0
      %5939 = vmatprep.subr.mxu0 0.0
      %5940 = vmatpush1.msra.mxu0 0.0
      %5941 = vmatprep.subr.mxu0 0.0
      %5942 = vmatpush1.msra.mxu0 0.0
      %5943 = vmatprep.subr.mxu0 0.0
      %5944 = vmatpush1.msra.mxu0 0.0
      %5945 = vmatprep.subr.mxu0 0.0
      %5946 = vmatpush1.msra.mxu0 0.0
      %5947 = vmatprep.subr.mxu0 0.0
      %5948 = vmatpush1.msra.mxu0 0.0
      %5949 = vmatprep.subr.mxu0 0.0
      %5950 = vmatpush1.msra.mxu0 0.0
      %5951 = vmatprep.subr.mxu0 0.0
      %5952 = vmatpush1.msra.mxu0 0.0
      %5953 = vmatprep.subr.mxu0 0.0
      %5954 = vmatpush1.msra.mxu0 0.0
      %5955 = vmatprep.subr.mxu0 0.0
      %5956 = vmatpush1.msra.mxu0 0.0
      %5957 = vmatprep.subr.mxu0 0.0
      %5958 = vmatpush1.msra.mxu0 %v5931
      %5959 = vmatprep.subr.mxu0 0.0
      %5960 = vmatpush1.msra.mxu0 %v5922
      %5961 = vmatprep.subr.mxu0 0.0
      %5962 = vmatpush1.msra.mxu0 %v5921
      %5963 = vmatprep.subr.mxu0 0.0
      %5964 = vmatpush1.msra.mxu0 %v5920
      %5965 = vmatprep.subr.mxu0 0.0
      %5966 = vmatpush2.msra.mxu0 0.0
      %5967 = vmatprep.subr.mxu0 0.0
      %5968 = vmatpush2.msra.mxu0 0.0
      %5969 = vmatprep.subr.mxu0 0.0
      %5970 = vmatpush2.msra.mxu0 0.0
      %5971 = vmatprep.subr.mxu0 0.0
      %5972 = vmatpush2.msra.mxu0 0.0
      %5973 = vmatprep.subr.mxu0 0.0
      %5974 = vmatpush2.msra.mxu0 0.0
      %5975 = vmatprep.subr.mxu0 0.0
      %5976 = vmatpush2.msra.mxu0 0.0
      %5977 = vmatprep.subr.mxu0 0.0
      %5978 = vmatpush2.msra.mxu0 0.0
      %5979 = vmatprep.subr.mxu0 0.0
      %5980 = vmatpush2.msra.mxu0 0.0
      %5981 = vmatprep.subr.mxu0 0.0
      %5982 = vmatpush2.msra.mxu0 0.0
      %5983 = vmatprep.subr.mxu0 0.0
      %5984 = vmatpush2.msra.mxu0 0.0
      %5985 = vmatprep.subr.mxu0 0.0
      %5986 = vmatpush2.msra.mxu0 0.0
      %5987 = vmatprep.subr.mxu0 0.0
      %5988 = vmatpush2.msra.mxu0 0.0
      %5989 = vmatprep.subr.mxu0 0.0
      %5990 = vmatpush2.msra.mxu0 0.0
      %5991 = vmatprep.subr.mxu0 0.0
      %5992 = vmatpush2.msra.mxu0 0.0
      %5993 = vmatprep.subr.mxu0 0.0
      %5994 = vmatpush2.msra.mxu0 0.0
      %5995 = vmatprep.subr.mxu0 0.0
      %5996 = vmatpush2.msra.mxu0 0.0
      %5997 = vmatprep.mubr.f32.mxu0 0.0
      %5998 = vmatmul.mubr.f32.gmra.mxu0 %v5925
      %v5999 = vpop.f32.mrf.mxu0
      %v6000 = vadd.f32 0.0, %v5999
      %v6001 = vpop.f32.mrf.mxu0
      %6002 = vmatprep.mubr.f32.mxu0 0.0
      %6003 = vmatmul.mubr.f32.gmra.mxu0 %v5928
      %v6004 = vpop.f32.mrf.mxu0
      %v6005 = vadd.f32 0.0, %v6004
      %v6006 = vpop.f32.mrf.mxu0
      %6007 = vdwg.mxu0
      %v6008 = vadd.f32 %v5917, %v6000
      %v6009 = vadd.f32 %v5918, %v6005
      %s6010 = scalar_lea.vmem %s11, 256
      %v6011 = vld [vmem:[%s6010] sm:$0xff]
      %v6012 = vld [vmem:[%s6010 + $0x8] sm:$0xff]
      %v6013 = vld [vmem:[%s6010 + $0x10] sm:$0xff]
      %v6014 = vld [vmem:[%s6010 + $0x18] sm:$0x3f]
      %v6016 = vsel %vm646, %v5275, 0
      %v6019 = vsel %vm646, %v5276, 0
      %v6022 = vsel %vm1580, %v6014, 0
      %6024 = vmatprep.subr.mxu0 0.0
      %6025 = vmatpush1.msra.mxu0 0.0
      %6026 = vmatprep.subr.mxu0 0.0
      %6027 = vmatpush1.msra.mxu0 0.0
      %6028 = vmatprep.subr.mxu0 0.0
      %6029 = vmatpush1.msra.mxu0 0.0
      %6030 = vmatprep.subr.mxu0 0.0
      %6031 = vmatpush1.msra.mxu0 0.0
      %6032 = vmatprep.subr.mxu0 0.0
      %6033 = vmatpush1.msra.mxu0 0.0
      %6034 = vmatprep.subr.mxu0 0.0
      %6035 = vmatpush1.msra.mxu0 0.0
      %6036 = vmatprep.subr.mxu0 0.0
      %6037 = vmatpush1.msra.mxu0 0.0
      %6038 = vmatprep.subr.mxu0 0.0
      %6039 = vmatpush1.msra.mxu0 0.0
      %6040 = vmatprep.subr.mxu0 0.0
      %6041 = vmatpush1.msra.mxu0 0.0
      %6042 = vmatprep.subr.mxu0 0.0
      %6043 = vmatpush1.msra.mxu0 0.0
      %6044 = vmatprep.subr.mxu0 0.0
      %6045 = vmatpush1.msra.mxu0 0.0
      %6046 = vmatprep.subr.mxu0 0.0
      %6047 = vmatpush1.msra.mxu0 0.0
      %6048 = vmatprep.subr.mxu0 0.0
      %6049 = vmatpush1.msra.mxu0 %v6022
      %6050 = vmatprep.subr.mxu0 0.0
      %6051 = vmatpush1.msra.mxu0 %v6013
      %6052 = vmatprep.subr.mxu0 0.0
      %6053 = vmatpush1.msra.mxu0 %v6012
      %6054 = vmatprep.subr.mxu0 0.0
      %6055 = vmatpush1.msra.mxu0 %v6011
      %6056 = vmatprep.subr.mxu0 0.0
      %6057 = vmatpush2.msra.mxu0 0.0
      %6058 = vmatprep.subr.mxu0 0.0
      %6059 = vmatpush2.msra.mxu0 0.0
      %6060 = vmatprep.subr.mxu0 0.0
      %6061 = vmatpush2.msra.mxu0 0.0
      %6062 = vmatprep.subr.mxu0 0.0
      %6063 = vmatpush2.msra.mxu0 0.0
      %6064 = vmatprep.subr.mxu0 0.0
      %6065 = vmatpush2.msra.mxu0 0.0
      %6066 = vmatprep.subr.mxu0 0.0
      %6067 = vmatpush2.msra.mxu0 0.0
      %6068 = vmatprep.subr.mxu0 0.0
      %6069 = vmatpush2.msra.mxu0 0.0
      %6070 = vmatprep.subr.mxu0 0.0
      %6071 = vmatpush2.msra.mxu0 0.0
      %6072 = vmatprep.subr.mxu0 0.0
      %6073 = vmatpush2.msra.mxu0 0.0
      %6074 = vmatprep.subr.mxu0 0.0
      %6075 = vmatpush2.msra.mxu0 0.0
      %6076 = vmatprep.subr.mxu0 0.0
      %6077 = vmatpush2.msra.mxu0 0.0
      %6078 = vmatprep.subr.mxu0 0.0
      %6079 = vmatpush2.msra.mxu0 0.0
      %6080 = vmatprep.subr.mxu0 0.0
      %6081 = vmatpush2.msra.mxu0 0.0
      %6082 = vmatprep.subr.mxu0 0.0
      %6083 = vmatpush2.msra.mxu0 0.0
      %6084 = vmatprep.subr.mxu0 0.0
      %6085 = vmatpush2.msra.mxu0 0.0
      %6086 = vmatprep.subr.mxu0 0.0
      %6087 = vmatpush2.msra.mxu0 0.0
      %6088 = vmatprep.mubr.f32.mxu0 0.0
      %6089 = vmatmul.mubr.f32.gmra.mxu0 %v6016
      %v6090 = vpop.f32.mrf.mxu0
      %v6091 = vadd.f32 0.0, %v6090
      %v6092 = vpop.f32.mrf.mxu0
      %6093 = vmatprep.mubr.f32.mxu0 0.0
      %6094 = vmatmul.mubr.f32.gmra.mxu0 %v6019
      %v6095 = vpop.f32.mrf.mxu0
      %v6096 = vadd.f32 0.0, %v6095
      %v6097 = vpop.f32.mrf.mxu0
      %6098 = vdwg.mxu0
      %v6099 = vadd.f32 %v6008, %v6091
      %v6100 = vadd.f32 %v6009, %v6096
      %s6101 = scalar_lea.vmem %s11, 288
      %v6102 = vld [vmem:[%s6101] sm:$0xff]
      %v6103 = vld [vmem:[%s6101 + $0x8] sm:$0xff]
      %v6104 = vld [vmem:[%s6101 + $0x10] sm:$0xff]
      %v6105 = vld [vmem:[%s6101 + $0x18] sm:$0x3f]
      %v6107 = vsel %vm646, %v5277, 0
      %v6110 = vsel %vm646, %v5278, 0
      %v6113 = vsel %vm1580, %v6105, 0
      %6115 = vmatprep.subr.mxu0 0.0
      %6116 = vmatpush1.msra.mxu0 0.0
      %6117 = vmatprep.subr.mxu0 0.0
      %6118 = vmatpush1.msra.mxu0 0.0
      %6119 = vmatprep.subr.mxu0 0.0
      %6120 = vmatpush1.msra.mxu0 0.0
      %6121 = vmatprep.subr.mxu0 0.0
      %6122 = vmatpush1.msra.mxu0 0.0
      %6123 = vmatprep.subr.mxu0 0.0
      %6124 = vmatpush1.msra.mxu0 0.0
      %6125 = vmatprep.subr.mxu0 0.0
      %6126 = vmatpush1.msra.mxu0 0.0
      %6127 = vmatprep.subr.mxu0 0.0
      %6128 = vmatpush1.msra.mxu0 0.0
      %6129 = vmatprep.subr.mxu0 0.0
      %6130 = vmatpush1.msra.mxu0 0.0
      %6131 = vmatprep.subr.mxu0 0.0
      %6132 = vmatpush1.msra.mxu0 0.0
      %6133 = vmatprep.subr.mxu0 0.0
      %6134 = vmatpush1.msra.mxu0 0.0
      %6135 = vmatprep.subr.mxu0 0.0
      %6136 = vmatpush1.msra.mxu0 0.0
      %6137 = vmatprep.subr.mxu0 0.0
      %6138 = vmatpush1.msra.mxu0 0.0
      %6139 = vmatprep.subr.mxu0 0.0
      %6140 = vmatpush1.msra.mxu0 %v6113
      %6141 = vmatprep.subr.mxu0 0.0
      %6142 = vmatpush1.msra.mxu0 %v6104
      %6143 = vmatprep.subr.mxu0 0.0
      %6144 = vmatpush1.msra.mxu0 %v6103
      %6145 = vmatprep.subr.mxu0 0.0
      %6146 = vmatpush1.msra.mxu0 %v6102
      %6147 = vmatprep.subr.mxu0 0.0
      %6148 = vmatpush2.msra.mxu0 0.0
      %6149 = vmatprep.subr.mxu0 0.0
      %6150 = vmatpush2.msra.mxu0 0.0
      %6151 = vmatprep.subr.mxu0 0.0
      %6152 = vmatpush2.msra.mxu0 0.0
      %6153 = vmatprep.subr.mxu0 0.0
      %6154 = vmatpush2.msra.mxu0 0.0
      %6155 = vmatprep.subr.mxu0 0.0
      %6156 = vmatpush2.msra.mxu0 0.0
      %6157 = vmatprep.subr.mxu0 0.0
      %6158 = vmatpush2.msra.mxu0 0.0
      %6159 = vmatprep.subr.mxu0 0.0
      %6160 = vmatpush2.msra.mxu0 0.0
      %6161 = vmatprep.subr.mxu0 0.0
      %6162 = vmatpush2.msra.mxu0 0.0
      %6163 = vmatprep.subr.mxu0 0.0
      %6164 = vmatpush2.msra.mxu0 0.0
      %6165 = vmatprep.subr.mxu0 0.0
      %6166 = vmatpush2.msra.mxu0 0.0
      %6167 = vmatprep.subr.mxu0 0.0
      %6168 = vmatpush2.msra.mxu0 0.0
      %6169 = vmatprep.subr.mxu0 0.0
      %6170 = vmatpush2.msra.mxu0 0.0
      %6171 = vmatprep.subr.mxu0 0.0
      %6172 = vmatpush2.msra.mxu0 0.0
      %6173 = vmatprep.subr.mxu0 0.0
      %6174 = vmatpush2.msra.mxu0 0.0
      %6175 = vmatprep.subr.mxu0 0.0
      %6176 = vmatpush2.msra.mxu0 0.0
      %6177 = vmatprep.subr.mxu0 0.0
      %6178 = vmatpush2.msra.mxu0 0.0
      %6179 = vmatprep.mubr.f32.mxu0 0.0
      %6180 = vmatmul.mubr.f32.gmra.mxu0 %v6107
      %v6181 = vpop.f32.mrf.mxu0
      %v6182 = vadd.f32 0.0, %v6181
      %v6183 = vpop.f32.mrf.mxu0
      %6184 = vmatprep.mubr.f32.mxu0 0.0
      %6185 = vmatmul.mubr.f32.gmra.mxu0 %v6110
      %v6186 = vpop.f32.mrf.mxu0
      %v6187 = vadd.f32 0.0, %v6186
      %v6188 = vpop.f32.mrf.mxu0
      %6189 = vdwg.mxu0
      %v6190 = vadd.f32 %v6099, %v6182
      %v6191 = vadd.f32 %v6100, %v6187
      %s6192 = scalar_lea.vmem %s11, 320
      %v6193 = vld [vmem:[%s6192] sm:$0xff]
      %v6194 = vld [vmem:[%s6192 + $0x8] sm:$0xff]
      %v6195 = vld [vmem:[%s6192 + $0x10] sm:$0xff]
      %v6196 = vld [vmem:[%s6192 + $0x18] sm:$0x3f]
      %v6198 = vsel %vm646, %v5279, 0
      %v6201 = vsel %vm646, %v5280, 0
      %v6204 = vsel %vm1580, %v6196, 0
      %6206 = vmatprep.subr.mxu0 0.0
      %6207 = vmatpush1.msra.mxu0 0.0
      %6208 = vmatprep.subr.mxu0 0.0
      %6209 = vmatpush1.msra.mxu0 0.0
      %6210 = vmatprep.subr.mxu0 0.0
      %6211 = vmatpush1.msra.mxu0 0.0
      %6212 = vmatprep.subr.mxu0 0.0
      %6213 = vmatpush1.msra.mxu0 0.0
      %6214 = vmatprep.subr.mxu0 0.0
      %6215 = vmatpush1.msra.mxu0 0.0
      %6216 = vmatprep.subr.mxu0 0.0
      %6217 = vmatpush1.msra.mxu0 0.0
      %6218 = vmatprep.subr.mxu0 0.0
      %6219 = vmatpush1.msra.mxu0 0.0
      %6220 = vmatprep.subr.mxu0 0.0
      %6221 = vmatpush1.msra.mxu0 0.0
      %6222 = vmatprep.subr.mxu0 0.0
      %6223 = vmatpush1.msra.mxu0 0.0
      %6224 = vmatprep.subr.mxu0 0.0
      %6225 = vmatpush1.msra.mxu0 0.0
      %6226 = vmatprep.subr.mxu0 0.0
      %6227 = vmatpush1.msra.mxu0 0.0
      %6228 = vmatprep.subr.mxu0 0.0
      %6229 = vmatpush1.msra.mxu0 0.0
      %6230 = vmatprep.subr.mxu0 0.0
      %6231 = vmatpush1.msra.mxu0 %v6204
      %6232 = vmatprep.subr.mxu0 0.0
      %6233 = vmatpush1.msra.mxu0 %v6195
      %6234 = vmatprep.subr.mxu0 0.0
      %6235 = vmatpush1.msra.mxu0 %v6194
      %6236 = vmatprep.subr.mxu0 0.0
      %6237 = vmatpush1.msra.mxu0 %v6193
      %6238 = vmatprep.subr.mxu0 0.0
      %6239 = vmatpush2.msra.mxu0 0.0
      %6240 = vmatprep.subr.mxu0 0.0
      %6241 = vmatpush2.msra.mxu0 0.0
      %6242 = vmatprep.subr.mxu0 0.0
      %6243 = vmatpush2.msra.mxu0 0.0
      %6244 = vmatprep.subr.mxu0 0.0
      %6245 = vmatpush2.msra.mxu0 0.0
      %6246 = vmatprep.subr.mxu0 0.0
      %6247 = vmatpush2.msra.mxu0 0.0
      %6248 = vmatprep.subr.mxu0 0.0
      %6249 = vmatpush2.msra.mxu0 0.0
      %6250 = vmatprep.subr.mxu0 0.0
      %6251 = vmatpush2.msra.mxu0 0.0
      %6252 = vmatprep.subr.mxu0 0.0
      %6253 = vmatpush2.msra.mxu0 0.0
      %6254 = vmatprep.subr.mxu0 0.0
      %6255 = vmatpush2.msra.mxu0 0.0
      %6256 = vmatprep.subr.mxu0 0.0
      %6257 = vmatpush2.msra.mxu0 0.0
      %6258 = vmatprep.subr.mxu0 0.0
      %6259 = vmatpush2.msra.mxu0 0.0
      %6260 = vmatprep.subr.mxu0 0.0
      %6261 = vmatpush2.msra.mxu0 0.0
      %6262 = vmatprep.subr.mxu0 0.0
      %6263 = vmatpush2.msra.mxu0 0.0
      %6264 = vmatprep.subr.mxu0 0.0
      %6265 = vmatpush2.msra.mxu0 0.0
      %6266 = vmatprep.subr.mxu0 0.0
      %6267 = vmatpush2.msra.mxu0 0.0
      %6268 = vmatprep.subr.mxu0 0.0
      %6269 = vmatpush2.msra.mxu0 0.0
      %6270 = vmatprep.mubr.f32.mxu0 0.0
      %6271 = vmatmul.mubr.f32.gmra.mxu0 %v6198
      %v6272 = vpop.f32.mrf.mxu0
      %v6273 = vadd.f32 0.0, %v6272
      %v6274 = vpop.f32.mrf.mxu0
      %6275 = vmatprep.mubr.f32.mxu0 0.0
      %6276 = vmatmul.mubr.f32.gmra.mxu0 %v6201
      %v6277 = vpop.f32.mrf.mxu0
      %v6278 = vadd.f32 0.0, %v6277
      %v6279 = vpop.f32.mrf.mxu0
      %6280 = vdwg.mxu0
      %v6281 = vadd.f32 %v6190, %v6273
      %v6282 = vadd.f32 %v6191, %v6278
      %s6283 = scalar_lea.vmem %s11, 352
      %v6284 = vld [vmem:[%s6283] sm:$0xff]
      %v6285 = vld [vmem:[%s6283 + $0x8] sm:$0xff]
      %v6286 = vld [vmem:[%s6283 + $0x10] sm:$0xff]
      %v6287 = vld [vmem:[%s6283 + $0x18] sm:$0x3f]
      %v6289 = vsel %vm646, %v5281, 0
      %v6292 = vsel %vm646, %v5282, 0
      %v6295 = vsel %vm1580, %v6287, 0
      %6297 = vmatprep.subr.mxu0 0.0
      %6298 = vmatpush1.msra.mxu0 0.0
      %6299 = vmatprep.subr.mxu0 0.0
      %6300 = vmatpush1.msra.mxu0 0.0
      %6301 = vmatprep.subr.mxu0 0.0
      %6302 = vmatpush1.msra.mxu0 0.0
      %6303 = vmatprep.subr.mxu0 0.0
      %6304 = vmatpush1.msra.mxu0 0.0
      %6305 = vmatprep.subr.mxu0 0.0
      %6306 = vmatpush1.msra.mxu0 0.0
      %6307 = vmatprep.subr.mxu0 0.0
      %6308 = vmatpush1.msra.mxu0 0.0
      %6309 = vmatprep.subr.mxu0 0.0
      %6310 = vmatpush1.msra.mxu0 0.0
      %6311 = vmatprep.subr.mxu0 0.0
      %6312 = vmatpush1.msra.mxu0 0.0
      %6313 = vmatprep.subr.mxu0 0.0
      %6314 = vmatpush1.msra.mxu0 0.0
      %6315 = vmatprep.subr.mxu0 0.0
      %6316 = vmatpush1.msra.mxu0 0.0
      %6317 = vmatprep.subr.mxu0 0.0
      %6318 = vmatpush1.msra.mxu0 0.0
      %6319 = vmatprep.subr.mxu0 0.0
      %6320 = vmatpush1.msra.mxu0 0.0
      %6321 = vmatprep.subr.mxu0 0.0
      %6322 = vmatpush1.msra.mxu0 %v6295
      %6323 = vmatprep.subr.mxu0 0.0
      %6324 = vmatpush1.msra.mxu0 %v6286
      %6325 = vmatprep.subr.mxu0 0.0
      %6326 = vmatpush1.msra.mxu0 %v6285
      %6327 = vmatprep.subr.mxu0 0.0
      %6328 = vmatpush1.msra.mxu0 %v6284
      %6329 = vmatprep.subr.mxu0 0.0
      %6330 = vmatpush2.msra.mxu0 0.0
      %6331 = vmatprep.subr.mxu0 0.0
      %6332 = vmatpush2.msra.mxu0 0.0
      %6333 = vmatprep.subr.mxu0 0.0
      %6334 = vmatpush2.msra.mxu0 0.0
      %6335 = vmatprep.subr.mxu0 0.0
      %6336 = vmatpush2.msra.mxu0 0.0
      %6337 = vmatprep.subr.mxu0 0.0
      %6338 = vmatpush2.msra.mxu0 0.0
      %6339 = vmatprep.subr.mxu0 0.0
      %6340 = vmatpush2.msra.mxu0 0.0
      %6341 = vmatprep.subr.mxu0 0.0
      %6342 = vmatpush2.msra.mxu0 0.0
      %6343 = vmatprep.subr.mxu0 0.0
      %6344 = vmatpush2.msra.mxu0 0.0
      %6345 = vmatprep.subr.mxu0 0.0
      %6346 = vmatpush2.msra.mxu0 0.0
      %6347 = vmatprep.subr.mxu0 0.0
      %6348 = vmatpush2.msra.mxu0 0.0
      %6349 = vmatprep.subr.mxu0 0.0
      %6350 = vmatpush2.msra.mxu0 0.0
      %6351 = vmatprep.subr.mxu0 0.0
      %6352 = vmatpush2.msra.mxu0 0.0
      %6353 = vmatprep.subr.mxu0 0.0
      %6354 = vmatpush2.msra.mxu0 0.0
      %6355 = vmatprep.subr.mxu0 0.0
      %6356 = vmatpush2.msra.mxu0 0.0
      %6357 = vmatprep.subr.mxu0 0.0
      %6358 = vmatpush2.msra.mxu0 0.0
      %6359 = vmatprep.subr.mxu0 0.0
      %6360 = vmatpush2.msra.mxu0 0.0
      %6361 = vmatprep.mubr.f32.mxu0 0.0
      %6362 = vmatmul.mubr.f32.gmra.mxu0 %v6289
      %v6363 = vpop.f32.mrf.mxu0
      %v6364 = vadd.f32 0.0, %v6363
      %v6365 = vpop.f32.mrf.mxu0
      %6366 = vmatprep.mubr.f32.mxu0 0.0
      %6367 = vmatmul.mubr.f32.gmra.mxu0 %v6292
      %v6368 = vpop.f32.mrf.mxu0
      %v6369 = vadd.f32 0.0, %v6368
      %v6370 = vpop.f32.mrf.mxu0
      %6371 = vdwg.mxu0
      %v6372 = vadd.f32 %v6281, %v6364
      %v6373 = vadd.f32 %v6282, %v6369
      %s6374 = scalar_lea.vmem %s11, 384
      %v6375 = vld [vmem:[%s6374] sm:$0xff]
      %v6376 = vld [vmem:[%s6374 + $0x8] sm:$0xff]
      %v6377 = vld [vmem:[%s6374 + $0x10] sm:$0xff]
      %v6378 = vld [vmem:[%s6374 + $0x18] sm:$0x3f]
      %v6380 = vsel %vm646, %v5283, 0
      %v6383 = vsel %vm646, %v5284, 0
      %v6386 = vsel %vm1580, %v6378, 0
      %6388 = vmatprep.subr.mxu0 0.0
      %6389 = vmatpush1.msra.mxu0 0.0
      %6390 = vmatprep.subr.mxu0 0.0
      %6391 = vmatpush1.msra.mxu0 0.0
      %6392 = vmatprep.subr.mxu0 0.0
      %6393 = vmatpush1.msra.mxu0 0.0
      %6394 = vmatprep.subr.mxu0 0.0
      %6395 = vmatpush1.msra.mxu0 0.0
      %6396 = vmatprep.subr.mxu0 0.0
      %6397 = vmatpush1.msra.mxu0 0.0
      %6398 = vmatprep.subr.mxu0 0.0
      %6399 = vmatpush1.msra.mxu0 0.0
      %6400 = vmatprep.subr.mxu0 0.0
      %6401 = vmatpush1.msra.mxu0 0.0
      %6402 = vmatprep.subr.mxu0 0.0
      %6403 = vmatpush1.msra.mxu0 0.0
      %6404 = vmatprep.subr.mxu0 0.0
      %6405 = vmatpush1.msra.mxu0 0.0
      %6406 = vmatprep.subr.mxu0 0.0
      %6407 = vmatpush1.msra.mxu0 0.0
      %6408 = vmatprep.subr.mxu0 0.0
      %6409 = vmatpush1.msra.mxu0 0.0
      %6410 = vmatprep.subr.mxu0 0.0
      %6411 = vmatpush1.msra.mxu0 0.0
      %6412 = vmatprep.subr.mxu0 0.0
      %6413 = vmatpush1.msra.mxu0 %v6386
      %6414 = vmatprep.subr.mxu0 0.0
      %6415 = vmatpush1.msra.mxu0 %v6377
      %6416 = vmatprep.subr.mxu0 0.0
      %6417 = vmatpush1.msra.mxu0 %v6376
      %6418 = vmatprep.subr.mxu0 0.0
      %6419 = vmatpush1.msra.mxu0 %v6375
      %6420 = vmatprep.subr.mxu0 0.0
      %6421 = vmatpush2.msra.mxu0 0.0
      %6422 = vmatprep.subr.mxu0 0.0
      %6423 = vmatpush2.msra.mxu0 0.0
      %6424 = vmatprep.subr.mxu0 0.0
      %6425 = vmatpush2.msra.mxu0 0.0
      %6426 = vmatprep.subr.mxu0 0.0
      %6427 = vmatpush2.msra.mxu0 0.0
      %6428 = vmatprep.subr.mxu0 0.0
      %6429 = vmatpush2.msra.mxu0 0.0
      %6430 = vmatprep.subr.mxu0 0.0
      %6431 = vmatpush2.msra.mxu0 0.0
      %6432 = vmatprep.subr.mxu0 0.0
      %6433 = vmatpush2.msra.mxu0 0.0
      %6434 = vmatprep.subr.mxu0 0.0
      %6435 = vmatpush2.msra.mxu0 0.0
      %6436 = vmatprep.subr.mxu0 0.0
      %6437 = vmatpush2.msra.mxu0 0.0
      %6438 = vmatprep.subr.mxu0 0.0
      %6439 = vmatpush2.msra.mxu0 0.0
      %6440 = vmatprep.subr.mxu0 0.0
      %6441 = vmatpush2.msra.mxu0 0.0
      %6442 = vmatprep.subr.mxu0 0.0
      %6443 = vmatpush2.msra.mxu0 0.0
      %6444 = vmatprep.subr.mxu0 0.0
      %6445 = vmatpush2.msra.mxu0 0.0
      %6446 = vmatprep.subr.mxu0 0.0
      %6447 = vmatpush2.msra.mxu0 0.0
      %6448 = vmatprep.subr.mxu0 0.0
      %6449 = vmatpush2.msra.mxu0 0.0
      %6450 = vmatprep.subr.mxu0 0.0
      %6451 = vmatpush2.msra.mxu0 0.0
      %6452 = vmatprep.mubr.f32.mxu0 0.0
      %6453 = vmatmul.mubr.f32.gmra.mxu0 %v6380
      %v6454 = vpop.f32.mrf.mxu0
      %v6455 = vadd.f32 0.0, %v6454
      %v6456 = vpop.f32.mrf.mxu0
      %6457 = vmatprep.mubr.f32.mxu0 0.0
      %6458 = vmatmul.mubr.f32.gmra.mxu0 %v6383
      %v6459 = vpop.f32.mrf.mxu0
      %v6460 = vadd.f32 0.0, %v6459
      %v6461 = vpop.f32.mrf.mxu0
      %6462 = vdwg.mxu0
      %v6463 = vadd.f32 %v6372, %v6455
      %v6464 = vadd.f32 %v6373, %v6460
      %s6465 = scalar_lea.vmem %s11, 416
      %v6466 = vld [vmem:[%s6465] sm:$0xff]
      %v6467 = vld [vmem:[%s6465 + $0x8] sm:$0xff]
      %v6468 = vld [vmem:[%s6465 + $0x10] sm:$0xff]
      %v6469 = vld [vmem:[%s6465 + $0x18] sm:$0x3f]
      %v6471 = vsel %vm646, %v5285, 0
      %v6474 = vsel %vm646, %v5286, 0
      %v6477 = vsel %vm1580, %v6469, 0
      %6479 = vmatprep.subr.mxu0 0.0
      %6480 = vmatpush1.msra.mxu0 0.0
      %6481 = vmatprep.subr.mxu0 0.0
      %6482 = vmatpush1.msra.mxu0 0.0
      %6483 = vmatprep.subr.mxu0 0.0
      %6484 = vmatpush1.msra.mxu0 0.0
      %6485 = vmatprep.subr.mxu0 0.0
      %6486 = vmatpush1.msra.mxu0 0.0
      %6487 = vmatprep.subr.mxu0 0.0
      %6488 = vmatpush1.msra.mxu0 0.0
      %6489 = vmatprep.subr.mxu0 0.0
      %6490 = vmatpush1.msra.mxu0 0.0
      %6491 = vmatprep.subr.mxu0 0.0
      %6492 = vmatpush1.msra.mxu0 0.0
      %6493 = vmatprep.subr.mxu0 0.0
      %6494 = vmatpush1.msra.mxu0 0.0
      %6495 = vmatprep.subr.mxu0 0.0
      %6496 = vmatpush1.msra.mxu0 0.0
      %6497 = vmatprep.subr.mxu0 0.0
      %6498 = vmatpush1.msra.mxu0 0.0
      %6499 = vmatprep.subr.mxu0 0.0
      %6500 = vmatpush1.msra.mxu0 0.0
      %6501 = vmatprep.subr.mxu0 0.0
      %6502 = vmatpush1.msra.mxu0 0.0
      %6503 = vmatprep.subr.mxu0 0.0
      %6504 = vmatpush1.msra.mxu0 %v6477
      %6505 = vmatprep.subr.mxu0 0.0
      %6506 = vmatpush1.msra.mxu0 %v6468
      %6507 = vmatprep.subr.mxu0 0.0
      %6508 = vmatpush1.msra.mxu0 %v6467
      %6509 = vmatprep.subr.mxu0 0.0
      %6510 = vmatpush1.msra.mxu0 %v6466
      %6511 = vmatprep.subr.mxu0 0.0
      %6512 = vmatpush2.msra.mxu0 0.0
      %6513 = vmatprep.subr.mxu0 0.0
      %6514 = vmatpush2.msra.mxu0 0.0
      %6515 = vmatprep.subr.mxu0 0.0
      %6516 = vmatpush2.msra.mxu0 0.0
      %6517 = vmatprep.subr.mxu0 0.0
      %6518 = vmatpush2.msra.mxu0 0.0
      %6519 = vmatprep.subr.mxu0 0.0
      %6520 = vmatpush2.msra.mxu0 0.0
      %6521 = vmatprep.subr.mxu0 0.0
      %6522 = vmatpush2.msra.mxu0 0.0
      %6523 = vmatprep.subr.mxu0 0.0
      %6524 = vmatpush2.msra.mxu0 0.0
      %6525 = vmatprep.subr.mxu0 0.0
      %6526 = vmatpush2.msra.mxu0 0.0
      %6527 = vmatprep.subr.mxu0 0.0
      %6528 = vmatpush2.msra.mxu0 0.0
      %6529 = vmatprep.subr.mxu0 0.0
      %6530 = vmatpush2.msra.mxu0 0.0
      %6531 = vmatprep.subr.mxu0 0.0
      %6532 = vmatpush2.msra.mxu0 0.0
      %6533 = vmatprep.subr.mxu0 0.0
      %6534 = vmatpush2.msra.mxu0 0.0
      %6535 = vmatprep.subr.mxu0 0.0
      %6536 = vmatpush2.msra.mxu0 0.0
      %6537 = vmatprep.subr.mxu0 0.0
      %6538 = vmatpush2.msra.mxu0 0.0
      %6539 = vmatprep.subr.mxu0 0.0
      %6540 = vmatpush2.msra.mxu0 0.0
      %6541 = vmatprep.subr.mxu0 0.0
      %6542 = vmatpush2.msra.mxu0 0.0
      %6543 = vmatprep.mubr.f32.mxu0 0.0
      %6544 = vmatmul.mubr.f32.gmra.mxu0 %v6471
      %v6545 = vpop.f32.mrf.mxu0
      %v6546 = vadd.f32 0.0, %v6545
      %v6547 = vpop.f32.mrf.mxu0
      %6548 = vmatprep.mubr.f32.mxu0 0.0
      %6549 = vmatmul.mubr.f32.gmra.mxu0 %v6474
      %v6550 = vpop.f32.mrf.mxu0
      %v6551 = vadd.f32 0.0, %v6550
      %v6552 = vpop.f32.mrf.mxu0
      %6553 = vdwg.mxu0
      %v6554 = vadd.f32 %v6463, %v6546
      %v6555 = vadd.f32 %v6464, %v6551
      %v6556 = vld [vmem:[%s12] sm:$0x1]
      %v6558 = vlaneseq
      %v6559 = vshrl.u32 %v6558, 7
      %v6560 = vsub.s32 0, %v6559
      %v6561 = vrot.slane %v6556, %v6560
      %v6563 = vadd.f32 %v6554, %v6561
      %v6564 = vadd.f32 %v6555, %v6561
      %v6565 = vtanh.pop %v6563
      %v6566 = vtanh.pop %v6564
      %v6567 = vld [vmem:[%s13] sm:$0x1]
      %v6568 = vld [vmem:[#allocation2] sm:$0x1]
      %6570 = vset.pattern.permute.xlu0 0
      %6571 = vperm.xlu0 %6570, %v6568
      %v6572 = vpop.permute.xlu0 %6571
      %v6574 = vlaneseq
      %v6575 = vshrl.u32 %v6574, 7
      %v6576 = vsub.s32 0, %v6575
      %v6577 = vrot.slane %v6572, %v6576
      %vm6578 = vcmask 818176
      %v6580 = vsel %vm6578, %v6567, 0
      %v6583 = vsel %vm6578, %v6565, 0
      %v6586 = vsel %vm6578, %v6566, 0
      %6588 = vmatprep.subr.mxu0 0.0
      %6589 = vmatpush1.xpose.msra.mxu0 0.0
      %6590 = vmatprep.subr.mxu0 0.0
      %6591 = vmatpush1.xpose.msra.mxu0 0.0
      %6592 = vmatprep.subr.mxu0 0.0
      %6593 = vmatpush1.xpose.msra.mxu0 0.0
      %6594 = vmatprep.subr.mxu0 0.0
      %6595 = vmatpush1.xpose.msra.mxu0 0.0
      %6596 = vmatprep.subr.mxu0 0.0
      %6597 = vmatpush1.xpose.msra.mxu0 0.0
      %6598 = vmatprep.subr.mxu0 0.0
      %6599 = vmatpush1.xpose.msra.mxu0 0.0
      %6600 = vmatprep.subr.mxu0 0.0
      %6601 = vmatpush1.xpose.msra.mxu0 0.0
      %6602 = vmatprep.subr.mxu0 0.0
      %6603 = vmatpush1.xpose.msra.mxu0 0.0
      %6604 = vmatprep.subr.mxu0 0.0
      %6605 = vmatpush1.xpose.msra.mxu0 0.0
      %6606 = vmatprep.subr.mxu0 0.0
      %6607 = vmatpush1.xpose.msra.mxu0 0.0
      %6608 = vmatprep.subr.mxu0 0.0
      %6609 = vmatpush1.xpose.msra.mxu0 0.0
      %6610 = vmatprep.subr.mxu0 0.0
      %6611 = vmatpush1.xpose.msra.mxu0 0.0
      %6612 = vmatprep.subr.mxu0 0.0
      %6613 = vmatpush1.xpose.msra.mxu0 0.0
      %6614 = vmatprep.subr.mxu0 0.0
      %6615 = vmatpush1.xpose.msra.mxu0 0.0
      %6616 = vmatprep.subr.mxu0 0.0
      %6617 = vmatpush1.xpose.msra.mxu0 %v6586
      %6618 = vmatprep.subr.mxu0 0.0
      %6619 = vmatpush1.xpose.msra.mxu0 %v6583
      %6620 = vmatprep.subr.mxu0 0.0
      %6621 = vmatpush2.xpose.msra.mxu0 0.0
      %6622 = vmatprep.subr.mxu0 0.0
      %6623 = vmatpush2.xpose.msra.mxu0 0.0
      %6624 = vmatprep.subr.mxu0 0.0
      %6625 = vmatpush2.xpose.msra.mxu0 0.0
      %6626 = vmatprep.subr.mxu0 0.0
      %6627 = vmatpush2.xpose.msra.mxu0 0.0
      %6628 = vmatprep.subr.mxu0 0.0
      %6629 = vmatpush2.xpose.msra.mxu0 0.0
      %6630 = vmatprep.subr.mxu0 0.0
      %6631 = vmatpush2.xpose.msra.mxu0 0.0
      %6632 = vmatprep.subr.mxu0 0.0
      %6633 = vmatpush2.xpose.msra.mxu0 0.0
      %6634 = vmatprep.subr.mxu0 0.0
      %6635 = vmatpush2.xpose.msra.mxu0 0.0
      %6636 = vmatprep.subr.mxu0 0.0
      %6637 = vmatpush2.xpose.msra.mxu0 0.0
      %6638 = vmatprep.subr.mxu0 0.0
      %6639 = vmatpush2.xpose.msra.mxu0 0.0
      %6640 = vmatprep.subr.mxu0 0.0
      %6641 = vmatpush2.xpose.msra.mxu0 0.0
      %6642 = vmatprep.subr.mxu0 0.0
      %6643 = vmatpush2.xpose.msra.mxu0 0.0
      %6644 = vmatprep.subr.mxu0 0.0
      %6645 = vmatpush2.xpose.msra.mxu0 0.0
      %6646 = vmatprep.subr.mxu0 0.0
      %6647 = vmatpush2.xpose.msra.mxu0 0.0
      %6648 = vmatprep.subr.mxu0 0.0
      %6649 = vmatpush2.xpose.msra.mxu0 0.0
      %6650 = vmatprep.subr.mxu0 0.0
      %6651 = vmatpush2.xpose.msra.mxu0 0.0
      %6652 = vmatprep.mubr.f32.mxu0 0.0
      %6653 = vmatmul.mubr.f32.gmra.mxu0 %v6580
      %v6654 = vpop.f32.mrf.mxu0
      %v6655 = vadd.f32 %v6577, %v6654
      %v6656 = vpop.f32.mrf.mxu0
      %6657 = vdwg.mxu0
      %vm6658 = vcmask 122880
      %6659 = vst.msk [vmem:[%s492] sm:$0x1] %vm6658, %v6655
      %p6660 = scmp.lt.s32.totalorder %s28, 1
      %s6661 = scalar_select %p6660, %s28, 1
      %s6662 = scalar_lea.vmem %s15, %s6661
      // Predicated region
      $region81: #{cnn_forward_pallas.1} parent=79 // pred_check
        %p6663 = pneg %p366
      $region82: #{cnn_forward_pallas.1} parent=79 // pred_check_branch
        %6665 = sbr.rel (%p6663) target = $region84
      $region83: #{cnn_forward_pallas.1} parent=79 // pred_region
        _
      $region84: #{cnn_forward_pallas.1} parent=79 // pred_fallthru
        _
    $region80: #{cnn_forward_pallas.1} parent=5 // pred_fallthru
      _
    %p6666 = scmp.le.s32.totalorder 2, %s23
    // Predicated region
    $region85: #{cnn_forward_pallas.1} parent=5 // pred_check
      %p6667 = pneg %p6666
    $region86: #{cnn_forward_pallas.1} parent=5 // pred_check_branch
      %6669 = sbr.rel (%p6667) target = $region88
    $region87: #{cnn_forward_pallas.1} parent=5 // pred_region
      %s6670 = ssub.s32 %s23, 2
      // Predicated region
      $region89: #{cnn_forward_pallas.1} parent=87 // pred_check
        %p6671 = pneg %p372
      $region90: #{cnn_forward_pallas.1} parent=87 // pred_check_branch
        %6673 = sbr.rel (%p6671) target = $region92
      $region91: #{cnn_forward_pallas.1} parent=87 // pred_region
        %p6674 = scmp.lt.s32.totalorder %s29, 1
        %s6675 = scalar_select %p6674, %s29, 1
        %s6676 = scalar_lea.vmem %s15, %s6675
      $region92: #{cnn_forward_pallas.1} parent=87 // pred_fallthru
        _
    $region88: #{cnn_forward_pallas.1} parent=5 // pred_fallthru
      _
  $region6: #{cnn_forward_pallas.1} parent=0 // loop_footer
    %s27 = sadd.s32 1, %s23
  $region7: #{cnn_forward_pallas.1} parent=0 // loop_footer_branch
    %22 = sbr.rel target = $region3
  $region8: #{cnn_forward_pallas.1} parent=0 // loop_exit
    _

</llo_original>
